<compile_context>
chip_gen: v7x
topology: tpu7x:2x2x1
jax: 0.10.0
libtpu: 0.0.40
codegen_flags: <defaults>
</compile_context>

<pallas_src>
from functools import partial

import numpy as np
import jax
import jax.numpy as jnp
from jax.experimental import pallas as pl
from jax.experimental.pallas import tpu as pltpu

RADIUS = 1      # MINDLoss default
DILATION = 2    # MINDLoss default
NUM_CH = 12

# ----------------------------------------------------------------------------- #
# MIND-SSC six-neighbourhood points and the 12 channel pairs (indices into SIX).
# ----------------------------------------------------------------------------- #
_SIX_NP = np.array([[0, 1, 1], [1, 1, 0], [1, 0, 1],
                    [1, 1, 2], [2, 1, 1], [1, 2, 1]], dtype=np.int64)


def _mind_pairs():
    diff = _SIX_NP[:, None, :] - _SIX_NP[None, :, :]
    dist = (diff ** 2).sum(-1)                       # pdist_squared
    ii, jj = np.meshgrid(np.arange(6), np.arange(6), indexing="ij")
    mask = (ii > jj) & (dist == 2)
    return list(zip(ii[mask].tolist(), jj[mask].tolist()))


SIX = [tuple(r) for r in _SIX_NP.tolist()]           # 6 (z, y, x) triplets in {0,1,2}
PAIRS = _mind_pairs()                                # 12 (a, b) index pairs into SIX
assert len(PAIRS) == NUM_CH


# ----------------------------------------------------------------------------- #
# Shared per-slab SSD computation (shift-diffs + separable box filter), in VMEM.
# ----------------------------------------------------------------------------- #
def _slab_ssd(img3, z0, pbuf_ref, ybuf_ref, xbuf_ref,
              *, D, H, W, radius, dilation, slab):
    """Returns the 12 box-filtered squared shift-difference slabs (slab, H, W).

    img3: ref-view of the dilation-replication-padded volume (Dp, Hp, Wp).
    z0  : dynamic slab start (output z coords).
    """
    r, dil = radius, dilation
    ks = 2 * r + 1
    zq = slab + 2 * r
    inv_pool = np.float32(1.0 / ks ** 3)

    # --- 6 unique dilated shifted windows (the 12 channels share these) -------
    for k in range(zq):
        # Replication pad of the shift-difference field along z == index clamp.
        zc = jnp.clip(z0 - r + k, 0, D - 1)
        zplanes = [img3[zc + t * dil] for t in range(3)]          # (Hp, Wp) each
        for j, (sz, sy, sx) in enumerate(SIX):
            pbuf_ref[j, k] = zplanes[sz][sy * dil:sy * dil + H,
                                         sx * dil:sx * dil + W]

    ssd = []
    for (a, b) in PAIRS:                                          # 12 channels
        d = pbuf_ref[a] - pbuf_ref[b]
        q = d * d                                                 # (zq, H, W)

        # --- separable box filter (avg_pool3d, stride 1) ----------------------
        # z pass (replication already handled by the clamp above).
        acc = q[0:slab]
        for t in range(1, ks):
            acc = acc + q[t:t + slab]                             # (slab, H, W)

        # y (sublane) pass; replication pad via scratch buffer.
        ybuf_ref[:, r:r + H, :] = acc
        ybuf_ref[:, 0:r, :] = jnp.broadcast_to(acc[:, 0:1, :], (slab, r, W))
        ybuf_ref[:, r + H:, :] = jnp.broadcast_to(acc[:, H - 1:H, :], (slab, r, W))
        yb = ybuf_ref[...]
        acc = yb[:, 0:H, :]
        for t in range(1, ks):
            acc = acc + yb[:, t:t + H, :]

        # x (lane) pass; replication pad via scratch buffer.
        xbuf_ref[:, :, r:r + W] = acc
        xbuf_ref[:, :, 0:r] = jnp.broadcast_to(acc[:, :, 0:1], (slab, H, r))
        xbuf_ref[:, :, r + W:] = jnp.broadcast_to(acc[:, :, W - 1:W], (slab, H, r))
        xb = xbuf_ref[...]
        acc = xb[:, :, 0:W]
        for t in range(1, ks):
            acc = acc + xb[:, :, t:t + W]

        ssd.append(acc * inv_pool)
    return ssd


# ----------------------------------------------------------------------------- #
# Pass 1: per-image sum of mind_var (for the global clamp bounds).
# grid = (image, slab); image axis "parallel" (v7x megacore), slab axis "arbitrary".
# ----------------------------------------------------------------------------- #
def _stats_kernel(img_ref, out_ref, acc_ref, pbuf_ref, ybuf_ref, xbuf_ref,
                  *, D, H, W, radius, dilation, slab):
    s = pl.program_id(1)
    z0 = s * slab

    @pl.when(s == 0)
    def _init():
        acc_ref[...] = jnp.zeros_like(acc_ref)

    ssd = _slab_ssd(img_ref.at[0], z0, pbuf_ref, ybuf_ref, xbuf_ref,
                    D=D, H=H, W=W, radius=radius, dilation=dilation, slab=slab)
    mn = ssd[0]
    tot = ssd[0]
    for c in range(1, NUM_CH):
        mn = jnp.minimum(mn, ssd[c])
        tot = tot + ssd[c]
    # mean_c(ssd - min_c) == mean_c(ssd) - min_c : no `mind` temporaries needed.
    mind_var = tot * np.float32(1.0 / NUM_CH) - mn
    acc_ref[...] = acc_ref[...] + mind_var            # elementwise accumulation

    @pl.when(s == pl.num_programs(1) - 1)
    def _emit():
        out_ref[...] = jnp.full((1, 8, 128), jnp.sum(acc_ref[...]), jnp.float32)


# ----------------------------------------------------------------------------- #
# Pass 2: fused MIND features for BOTH images (recomputed per slab) + MSE.
# ----------------------------------------------------------------------------- #
def _loss_kernel(mv_ref, imgs_ref, out_ref, acc_ref, pbuf_ref, ybuf_ref, xbuf_ref,
                 *, D, H, W, radius, dilation, slab):
    s = pl.program_id(0)
    z0 = s * slab

    @pl.when(s == 0)
    def _init():
        acc_ref[...] = jnp.zeros_like(acc_ref)

    def mind_parts(img_idx):
        ssd = _slab_ssd(imgs_ref.at[img_idx], z0, pbuf_ref, ybuf_ref, xbuf_ref,
                        D=D, H=H, W=W, radius=radius, dilation=dilation, slab=slab)
        mn = ssd[0]
        tot = ssd[0]
        for c in range(1, NUM_CH):
            mn = jnp.minimum(mn, ssd[c])
            tot = tot + ssd[c]
        mind_var = tot * np.float32(1.0 / NUM_CH) - mn
        mv_mean = mv_ref[img_idx]                     # global scalar from pass 1
        mind_var = jnp.clip(mind_var, mv_mean * 0.001, mv_mean * 1000.0)
        inv_var = 1.0 / mind_var
        return ssd, mn, inv_var

    ssd1, mn1, inv1 = mind_parts(0)
    ssd2, mn2, inv2 = mind_parts(1)

    for c in range(NUM_CH):
        # exp(-(ssd - min) / mind_var), emitted on the fly; MSE accumulated
        # elementwise (single cross-lane reduction at the very end).
        e1 = jnp.exp((mn1 - ssd1[c]) * inv1)
        e2 = jnp.exp((mn2 - ssd2[c]) * inv2)
        d = e1 - e2
        acc_ref[...] = acc_ref[...] + d * d

    @pl.when(s == pl.num_programs(0) - 1)
    def _emit():
        total = jnp.sum(acc_ref[...]) * np.float32(1.0 / (NUM_CH * D * H * W))
        out_ref[...] = jnp.full((8, 128), total, jnp.float32)


# ----------------------------------------------------------------------------- #
# Glue.
# ----------------------------------------------------------------------------- #
def _pick_slab(D, H, W, requested=None):
    if requested is None:
        # Keep the per-slab live set (~50 slab-sized f32 fields across both
        # images + halo scratch) well under v7x's 64 MiB VMEM.
        budget = 6 * 1024 * 1024
        requested = max(1, budget // max(1, 50 * H * W * 4))
    slab = int(max(1, min(int(requested), D)))
    # TODO(synk): ragged last slab via masked accumulation instead of divisor fallback.
    while D % slab:
        slab -= 1
    return slab


def mind_loss(im1, im2, radius=RADIUS, dilation=DILATION, slab=None):
    """Equivalent of MINDLoss()(im1, im2) for b=c=1 3-D volumes."""
    v1 = jnp.squeeze(im1).astype(jnp.float32)         # 'd h w'
    v2 = jnp.squeeze(im2).astype(jnp.float32)
    assert v1.ndim == 3 and v1.shape == v2.shape

    # Lane density: map the largest spatial dim to the lane (last) axis, the
    # second largest to sublanes.  MIND-SSC + MSE is invariant under applying
    # the *same* axis permutation to both inputs (the six-neighbourhood / pair
    # set is permutation-symmetric; pooling, min/mean and MSE are isotropic).
    order = tuple(int(a) for a in np.argsort(np.asarray(v1.shape)))
    v1 = jnp.transpose(v1, order)
    v2 = jnp.transpose(v2, order)
    D, H, W = v1.shape
    r, dil = int(radius), int(dilation)
    td = _pick_slab(D, H, W, slab)
    n_slabs = D // td
    zq = td + 2 * r

    # Only the single-channel inputs get a (cheap) replication pad in HBM (the
    # dilation halo).  The radius halo of the SSC field is handled in-kernel.
    pad = ((dil, dil), (dil, dil), (dil, dil))
    imgs = jnp.stack([jnp.pad(v1, pad, mode="edge"),
                      jnp.pad(v2, pad, mode="edge")], axis=0)
    _, Dp, Hp, Wp = imgs.shape

    scratch = [
        pltpu.VMEM((td, H, W), jnp.float32),            # elementwise accumulator
        pltpu.VMEM((6, zq, H, W), jnp.float32),         # 6 dedup'd shifted slabs
        pltpu.VMEM((td, H + 2 * r, W), jnp.float32),    # y-pass replication pad
        pltpu.VMEM((td, H, W + 2 * r), jnp.float32),    # x-pass replication pad
    ]
    vmem_cap = 48 * 1024 * 1024                         # headroom under v7x's 64 MiB

    # Pass 1: per-image sum of mind_var.
    sums = pl.pallas_call(
        partial(_stats_kernel, D=D, H=H, W=W, radius=r, dilation=dil, slab=td),
        grid=(2, n_slabs),
        in_specs=[pl.BlockSpec((1, Dp, Hp, Wp), lambda i, s: (i, 0, 0, 0))],
        out_specs=pl.BlockSpec((1, 8, 128), lambda i, s: (i, 0, 0)),
        out_shape=jax.ShapeDtypeStruct((2, 8, 128), jnp.float32),
        scratch_shapes=scratch,
        compiler_params=pltpu.CompilerParams(
            dimension_semantics=("parallel", "arbitrary"),
            vmem_limit_bytes=vmem_cap),
    )(imgs)
    mv_means = sums[:, 0, 0] * np.float32(1.0 / (D * H * W))   # (2,) f32

    # Pass 2: fused MIND + MSE, accumulated across slabs.
    loss = pl.pallas_call(
        partial(_loss_kernel, D=D, H=H, W=W, radius=r, dilation=dil, slab=td),
        grid=(n_slabs,),
        in_specs=[pl.BlockSpec(memory_space=pltpu.MemorySpace.SMEM),
                  pl.BlockSpec((2, Dp, Hp, Wp), lambda s: (0, 0, 0, 0))],
        out_specs=pl.BlockSpec((8, 128), lambda s: (0, 0)),
        out_shape=jax.ShapeDtypeStruct((8, 128), jnp.float32),
        scratch_shapes=scratch,
        compiler_params=pltpu.CompilerParams(
            dimension_semantics=("arbitrary",),
            vmem_limit_bytes=vmem_cap),
    )(mv_means, imgs)
    # NOTE: MINDSSC's final fixed channel permutation is applied identically to
    # both images, so it cannot change the MSE -> omitted.
    return loss[0, 0]


# ----------------------------------------------------------------------------- #
# Pure-JAX reference (same math, no Pallas) for the correctness check.
# ----------------------------------------------------------------------------- #
def _mind_ref(vol, radius, dilation):
    D, H, W = vol.shape
    d = dilation
    p = jnp.pad(vol, ((d, d), (d, d), (d, d)), mode="edge")
    chans = []
    for (a, b) in PAIRS:
        z1, y1, x1 = (d * s for s in SIX[a])
        z2, y2, x2 = (d * s for s in SIX[b])
        A = p[z1:z1 + D, y1:y1 + H, x1:x1 + W]
        B = p[z2:z2 + D, y2:y2 + H, x2:x2 + W]
        chans.append((A - B) ** 2)
    dsq = jnp.stack(chans)
    r = radius
    ks = 2 * r + 1
    dp = jnp.pad(dsq, ((0, 0), (r, r), (r, r), (r, r)), mode="edge")
    acc = sum(dp[:, dz:dz + D, dy:dy + H, dx:dx + W]
              for dz in range(ks) for dy in range(ks) for dx in range(ks))
    ssd = acc / (ks ** 3)
    mind = ssd - jnp.min(ssd, axis=0, keepdims=True)
    mv = jnp.mean(mind, axis=0, keepdims=True)
    mvm = jnp.mean(mv)
    mv = jnp.clip(mv, mvm * 0.001, mvm * 1000.0)
    return jnp.exp(-mind / mv)


def mind_loss_ref(im1, im2):
    m1 = _mind_ref(jnp.squeeze(im1).astype(jnp.float32), RADIUS, DILATION)
    m2 = _mind_ref(jnp.squeeze(im2).astype(jnp.float32), RADIUS, DILATION)
    return jnp.mean((m1 - m2) ** 2)


# ----------------------------------------------------------------------------- #
if __name__ == "__main__":
    key = jax.random.PRNGKey(0)
    k1, k2 = jax.random.split(key)
    D, H, W = 24, 16, 12
    # PyTorch-style inputs (b, c, d, h, w) = (1, 1, D, H, W); forward squeezes them.
    im1 = jax.random.uniform(k1, (1, 1, D, H, W), dtype=jnp.float32)
    im2 = jax.random.uniform(k2, (1, 1, D, H, W), dtype=jnp.float32)

    # slab=4 -> 3 D-slabs after the lane-density transpose (D'=12): exercises the
    # gridded, multi-slab path including the clamped halo at both z boundaries.
    loss = jax.block_until_ready(mind_loss(im1, im2, slab=4))
    ref = jax.block_until_ready(mind_loss_ref(im1, im2))

    assert np.isfinite(float(loss))
    np.testing.assert_allclose(float(loss), float(ref), rtol=1e-4, atol=1e-6)
    print("KERNEL_OK")
</pallas_src>

<mosaic_0001>
module attributes {stable_mosaic.version = 11 : i64} {
  func.func @_stats_kernel(%arg0: i32, %arg1: i32, %arg2: memref<1x16x20x28xf32, #tpu.memory_space<vmem>>, %arg3: memref<1x8x128xf32, #tpu.memory_space<vmem>>, %arg4: memref<4x16x24xf32, #tpu.memory_space<vmem>>, %arg5: memref<6x6x16x24xf32, #tpu.memory_space<vmem>>, %arg6: memref<4x18x24xf32, #tpu.memory_space<vmem>>, %arg7: memref<4x16x26xf32, #tpu.memory_space<vmem>>) attributes {dimension_semantics = [#tpu.dimension_semantics<parallel>, #tpu.dimension_semantics<arbitrary>], iteration_bounds = array<i64: 2, 3>, scalar_prefetch = 0 : i64, scratch_operands = 4 : i64, tpu.core_type = #tpu.core_type<tc>, window_params = [{transform_indices = @transform_0, window_bounds = array<i64: 1, 16, 20, 28>}, {transform_indices = @transform_1, window_bounds = array<i64: 1, 8, 128>}]} {
    %c4_i32 = arith.constant 4 : i32
    %0 = arith.muli %arg1, %c4_i32 : i32
    %c0_i32 = arith.constant 0 : i32
    %1 = arith.cmpi eq, %arg1, %c0_i32 : i32
    %2 = arith.extui %1 : i1 to i32
    %c0_i32_0 = arith.constant 0 : i32
    %3 = arith.cmpi ne, %2, %c0_i32_0 : i32
    scf.if %3 {
      %cst_686 = arith.constant 0.000000e+00 : f32
      %731 = vector.broadcast %cst_686 : f32 to vector<4x16x24xf32>
      %c0_687 = arith.constant 0 : index
      %c0_688 = arith.constant 0 : index
      %c0_689 = arith.constant 0 : index
      %732 = vector.load %arg4[%c0_687, %c0_688, %c0_689] : memref<4x16x24xf32, #tpu.memory_space<vmem>>, vector<4x16x24xf32>
      tpu.vector_store %arg4[%c0_687, %c0_688, %c0_689], %731 {strides = array<i32>} : memref<4x16x24xf32, #tpu.memory_space<vmem>>, vector<4x16x24xf32>,
    } else {
    }
    %c1_i32 = arith.constant 1 : i32
    %4 = arith.subi %0, %c1_i32 : i32
    %c0_i32_1 = arith.constant 0 : i32
    %5 = arith.addi %4, %c0_i32_1 : i32
    %c0_i32_2 = arith.constant 0 : i32
    %c11_i32 = arith.constant 11 : i32
    %6 = arith.maxsi %c0_i32_2, %5 : i32
    %7 = arith.minsi %c11_i32, %6 : i32
    %c0_i32_3 = arith.constant 0 : i32
    %8 = arith.addi %7, %c0_i32_3 : i32
    %c0_i32_4 = arith.constant 0 : i32
    %c0_i32_5 = arith.constant 0 : i32
    %c0_i32_6 = arith.constant 0 : i32
    %c0_i32_7 = arith.constant 0 : i32
    %9 = tpu.memref_slice %arg2[%c0_i32_4, %c0_i32_5, %c0_i32_6, %c0_i32_7] : memref<1x16x20x28xf32, #tpu.memory_space<vmem>> -> memref<1x16x20x28xf32, #tpu.memory_space<vmem>>
    %10 = tpu.memref_squeeze %9 : memref<1x16x20x28xf32, #tpu.memory_space<vmem>> -> memref<16x20x28xf32, #tpu.memory_space<vmem>>
    %11 = arith.index_cast %8 : i32 to index
    %c0 = arith.constant 0 : index
    %c0_8 = arith.constant 0 : index
    %12 = vector.load %10[%11, %c0, %c0_8] : memref<16x20x28xf32, #tpu.memory_space<vmem>>, vector<1x20x28xf32>
    %13 = vector.shape_cast %12 : vector<1x20x28xf32> to vector<20x28xf32>
    %c2_i32 = arith.constant 2 : i32
    %14 = arith.addi %7, %c2_i32 : i32
    %c0_i32_9 = arith.constant 0 : i32
    %c0_i32_10 = arith.constant 0 : i32
    %c0_i32_11 = arith.constant 0 : i32
    %c0_i32_12 = arith.constant 0 : i32
    %15 = tpu.memref_slice %arg2[%c0_i32_9, %c0_i32_10, %c0_i32_11, %c0_i32_12] : memref<1x16x20x28xf32, #tpu.memory_space<vmem>> -> memref<1x16x20x28xf32, #tpu.memory_space<vmem>>
    %16 = tpu.memref_squeeze %15 : memref<1x16x20x28xf32, #tpu.memory_space<vmem>> -> memref<16x20x28xf32, #tpu.memory_space<vmem>>
    %17 = arith.index_cast %14 : i32 to index
    %c0_13 = arith.constant 0 : index
    %c0_14 = arith.constant 0 : index
    %18 = vector.load %16[%17, %c0_13, %c0_14] : memref<16x20x28xf32, #tpu.memory_space<vmem>>, vector<1x20x28xf32>
    %19 = vector.shape_cast %18 : vector<1x20x28xf32> to vector<20x28xf32>
    %c4_i32_15 = arith.constant 4 : i32
    %20 = arith.addi %7, %c4_i32_15 : i32
    %c0_i32_16 = arith.constant 0 : i32
    %c0_i32_17 = arith.constant 0 : i32
    %c0_i32_18 = arith.constant 0 : i32
    %c0_i32_19 = arith.constant 0 : i32
    %21 = tpu.memref_slice %arg2[%c0_i32_16, %c0_i32_17, %c0_i32_18, %c0_i32_19] : memref<1x16x20x28xf32, #tpu.memory_space<vmem>> -> memref<1x16x20x28xf32, #tpu.memory_space<vmem>>
    %22 = tpu.memref_squeeze %21 : memref<1x16x20x28xf32, #tpu.memory_space<vmem>> -> memref<16x20x28xf32, #tpu.memory_space<vmem>>
    %23 = arith.index_cast %20 : i32 to index
    %c0_20 = arith.constant 0 : index
    %c0_21 = arith.constant 0 : index
    %24 = vector.load %22[%23, %c0_20, %c0_21] : memref<16x20x28xf32, #tpu.memory_space<vmem>>, vector<1x20x28xf32>
    %25 = vector.shape_cast %24 : vector<1x20x28xf32> to vector<20x28xf32>
    %26 = vector.extract_strided_slice %13 {offsets = [2, 2], sizes = [16, 24], strides = [1, 1]} : vector<20x28xf32> to vector<16x24xf32>
    %c0_22 = arith.constant 0 : index
    %c0_23 = arith.constant 0 : index
    %c0_24 = arith.constant 0 : index
    %c0_25 = arith.constant 0 : index
    %27 = vector.load %arg5[%c0_22, %c0_23, %c0_24, %c0_25] : memref<6x6x16x24xf32, #tpu.memory_space<vmem>>, vector<1x1x16x24xf32>
    %28 = vector.shape_cast %27 : vector<1x1x16x24xf32> to vector<16x24xf32>
    %29 = vector.shape_cast %26 : vector<16x24xf32> to vector<1x1x16x24xf32>
    tpu.vector_store %arg5[%c0_22, %c0_23, %c0_24, %c0_25], %29 {strides = array<i32>} : memref<6x6x16x24xf32, #tpu.memory_space<vmem>>, vector<1x1x16x24xf32>,
    %30 = vector.extract_strided_slice %19 {offsets = [2, 0], sizes = [16, 24], strides = [1, 1]} : vector<20x28xf32> to vector<16x24xf32>
    %c1 = arith.constant 1 : index
    %c0_26 = arith.constant 0 : index
    %c0_27 = arith.constant 0 : index
    %c0_28 = arith.constant 0 : index
    %31 = vector.load %arg5[%c1, %c0_26, %c0_27, %c0_28] : memref<6x6x16x24xf32, #tpu.memory_space<vmem>>, vector<1x1x16x24xf32>
    %32 = vector.shape_cast %31 : vector<1x1x16x24xf32> to vector<16x24xf32>
    %33 = vector.shape_cast %30 : vector<16x24xf32> to vector<1x1x16x24xf32>
    tpu.vector_store %arg5[%c1, %c0_26, %c0_27, %c0_28], %33 {strides = array<i32>} : memref<6x6x16x24xf32, #tpu.memory_space<vmem>>, vector<1x1x16x24xf32>,
    %34 = vector.extract_strided_slice %19 {offsets = [0, 2], sizes = [16, 24], strides = [1, 1]} : vector<20x28xf32> to vector<16x24xf32>
    %c2 = arith.constant 2 : index
    %c0_29 = arith.constant 0 : index
    %c0_30 = arith.constant 0 : index
    %c0_31 = arith.constant 0 : index
    %35 = vector.load %arg5[%c2, %c0_29, %c0_30, %c0_31] : memref<6x6x16x24xf32, #tpu.memory_space<vmem>>, vector<1x1x16x24xf32>
    %36 = vector.shape_cast %35 : vector<1x1x16x24xf32> to vector<16x24xf32>
    %37 = vector.shape_cast %34 : vector<16x24xf32> to vector<1x1x16x24xf32>
    tpu.vector_store %arg5[%c2, %c0_29, %c0_30, %c0_31], %37 {strides = array<i32>} : memref<6x6x16x24xf32, #tpu.memory_space<vmem>>, vector<1x1x16x24xf32>,
    %38 = vector.extract_strided_slice %19 {offsets = [2, 4], sizes = [16, 24], strides = [1, 1]} : vector<20x28xf32> to vector<16x24xf32>
    %c3 = arith.constant 3 : index
    %c0_32 = arith.constant 0 : index
    %c0_33 = arith.constant 0 : index
    %c0_34 = arith.constant 0 : index
    %39 = vector.load %arg5[%c3, %c0_32, %c0_33, %c0_34] : memref<6x6x16x24xf32, #tpu.memory_space<vmem>>, vector<1x1x16x24xf32>
    %40 = vector.shape_cast %39 : vector<1x1x16x24xf32> to vector<16x24xf32>
    %41 = vector.shape_cast %38 : vector<16x24xf32> to vector<1x1x16x24xf32>
    tpu.vector_store %arg5[%c3, %c0_32, %c0_33, %c0_34], %41 {strides = array<i32>} : memref<6x6x16x24xf32, #tpu.memory_space<vmem>>, vector<1x1x16x24xf32>,
    %42 = vector.extract_strided_slice %25 {offsets = [2, 2], sizes = [16, 24], strides = [1, 1]} : vector<20x28xf32> to vector<16x24xf32>
    %c4 = arith.constant 4 : index
    %c0_35 = arith.constant 0 : index
    %c0_36 = arith.constant 0 : index
    %c0_37 = arith.constant 0 : index
    %43 = vector.load %arg5[%c4, %c0_35, %c0_36, %c0_37] : memref<6x6x16x24xf32, #tpu.memory_space<vmem>>, vector<1x1x16x24xf32>
    %44 = vector.shape_cast %43 : vector<1x1x16x24xf32> to vector<16x24xf32>
    %45 = vector.shape_cast %42 : vector<16x24xf32> to vector<1x1x16x24xf32>
    tpu.vector_store %arg5[%c4, %c0_35, %c0_36, %c0_37], %45 {strides = array<i32>} : memref<6x6x16x24xf32, #tpu.memory_space<vmem>>, vector<1x1x16x24xf32>,
    %46 = vector.extract_strided_slice %19 {offsets = [4, 2], sizes = [16, 24], strides = [1, 1]} : vector<20x28xf32> to vector<16x24xf32>
    %c5 = arith.constant 5 : index
    %c0_38 = arith.constant 0 : index
    %c0_39 = arith.constant 0 : index
    %c0_40 = arith.constant 0 : index
    %47 = vector.load %arg5[%c5, %c0_38, %c0_39, %c0_40] : memref<6x6x16x24xf32, #tpu.memory_space<vmem>>, vector<1x1x16x24xf32>
    %48 = vector.shape_cast %47 : vector<1x1x16x24xf32> to vector<16x24xf32>
    %49 = vector.shape_cast %46 : vector<16x24xf32> to vector<1x1x16x24xf32>
    tpu.vector_store %arg5[%c5, %c0_38, %c0_39, %c0_40], %49 {strides = array<i32>} : memref<6x6x16x24xf32, #tpu.memory_space<vmem>>, vector<1x1x16x24xf32>,
    %c1_i32_41 = arith.constant 1 : i32
    %50 = arith.subi %0, %c1_i32_41 : i32
    %c1_i32_42 = arith.constant 1 : i32
    %51 = arith.addi %50, %c1_i32_42 : i32
    %c0_i32_43 = arith.constant 0 : i32
    %c11_i32_44 = arith.constant 11 : i32
    %52 = arith.maxsi %c0_i32_43, %51 : i32
    %53 = arith.minsi %c11_i32_44, %52 : i32
    %c0_i32_45 = arith.constant 0 : i32
    %54 = arith.addi %53, %c0_i32_45 : i32
    %c0_i32_46 = arith.constant 0 : i32
    %c0_i32_47 = arith.constant 0 : i32
    %c0_i32_48 = arith.constant 0 : i32
    %c0_i32_49 = arith.constant 0 : i32
    %55 = tpu.memref_slice %arg2[%c0_i32_46, %c0_i32_47, %c0_i32_48, %c0_i32_49] : memref<1x16x20x28xf32, #tpu.memory_space<vmem>> -> memref<1x16x20x28xf32, #tpu.memory_space<vmem>>
    %56 = tpu.memref_squeeze %55 : memref<1x16x20x28xf32, #tpu.memory_space<vmem>> -> memref<16x20x28xf32, #tpu.memory_space<vmem>>
    %57 = arith.index_cast %54 : i32 to index
    %c0_50 = arith.constant 0 : index
    %c0_51 = arith.constant 0 : index
    %58 = vector.load %56[%57, %c0_50, %c0_51] : memref<16x20x28xf32, #tpu.memory_space<vmem>>, vector<1x20x28xf32>
    %59 = vector.shape_cast %58 : vector<1x20x28xf32> to vector<20x28xf32>
    %c2_i32_52 = arith.constant 2 : i32
    %60 = arith.addi %53, %c2_i32_52 : i32
    %c0_i32_53 = arith.constant 0 : i32
    %c0_i32_54 = arith.constant 0 : i32
    %c0_i32_55 = arith.constant 0 : i32
    %c0_i32_56 = arith.constant 0 : i32
    %61 = tpu.memref_slice %arg2[%c0_i32_53, %c0_i32_54, %c0_i32_55, %c0_i32_56] : memref<1x16x20x28xf32, #tpu.memory_space<vmem>> -> memref<1x16x20x28xf32, #tpu.memory_space<vmem>>
    %62 = tpu.memref_squeeze %61 : memref<1x16x20x28xf32, #tpu.memory_space<vmem>> -> memref<16x20x28xf32, #tpu.memory_space<vmem>>
    %63 = arith.index_cast %60 : i32 to index
    %c0_57 = arith.constant 0 : index
    %c0_58 = arith.constant 0 : index
    %64 = vector.load %62[%63, %c0_57, %c0_58] : memref<16x20x28xf32, #tpu.memory_space<vmem>>, vector<1x20x28xf32>
    %65 = vector.shape_cast %64 : vector<1x20x28xf32> to vector<20x28xf32>
    %c4_i32_59 = arith.constant 4 : i32
    %66 = arith.addi %53, %c4_i32_59 : i32
    %c0_i32_60 = arith.constant 0 : i32
    %c0_i32_61 = arith.constant 0 : i32
    %c0_i32_62 = arith.constant 0 : i32
    %c0_i32_63 = arith.constant 0 : i32
    %67 = tpu.memref_slice %arg2[%c0_i32_60, %c0_i32_61, %c0_i32_62, %c0_i32_63] : memref<1x16x20x28xf32, #tpu.memory_space<vmem>> -> memref<1x16x20x28xf32, #tpu.memory_space<vmem>>
    %68 = tpu.memref_squeeze %67 : memref<1x16x20x28xf32, #tpu.memory_space<vmem>> -> memref<16x20x28xf32, #tpu.memory_space<vmem>>
    %69 = arith.index_cast %66 : i32 to index
    %c0_64 = arith.constant 0 : index
    %c0_65 = arith.constant 0 : index
    %70 = vector.load %68[%69, %c0_64, %c0_65] : memref<16x20x28xf32, #tpu.memory_space<vmem>>, vector<1x20x28xf32>
    %71 = vector.shape_cast %70 : vector<1x20x28xf32> to vector<20x28xf32>
    %72 = vector.extract_strided_slice %59 {offsets = [2, 2], sizes = [16, 24], strides = [1, 1]} : vector<20x28xf32> to vector<16x24xf32>
    %c0_66 = arith.constant 0 : index
    %c1_67 = arith.constant 1 : index
    %c0_68 = arith.constant 0 : index
    %c0_69 = arith.constant 0 : index
    %73 = vector.load %arg5[%c0_66, %c1_67, %c0_68, %c0_69] : memref<6x6x16x24xf32, #tpu.memory_space<vmem>>, vector<1x1x16x24xf32>
    %74 = vector.shape_cast %73 : vector<1x1x16x24xf32> to vector<16x24xf32>
    %75 = vector.shape_cast %72 : vector<16x24xf32> to vector<1x1x16x24xf32>
    tpu.vector_store %arg5[%c0_66, %c1_67, %c0_68, %c0_69], %75 {strides = array<i32>} : memref<6x6x16x24xf32, #tpu.memory_space<vmem>>, vector<1x1x16x24xf32>,
    %76 = vector.extract_strided_slice %65 {offsets = [2, 0], sizes = [16, 24], strides = [1, 1]} : vector<20x28xf32> to vector<16x24xf32>
    %c1_70 = arith.constant 1 : index
    %c1_71 = arith.constant 1 : index
    %c0_72 = arith.constant 0 : index
    %c0_73 = arith.constant 0 : index
    %77 = vector.load %arg5[%c1_70, %c1_71, %c0_72, %c0_73] : memref<6x6x16x24xf32, #tpu.memory_space<vmem>>, vector<1x1x16x24xf32>
    %78 = vector.shape_cast %77 : vector<1x1x16x24xf32> to vector<16x24xf32>
    %79 = vector.shape_cast %76 : vector<16x24xf32> to vector<1x1x16x24xf32>
    tpu.vector_store %arg5[%c1_70, %c1_71, %c0_72, %c0_73], %79 {strides = array<i32>} : memref<6x6x16x24xf32, #tpu.memory_space<vmem>>, vector<1x1x16x24xf32>,
    %80 = vector.extract_strided_slice %65 {offsets = [0, 2], sizes = [16, 24], strides = [1, 1]} : vector<20x28xf32> to vector<16x24xf32>
    %c2_74 = arith.constant 2 : index
    %c1_75 = arith.constant 1 : index
    %c0_76 = arith.constant 0 : index
    %c0_77 = arith.constant 0 : index
    %81 = vector.load %arg5[%c2_74, %c1_75, %c0_76, %c0_77] : memref<6x6x16x24xf32, #tpu.memory_space<vmem>>, vector<1x1x16x24xf32>
    %82 = vector.shape_cast %81 : vector<1x1x16x24xf32> to vector<16x24xf32>
    %83 = vector.shape_cast %80 : vector<16x24xf32> to vector<1x1x16x24xf32>
    tpu.vector_store %arg5[%c2_74, %c1_75, %c0_76, %c0_77], %83 {strides = array<i32>} : memref<6x6x16x24xf32, #tpu.memory_space<vmem>>, vector<1x1x16x24xf32>,
    %84 = vector.extract_strided_slice %65 {offsets = [2, 4], sizes = [16, 24], strides = [1, 1]} : vector<20x28xf32> to vector<16x24xf32>
    %c3_78 = arith.constant 3 : index
    %c1_79 = arith.constant 1 : index
    %c0_80 = arith.constant 0 : index
    %c0_81 = arith.constant 0 : index
    %85 = vector.load %arg5[%c3_78, %c1_79, %c0_80, %c0_81] : memref<6x6x16x24xf32, #tpu.memory_space<vmem>>, vector<1x1x16x24xf32>
    %86 = vector.shape_cast %85 : vector<1x1x16x24xf32> to vector<16x24xf32>
    %87 = vector.shape_cast %84 : vector<16x24xf32> to vector<1x1x16x24xf32>
    tpu.vector_store %arg5[%c3_78, %c1_79, %c0_80, %c0_81], %87 {strides = array<i32>} : memref<6x6x16x24xf32, #tpu.memory_space<vmem>>, vector<1x1x16x24xf32>,
    %88 = vector.extract_strided_slice %71 {offsets = [2, 2], sizes = [16, 24], strides = [1, 1]} : vector<20x28xf32> to vector<16x24xf32>
    %c4_82 = arith.constant 4 : index
    %c1_83 = arith.constant 1 : index
    %c0_84 = arith.constant 0 : index
    %c0_85 = arith.constant 0 : index
    %89 = vector.load %arg5[%c4_82, %c1_83, %c0_84, %c0_85] : memref<6x6x16x24xf32, #tpu.memory_space<vmem>>, vector<1x1x16x24xf32>
    %90 = vector.shape_cast %89 : vector<1x1x16x24xf32> to vector<16x24xf32>
    %91 = vector.shape_cast %88 : vector<16x24xf32> to vector<1x1x16x24xf32>
    tpu.vector_store %arg5[%c4_82, %c1_83, %c0_84, %c0_85], %91 {strides = array<i32>} : memref<6x6x16x24xf32, #tpu.memory_space<vmem>>, vector<1x1x16x24xf32>,
    %92 = vector.extract_strided_slice %65 {offsets = [4, 2], sizes = [16, 24], strides = [1, 1]} : vector<20x28xf32> to vector<16x24xf32>
    %c5_86 = arith.constant 5 : index
    %c1_87 = arith.constant 1 : index
    %c0_88 = arith.constant 0 : index
    %c0_89 = arith.constant 0 : index
    %93 = vector.load %arg5[%c5_86, %c1_87, %c0_88, %c0_89] : memref<6x6x16x24xf32, #tpu.memory_space<vmem>>, vector<1x1x16x24xf32>
    %94 = vector.shape_cast %93 : vector<1x1x16x24xf32> to vector<16x24xf32>
    %95 = vector.shape_cast %92 : vector<16x24xf32> to vector<1x1x16x24xf32>
    tpu.vector_store %arg5[%c5_86, %c1_87, %c0_88, %c0_89], %95 {strides = array<i32>} : memref<6x6x16x24xf32, #tpu.memory_space<vmem>>, vector<1x1x16x24xf32>,
    %c1_i32_90 = arith.constant 1 : i32
    %96 = arith.subi %0, %c1_i32_90 : i32
    %c2_i32_91 = arith.constant 2 : i32
    %97 = arith.addi %96, %c2_i32_91 : i32
    %c0_i32_92 = arith.constant 0 : i32
    %c11_i32_93 = arith.constant 11 : i32
    %98 = arith.maxsi %c0_i32_92, %97 : i32
    %99 = arith.minsi %c11_i32_93, %98 : i32
    %c0_i32_94 = arith.constant 0 : i32
    %100 = arith.addi %99, %c0_i32_94 : i32
    %c0_i32_95 = arith.constant 0 : i32
    %c0_i32_96 = arith.constant 0 : i32
    %c0_i32_97 = arith.constant 0 : i32
    %c0_i32_98 = arith.constant 0 : i32
    %101 = tpu.memref_slice %arg2[%c0_i32_95, %c0_i32_96, %c0_i32_97, %c0_i32_98] : memref<1x16x20x28xf32, #tpu.memory_space<vmem>> -> memref<1x16x20x28xf32, #tpu.memory_space<vmem>>
    %102 = tpu.memref_squeeze %101 : memref<1x16x20x28xf32, #tpu.memory_space<vmem>> -> memref<16x20x28xf32, #tpu.memory_space<vmem>>
    %103 = arith.index_cast %100 : i32 to index
    %c0_99 = arith.constant 0 : index
    %c0_100 = arith.constant 0 : index
    %104 = vector.load %102[%103, %c0_99, %c0_100] : memref<16x20x28xf32, #tpu.memory_space<vmem>>, vector<1x20x28xf32>
    %105 = vector.shape_cast %104 : vector<1x20x28xf32> to vector<20x28xf32>
    %c2_i32_101 = arith.constant 2 : i32
    %106 = arith.addi %99, %c2_i32_101 : i32
    %c0_i32_102 = arith.constant 0 : i32
    %c0_i32_103 = arith.constant 0 : i32
    %c0_i32_104 = arith.constant 0 : i32
    %c0_i32_105 = arith.constant 0 : i32
    %107 = tpu.memref_slice %arg2[%c0_i32_102, %c0_i32_103, %c0_i32_104, %c0_i32_105] : memref<1x16x20x28xf32, #tpu.memory_space<vmem>> -> memref<1x16x20x28xf32, #tpu.memory_space<vmem>>
    %108 = tpu.memref_squeeze %107 : memref<1x16x20x28xf32, #tpu.memory_space<vmem>> -> memref<16x20x28xf32, #tpu.memory_space<vmem>>
    %109 = arith.index_cast %106 : i32 to index
    %c0_106 = arith.constant 0 : index
    %c0_107 = arith.constant 0 : index
    %110 = vector.load %108[%109, %c0_106, %c0_107] : memref<16x20x28xf32, #tpu.memory_space<vmem>>, vector<1x20x28xf32>
    %111 = vector.shape_cast %110 : vector<1x20x28xf32> to vector<20x28xf32>
    %c4_i32_108 = arith.constant 4 : i32
    %112 = arith.addi %99, %c4_i32_108 : i32
    %c0_i32_109 = arith.constant 0 : i32
    %c0_i32_110 = arith.constant 0 : i32
    %c0_i32_111 = arith.constant 0 : i32
    %c0_i32_112 = arith.constant 0 : i32
    %113 = tpu.memref_slice %arg2[%c0_i32_109, %c0_i32_110, %c0_i32_111, %c0_i32_112] : memref<1x16x20x28xf32, #tpu.memory_space<vmem>> -> memref<1x16x20x28xf32, #tpu.memory_space<vmem>>
    %114 = tpu.memref_squeeze %113 : memref<1x16x20x28xf32, #tpu.memory_space<vmem>> -> memref<16x20x28xf32, #tpu.memory_space<vmem>>
    %115 = arith.index_cast %112 : i32 to index
    %c0_113 = arith.constant 0 : index
    %c0_114 = arith.constant 0 : index
    %116 = vector.load %114[%115, %c0_113, %c0_114] : memref<16x20x28xf32, #tpu.memory_space<vmem>>, vector<1x20x28xf32>
    %117 = vector.shape_cast %116 : vector<1x20x28xf32> to vector<20x28xf32>
    %118 = vector.extract_strided_slice %105 {offsets = [2, 2], sizes = [16, 24], strides = [1, 1]} : vector<20x28xf32> to vector<16x24xf32>
    %c0_115 = arith.constant 0 : index
    %c2_116 = arith.constant 2 : index
    %c0_117 = arith.constant 0 : index
    %c0_118 = arith.constant 0 : index
    %119 = vector.load %arg5[%c0_115, %c2_116, %c0_117, %c0_118] : memref<6x6x16x24xf32, #tpu.memory_space<vmem>>, vector<1x1x16x24xf32>
    %120 = vector.shape_cast %119 : vector<1x1x16x24xf32> to vector<16x24xf32>
    %121 = vector.shape_cast %118 : vector<16x24xf32> to vector<1x1x16x24xf32>
    tpu.vector_store %arg5[%c0_115, %c2_116, %c0_117, %c0_118], %121 {strides = array<i32>} : memref<6x6x16x24xf32, #tpu.memory_space<vmem>>, vector<1x1x16x24xf32>,
    %122 = vector.extract_strided_slice %111 {offsets = [2, 0], sizes = [16, 24], strides = [1, 1]} : vector<20x28xf32> to vector<16x24xf32>
    %c1_119 = arith.constant 1 : index
    %c2_120 = arith.constant 2 : index
    %c0_121 = arith.constant 0 : index
    %c0_122 = arith.constant 0 : index
    %123 = vector.load %arg5[%c1_119, %c2_120, %c0_121, %c0_122] : memref<6x6x16x24xf32, #tpu.memory_space<vmem>>, vector<1x1x16x24xf32>
    %124 = vector.shape_cast %123 : vector<1x1x16x24xf32> to vector<16x24xf32>
    %125 = vector.shape_cast %122 : vector<16x24xf32> to vector<1x1x16x24xf32>
    tpu.vector_store %arg5[%c1_119, %c2_120, %c0_121, %c0_122], %125 {strides = array<i32>} : memref<6x6x16x24xf32, #tpu.memory_space<vmem>>, vector<1x1x16x24xf32>,
    %126 = vector.extract_strided_slice %111 {offsets = [0, 2], sizes = [16, 24], strides = [1, 1]} : vector<20x28xf32> to vector<16x24xf32>
    %c2_123 = arith.constant 2 : index
    %c2_124 = arith.constant 2 : index
    %c0_125 = arith.constant 0 : index
    %c0_126 = arith.constant 0 : index
    %127 = vector.load %arg5[%c2_123, %c2_124, %c0_125, %c0_126] : memref<6x6x16x24xf32, #tpu.memory_space<vmem>>, vector<1x1x16x24xf32>
    %128 = vector.shape_cast %127 : vector<1x1x16x24xf32> to vector<16x24xf32>
    %129 = vector.shape_cast %126 : vector<16x24xf32> to vector<1x1x16x24xf32>
    tpu.vector_store %arg5[%c2_123, %c2_124, %c0_125, %c0_126], %129 {strides = array<i32>} : memref<6x6x16x24xf32, #tpu.memory_space<vmem>>, vector<1x1x16x24xf32>,
    %130 = vector.extract_strided_slice %111 {offsets = [2, 4], sizes = [16, 24], strides = [1, 1]} : vector<20x28xf32> to vector<16x24xf32>
    %c3_127 = arith.constant 3 : index
    %c2_128 = arith.constant 2 : index
    %c0_129 = arith.constant 0 : index
    %c0_130 = arith.constant 0 : index
    %131 = vector.load %arg5[%c3_127, %c2_128, %c0_129, %c0_130] : memref<6x6x16x24xf32, #tpu.memory_space<vmem>>, vector<1x1x16x24xf32>
    %132 = vector.shape_cast %131 : vector<1x1x16x24xf32> to vector<16x24xf32>
    %133 = vector.shape_cast %130 : vector<16x24xf32> to vector<1x1x16x24xf32>
    tpu.vector_store %arg5[%c3_127, %c2_128, %c0_129, %c0_130], %133 {strides = array<i32>} : memref<6x6x16x24xf32, #tpu.memory_space<vmem>>, vector<1x1x16x24xf32>,
    %134 = vector.extract_strided_slice %117 {offsets = [2, 2], sizes = [16, 24], strides = [1, 1]} : vector<20x28xf32> to vector<16x24xf32>
    %c4_131 = arith.constant 4 : index
    %c2_132 = arith.constant 2 : index
    %c0_133 = arith.constant 0 : index
    %c0_134 = arith.constant 0 : index
    %135 = vector.load %arg5[%c4_131, %c2_132, %c0_133, %c0_134] : memref<6x6x16x24xf32, #tpu.memory_space<vmem>>, vector<1x1x16x24xf32>
    %136 = vector.shape_cast %135 : vector<1x1x16x24xf32> to vector<16x24xf32>
    %137 = vector.shape_cast %134 : vector<16x24xf32> to vector<1x1x16x24xf32>
    tpu.vector_store %arg5[%c4_131, %c2_132, %c0_133, %c0_134], %137 {strides = array<i32>} : memref<6x6x16x24xf32, #tpu.memory_space<vmem>>, vector<1x1x16x24xf32>,
    %138 = vector.extract_strided_slice %111 {offsets = [4, 2], sizes = [16, 24], strides = [1, 1]} : vector<20x28xf32> to vector<16x24xf32>
    %c5_135 = arith.constant 5 : index
    %c2_136 = arith.constant 2 : index
    %c0_137 = arith.constant 0 : index
    %c0_138 = arith.constant 0 : index
    %139 = vector.load %arg5[%c5_135, %c2_136, %c0_137, %c0_138] : memref<6x6x16x24xf32, #tpu.memory_space<vmem>>, vector<1x1x16x24xf32>
    %140 = vector.shape_cast %139 : vector<1x1x16x24xf32> to vector<16x24xf32>
    %141 = vector.shape_cast %138 : vector<16x24xf32> to vector<1x1x16x24xf32>
    tpu.vector_store %arg5[%c5_135, %c2_136, %c0_137, %c0_138], %141 {strides = array<i32>} : memref<6x6x16x24xf32, #tpu.memory_space<vmem>>, vector<1x1x16x24xf32>,
    %c1_i32_139 = arith.constant 1 : i32
    %142 = arith.subi %0, %c1_i32_139 : i32
    %c3_i32 = arith.constant 3 : i32
    %143 = arith.addi %142, %c3_i32 : i32
    %c0_i32_140 = arith.constant 0 : i32
    %c11_i32_141 = arith.constant 11 : i32
    %144 = arith.maxsi %c0_i32_140, %143 : i32
    %145 = arith.minsi %c11_i32_141, %144 : i32
    %c0_i32_142 = arith.constant 0 : i32
    %146 = arith.addi %145, %c0_i32_142 : i32
    %c0_i32_143 = arith.constant 0 : i32
    %c0_i32_144 = arith.constant 0 : i32
    %c0_i32_145 = arith.constant 0 : i32
    %c0_i32_146 = arith.constant 0 : i32
    %147 = tpu.memref_slice %arg2[%c0_i32_143, %c0_i32_144, %c0_i32_145, %c0_i32_146] : memref<1x16x20x28xf32, #tpu.memory_space<vmem>> -> memref<1x16x20x28xf32, #tpu.memory_space<vmem>>
    %148 = tpu.memref_squeeze %147 : memref<1x16x20x28xf32, #tpu.memory_space<vmem>> -> memref<16x20x28xf32, #tpu.memory_space<vmem>>
    %149 = arith.index_cast %146 : i32 to index
    %c0_147 = arith.constant 0 : index
    %c0_148 = arith.constant 0 : index
    %150 = vector.load %148[%149, %c0_147, %c0_148] : memref<16x20x28xf32, #tpu.memory_space<vmem>>, vector<1x20x28xf32>
    %151 = vector.shape_cast %150 : vector<1x20x28xf32> to vector<20x28xf32>
    %c2_i32_149 = arith.constant 2 : i32
    %152 = arith.addi %145, %c2_i32_149 : i32
    %c0_i32_150 = arith.constant 0 : i32
    %c0_i32_151 = arith.constant 0 : i32
    %c0_i32_152 = arith.constant 0 : i32
    %c0_i32_153 = arith.constant 0 : i32
    %153 = tpu.memref_slice %arg2[%c0_i32_150, %c0_i32_151, %c0_i32_152, %c0_i32_153] : memref<1x16x20x28xf32, #tpu.memory_space<vmem>> -> memref<1x16x20x28xf32, #tpu.memory_space<vmem>>
    %154 = tpu.memref_squeeze %153 : memref<1x16x20x28xf32, #tpu.memory_space<vmem>> -> memref<16x20x28xf32, #tpu.memory_space<vmem>>
    %155 = arith.index_cast %152 : i32 to index
    %c0_154 = arith.constant 0 : index
    %c0_155 = arith.constant 0 : index
    %156 = vector.load %154[%155, %c0_154, %c0_155] : memref<16x20x28xf32, #tpu.memory_space<vmem>>, vector<1x20x28xf32>
    %157 = vector.shape_cast %156 : vector<1x20x28xf32> to vector<20x28xf32>
    %c4_i32_156 = arith.constant 4 : i32
    %158 = arith.addi %145, %c4_i32_156 : i32
    %c0_i32_157 = arith.constant 0 : i32
    %c0_i32_158 = arith.constant 0 : i32
    %c0_i32_159 = arith.constant 0 : i32
    %c0_i32_160 = arith.constant 0 : i32
    %159 = tpu.memref_slice %arg2[%c0_i32_157, %c0_i32_158, %c0_i32_159, %c0_i32_160] : memref<1x16x20x28xf32, #tpu.memory_space<vmem>> -> memref<1x16x20x28xf32, #tpu.memory_space<vmem>>
    %160 = tpu.memref_squeeze %159 : memref<1x16x20x28xf32, #tpu.memory_space<vmem>> -> memref<16x20x28xf32, #tpu.memory_space<vmem>>
    %161 = arith.index_cast %158 : i32 to index
    %c0_161 = arith.constant 0 : index
    %c0_162 = arith.constant 0 : index
    %162 = vector.load %160[%161, %c0_161, %c0_162] : memref<16x20x28xf32, #tpu.memory_space<vmem>>, vector<1x20x28xf32>
    %163 = vector.shape_cast %162 : vector<1x20x28xf32> to vector<20x28xf32>
    %164 = vector.extract_strided_slice %151 {offsets = [2, 2], sizes = [16, 24], strides = [1, 1]} : vector<20x28xf32> to vector<16x24xf32>
    %c0_163 = arith.constant 0 : index
    %c3_164 = arith.constant 3 : index
    %c0_165 = arith.constant 0 : index
    %c0_166 = arith.constant 0 : index
    %165 = vector.load %arg5[%c0_163, %c3_164, %c0_165, %c0_166] : memref<6x6x16x24xf32, #tpu.memory_space<vmem>>, vector<1x1x16x24xf32>
    %166 = vector.shape_cast %165 : vector<1x1x16x24xf32> to vector<16x24xf32>
    %167 = vector.shape_cast %164 : vector<16x24xf32> to vector<1x1x16x24xf32>
    tpu.vector_store %arg5[%c0_163, %c3_164, %c0_165, %c0_166], %167 {strides = array<i32>} : memref<6x6x16x24xf32, #tpu.memory_space<vmem>>, vector<1x1x16x24xf32>,
    %168 = vector.extract_strided_slice %157 {offsets = [2, 0], sizes = [16, 24], strides = [1, 1]} : vector<20x28xf32> to vector<16x24xf32>
    %c1_167 = arith.constant 1 : index
    %c3_168 = arith.constant 3 : index
    %c0_169 = arith.constant 0 : index
    %c0_170 = arith.constant 0 : index
    %169 = vector.load %arg5[%c1_167, %c3_168, %c0_169, %c0_170] : memref<6x6x16x24xf32, #tpu.memory_space<vmem>>, vector<1x1x16x24xf32>
    %170 = vector.shape_cast %169 : vector<1x1x16x24xf32> to vector<16x24xf32>
    %171 = vector.shape_cast %168 : vector<16x24xf32> to vector<1x1x16x24xf32>
    tpu.vector_store %arg5[%c1_167, %c3_168, %c0_169, %c0_170], %171 {strides = array<i32>} : memref<6x6x16x24xf32, #tpu.memory_space<vmem>>, vector<1x1x16x24xf32>,
    %172 = vector.extract_strided_slice %157 {offsets = [0, 2], sizes = [16, 24], strides = [1, 1]} : vector<20x28xf32> to vector<16x24xf32>
    %c2_171 = arith.constant 2 : index
    %c3_172 = arith.constant 3 : index
    %c0_173 = arith.constant 0 : index
    %c0_174 = arith.constant 0 : index
    %173 = vector.load %arg5[%c2_171, %c3_172, %c0_173, %c0_174] : memref<6x6x16x24xf32, #tpu.memory_space<vmem>>, vector<1x1x16x24xf32>
    %174 = vector.shape_cast %173 : vector<1x1x16x24xf32> to vector<16x24xf32>
    %175 = vector.shape_cast %172 : vector<16x24xf32> to vector<1x1x16x24xf32>
    tpu.vector_store %arg5[%c2_171, %c3_172, %c0_173, %c0_174], %175 {strides = array<i32>} : memref<6x6x16x24xf32, #tpu.memory_space<vmem>>, vector<1x1x16x24xf32>,
    %176 = vector.extract_strided_slice %157 {offsets = [2, 4], sizes = [16, 24], strides = [1, 1]} : vector<20x28xf32> to vector<16x24xf32>
    %c3_175 = arith.constant 3 : index
    %c3_176 = arith.constant 3 : index
    %c0_177 = arith.constant 0 : index
    %c0_178 = arith.constant 0 : index
    %177 = vector.load %arg5[%c3_175, %c3_176, %c0_177, %c0_178] : memref<6x6x16x24xf32, #tpu.memory_space<vmem>>, vector<1x1x16x24xf32>
    %178 = vector.shape_cast %177 : vector<1x1x16x24xf32> to vector<16x24xf32>
    %179 = vector.shape_cast %176 : vector<16x24xf32> to vector<1x1x16x24xf32>
    tpu.vector_store %arg5[%c3_175, %c3_176, %c0_177, %c0_178], %179 {strides = array<i32>} : memref<6x6x16x24xf32, #tpu.memory_space<vmem>>, vector<1x1x16x24xf32>,
    %180 = vector.extract_strided_slice %163 {offsets = [2, 2], sizes = [16, 24], strides = [1, 1]} : vector<20x28xf32> to vector<16x24xf32>
    %c4_179 = arith.constant 4 : index
    %c3_180 = arith.constant 3 : index
    %c0_181 = arith.constant 0 : index
    %c0_182 = arith.constant 0 : index
    %181 = vector.load %arg5[%c4_179, %c3_180, %c0_181, %c0_182] : memref<6x6x16x24xf32, #tpu.memory_space<vmem>>, vector<1x1x16x24xf32>
    %182 = vector.shape_cast %181 : vector<1x1x16x24xf32> to vector<16x24xf32>
    %183 = vector.shape_cast %180 : vector<16x24xf32> to vector<1x1x16x24xf32>
    tpu.vector_store %arg5[%c4_179, %c3_180, %c0_181, %c0_182], %183 {strides = array<i32>} : memref<6x6x16x24xf32, #tpu.memory_space<vmem>>, vector<1x1x16x24xf32>,
    %184 = vector.extract_strided_slice %157 {offsets = [4, 2], sizes = [16, 24], strides = [1, 1]} : vector<20x28xf32> to vector<16x24xf32>
    %c5_183 = arith.constant 5 : index
    %c3_184 = arith.constant 3 : index
    %c0_185 = arith.constant 0 : index
    %c0_186 = arith.constant 0 : index
    %185 = vector.load %arg5[%c5_183, %c3_184, %c0_185, %c0_186] : memref<6x6x16x24xf32, #tpu.memory_space<vmem>>, vector<1x1x16x24xf32>
    %186 = vector.shape_cast %185 : vector<1x1x16x24xf32> to vector<16x24xf32>
    %187 = vector.shape_cast %184 : vector<16x24xf32> to vector<1x1x16x24xf32>
    tpu.vector_store %arg5[%c5_183, %c3_184, %c0_185, %c0_186], %187 {strides = array<i32>} : memref<6x6x16x24xf32, #tpu.memory_space<vmem>>, vector<1x1x16x24xf32>,
    %c1_i32_187 = arith.constant 1 : i32
    %188 = arith.subi %0, %c1_i32_187 : i32
    %c4_i32_188 = arith.constant 4 : i32
    %189 = arith.addi %188, %c4_i32_188 : i32
    %c0_i32_189 = arith.constant 0 : i32
    %c11_i32_190 = arith.constant 11 : i32
    %190 = arith.maxsi %c0_i32_189, %189 : i32
    %191 = arith.minsi %c11_i32_190, %190 : i32
    %c0_i32_191 = arith.constant 0 : i32
    %192 = arith.addi %191, %c0_i32_191 : i32
    %c0_i32_192 = arith.constant 0 : i32
    %c0_i32_193 = arith.constant 0 : i32
    %c0_i32_194 = arith.constant 0 : i32
    %c0_i32_195 = arith.constant 0 : i32
    %193 = tpu.memref_slice %arg2[%c0_i32_192, %c0_i32_193, %c0_i32_194, %c0_i32_195] : memref<1x16x20x28xf32, #tpu.memory_space<vmem>> -> memref<1x16x20x28xf32, #tpu.memory_space<vmem>>
    %194 = tpu.memref_squeeze %193 : memref<1x16x20x28xf32, #tpu.memory_space<vmem>> -> memref<16x20x28xf32, #tpu.memory_space<vmem>>
    %195 = arith.index_cast %192 : i32 to index
    %c0_196 = arith.constant 0 : index
    %c0_197 = arith.constant 0 : index
    %196 = vector.load %194[%195, %c0_196, %c0_197] : memref<16x20x28xf32, #tpu.memory_space<vmem>>, vector<1x20x28xf32>
    %197 = vector.shape_cast %196 : vector<1x20x28xf32> to vector<20x28xf32>
    %c2_i32_198 = arith.constant 2 : i32
    %198 = arith.addi %191, %c2_i32_198 : i32
    %c0_i32_199 = arith.constant 0 : i32
    %c0_i32_200 = arith.constant 0 : i32
    %c0_i32_201 = arith.constant 0 : i32
    %c0_i32_202 = arith.constant 0 : i32
    %199 = tpu.memref_slice %arg2[%c0_i32_199, %c0_i32_200, %c0_i32_201, %c0_i32_202] : memref<1x16x20x28xf32, #tpu.memory_space<vmem>> -> memref<1x16x20x28xf32, #tpu.memory_space<vmem>>
    %200 = tpu.memref_squeeze %199 : memref<1x16x20x28xf32, #tpu.memory_space<vmem>> -> memref<16x20x28xf32, #tpu.memory_space<vmem>>
    %201 = arith.index_cast %198 : i32 to index
    %c0_203 = arith.constant 0 : index
    %c0_204 = arith.constant 0 : index
    %202 = vector.load %200[%201, %c0_203, %c0_204] : memref<16x20x28xf32, #tpu.memory_space<vmem>>, vector<1x20x28xf32>
    %203 = vector.shape_cast %202 : vector<1x20x28xf32> to vector<20x28xf32>
    %c4_i32_205 = arith.constant 4 : i32
    %204 = arith.addi %191, %c4_i32_205 : i32
    %c0_i32_206 = arith.constant 0 : i32
    %c0_i32_207 = arith.constant 0 : i32
    %c0_i32_208 = arith.constant 0 : i32
    %c0_i32_209 = arith.constant 0 : i32
    %205 = tpu.memref_slice %arg2[%c0_i32_206, %c0_i32_207, %c0_i32_208, %c0_i32_209] : memref<1x16x20x28xf32, #tpu.memory_space<vmem>> -> memref<1x16x20x28xf32, #tpu.memory_space<vmem>>
    %206 = tpu.memref_squeeze %205 : memref<1x16x20x28xf32, #tpu.memory_space<vmem>> -> memref<16x20x28xf32, #tpu.memory_space<vmem>>
    %207 = arith.index_cast %204 : i32 to index
    %c0_210 = arith.constant 0 : index
    %c0_211 = arith.constant 0 : index
    %208 = vector.load %206[%207, %c0_210, %c0_211] : memref<16x20x28xf32, #tpu.memory_space<vmem>>, vector<1x20x28xf32>
    %209 = vector.shape_cast %208 : vector<1x20x28xf32> to vector<20x28xf32>
    %210 = vector.extract_strided_slice %197 {offsets = [2, 2], sizes = [16, 24], strides = [1, 1]} : vector<20x28xf32> to vector<16x24xf32>
    %c0_212 = arith.constant 0 : index
    %c4_213 = arith.constant 4 : index
    %c0_214 = arith.constant 0 : index
    %c0_215 = arith.constant 0 : index
    %211 = vector.load %arg5[%c0_212, %c4_213, %c0_214, %c0_215] : memref<6x6x16x24xf32, #tpu.memory_space<vmem>>, vector<1x1x16x24xf32>
    %212 = vector.shape_cast %211 : vector<1x1x16x24xf32> to vector<16x24xf32>
    %213 = vector.shape_cast %210 : vector<16x24xf32> to vector<1x1x16x24xf32>
    tpu.vector_store %arg5[%c0_212, %c4_213, %c0_214, %c0_215], %213 {strides = array<i32>} : memref<6x6x16x24xf32, #tpu.memory_space<vmem>>, vector<1x1x16x24xf32>,
    %214 = vector.extract_strided_slice %203 {offsets = [2, 0], sizes = [16, 24], strides = [1, 1]} : vector<20x28xf32> to vector<16x24xf32>
    %c1_216 = arith.constant 1 : index
    %c4_217 = arith.constant 4 : index
    %c0_218 = arith.constant 0 : index
    %c0_219 = arith.constant 0 : index
    %215 = vector.load %arg5[%c1_216, %c4_217, %c0_218, %c0_219] : memref<6x6x16x24xf32, #tpu.memory_space<vmem>>, vector<1x1x16x24xf32>
    %216 = vector.shape_cast %215 : vector<1x1x16x24xf32> to vector<16x24xf32>
    %217 = vector.shape_cast %214 : vector<16x24xf32> to vector<1x1x16x24xf32>
    tpu.vector_store %arg5[%c1_216, %c4_217, %c0_218, %c0_219], %217 {strides = array<i32>} : memref<6x6x16x24xf32, #tpu.memory_space<vmem>>, vector<1x1x16x24xf32>,
    %218 = vector.extract_strided_slice %203 {offsets = [0, 2], sizes = [16, 24], strides = [1, 1]} : vector<20x28xf32> to vector<16x24xf32>
    %c2_220 = arith.constant 2 : index
    %c4_221 = arith.constant 4 : index
    %c0_222 = arith.constant 0 : index
    %c0_223 = arith.constant 0 : index
    %219 = vector.load %arg5[%c2_220, %c4_221, %c0_222, %c0_223] : memref<6x6x16x24xf32, #tpu.memory_space<vmem>>, vector<1x1x16x24xf32>
    %220 = vector.shape_cast %219 : vector<1x1x16x24xf32> to vector<16x24xf32>
    %221 = vector.shape_cast %218 : vector<16x24xf32> to vector<1x1x16x24xf32>
    tpu.vector_store %arg5[%c2_220, %c4_221, %c0_222, %c0_223], %221 {strides = array<i32>} : memref<6x6x16x24xf32, #tpu.memory_space<vmem>>, vector<1x1x16x24xf32>,
    %222 = vector.extract_strided_slice %203 {offsets = [2, 4], sizes = [16, 24], strides = [1, 1]} : vector<20x28xf32> to vector<16x24xf32>
    %c3_224 = arith.constant 3 : index
    %c4_225 = arith.constant 4 : index
    %c0_226 = arith.constant 0 : index
    %c0_227 = arith.constant 0 : index
    %223 = vector.load %arg5[%c3_224, %c4_225, %c0_226, %c0_227] : memref<6x6x16x24xf32, #tpu.memory_space<vmem>>, vector<1x1x16x24xf32>
    %224 = vector.shape_cast %223 : vector<1x1x16x24xf32> to vector<16x24xf32>
    %225 = vector.shape_cast %222 : vector<16x24xf32> to vector<1x1x16x24xf32>
    tpu.vector_store %arg5[%c3_224, %c4_225, %c0_226, %c0_227], %225 {strides = array<i32>} : memref<6x6x16x24xf32, #tpu.memory_space<vmem>>, vector<1x1x16x24xf32>,
    %226 = vector.extract_strided_slice %209 {offsets = [2, 2], sizes = [16, 24], strides = [1, 1]} : vector<20x28xf32> to vector<16x24xf32>
    %c4_228 = arith.constant 4 : index
    %c4_229 = arith.constant 4 : index
    %c0_230 = arith.constant 0 : index
    %c0_231 = arith.constant 0 : index
    %227 = vector.load %arg5[%c4_228, %c4_229, %c0_230, %c0_231] : memref<6x6x16x24xf32, #tpu.memory_space<vmem>>, vector<1x1x16x24xf32>
    %228 = vector.shape_cast %227 : vector<1x1x16x24xf32> to vector<16x24xf32>
    %229 = vector.shape_cast %226 : vector<16x24xf32> to vector<1x1x16x24xf32>
    tpu.vector_store %arg5[%c4_228, %c4_229, %c0_230, %c0_231], %229 {strides = array<i32>} : memref<6x6x16x24xf32, #tpu.memory_space<vmem>>, vector<1x1x16x24xf32>,
    %230 = vector.extract_strided_slice %203 {offsets = [4, 2], sizes = [16, 24], strides = [1, 1]} : vector<20x28xf32> to vector<16x24xf32>
    %c5_232 = arith.constant 5 : index
    %c4_233 = arith.constant 4 : index
    %c0_234 = arith.constant 0 : index
    %c0_235 = arith.constant 0 : index
    %231 = vector.load %arg5[%c5_232, %c4_233, %c0_234, %c0_235] : memref<6x6x16x24xf32, #tpu.memory_space<vmem>>, vector<1x1x16x24xf32>
    %232 = vector.shape_cast %231 : vector<1x1x16x24xf32> to vector<16x24xf32>
    %233 = vector.shape_cast %230 : vector<16x24xf32> to vector<1x1x16x24xf32>
    tpu.vector_store %arg5[%c5_232, %c4_233, %c0_234, %c0_235], %233 {strides = array<i32>} : memref<6x6x16x24xf32, #tpu.memory_space<vmem>>, vector<1x1x16x24xf32>,
    %c1_i32_236 = arith.constant 1 : i32
    %234 = arith.subi %0, %c1_i32_236 : i32
    %c5_i32 = arith.constant 5 : i32
    %235 = arith.addi %234, %c5_i32 : i32
    %c0_i32_237 = arith.constant 0 : i32
    %c11_i32_238 = arith.constant 11 : i32
    %236 = arith.maxsi %c0_i32_237, %235 : i32
    %237 = arith.minsi %c11_i32_238, %236 : i32
    %c0_i32_239 = arith.constant 0 : i32
    %238 = arith.addi %237, %c0_i32_239 : i32
    %c0_i32_240 = arith.constant 0 : i32
    %c0_i32_241 = arith.constant 0 : i32
    %c0_i32_242 = arith.constant 0 : i32
    %c0_i32_243 = arith.constant 0 : i32
    %239 = tpu.memref_slice %arg2[%c0_i32_240, %c0_i32_241, %c0_i32_242, %c0_i32_243] : memref<1x16x20x28xf32, #tpu.memory_space<vmem>> -> memref<1x16x20x28xf32, #tpu.memory_space<vmem>>
    %240 = tpu.memref_squeeze %239 : memref<1x16x20x28xf32, #tpu.memory_space<vmem>> -> memref<16x20x28xf32, #tpu.memory_space<vmem>>
    %241 = arith.index_cast %238 : i32 to index
    %c0_244 = arith.constant 0 : index
    %c0_245 = arith.constant 0 : index
    %242 = vector.load %240[%241, %c0_244, %c0_245] : memref<16x20x28xf32, #tpu.memory_space<vmem>>, vector<1x20x28xf32>
    %243 = vector.shape_cast %242 : vector<1x20x28xf32> to vector<20x28xf32>
    %c2_i32_246 = arith.constant 2 : i32
    %244 = arith.addi %237, %c2_i32_246 : i32
    %c0_i32_247 = arith.constant 0 : i32
    %c0_i32_248 = arith.constant 0 : i32
    %c0_i32_249 = arith.constant 0 : i32
    %c0_i32_250 = arith.constant 0 : i32
    %245 = tpu.memref_slice %arg2[%c0_i32_247, %c0_i32_248, %c0_i32_249, %c0_i32_250] : memref<1x16x20x28xf32, #tpu.memory_space<vmem>> -> memref<1x16x20x28xf32, #tpu.memory_space<vmem>>
    %246 = tpu.memref_squeeze %245 : memref<1x16x20x28xf32, #tpu.memory_space<vmem>> -> memref<16x20x28xf32, #tpu.memory_space<vmem>>
    %247 = arith.index_cast %244 : i32 to index
    %c0_251 = arith.constant 0 : index
    %c0_252 = arith.constant 0 : index
    %248 = vector.load %246[%247, %c0_251, %c0_252] : memref<16x20x28xf32, #tpu.memory_space<vmem>>, vector<1x20x28xf32>
    %249 = vector.shape_cast %248 : vector<1x20x28xf32> to vector<20x28xf32>
    %c4_i32_253 = arith.constant 4 : i32
    %250 = arith.addi %237, %c4_i32_253 : i32
    %c0_i32_254 = arith.constant 0 : i32
    %c0_i32_255 = arith.constant 0 : i32
    %c0_i32_256 = arith.constant 0 : i32
    %c0_i32_257 = arith.constant 0 : i32
    %251 = tpu.memref_slice %arg2[%c0_i32_254, %c0_i32_255, %c0_i32_256, %c0_i32_257] : memref<1x16x20x28xf32, #tpu.memory_space<vmem>> -> memref<1x16x20x28xf32, #tpu.memory_space<vmem>>
    %252 = tpu.memref_squeeze %251 : memref<1x16x20x28xf32, #tpu.memory_space<vmem>> -> memref<16x20x28xf32, #tpu.memory_space<vmem>>
    %253 = arith.index_cast %250 : i32 to index
    %c0_258 = arith.constant 0 : index
    %c0_259 = arith.constant 0 : index
    %254 = vector.load %252[%253, %c0_258, %c0_259] : memref<16x20x28xf32, #tpu.memory_space<vmem>>, vector<1x20x28xf32>
    %255 = vector.shape_cast %254 : vector<1x20x28xf32> to vector<20x28xf32>
    %256 = vector.extract_strided_slice %243 {offsets = [2, 2], sizes = [16, 24], strides = [1, 1]} : vector<20x28xf32> to vector<16x24xf32>
    %c0_260 = arith.constant 0 : index
    %c5_261 = arith.constant 5 : index
    %c0_262 = arith.constant 0 : index
    %c0_263 = arith.constant 0 : index
    %257 = vector.load %arg5[%c0_260, %c5_261, %c0_262, %c0_263] : memref<6x6x16x24xf32, #tpu.memory_space<vmem>>, vector<1x1x16x24xf32>
    %258 = vector.shape_cast %257 : vector<1x1x16x24xf32> to vector<16x24xf32>
    %259 = vector.shape_cast %256 : vector<16x24xf32> to vector<1x1x16x24xf32>
    tpu.vector_store %arg5[%c0_260, %c5_261, %c0_262, %c0_263], %259 {strides = array<i32>} : memref<6x6x16x24xf32, #tpu.memory_space<vmem>>, vector<1x1x16x24xf32>,
    %260 = vector.extract_strided_slice %249 {offsets = [2, 0], sizes = [16, 24], strides = [1, 1]} : vector<20x28xf32> to vector<16x24xf32>
    %c1_264 = arith.constant 1 : index
    %c5_265 = arith.constant 5 : index
    %c0_266 = arith.constant 0 : index
    %c0_267 = arith.constant 0 : index
    %261 = vector.load %arg5[%c1_264, %c5_265, %c0_266, %c0_267] : memref<6x6x16x24xf32, #tpu.memory_space<vmem>>, vector<1x1x16x24xf32>
    %262 = vector.shape_cast %261 : vector<1x1x16x24xf32> to vector<16x24xf32>
    %263 = vector.shape_cast %260 : vector<16x24xf32> to vector<1x1x16x24xf32>
    tpu.vector_store %arg5[%c1_264, %c5_265, %c0_266, %c0_267], %263 {strides = array<i32>} : memref<6x6x16x24xf32, #tpu.memory_space<vmem>>, vector<1x1x16x24xf32>,
    %264 = vector.extract_strided_slice %249 {offsets = [0, 2], sizes = [16, 24], strides = [1, 1]} : vector<20x28xf32> to vector<16x24xf32>
    %c2_268 = arith.constant 2 : index
    %c5_269 = arith.constant 5 : index
    %c0_270 = arith.constant 0 : index
    %c0_271 = arith.constant 0 : index
    %265 = vector.load %arg5[%c2_268, %c5_269, %c0_270, %c0_271] : memref<6x6x16x24xf32, #tpu.memory_space<vmem>>, vector<1x1x16x24xf32>
    %266 = vector.shape_cast %265 : vector<1x1x16x24xf32> to vector<16x24xf32>
    %267 = vector.shape_cast %264 : vector<16x24xf32> to vector<1x1x16x24xf32>
    tpu.vector_store %arg5[%c2_268, %c5_269, %c0_270, %c0_271], %267 {strides = array<i32>} : memref<6x6x16x24xf32, #tpu.memory_space<vmem>>, vector<1x1x16x24xf32>,
    %268 = vector.extract_strided_slice %249 {offsets = [2, 4], sizes = [16, 24], strides = [1, 1]} : vector<20x28xf32> to vector<16x24xf32>
    %c3_272 = arith.constant 3 : index
    %c5_273 = arith.constant 5 : index
    %c0_274 = arith.constant 0 : index
    %c0_275 = arith.constant 0 : index
    %269 = vector.load %arg5[%c3_272, %c5_273, %c0_274, %c0_275] : memref<6x6x16x24xf32, #tpu.memory_space<vmem>>, vector<1x1x16x24xf32>
    %270 = vector.shape_cast %269 : vector<1x1x16x24xf32> to vector<16x24xf32>
    %271 = vector.shape_cast %268 : vector<16x24xf32> to vector<1x1x16x24xf32>
    tpu.vector_store %arg5[%c3_272, %c5_273, %c0_274, %c0_275], %271 {strides = array<i32>} : memref<6x6x16x24xf32, #tpu.memory_space<vmem>>, vector<1x1x16x24xf32>,
    %272 = vector.extract_strided_slice %255 {offsets = [2, 2], sizes = [16, 24], strides = [1, 1]} : vector<20x28xf32> to vector<16x24xf32>
    %c4_276 = arith.constant 4 : index
    %c5_277 = arith.constant 5 : index
    %c0_278 = arith.constant 0 : index
    %c0_279 = arith.constant 0 : index
    %273 = vector.load %arg5[%c4_276, %c5_277, %c0_278, %c0_279] : memref<6x6x16x24xf32, #tpu.memory_space<vmem>>, vector<1x1x16x24xf32>
    %274 = vector.shape_cast %273 : vector<1x1x16x24xf32> to vector<16x24xf32>
    %275 = vector.shape_cast %272 : vector<16x24xf32> to vector<1x1x16x24xf32>
    tpu.vector_store %arg5[%c4_276, %c5_277, %c0_278, %c0_279], %275 {strides = array<i32>} : memref<6x6x16x24xf32, #tpu.memory_space<vmem>>, vector<1x1x16x24xf32>,
    %276 = vector.extract_strided_slice %249 {offsets = [4, 2], sizes = [16, 24], strides = [1, 1]} : vector<20x28xf32> to vector<16x24xf32>
    %c5_280 = arith.constant 5 : index
    %c5_281 = arith.constant 5 : index
    %c0_282 = arith.constant 0 : index
    %c0_283 = arith.constant 0 : index
    %277 = vector.load %arg5[%c5_280, %c5_281, %c0_282, %c0_283] : memref<6x6x16x24xf32, #tpu.memory_space<vmem>>, vector<1x1x16x24xf32>
    %278 = vector.shape_cast %277 : vector<1x1x16x24xf32> to vector<16x24xf32>
    %279 = vector.shape_cast %276 : vector<16x24xf32> to vector<1x1x16x24xf32>
    tpu.vector_store %arg5[%c5_280, %c5_281, %c0_282, %c0_283], %279 {strides = array<i32>} : memref<6x6x16x24xf32, #tpu.memory_space<vmem>>, vector<1x1x16x24xf32>,
    %c1_284 = arith.constant 1 : index
    %c0_285 = arith.constant 0 : index
    %c0_286 = arith.constant 0 : index
    %c0_287 = arith.constant 0 : index
    %280 = vector.load %arg5[%c1_284, %c0_285, %c0_286, %c0_287] : memref<6x6x16x24xf32, #tpu.memory_space<vmem>>, vector<1x6x16x24xf32>
    %281 = vector.shape_cast %280 : vector<1x6x16x24xf32> to vector<6x16x24xf32>
    %c0_288 = arith.constant 0 : index
    %c0_289 = arith.constant 0 : index
    %c0_290 = arith.constant 0 : index
    %c0_291 = arith.constant 0 : index
    %282 = vector.load %arg5[%c0_288, %c0_289, %c0_290, %c0_291] : memref<6x6x16x24xf32, #tpu.memory_space<vmem>>, vector<1x6x16x24xf32>
    %283 = vector.shape_cast %282 : vector<1x6x16x24xf32> to vector<6x16x24xf32>
    %284 = arith.subf %281, %283 : vector<6x16x24xf32>
    %285 = arith.mulf %284, %284 : vector<6x16x24xf32>
    %286 = vector.extract_strided_slice %285 {offsets = [0, 0, 0], sizes = [4, 16, 24], strides = [1, 1, 1]} : vector<6x16x24xf32> to vector<4x16x24xf32>
    %287 = vector.extract_strided_slice %285 {offsets = [1, 0, 0], sizes = [4, 16, 24], strides = [1, 1, 1]} : vector<6x16x24xf32> to vector<4x16x24xf32>
    %288 = arith.addf %286, %287 : vector<4x16x24xf32>
    %289 = vector.extract_strided_slice %285 {offsets = [2, 0, 0], sizes = [4, 16, 24], strides = [1, 1, 1]} : vector<6x16x24xf32> to vector<4x16x24xf32>
    %290 = arith.addf %288, %289 : vector<4x16x24xf32>
    %c0_292 = arith.constant 0 : index
    %c1_293 = arith.constant 1 : index
    %c0_294 = arith.constant 0 : index
    %291 = vector.load %arg6[%c0_292, %c1_293, %c0_294] : memref<4x18x24xf32, #tpu.memory_space<vmem>>, vector<4x16x24xf32>
    tpu.vector_store %arg6[%c0_292, %c1_293, %c0_294], %290 {strides = array<i32>} : memref<4x18x24xf32, #tpu.memory_space<vmem>>, vector<4x16x24xf32>,
    %292 = vector.extract_strided_slice %290 {offsets = [0, 0, 0], sizes = [4, 1, 24], strides = [1, 1, 1]} : vector<4x16x24xf32> to vector<4x1x24xf32>
    %c0_295 = arith.constant 0 : index
    %c0_296 = arith.constant 0 : index
    %c0_297 = arith.constant 0 : index
    %293 = vector.load %arg6[%c0_295, %c0_296, %c0_297] : memref<4x18x24xf32, #tpu.memory_space<vmem>>, vector<4x1x24xf32>
    tpu.vector_store %arg6[%c0_295, %c0_296, %c0_297], %292 {strides = array<i32>} : memref<4x18x24xf32, #tpu.memory_space<vmem>>, vector<4x1x24xf32>,
    %294 = vector.extract_strided_slice %290 {offsets = [0, 15, 0], sizes = [4, 1, 24], strides = [1, 1, 1]} : vector<4x16x24xf32> to vector<4x1x24xf32>
    %c0_298 = arith.constant 0 : index
    %c17 = arith.constant 17 : index
    %c0_299 = arith.constant 0 : index
    %295 = vector.load %arg6[%c0_298, %c17, %c0_299] : memref<4x18x24xf32, #tpu.memory_space<vmem>>, vector<4x1x24xf32>
    tpu.vector_store %arg6[%c0_298, %c17, %c0_299], %294 {strides = array<i32>} : memref<4x18x24xf32, #tpu.memory_space<vmem>>, vector<4x1x24xf32>,
    %c0_300 = arith.constant 0 : index
    %c0_301 = arith.constant 0 : index
    %c0_302 = arith.constant 0 : index
    %296 = vector.load %arg6[%c0_300, %c0_301, %c0_302] : memref<4x18x24xf32, #tpu.memory_space<vmem>>, vector<4x18x24xf32>
    %297 = vector.extract_strided_slice %296 {offsets = [0, 0, 0], sizes = [4, 16, 24], strides = [1, 1, 1]} : vector<4x18x24xf32> to vector<4x16x24xf32>
    %298 = vector.extract_strided_slice %296 {offsets = [0, 1, 0], sizes = [4, 16, 24], strides = [1, 1, 1]} : vector<4x18x24xf32> to vector<4x16x24xf32>
    %299 = arith.addf %297, %298 : vector<4x16x24xf32>
    %300 = vector.extract_strided_slice %296 {offsets = [0, 2, 0], sizes = [4, 16, 24], strides = [1, 1, 1]} : vector<4x18x24xf32> to vector<4x16x24xf32>
    %301 = arith.addf %299, %300 : vector<4x16x24xf32>
    %c0_303 = arith.constant 0 : index
    %c0_304 = arith.constant 0 : index
    %c1_305 = arith.constant 1 : index
    %302 = vector.load %arg7[%c0_303, %c0_304, %c1_305] : memref<4x16x26xf32, #tpu.memory_space<vmem>>, vector<4x16x24xf32>
    tpu.vector_store %arg7[%c0_303, %c0_304, %c1_305], %301 {strides = array<i32>} : memref<4x16x26xf32, #tpu.memory_space<vmem>>, vector<4x16x24xf32>,
    %303 = vector.extract_strided_slice %301 {offsets = [0, 0, 0], sizes = [4, 16, 1], strides = [1, 1, 1]} : vector<4x16x24xf32> to vector<4x16x1xf32>
    %c0_306 = arith.constant 0 : index
    %c0_307 = arith.constant 0 : index
    %c0_308 = arith.constant 0 : index
    %304 = vector.load %arg7[%c0_306, %c0_307, %c0_308] : memref<4x16x26xf32, #tpu.memory_space<vmem>>, vector<4x16x1xf32>
    tpu.vector_store %arg7[%c0_306, %c0_307, %c0_308], %303 {strides = array<i32>} : memref<4x16x26xf32, #tpu.memory_space<vmem>>, vector<4x16x1xf32>,
    %305 = vector.extract_strided_slice %301 {offsets = [0, 0, 23], sizes = [4, 16, 1], strides = [1, 1, 1]} : vector<4x16x24xf32> to vector<4x16x1xf32>
    %c0_309 = arith.constant 0 : index
    %c0_310 = arith.constant 0 : index
    %c25 = arith.constant 25 : index
    %306 = vector.load %arg7[%c0_309, %c0_310, %c25] : memref<4x16x26xf32, #tpu.memory_space<vmem>>, vector<4x16x1xf32>
    tpu.vector_store %arg7[%c0_309, %c0_310, %c25], %305 {strides = array<i32>} : memref<4x16x26xf32, #tpu.memory_space<vmem>>, vector<4x16x1xf32>,
    %c0_311 = arith.constant 0 : index
    %c0_312 = arith.constant 0 : index
    %c0_313 = arith.constant 0 : index
    %307 = vector.load %arg7[%c0_311, %c0_312, %c0_313] : memref<4x16x26xf32, #tpu.memory_space<vmem>>, vector<4x16x26xf32>
    %308 = vector.extract_strided_slice %307 {offsets = [0, 0, 0], sizes = [4, 16, 24], strides = [1, 1, 1]} : vector<4x16x26xf32> to vector<4x16x24xf32>
    %309 = vector.extract_strided_slice %307 {offsets = [0, 0, 1], sizes = [4, 16, 24], strides = [1, 1, 1]} : vector<4x16x26xf32> to vector<4x16x24xf32>
    %310 = arith.addf %308, %309 : vector<4x16x24xf32>
    %311 = vector.extract_strided_slice %307 {offsets = [0, 0, 2], sizes = [4, 16, 24], strides = [1, 1, 1]} : vector<4x16x26xf32> to vector<4x16x24xf32>
    %312 = arith.addf %310, %311 : vector<4x16x24xf32>
    %cst = arith.constant 0.0370370373 : f32
    %313 = vector.broadcast %cst : f32 to vector<4x16x24xf32>
    %314 = arith.mulf %312, %313 : vector<4x16x24xf32>
    %c2_314 = arith.constant 2 : index
    %c0_315 = arith.constant 0 : index
    %c0_316 = arith.constant 0 : index
    %c0_317 = arith.constant 0 : index
    %315 = vector.load %arg5[%c2_314, %c0_315, %c0_316, %c0_317] : memref<6x6x16x24xf32, #tpu.memory_space<vmem>>, vector<1x6x16x24xf32>
    %316 = vector.shape_cast %315 : vector<1x6x16x24xf32> to vector<6x16x24xf32>
    %c0_318 = arith.constant 0 : index
    %c0_319 = arith.constant 0 : index
    %c0_320 = arith.constant 0 : index
    %c0_321 = arith.constant 0 : index
    %317 = vector.load %arg5[%c0_318, %c0_319, %c0_320, %c0_321] : memref<6x6x16x24xf32, #tpu.memory_space<vmem>>, vector<1x6x16x24xf32>
    %318 = vector.shape_cast %317 : vector<1x6x16x24xf32> to vector<6x16x24xf32>
    %319 = arith.subf %316, %318 : vector<6x16x24xf32>
    %320 = arith.mulf %319, %319 : vector<6x16x24xf32>
    %321 = vector.extract_strided_slice %320 {offsets = [0, 0, 0], sizes = [4, 16, 24], strides = [1, 1, 1]} : vector<6x16x24xf32> to vector<4x16x24xf32>
    %322 = vector.extract_strided_slice %320 {offsets = [1, 0, 0], sizes = [4, 16, 24], strides = [1, 1, 1]} : vector<6x16x24xf32> to vector<4x16x24xf32>
    %323 = arith.addf %321, %322 : vector<4x16x24xf32>
    %324 = vector.extract_strided_slice %320 {offsets = [2, 0, 0], sizes = [4, 16, 24], strides = [1, 1, 1]} : vector<6x16x24xf32> to vector<4x16x24xf32>
    %325 = arith.addf %323, %324 : vector<4x16x24xf32>
    %c0_322 = arith.constant 0 : index
    %c1_323 = arith.constant 1 : index
    %c0_324 = arith.constant 0 : index
    %326 = vector.load %arg6[%c0_322, %c1_323, %c0_324] : memref<4x18x24xf32, #tpu.memory_space<vmem>>, vector<4x16x24xf32>
    tpu.vector_store %arg6[%c0_322, %c1_323, %c0_324], %325 {strides = array<i32>} : memref<4x18x24xf32, #tpu.memory_space<vmem>>, vector<4x16x24xf32>,
    %327 = vector.extract_strided_slice %325 {offsets = [0, 0, 0], sizes = [4, 1, 24], strides = [1, 1, 1]} : vector<4x16x24xf32> to vector<4x1x24xf32>
    %c0_325 = arith.constant 0 : index
    %c0_326 = arith.constant 0 : index
    %c0_327 = arith.constant 0 : index
    %328 = vector.load %arg6[%c0_325, %c0_326, %c0_327] : memref<4x18x24xf32, #tpu.memory_space<vmem>>, vector<4x1x24xf32>
    tpu.vector_store %arg6[%c0_325, %c0_326, %c0_327], %327 {strides = array<i32>} : memref<4x18x24xf32, #tpu.memory_space<vmem>>, vector<4x1x24xf32>,
    %329 = vector.extract_strided_slice %325 {offsets = [0, 15, 0], sizes = [4, 1, 24], strides = [1, 1, 1]} : vector<4x16x24xf32> to vector<4x1x24xf32>
    %c0_328 = arith.constant 0 : index
    %c17_329 = arith.constant 17 : index
    %c0_330 = arith.constant 0 : index
    %330 = vector.load %arg6[%c0_328, %c17_329, %c0_330] : memref<4x18x24xf32, #tpu.memory_space<vmem>>, vector<4x1x24xf32>
    tpu.vector_store %arg6[%c0_328, %c17_329, %c0_330], %329 {strides = array<i32>} : memref<4x18x24xf32, #tpu.memory_space<vmem>>, vector<4x1x24xf32>,
    %c0_331 = arith.constant 0 : index
    %c0_332 = arith.constant 0 : index
    %c0_333 = arith.constant 0 : index
    %331 = vector.load %arg6[%c0_331, %c0_332, %c0_333] : memref<4x18x24xf32, #tpu.memory_space<vmem>>, vector<4x18x24xf32>
    %332 = vector.extract_strided_slice %331 {offsets = [0, 0, 0], sizes = [4, 16, 24], strides = [1, 1, 1]} : vector<4x18x24xf32> to vector<4x16x24xf32>
    %333 = vector.extract_strided_slice %331 {offsets = [0, 1, 0], sizes = [4, 16, 24], strides = [1, 1, 1]} : vector<4x18x24xf32> to vector<4x16x24xf32>
    %334 = arith.addf %332, %333 : vector<4x16x24xf32>
    %335 = vector.extract_strided_slice %331 {offsets = [0, 2, 0], sizes = [4, 16, 24], strides = [1, 1, 1]} : vector<4x18x24xf32> to vector<4x16x24xf32>
    %336 = arith.addf %334, %335 : vector<4x16x24xf32>
    %c0_334 = arith.constant 0 : index
    %c0_335 = arith.constant 0 : index
    %c1_336 = arith.constant 1 : index
    %337 = vector.load %arg7[%c0_334, %c0_335, %c1_336] : memref<4x16x26xf32, #tpu.memory_space<vmem>>, vector<4x16x24xf32>
    tpu.vector_store %arg7[%c0_334, %c0_335, %c1_336], %336 {strides = array<i32>} : memref<4x16x26xf32, #tpu.memory_space<vmem>>, vector<4x16x24xf32>,
    %338 = vector.extract_strided_slice %336 {offsets = [0, 0, 0], sizes = [4, 16, 1], strides = [1, 1, 1]} : vector<4x16x24xf32> to vector<4x16x1xf32>
    %c0_337 = arith.constant 0 : index
    %c0_338 = arith.constant 0 : index
    %c0_339 = arith.constant 0 : index
    %339 = vector.load %arg7[%c0_337, %c0_338, %c0_339] : memref<4x16x26xf32, #tpu.memory_space<vmem>>, vector<4x16x1xf32>
    tpu.vector_store %arg7[%c0_337, %c0_338, %c0_339], %338 {strides = array<i32>} : memref<4x16x26xf32, #tpu.memory_space<vmem>>, vector<4x16x1xf32>,
    %340 = vector.extract_strided_slice %336 {offsets = [0, 0, 23], sizes = [4, 16, 1], strides = [1, 1, 1]} : vector<4x16x24xf32> to vector<4x16x1xf32>
    %c0_340 = arith.constant 0 : index
    %c0_341 = arith.constant 0 : index
    %c25_342 = arith.constant 25 : index
    %341 = vector.load %arg7[%c0_340, %c0_341, %c25_342] : memref<4x16x26xf32, #tpu.memory_space<vmem>>, vector<4x16x1xf32>
    tpu.vector_store %arg7[%c0_340, %c0_341, %c25_342], %340 {strides = array<i32>} : memref<4x16x26xf32, #tpu.memory_space<vmem>>, vector<4x16x1xf32>,
    %c0_343 = arith.constant 0 : index
    %c0_344 = arith.constant 0 : index
    %c0_345 = arith.constant 0 : index
    %342 = vector.load %arg7[%c0_343, %c0_344, %c0_345] : memref<4x16x26xf32, #tpu.memory_space<vmem>>, vector<4x16x26xf32>
    %343 = vector.extract_strided_slice %342 {offsets = [0, 0, 0], sizes = [4, 16, 24], strides = [1, 1, 1]} : vector<4x16x26xf32> to vector<4x16x24xf32>
    %344 = vector.extract_strided_slice %342 {offsets = [0, 0, 1], sizes = [4, 16, 24], strides = [1, 1, 1]} : vector<4x16x26xf32> to vector<4x16x24xf32>
    %345 = arith.addf %343, %344 : vector<4x16x24xf32>
    %346 = vector.extract_strided_slice %342 {offsets = [0, 0, 2], sizes = [4, 16, 24], strides = [1, 1, 1]} : vector<4x16x26xf32> to vector<4x16x24xf32>
    %347 = arith.addf %345, %346 : vector<4x16x24xf32>
    %cst_346 = arith.constant 0.0370370373 : f32
    %348 = vector.broadcast %cst_346 : f32 to vector<4x16x24xf32>
    %349 = arith.mulf %347, %348 : vector<4x16x24xf32>
    %c2_347 = arith.constant 2 : index
    %c0_348 = arith.constant 0 : index
    %c0_349 = arith.constant 0 : index
    %c0_350 = arith.constant 0 : index
    %350 = vector.load %arg5[%c2_347, %c0_348, %c0_349, %c0_350] : memref<6x6x16x24xf32, #tpu.memory_space<vmem>>, vector<1x6x16x24xf32>
    %351 = vector.shape_cast %350 : vector<1x6x16x24xf32> to vector<6x16x24xf32>
    %c1_351 = arith.constant 1 : index
    %c0_352 = arith.constant 0 : index
    %c0_353 = arith.constant 0 : index
    %c0_354 = arith.constant 0 : index
    %352 = vector.load %arg5[%c1_351, %c0_352, %c0_353, %c0_354] : memref<6x6x16x24xf32, #tpu.memory_space<vmem>>, vector<1x6x16x24xf32>
    %353 = vector.shape_cast %352 : vector<1x6x16x24xf32> to vector<6x16x24xf32>
    %354 = arith.subf %351, %353 : vector<6x16x24xf32>
    %355 = arith.mulf %354, %354 : vector<6x16x24xf32>
    %356 = vector.extract_strided_slice %355 {offsets = [0, 0, 0], sizes = [4, 16, 24], strides = [1, 1, 1]} : vector<6x16x24xf32> to vector<4x16x24xf32>
    %357 = vector.extract_strided_slice %355 {offsets = [1, 0, 0], sizes = [4, 16, 24], strides = [1, 1, 1]} : vector<6x16x24xf32> to vector<4x16x24xf32>
    %358 = arith.addf %356, %357 : vector<4x16x24xf32>
    %359 = vector.extract_strided_slice %355 {offsets = [2, 0, 0], sizes = [4, 16, 24], strides = [1, 1, 1]} : vector<6x16x24xf32> to vector<4x16x24xf32>
    %360 = arith.addf %358, %359 : vector<4x16x24xf32>
    %c0_355 = arith.constant 0 : index
    %c1_356 = arith.constant 1 : index
    %c0_357 = arith.constant 0 : index
    %361 = vector.load %arg6[%c0_355, %c1_356, %c0_357] : memref<4x18x24xf32, #tpu.memory_space<vmem>>, vector<4x16x24xf32>
    tpu.vector_store %arg6[%c0_355, %c1_356, %c0_357], %360 {strides = array<i32>} : memref<4x18x24xf32, #tpu.memory_space<vmem>>, vector<4x16x24xf32>,
    %362 = vector.extract_strided_slice %360 {offsets = [0, 0, 0], sizes = [4, 1, 24], strides = [1, 1, 1]} : vector<4x16x24xf32> to vector<4x1x24xf32>
    %c0_358 = arith.constant 0 : index
    %c0_359 = arith.constant 0 : index
    %c0_360 = arith.constant 0 : index
    %363 = vector.load %arg6[%c0_358, %c0_359, %c0_360] : memref<4x18x24xf32, #tpu.memory_space<vmem>>, vector<4x1x24xf32>
    tpu.vector_store %arg6[%c0_358, %c0_359, %c0_360], %362 {strides = array<i32>} : memref<4x18x24xf32, #tpu.memory_space<vmem>>, vector<4x1x24xf32>,
    %364 = vector.extract_strided_slice %360 {offsets = [0, 15, 0], sizes = [4, 1, 24], strides = [1, 1, 1]} : vector<4x16x24xf32> to vector<4x1x24xf32>
    %c0_361 = arith.constant 0 : index
    %c17_362 = arith.constant 17 : index
    %c0_363 = arith.constant 0 : index
    %365 = vector.load %arg6[%c0_361, %c17_362, %c0_363] : memref<4x18x24xf32, #tpu.memory_space<vmem>>, vector<4x1x24xf32>
    tpu.vector_store %arg6[%c0_361, %c17_362, %c0_363], %364 {strides = array<i32>} : memref<4x18x24xf32, #tpu.memory_space<vmem>>, vector<4x1x24xf32>,
    %c0_364 = arith.constant 0 : index
    %c0_365 = arith.constant 0 : index
    %c0_366 = arith.constant 0 : index
    %366 = vector.load %arg6[%c0_364, %c0_365, %c0_366] : memref<4x18x24xf32, #tpu.memory_space<vmem>>, vector<4x18x24xf32>
    %367 = vector.extract_strided_slice %366 {offsets = [0, 0, 0], sizes = [4, 16, 24], strides = [1, 1, 1]} : vector<4x18x24xf32> to vector<4x16x24xf32>
    %368 = vector.extract_strided_slice %366 {offsets = [0, 1, 0], sizes = [4, 16, 24], strides = [1, 1, 1]} : vector<4x18x24xf32> to vector<4x16x24xf32>
    %369 = arith.addf %367, %368 : vector<4x16x24xf32>
    %370 = vector.extract_strided_slice %366 {offsets = [0, 2, 0], sizes = [4, 16, 24], strides = [1, 1, 1]} : vector<4x18x24xf32> to vector<4x16x24xf32>
    %371 = arith.addf %369, %370 : vector<4x16x24xf32>
    %c0_367 = arith.constant 0 : index
    %c0_368 = arith.constant 0 : index
    %c1_369 = arith.constant 1 : index
    %372 = vector.load %arg7[%c0_367, %c0_368, %c1_369] : memref<4x16x26xf32, #tpu.memory_space<vmem>>, vector<4x16x24xf32>
    tpu.vector_store %arg7[%c0_367, %c0_368, %c1_369], %371 {strides = array<i32>} : memref<4x16x26xf32, #tpu.memory_space<vmem>>, vector<4x16x24xf32>,
    %373 = vector.extract_strided_slice %371 {offsets = [0, 0, 0], sizes = [4, 16, 1], strides = [1, 1, 1]} : vector<4x16x24xf32> to vector<4x16x1xf32>
    %c0_370 = arith.constant 0 : index
    %c0_371 = arith.constant 0 : index
    %c0_372 = arith.constant 0 : index
    %374 = vector.load %arg7[%c0_370, %c0_371, %c0_372] : memref<4x16x26xf32, #tpu.memory_space<vmem>>, vector<4x16x1xf32>
    tpu.vector_store %arg7[%c0_370, %c0_371, %c0_372], %373 {strides = array<i32>} : memref<4x16x26xf32, #tpu.memory_space<vmem>>, vector<4x16x1xf32>,
    %375 = vector.extract_strided_slice %371 {offsets = [0, 0, 23], sizes = [4, 16, 1], strides = [1, 1, 1]} : vector<4x16x24xf32> to vector<4x16x1xf32>
    %c0_373 = arith.constant 0 : index
    %c0_374 = arith.constant 0 : index
    %c25_375 = arith.constant 25 : index
    %376 = vector.load %arg7[%c0_373, %c0_374, %c25_375] : memref<4x16x26xf32, #tpu.memory_space<vmem>>, vector<4x16x1xf32>
    tpu.vector_store %arg7[%c0_373, %c0_374, %c25_375], %375 {strides = array<i32>} : memref<4x16x26xf32, #tpu.memory_space<vmem>>, vector<4x16x1xf32>,
    %c0_376 = arith.constant 0 : index
    %c0_377 = arith.constant 0 : index
    %c0_378 = arith.constant 0 : index
    %377 = vector.load %arg7[%c0_376, %c0_377, %c0_378] : memref<4x16x26xf32, #tpu.memory_space<vmem>>, vector<4x16x26xf32>
    %378 = vector.extract_strided_slice %377 {offsets = [0, 0, 0], sizes = [4, 16, 24], strides = [1, 1, 1]} : vector<4x16x26xf32> to vector<4x16x24xf32>
    %379 = vector.extract_strided_slice %377 {offsets = [0, 0, 1], sizes = [4, 16, 24], strides = [1, 1, 1]} : vector<4x16x26xf32> to vector<4x16x24xf32>
    %380 = arith.addf %378, %379 : vector<4x16x24xf32>
    %381 = vector.extract_strided_slice %377 {offsets = [0, 0, 2], sizes = [4, 16, 24], strides = [1, 1, 1]} : vector<4x16x26xf32> to vector<4x16x24xf32>
    %382 = arith.addf %380, %381 : vector<4x16x24xf32>
    %cst_379 = arith.constant 0.0370370373 : f32
    %383 = vector.broadcast %cst_379 : f32 to vector<4x16x24xf32>
    %384 = arith.mulf %382, %383 : vector<4x16x24xf32>
    %c3_380 = arith.constant 3 : index
    %c0_381 = arith.constant 0 : index
    %c0_382 = arith.constant 0 : index
    %c0_383 = arith.constant 0 : index
    %385 = vector.load %arg5[%c3_380, %c0_381, %c0_382, %c0_383] : memref<6x6x16x24xf32, #tpu.memory_space<vmem>>, vector<1x6x16x24xf32>
    %386 = vector.shape_cast %385 : vector<1x6x16x24xf32> to vector<6x16x24xf32>
    %c0_384 = arith.constant 0 : index
    %c0_385 = arith.constant 0 : index
    %c0_386 = arith.constant 0 : index
    %c0_387 = arith.constant 0 : index
    %387 = vector.load %arg5[%c0_384, %c0_385, %c0_386, %c0_387] : memref<6x6x16x24xf32, #tpu.memory_space<vmem>>, vector<1x6x16x24xf32>
    %388 = vector.shape_cast %387 : vector<1x6x16x24xf32> to vector<6x16x24xf32>
    %389 = arith.subf %386, %388 : vector<6x16x24xf32>
    %390 = arith.mulf %389, %389 : vector<6x16x24xf32>
    %391 = vector.extract_strided_slice %390 {offsets = [0, 0, 0], sizes = [4, 16, 24], strides = [1, 1, 1]} : vector<6x16x24xf32> to vector<4x16x24xf32>
    %392 = vector.extract_strided_slice %390 {offsets = [1, 0, 0], sizes = [4, 16, 24], strides = [1, 1, 1]} : vector<6x16x24xf32> to vector<4x16x24xf32>
    %393 = arith.addf %391, %392 : vector<4x16x24xf32>
    %394 = vector.extract_strided_slice %390 {offsets = [2, 0, 0], sizes = [4, 16, 24], strides = [1, 1, 1]} : vector<6x16x24xf32> to vector<4x16x24xf32>
    %395 = arith.addf %393, %394 : vector<4x16x24xf32>
    %c0_388 = arith.constant 0 : index
    %c1_389 = arith.constant 1 : index
    %c0_390 = arith.constant 0 : index
    %396 = vector.load %arg6[%c0_388, %c1_389, %c0_390] : memref<4x18x24xf32, #tpu.memory_space<vmem>>, vector<4x16x24xf32>
    tpu.vector_store %arg6[%c0_388, %c1_389, %c0_390], %395 {strides = array<i32>} : memref<4x18x24xf32, #tpu.memory_space<vmem>>, vector<4x16x24xf32>,
    %397 = vector.extract_strided_slice %395 {offsets = [0, 0, 0], sizes = [4, 1, 24], strides = [1, 1, 1]} : vector<4x16x24xf32> to vector<4x1x24xf32>
    %c0_391 = arith.constant 0 : index
    %c0_392 = arith.constant 0 : index
    %c0_393 = arith.constant 0 : index
    %398 = vector.load %arg6[%c0_391, %c0_392, %c0_393] : memref<4x18x24xf32, #tpu.memory_space<vmem>>, vector<4x1x24xf32>
    tpu.vector_store %arg6[%c0_391, %c0_392, %c0_393], %397 {strides = array<i32>} : memref<4x18x24xf32, #tpu.memory_space<vmem>>, vector<4x1x24xf32>,
    %399 = vector.extract_strided_slice %395 {offsets = [0, 15, 0], sizes = [4, 1, 24], strides = [1, 1, 1]} : vector<4x16x24xf32> to vector<4x1x24xf32>
    %c0_394 = arith.constant 0 : index
    %c17_395 = arith.constant 17 : index
    %c0_396 = arith.constant 0 : index
    %400 = vector.load %arg6[%c0_394, %c17_395, %c0_396] : memref<4x18x24xf32, #tpu.memory_space<vmem>>, vector<4x1x24xf32>
    tpu.vector_store %arg6[%c0_394, %c17_395, %c0_396], %399 {strides = array<i32>} : memref<4x18x24xf32, #tpu.memory_space<vmem>>, vector<4x1x24xf32>,
    %c0_397 = arith.constant 0 : index
    %c0_398 = arith.constant 0 : index
    %c0_399 = arith.constant 0 : index
    %401 = vector.load %arg6[%c0_397, %c0_398, %c0_399] : memref<4x18x24xf32, #tpu.memory_space<vmem>>, vector<4x18x24xf32>
    %402 = vector.extract_strided_slice %401 {offsets = [0, 0, 0], sizes = [4, 16, 24], strides = [1, 1, 1]} : vector<4x18x24xf32> to vector<4x16x24xf32>
    %403 = vector.extract_strided_slice %401 {offsets = [0, 1, 0], sizes = [4, 16, 24], strides = [1, 1, 1]} : vector<4x18x24xf32> to vector<4x16x24xf32>
    %404 = arith.addf %402, %403 : vector<4x16x24xf32>
    %405 = vector.extract_strided_slice %401 {offsets = [0, 2, 0], sizes = [4, 16, 24], strides = [1, 1, 1]} : vector<4x18x24xf32> to vector<4x16x24xf32>
    %406 = arith.addf %404, %405 : vector<4x16x24xf32>
    %c0_400 = arith.constant 0 : index
    %c0_401 = arith.constant 0 : index
    %c1_402 = arith.constant 1 : index
    %407 = vector.load %arg7[%c0_400, %c0_401, %c1_402] : memref<4x16x26xf32, #tpu.memory_space<vmem>>, vector<4x16x24xf32>
    tpu.vector_store %arg7[%c0_400, %c0_401, %c1_402], %406 {strides = array<i32>} : memref<4x16x26xf32, #tpu.memory_space<vmem>>, vector<4x16x24xf32>,
    %408 = vector.extract_strided_slice %406 {offsets = [0, 0, 0], sizes = [4, 16, 1], strides = [1, 1, 1]} : vector<4x16x24xf32> to vector<4x16x1xf32>
    %c0_403 = arith.constant 0 : index
    %c0_404 = arith.constant 0 : index
    %c0_405 = arith.constant 0 : index
    %409 = vector.load %arg7[%c0_403, %c0_404, %c0_405] : memref<4x16x26xf32, #tpu.memory_space<vmem>>, vector<4x16x1xf32>
    tpu.vector_store %arg7[%c0_403, %c0_404, %c0_405], %408 {strides = array<i32>} : memref<4x16x26xf32, #tpu.memory_space<vmem>>, vector<4x16x1xf32>,
    %410 = vector.extract_strided_slice %406 {offsets = [0, 0, 23], sizes = [4, 16, 1], strides = [1, 1, 1]} : vector<4x16x24xf32> to vector<4x16x1xf32>
    %c0_406 = arith.constant 0 : index
    %c0_407 = arith.constant 0 : index
    %c25_408 = arith.constant 25 : index
    %411 = vector.load %arg7[%c0_406, %c0_407, %c25_408] : memref<4x16x26xf32, #tpu.memory_space<vmem>>, vector<4x16x1xf32>
    tpu.vector_store %arg7[%c0_406, %c0_407, %c25_408], %410 {strides = array<i32>} : memref<4x16x26xf32, #tpu.memory_space<vmem>>, vector<4x16x1xf32>,
    %c0_409 = arith.constant 0 : index
    %c0_410 = arith.constant 0 : index
    %c0_411 = arith.constant 0 : index
    %412 = vector.load %arg7[%c0_409, %c0_410, %c0_411] : memref<4x16x26xf32, #tpu.memory_space<vmem>>, vector<4x16x26xf32>
    %413 = vector.extract_strided_slice %412 {offsets = [0, 0, 0], sizes = [4, 16, 24], strides = [1, 1, 1]} : vector<4x16x26xf32> to vector<4x16x24xf32>
    %414 = vector.extract_strided_slice %412 {offsets = [0, 0, 1], sizes = [4, 16, 24], strides = [1, 1, 1]} : vector<4x16x26xf32> to vector<4x16x24xf32>
    %415 = arith.addf %413, %414 : vector<4x16x24xf32>
    %416 = vector.extract_strided_slice %412 {offsets = [0, 0, 2], sizes = [4, 16, 24], strides = [1, 1, 1]} : vector<4x16x26xf32> to vector<4x16x24xf32>
    %417 = arith.addf %415, %416 : vector<4x16x24xf32>
    %cst_412 = arith.constant 0.0370370373 : f32
    %418 = vector.broadcast %cst_412 : f32 to vector<4x16x24xf32>
    %419 = arith.mulf %417, %418 : vector<4x16x24xf32>
    %c3_413 = arith.constant 3 : index
    %c0_414 = arith.constant 0 : index
    %c0_415 = arith.constant 0 : index
    %c0_416 = arith.constant 0 : index
    %420 = vector.load %arg5[%c3_413, %c0_414, %c0_415, %c0_416] : memref<6x6x16x24xf32, #tpu.memory_space<vmem>>, vector<1x6x16x24xf32>
    %421 = vector.shape_cast %420 : vector<1x6x16x24xf32> to vector<6x16x24xf32>
    %c2_417 = arith.constant 2 : index
    %c0_418 = arith.constant 0 : index
    %c0_419 = arith.constant 0 : index
    %c0_420 = arith.constant 0 : index
    %422 = vector.load %arg5[%c2_417, %c0_418, %c0_419, %c0_420] : memref<6x6x16x24xf32, #tpu.memory_space<vmem>>, vector<1x6x16x24xf32>
    %423 = vector.shape_cast %422 : vector<1x6x16x24xf32> to vector<6x16x24xf32>
    %424 = arith.subf %421, %423 : vector<6x16x24xf32>
    %425 = arith.mulf %424, %424 : vector<6x16x24xf32>
    %426 = vector.extract_strided_slice %425 {offsets = [0, 0, 0], sizes = [4, 16, 24], strides = [1, 1, 1]} : vector<6x16x24xf32> to vector<4x16x24xf32>
    %427 = vector.extract_strided_slice %425 {offsets = [1, 0, 0], sizes = [4, 16, 24], strides = [1, 1, 1]} : vector<6x16x24xf32> to vector<4x16x24xf32>
    %428 = arith.addf %426, %427 : vector<4x16x24xf32>
    %429 = vector.extract_strided_slice %425 {offsets = [2, 0, 0], sizes = [4, 16, 24], strides = [1, 1, 1]} : vector<6x16x24xf32> to vector<4x16x24xf32>
    %430 = arith.addf %428, %429 : vector<4x16x24xf32>
    %c0_421 = arith.constant 0 : index
    %c1_422 = arith.constant 1 : index
    %c0_423 = arith.constant 0 : index
    %431 = vector.load %arg6[%c0_421, %c1_422, %c0_423] : memref<4x18x24xf32, #tpu.memory_space<vmem>>, vector<4x16x24xf32>
    tpu.vector_store %arg6[%c0_421, %c1_422, %c0_423], %430 {strides = array<i32>} : memref<4x18x24xf32, #tpu.memory_space<vmem>>, vector<4x16x24xf32>,
    %432 = vector.extract_strided_slice %430 {offsets = [0, 0, 0], sizes = [4, 1, 24], strides = [1, 1, 1]} : vector<4x16x24xf32> to vector<4x1x24xf32>
    %c0_424 = arith.constant 0 : index
    %c0_425 = arith.constant 0 : index
    %c0_426 = arith.constant 0 : index
    %433 = vector.load %arg6[%c0_424, %c0_425, %c0_426] : memref<4x18x24xf32, #tpu.memory_space<vmem>>, vector<4x1x24xf32>
    tpu.vector_store %arg6[%c0_424, %c0_425, %c0_426], %432 {strides = array<i32>} : memref<4x18x24xf32, #tpu.memory_space<vmem>>, vector<4x1x24xf32>,
    %434 = vector.extract_strided_slice %430 {offsets = [0, 15, 0], sizes = [4, 1, 24], strides = [1, 1, 1]} : vector<4x16x24xf32> to vector<4x1x24xf32>
    %c0_427 = arith.constant 0 : index
    %c17_428 = arith.constant 17 : index
    %c0_429 = arith.constant 0 : index
    %435 = vector.load %arg6[%c0_427, %c17_428, %c0_429] : memref<4x18x24xf32, #tpu.memory_space<vmem>>, vector<4x1x24xf32>
    tpu.vector_store %arg6[%c0_427, %c17_428, %c0_429], %434 {strides = array<i32>} : memref<4x18x24xf32, #tpu.memory_space<vmem>>, vector<4x1x24xf32>,
    %c0_430 = arith.constant 0 : index
    %c0_431 = arith.constant 0 : index
    %c0_432 = arith.constant 0 : index
    %436 = vector.load %arg6[%c0_430, %c0_431, %c0_432] : memref<4x18x24xf32, #tpu.memory_space<vmem>>, vector<4x18x24xf32>
    %437 = vector.extract_strided_slice %436 {offsets = [0, 0, 0], sizes = [4, 16, 24], strides = [1, 1, 1]} : vector<4x18x24xf32> to vector<4x16x24xf32>
    %438 = vector.extract_strided_slice %436 {offsets = [0, 1, 0], sizes = [4, 16, 24], strides = [1, 1, 1]} : vector<4x18x24xf32> to vector<4x16x24xf32>
    %439 = arith.addf %437, %438 : vector<4x16x24xf32>
    %440 = vector.extract_strided_slice %436 {offsets = [0, 2, 0], sizes = [4, 16, 24], strides = [1, 1, 1]} : vector<4x18x24xf32> to vector<4x16x24xf32>
    %441 = arith.addf %439, %440 : vector<4x16x24xf32>
    %c0_433 = arith.constant 0 : index
    %c0_434 = arith.constant 0 : index
    %c1_435 = arith.constant 1 : index
    %442 = vector.load %arg7[%c0_433, %c0_434, %c1_435] : memref<4x16x26xf32, #tpu.memory_space<vmem>>, vector<4x16x24xf32>
    tpu.vector_store %arg7[%c0_433, %c0_434, %c1_435], %441 {strides = array<i32>} : memref<4x16x26xf32, #tpu.memory_space<vmem>>, vector<4x16x24xf32>,
    %443 = vector.extract_strided_slice %441 {offsets = [0, 0, 0], sizes = [4, 16, 1], strides = [1, 1, 1]} : vector<4x16x24xf32> to vector<4x16x1xf32>
    %c0_436 = arith.constant 0 : index
    %c0_437 = arith.constant 0 : index
    %c0_438 = arith.constant 0 : index
    %444 = vector.load %arg7[%c0_436, %c0_437, %c0_438] : memref<4x16x26xf32, #tpu.memory_space<vmem>>, vector<4x16x1xf32>
    tpu.vector_store %arg7[%c0_436, %c0_437, %c0_438], %443 {strides = array<i32>} : memref<4x16x26xf32, #tpu.memory_space<vmem>>, vector<4x16x1xf32>,
    %445 = vector.extract_strided_slice %441 {offsets = [0, 0, 23], sizes = [4, 16, 1], strides = [1, 1, 1]} : vector<4x16x24xf32> to vector<4x16x1xf32>
    %c0_439 = arith.constant 0 : index
    %c0_440 = arith.constant 0 : index
    %c25_441 = arith.constant 25 : index
    %446 = vector.load %arg7[%c0_439, %c0_440, %c25_441] : memref<4x16x26xf32, #tpu.memory_space<vmem>>, vector<4x16x1xf32>
    tpu.vector_store %arg7[%c0_439, %c0_440, %c25_441], %445 {strides = array<i32>} : memref<4x16x26xf32, #tpu.memory_space<vmem>>, vector<4x16x1xf32>,
    %c0_442 = arith.constant 0 : index
    %c0_443 = arith.constant 0 : index
    %c0_444 = arith.constant 0 : index
    %447 = vector.load %arg7[%c0_442, %c0_443, %c0_444] : memref<4x16x26xf32, #tpu.memory_space<vmem>>, vector<4x16x26xf32>
    %448 = vector.extract_strided_slice %447 {offsets = [0, 0, 0], sizes = [4, 16, 24], strides = [1, 1, 1]} : vector<4x16x26xf32> to vector<4x16x24xf32>
    %449 = vector.extract_strided_slice %447 {offsets = [0, 0, 1], sizes = [4, 16, 24], strides = [1, 1, 1]} : vector<4x16x26xf32> to vector<4x16x24xf32>
    %450 = arith.addf %448, %449 : vector<4x16x24xf32>
    %451 = vector.extract_strided_slice %447 {offsets = [0, 0, 2], sizes = [4, 16, 24], strides = [1, 1, 1]} : vector<4x16x26xf32> to vector<4x16x24xf32>
    %452 = arith.addf %450, %451 : vector<4x16x24xf32>
    %cst_445 = arith.constant 0.0370370373 : f32
    %453 = vector.broadcast %cst_445 : f32 to vector<4x16x24xf32>
    %454 = arith.mulf %452, %453 : vector<4x16x24xf32>
    %c4_446 = arith.constant 4 : index
    %c0_447 = arith.constant 0 : index
    %c0_448 = arith.constant 0 : index
    %c0_449 = arith.constant 0 : index
    %455 = vector.load %arg5[%c4_446, %c0_447, %c0_448, %c0_449] : memref<6x6x16x24xf32, #tpu.memory_space<vmem>>, vector<1x6x16x24xf32>
    %456 = vector.shape_cast %455 : vector<1x6x16x24xf32> to vector<6x16x24xf32>
    %c1_450 = arith.constant 1 : index
    %c0_451 = arith.constant 0 : index
    %c0_452 = arith.constant 0 : index
    %c0_453 = arith.constant 0 : index
    %457 = vector.load %arg5[%c1_450, %c0_451, %c0_452, %c0_453] : memref<6x6x16x24xf32, #tpu.memory_space<vmem>>, vector<1x6x16x24xf32>
    %458 = vector.shape_cast %457 : vector<1x6x16x24xf32> to vector<6x16x24xf32>
    %459 = arith.subf %456, %458 : vector<6x16x24xf32>
    %460 = arith.mulf %459, %459 : vector<6x16x24xf32>
    %461 = vector.extract_strided_slice %460 {offsets = [0, 0, 0], sizes = [4, 16, 24], strides = [1, 1, 1]} : vector<6x16x24xf32> to vector<4x16x24xf32>
    %462 = vector.extract_strided_slice %460 {offsets = [1, 0, 0], sizes = [4, 16, 24], strides = [1, 1, 1]} : vector<6x16x24xf32> to vector<4x16x24xf32>
    %463 = arith.addf %461, %462 : vector<4x16x24xf32>
    %464 = vector.extract_strided_slice %460 {offsets = [2, 0, 0], sizes = [4, 16, 24], strides = [1, 1, 1]} : vector<6x16x24xf32> to vector<4x16x24xf32>
    %465 = arith.addf %463, %464 : vector<4x16x24xf32>
    %c0_454 = arith.constant 0 : index
    %c1_455 = arith.constant 1 : index
    %c0_456 = arith.constant 0 : index
    %466 = vector.load %arg6[%c0_454, %c1_455, %c0_456] : memref<4x18x24xf32, #tpu.memory_space<vmem>>, vector<4x16x24xf32>
    tpu.vector_store %arg6[%c0_454, %c1_455, %c0_456], %465 {strides = array<i32>} : memref<4x18x24xf32, #tpu.memory_space<vmem>>, vector<4x16x24xf32>,
    %467 = vector.extract_strided_slice %465 {offsets = [0, 0, 0], sizes = [4, 1, 24], strides = [1, 1, 1]} : vector<4x16x24xf32> to vector<4x1x24xf32>
    %c0_457 = arith.constant 0 : index
    %c0_458 = arith.constant 0 : index
    %c0_459 = arith.constant 0 : index
    %468 = vector.load %arg6[%c0_457, %c0_458, %c0_459] : memref<4x18x24xf32, #tpu.memory_space<vmem>>, vector<4x1x24xf32>
    tpu.vector_store %arg6[%c0_457, %c0_458, %c0_459], %467 {strides = array<i32>} : memref<4x18x24xf32, #tpu.memory_space<vmem>>, vector<4x1x24xf32>,
    %469 = vector.extract_strided_slice %465 {offsets = [0, 15, 0], sizes = [4, 1, 24], strides = [1, 1, 1]} : vector<4x16x24xf32> to vector<4x1x24xf32>
    %c0_460 = arith.constant 0 : index
    %c17_461 = arith.constant 17 : index
    %c0_462 = arith.constant 0 : index
    %470 = vector.load %arg6[%c0_460, %c17_461, %c0_462] : memref<4x18x24xf32, #tpu.memory_space<vmem>>, vector<4x1x24xf32>
    tpu.vector_store %arg6[%c0_460, %c17_461, %c0_462], %469 {strides = array<i32>} : memref<4x18x24xf32, #tpu.memory_space<vmem>>, vector<4x1x24xf32>,
    %c0_463 = arith.constant 0 : index
    %c0_464 = arith.constant 0 : index
    %c0_465 = arith.constant 0 : index
    %471 = vector.load %arg6[%c0_463, %c0_464, %c0_465] : memref<4x18x24xf32, #tpu.memory_space<vmem>>, vector<4x18x24xf32>
    %472 = vector.extract_strided_slice %471 {offsets = [0, 0, 0], sizes = [4, 16, 24], strides = [1, 1, 1]} : vector<4x18x24xf32> to vector<4x16x24xf32>
    %473 = vector.extract_strided_slice %471 {offsets = [0, 1, 0], sizes = [4, 16, 24], strides = [1, 1, 1]} : vector<4x18x24xf32> to vector<4x16x24xf32>
    %474 = arith.addf %472, %473 : vector<4x16x24xf32>
    %475 = vector.extract_strided_slice %471 {offsets = [0, 2, 0], sizes = [4, 16, 24], strides = [1, 1, 1]} : vector<4x18x24xf32> to vector<4x16x24xf32>
    %476 = arith.addf %474, %475 : vector<4x16x24xf32>
    %c0_466 = arith.constant 0 : index
    %c0_467 = arith.constant 0 : index
    %c1_468 = arith.constant 1 : index
    %477 = vector.load %arg7[%c0_466, %c0_467, %c1_468] : memref<4x16x26xf32, #tpu.memory_space<vmem>>, vector<4x16x24xf32>
    tpu.vector_store %arg7[%c0_466, %c0_467, %c1_468], %476 {strides = array<i32>} : memref<4x16x26xf32, #tpu.memory_space<vmem>>, vector<4x16x24xf32>,
    %478 = vector.extract_strided_slice %476 {offsets = [0, 0, 0], sizes = [4, 16, 1], strides = [1, 1, 1]} : vector<4x16x24xf32> to vector<4x16x1xf32>
    %c0_469 = arith.constant 0 : index
    %c0_470 = arith.constant 0 : index
    %c0_471 = arith.constant 0 : index
    %479 = vector.load %arg7[%c0_469, %c0_470, %c0_471] : memref<4x16x26xf32, #tpu.memory_space<vmem>>, vector<4x16x1xf32>
    tpu.vector_store %arg7[%c0_469, %c0_470, %c0_471], %478 {strides = array<i32>} : memref<4x16x26xf32, #tpu.memory_space<vmem>>, vector<4x16x1xf32>,
    %480 = vector.extract_strided_slice %476 {offsets = [0, 0, 23], sizes = [4, 16, 1], strides = [1, 1, 1]} : vector<4x16x24xf32> to vector<4x16x1xf32>
    %c0_472 = arith.constant 0 : index
    %c0_473 = arith.constant 0 : index
    %c25_474 = arith.constant 25 : index
    %481 = vector.load %arg7[%c0_472, %c0_473, %c25_474] : memref<4x16x26xf32, #tpu.memory_space<vmem>>, vector<4x16x1xf32>
    tpu.vector_store %arg7[%c0_472, %c0_473, %c25_474], %480 {strides = array<i32>} : memref<4x16x26xf32, #tpu.memory_space<vmem>>, vector<4x16x1xf32>,
    %c0_475 = arith.constant 0 : index
    %c0_476 = arith.constant 0 : index
    %c0_477 = arith.constant 0 : index
    %482 = vector.load %arg7[%c0_475, %c0_476, %c0_477] : memref<4x16x26xf32, #tpu.memory_space<vmem>>, vector<4x16x26xf32>
    %483 = vector.extract_strided_slice %482 {offsets = [0, 0, 0], sizes = [4, 16, 24], strides = [1, 1, 1]} : vector<4x16x26xf32> to vector<4x16x24xf32>
    %484 = vector.extract_strided_slice %482 {offsets = [0, 0, 1], sizes = [4, 16, 24], strides = [1, 1, 1]} : vector<4x16x26xf32> to vector<4x16x24xf32>
    %485 = arith.addf %483, %484 : vector<4x16x24xf32>
    %486 = vector.extract_strided_slice %482 {offsets = [0, 0, 2], sizes = [4, 16, 24], strides = [1, 1, 1]} : vector<4x16x26xf32> to vector<4x16x24xf32>
    %487 = arith.addf %485, %486 : vector<4x16x24xf32>
    %cst_478 = arith.constant 0.0370370373 : f32
    %488 = vector.broadcast %cst_478 : f32 to vector<4x16x24xf32>
    %489 = arith.mulf %487, %488 : vector<4x16x24xf32>
    %c4_479 = arith.constant 4 : index
    %c0_480 = arith.constant 0 : index
    %c0_481 = arith.constant 0 : index
    %c0_482 = arith.constant 0 : index
    %490 = vector.load %arg5[%c4_479, %c0_480, %c0_481, %c0_482] : memref<6x6x16x24xf32, #tpu.memory_space<vmem>>, vector<1x6x16x24xf32>
    %491 = vector.shape_cast %490 : vector<1x6x16x24xf32> to vector<6x16x24xf32>
    %c2_483 = arith.constant 2 : index
    %c0_484 = arith.constant 0 : index
    %c0_485 = arith.constant 0 : index
    %c0_486 = arith.constant 0 : index
    %492 = vector.load %arg5[%c2_483, %c0_484, %c0_485, %c0_486] : memref<6x6x16x24xf32, #tpu.memory_space<vmem>>, vector<1x6x16x24xf32>
    %493 = vector.shape_cast %492 : vector<1x6x16x24xf32> to vector<6x16x24xf32>
    %494 = arith.subf %491, %493 : vector<6x16x24xf32>
    %495 = arith.mulf %494, %494 : vector<6x16x24xf32>
    %496 = vector.extract_strided_slice %495 {offsets = [0, 0, 0], sizes = [4, 16, 24], strides = [1, 1, 1]} : vector<6x16x24xf32> to vector<4x16x24xf32>
    %497 = vector.extract_strided_slice %495 {offsets = [1, 0, 0], sizes = [4, 16, 24], strides = [1, 1, 1]} : vector<6x16x24xf32> to vector<4x16x24xf32>
    %498 = arith.addf %496, %497 : vector<4x16x24xf32>
    %499 = vector.extract_strided_slice %495 {offsets = [2, 0, 0], sizes = [4, 16, 24], strides = [1, 1, 1]} : vector<6x16x24xf32> to vector<4x16x24xf32>
    %500 = arith.addf %498, %499 : vector<4x16x24xf32>
    %c0_487 = arith.constant 0 : index
    %c1_488 = arith.constant 1 : index
    %c0_489 = arith.constant 0 : index
    %501 = vector.load %arg6[%c0_487, %c1_488, %c0_489] : memref<4x18x24xf32, #tpu.memory_space<vmem>>, vector<4x16x24xf32>
    tpu.vector_store %arg6[%c0_487, %c1_488, %c0_489], %500 {strides = array<i32>} : memref<4x18x24xf32, #tpu.memory_space<vmem>>, vector<4x16x24xf32>,
    %502 = vector.extract_strided_slice %500 {offsets = [0, 0, 0], sizes = [4, 1, 24], strides = [1, 1, 1]} : vector<4x16x24xf32> to vector<4x1x24xf32>
    %c0_490 = arith.constant 0 : index
    %c0_491 = arith.constant 0 : index
    %c0_492 = arith.constant 0 : index
    %503 = vector.load %arg6[%c0_490, %c0_491, %c0_492] : memref<4x18x24xf32, #tpu.memory_space<vmem>>, vector<4x1x24xf32>
    tpu.vector_store %arg6[%c0_490, %c0_491, %c0_492], %502 {strides = array<i32>} : memref<4x18x24xf32, #tpu.memory_space<vmem>>, vector<4x1x24xf32>,
    %504 = vector.extract_strided_slice %500 {offsets = [0, 15, 0], sizes = [4, 1, 24], strides = [1, 1, 1]} : vector<4x16x24xf32> to vector<4x1x24xf32>
    %c0_493 = arith.constant 0 : index
    %c17_494 = arith.constant 17 : index
    %c0_495 = arith.constant 0 : index
    %505 = vector.load %arg6[%c0_493, %c17_494, %c0_495] : memref<4x18x24xf32, #tpu.memory_space<vmem>>, vector<4x1x24xf32>
    tpu.vector_store %arg6[%c0_493, %c17_494, %c0_495], %504 {strides = array<i32>} : memref<4x18x24xf32, #tpu.memory_space<vmem>>, vector<4x1x24xf32>,
    %c0_496 = arith.constant 0 : index
    %c0_497 = arith.constant 0 : index
    %c0_498 = arith.constant 0 : index
    %506 = vector.load %arg6[%c0_496, %c0_497, %c0_498] : memref<4x18x24xf32, #tpu.memory_space<vmem>>, vector<4x18x24xf32>
    %507 = vector.extract_strided_slice %506 {offsets = [0, 0, 0], sizes = [4, 16, 24], strides = [1, 1, 1]} : vector<4x18x24xf32> to vector<4x16x24xf32>
    %508 = vector.extract_strided_slice %506 {offsets = [0, 1, 0], sizes = [4, 16, 24], strides = [1, 1, 1]} : vector<4x18x24xf32> to vector<4x16x24xf32>
    %509 = arith.addf %507, %508 : vector<4x16x24xf32>
    %510 = vector.extract_strided_slice %506 {offsets = [0, 2, 0], sizes = [4, 16, 24], strides = [1, 1, 1]} : vector<4x18x24xf32> to vector<4x16x24xf32>
    %511 = arith.addf %509, %510 : vector<4x16x24xf32>
    %c0_499 = arith.constant 0 : index
    %c0_500 = arith.constant 0 : index
    %c1_501 = arith.constant 1 : index
    %512 = vector.load %arg7[%c0_499, %c0_500, %c1_501] : memref<4x16x26xf32, #tpu.memory_space<vmem>>, vector<4x16x24xf32>
    tpu.vector_store %arg7[%c0_499, %c0_500, %c1_501], %511 {strides = array<i32>} : memref<4x16x26xf32, #tpu.memory_space<vmem>>, vector<4x16x24xf32>,
    %513 = vector.extract_strided_slice %511 {offsets = [0, 0, 0], sizes = [4, 16, 1], strides = [1, 1, 1]} : vector<4x16x24xf32> to vector<4x16x1xf32>
    %c0_502 = arith.constant 0 : index
    %c0_503 = arith.constant 0 : index
    %c0_504 = arith.constant 0 : index
    %514 = vector.load %arg7[%c0_502, %c0_503, %c0_504] : memref<4x16x26xf32, #tpu.memory_space<vmem>>, vector<4x16x1xf32>
    tpu.vector_store %arg7[%c0_502, %c0_503, %c0_504], %513 {strides = array<i32>} : memref<4x16x26xf32, #tpu.memory_space<vmem>>, vector<4x16x1xf32>,
    %515 = vector.extract_strided_slice %511 {offsets = [0, 0, 23], sizes = [4, 16, 1], strides = [1, 1, 1]} : vector<4x16x24xf32> to vector<4x16x1xf32>
    %c0_505 = arith.constant 0 : index
    %c0_506 = arith.constant 0 : index
    %c25_507 = arith.constant 25 : index
    %516 = vector.load %arg7[%c0_505, %c0_506, %c25_507] : memref<4x16x26xf32, #tpu.memory_space<vmem>>, vector<4x16x1xf32>
    tpu.vector_store %arg7[%c0_505, %c0_506, %c25_507], %515 {strides = array<i32>} : memref<4x16x26xf32, #tpu.memory_space<vmem>>, vector<4x16x1xf32>,
    %c0_508 = arith.constant 0 : index
    %c0_509 = arith.constant 0 : index
    %c0_510 = arith.constant 0 : index
    %517 = vector.load %arg7[%c0_508, %c0_509, %c0_510] : memref<4x16x26xf32, #tpu.memory_space<vmem>>, vector<4x16x26xf32>
    %518 = vector.extract_strided_slice %517 {offsets = [0, 0, 0], sizes = [4, 16, 24], strides = [1, 1, 1]} : vector<4x16x26xf32> to vector<4x16x24xf32>
    %519 = vector.extract_strided_slice %517 {offsets = [0, 0, 1], sizes = [4, 16, 24], strides = [1, 1, 1]} : vector<4x16x26xf32> to vector<4x16x24xf32>
    %520 = arith.addf %518, %519 : vector<4x16x24xf32>
    %521 = vector.extract_strided_slice %517 {offsets = [0, 0, 2], sizes = [4, 16, 24], strides = [1, 1, 1]} : vector<4x16x26xf32> to vector<4x16x24xf32>
    %522 = arith.addf %520, %521 : vector<4x16x24xf32>
    %cst_511 = arith.constant 0.0370370373 : f32
    %523 = vector.broadcast %cst_511 : f32 to vector<4x16x24xf32>
    %524 = arith.mulf %522, %523 : vector<4x16x24xf32>
    %c4_512 = arith.constant 4 : index
    %c0_513 = arith.constant 0 : index
    %c0_514 = arith.constant 0 : index
    %c0_515 = arith.constant 0 : index
    %525 = vector.load %arg5[%c4_512, %c0_513, %c0_514, %c0_515] : memref<6x6x16x24xf32, #tpu.memory_space<vmem>>, vector<1x6x16x24xf32>
    %526 = vector.shape_cast %525 : vector<1x6x16x24xf32> to vector<6x16x24xf32>
    %c3_516 = arith.constant 3 : index
    %c0_517 = arith.constant 0 : index
    %c0_518 = arith.constant 0 : index
    %c0_519 = arith.constant 0 : index
    %527 = vector.load %arg5[%c3_516, %c0_517, %c0_518, %c0_519] : memref<6x6x16x24xf32, #tpu.memory_space<vmem>>, vector<1x6x16x24xf32>
    %528 = vector.shape_cast %527 : vector<1x6x16x24xf32> to vector<6x16x24xf32>
    %529 = arith.subf %526, %528 : vector<6x16x24xf32>
    %530 = arith.mulf %529, %529 : vector<6x16x24xf32>
    %531 = vector.extract_strided_slice %530 {offsets = [0, 0, 0], sizes = [4, 16, 24], strides = [1, 1, 1]} : vector<6x16x24xf32> to vector<4x16x24xf32>
    %532 = vector.extract_strided_slice %530 {offsets = [1, 0, 0], sizes = [4, 16, 24], strides = [1, 1, 1]} : vector<6x16x24xf32> to vector<4x16x24xf32>
    %533 = arith.addf %531, %532 : vector<4x16x24xf32>
    %534 = vector.extract_strided_slice %530 {offsets = [2, 0, 0], sizes = [4, 16, 24], strides = [1, 1, 1]} : vector<6x16x24xf32> to vector<4x16x24xf32>
    %535 = arith.addf %533, %534 : vector<4x16x24xf32>
    %c0_520 = arith.constant 0 : index
    %c1_521 = arith.constant 1 : index
    %c0_522 = arith.constant 0 : index
    %536 = vector.load %arg6[%c0_520, %c1_521, %c0_522] : memref<4x18x24xf32, #tpu.memory_space<vmem>>, vector<4x16x24xf32>
    tpu.vector_store %arg6[%c0_520, %c1_521, %c0_522], %535 {strides = array<i32>} : memref<4x18x24xf32, #tpu.memory_space<vmem>>, vector<4x16x24xf32>,
    %537 = vector.extract_strided_slice %535 {offsets = [0, 0, 0], sizes = [4, 1, 24], strides = [1, 1, 1]} : vector<4x16x24xf32> to vector<4x1x24xf32>
    %c0_523 = arith.constant 0 : index
    %c0_524 = arith.constant 0 : index
    %c0_525 = arith.constant 0 : index
    %538 = vector.load %arg6[%c0_523, %c0_524, %c0_525] : memref<4x18x24xf32, #tpu.memory_space<vmem>>, vector<4x1x24xf32>
    tpu.vector_store %arg6[%c0_523, %c0_524, %c0_525], %537 {strides = array<i32>} : memref<4x18x24xf32, #tpu.memory_space<vmem>>, vector<4x1x24xf32>,
    %539 = vector.extract_strided_slice %535 {offsets = [0, 15, 0], sizes = [4, 1, 24], strides = [1, 1, 1]} : vector<4x16x24xf32> to vector<4x1x24xf32>
    %c0_526 = arith.constant 0 : index
    %c17_527 = arith.constant 17 : index
    %c0_528 = arith.constant 0 : index
    %540 = vector.load %arg6[%c0_526, %c17_527, %c0_528] : memref<4x18x24xf32, #tpu.memory_space<vmem>>, vector<4x1x24xf32>
    tpu.vector_store %arg6[%c0_526, %c17_527, %c0_528], %539 {strides = array<i32>} : memref<4x18x24xf32, #tpu.memory_space<vmem>>, vector<4x1x24xf32>,
    %c0_529 = arith.constant 0 : index
    %c0_530 = arith.constant 0 : index
    %c0_531 = arith.constant 0 : index
    %541 = vector.load %arg6[%c0_529, %c0_530, %c0_531] : memref<4x18x24xf32, #tpu.memory_space<vmem>>, vector<4x18x24xf32>
    %542 = vector.extract_strided_slice %541 {offsets = [0, 0, 0], sizes = [4, 16, 24], strides = [1, 1, 1]} : vector<4x18x24xf32> to vector<4x16x24xf32>
    %543 = vector.extract_strided_slice %541 {offsets = [0, 1, 0], sizes = [4, 16, 24], strides = [1, 1, 1]} : vector<4x18x24xf32> to vector<4x16x24xf32>
    %544 = arith.addf %542, %543 : vector<4x16x24xf32>
    %545 = vector.extract_strided_slice %541 {offsets = [0, 2, 0], sizes = [4, 16, 24], strides = [1, 1, 1]} : vector<4x18x24xf32> to vector<4x16x24xf32>
    %546 = arith.addf %544, %545 : vector<4x16x24xf32>
    %c0_532 = arith.constant 0 : index
    %c0_533 = arith.constant 0 : index
    %c1_534 = arith.constant 1 : index
    %547 = vector.load %arg7[%c0_532, %c0_533, %c1_534] : memref<4x16x26xf32, #tpu.memory_space<vmem>>, vector<4x16x24xf32>
    tpu.vector_store %arg7[%c0_532, %c0_533, %c1_534], %546 {strides = array<i32>} : memref<4x16x26xf32, #tpu.memory_space<vmem>>, vector<4x16x24xf32>,
    %548 = vector.extract_strided_slice %546 {offsets = [0, 0, 0], sizes = [4, 16, 1], strides = [1, 1, 1]} : vector<4x16x24xf32> to vector<4x16x1xf32>
    %c0_535 = arith.constant 0 : index
    %c0_536 = arith.constant 0 : index
    %c0_537 = arith.constant 0 : index
    %549 = vector.load %arg7[%c0_535, %c0_536, %c0_537] : memref<4x16x26xf32, #tpu.memory_space<vmem>>, vector<4x16x1xf32>
    tpu.vector_store %arg7[%c0_535, %c0_536, %c0_537], %548 {strides = array<i32>} : memref<4x16x26xf32, #tpu.memory_space<vmem>>, vector<4x16x1xf32>,
    %550 = vector.extract_strided_slice %546 {offsets = [0, 0, 23], sizes = [4, 16, 1], strides = [1, 1, 1]} : vector<4x16x24xf32> to vector<4x16x1xf32>
    %c0_538 = arith.constant 0 : index
    %c0_539 = arith.constant 0 : index
    %c25_540 = arith.constant 25 : index
    %551 = vector.load %arg7[%c0_538, %c0_539, %c25_540] : memref<4x16x26xf32, #tpu.memory_space<vmem>>, vector<4x16x1xf32>
    tpu.vector_store %arg7[%c0_538, %c0_539, %c25_540], %550 {strides = array<i32>} : memref<4x16x26xf32, #tpu.memory_space<vmem>>, vector<4x16x1xf32>,
    %c0_541 = arith.constant 0 : index
    %c0_542 = arith.constant 0 : index
    %c0_543 = arith.constant 0 : index
    %552 = vector.load %arg7[%c0_541, %c0_542, %c0_543] : memref<4x16x26xf32, #tpu.memory_space<vmem>>, vector<4x16x26xf32>
    %553 = vector.extract_strided_slice %552 {offsets = [0, 0, 0], sizes = [4, 16, 24], strides = [1, 1, 1]} : vector<4x16x26xf32> to vector<4x16x24xf32>
    %554 = vector.extract_strided_slice %552 {offsets = [0, 0, 1], sizes = [4, 16, 24], strides = [1, 1, 1]} : vector<4x16x26xf32> to vector<4x16x24xf32>
    %555 = arith.addf %553, %554 : vector<4x16x24xf32>
    %556 = vector.extract_strided_slice %552 {offsets = [0, 0, 2], sizes = [4, 16, 24], strides = [1, 1, 1]} : vector<4x16x26xf32> to vector<4x16x24xf32>
    %557 = arith.addf %555, %556 : vector<4x16x24xf32>
    %cst_544 = arith.constant 0.0370370373 : f32
    %558 = vector.broadcast %cst_544 : f32 to vector<4x16x24xf32>
    %559 = arith.mulf %557, %558 : vector<4x16x24xf32>
    %c5_545 = arith.constant 5 : index
    %c0_546 = arith.constant 0 : index
    %c0_547 = arith.constant 0 : index
    %c0_548 = arith.constant 0 : index
    %560 = vector.load %arg5[%c5_545, %c0_546, %c0_547, %c0_548] : memref<6x6x16x24xf32, #tpu.memory_space<vmem>>, vector<1x6x16x24xf32>
    %561 = vector.shape_cast %560 : vector<1x6x16x24xf32> to vector<6x16x24xf32>
    %c0_549 = arith.constant 0 : index
    %c0_550 = arith.constant 0 : index
    %c0_551 = arith.constant 0 : index
    %c0_552 = arith.constant 0 : index
    %562 = vector.load %arg5[%c0_549, %c0_550, %c0_551, %c0_552] : memref<6x6x16x24xf32, #tpu.memory_space<vmem>>, vector<1x6x16x24xf32>
    %563 = vector.shape_cast %562 : vector<1x6x16x24xf32> to vector<6x16x24xf32>
    %564 = arith.subf %561, %563 : vector<6x16x24xf32>
    %565 = arith.mulf %564, %564 : vector<6x16x24xf32>
    %566 = vector.extract_strided_slice %565 {offsets = [0, 0, 0], sizes = [4, 16, 24], strides = [1, 1, 1]} : vector<6x16x24xf32> to vector<4x16x24xf32>
    %567 = vector.extract_strided_slice %565 {offsets = [1, 0, 0], sizes = [4, 16, 24], strides = [1, 1, 1]} : vector<6x16x24xf32> to vector<4x16x24xf32>
    %568 = arith.addf %566, %567 : vector<4x16x24xf32>
    %569 = vector.extract_strided_slice %565 {offsets = [2, 0, 0], sizes = [4, 16, 24], strides = [1, 1, 1]} : vector<6x16x24xf32> to vector<4x16x24xf32>
    %570 = arith.addf %568, %569 : vector<4x16x24xf32>
    %c0_553 = arith.constant 0 : index
    %c1_554 = arith.constant 1 : index
    %c0_555 = arith.constant 0 : index
    %571 = vector.load %arg6[%c0_553, %c1_554, %c0_555] : memref<4x18x24xf32, #tpu.memory_space<vmem>>, vector<4x16x24xf32>
    tpu.vector_store %arg6[%c0_553, %c1_554, %c0_555], %570 {strides = array<i32>} : memref<4x18x24xf32, #tpu.memory_space<vmem>>, vector<4x16x24xf32>,
    %572 = vector.extract_strided_slice %570 {offsets = [0, 0, 0], sizes = [4, 1, 24], strides = [1, 1, 1]} : vector<4x16x24xf32> to vector<4x1x24xf32>
    %c0_556 = arith.constant 0 : index
    %c0_557 = arith.constant 0 : index
    %c0_558 = arith.constant 0 : index
    %573 = vector.load %arg6[%c0_556, %c0_557, %c0_558] : memref<4x18x24xf32, #tpu.memory_space<vmem>>, vector<4x1x24xf32>
    tpu.vector_store %arg6[%c0_556, %c0_557, %c0_558], %572 {strides = array<i32>} : memref<4x18x24xf32, #tpu.memory_space<vmem>>, vector<4x1x24xf32>,
    %574 = vector.extract_strided_slice %570 {offsets = [0, 15, 0], sizes = [4, 1, 24], strides = [1, 1, 1]} : vector<4x16x24xf32> to vector<4x1x24xf32>
    %c0_559 = arith.constant 0 : index
    %c17_560 = arith.constant 17 : index
    %c0_561 = arith.constant 0 : index
    %575 = vector.load %arg6[%c0_559, %c17_560, %c0_561] : memref<4x18x24xf32, #tpu.memory_space<vmem>>, vector<4x1x24xf32>
    tpu.vector_store %arg6[%c0_559, %c17_560, %c0_561], %574 {strides = array<i32>} : memref<4x18x24xf32, #tpu.memory_space<vmem>>, vector<4x1x24xf32>,
    %c0_562 = arith.constant 0 : index
    %c0_563 = arith.constant 0 : index
    %c0_564 = arith.constant 0 : index
    %576 = vector.load %arg6[%c0_562, %c0_563, %c0_564] : memref<4x18x24xf32, #tpu.memory_space<vmem>>, vector<4x18x24xf32>
    %577 = vector.extract_strided_slice %576 {offsets = [0, 0, 0], sizes = [4, 16, 24], strides = [1, 1, 1]} : vector<4x18x24xf32> to vector<4x16x24xf32>
    %578 = vector.extract_strided_slice %576 {offsets = [0, 1, 0], sizes = [4, 16, 24], strides = [1, 1, 1]} : vector<4x18x24xf32> to vector<4x16x24xf32>
    %579 = arith.addf %577, %578 : vector<4x16x24xf32>
    %580 = vector.extract_strided_slice %576 {offsets = [0, 2, 0], sizes = [4, 16, 24], strides = [1, 1, 1]} : vector<4x18x24xf32> to vector<4x16x24xf32>
    %581 = arith.addf %579, %580 : vector<4x16x24xf32>
    %c0_565 = arith.constant 0 : index
    %c0_566 = arith.constant 0 : index
    %c1_567 = arith.constant 1 : index
    %582 = vector.load %arg7[%c0_565, %c0_566, %c1_567] : memref<4x16x26xf32, #tpu.memory_space<vmem>>, vector<4x16x24xf32>
    tpu.vector_store %arg7[%c0_565, %c0_566, %c1_567], %581 {strides = array<i32>} : memref<4x16x26xf32, #tpu.memory_space<vmem>>, vector<4x16x24xf32>,
    %583 = vector.extract_strided_slice %581 {offsets = [0, 0, 0], sizes = [4, 16, 1], strides = [1, 1, 1]} : vector<4x16x24xf32> to vector<4x16x1xf32>
    %c0_568 = arith.constant 0 : index
    %c0_569 = arith.constant 0 : index
    %c0_570 = arith.constant 0 : index
    %584 = vector.load %arg7[%c0_568, %c0_569, %c0_570] : memref<4x16x26xf32, #tpu.memory_space<vmem>>, vector<4x16x1xf32>
    tpu.vector_store %arg7[%c0_568, %c0_569, %c0_570], %583 {strides = array<i32>} : memref<4x16x26xf32, #tpu.memory_space<vmem>>, vector<4x16x1xf32>,
    %585 = vector.extract_strided_slice %581 {offsets = [0, 0, 23], sizes = [4, 16, 1], strides = [1, 1, 1]} : vector<4x16x24xf32> to vector<4x16x1xf32>
    %c0_571 = arith.constant 0 : index
    %c0_572 = arith.constant 0 : index
    %c25_573 = arith.constant 25 : index
    %586 = vector.load %arg7[%c0_571, %c0_572, %c25_573] : memref<4x16x26xf32, #tpu.memory_space<vmem>>, vector<4x16x1xf32>
    tpu.vector_store %arg7[%c0_571, %c0_572, %c25_573], %585 {strides = array<i32>} : memref<4x16x26xf32, #tpu.memory_space<vmem>>, vector<4x16x1xf32>,
    %c0_574 = arith.constant 0 : index
    %c0_575 = arith.constant 0 : index
    %c0_576 = arith.constant 0 : index
    %587 = vector.load %arg7[%c0_574, %c0_575, %c0_576] : memref<4x16x26xf32, #tpu.memory_space<vmem>>, vector<4x16x26xf32>
    %588 = vector.extract_strided_slice %587 {offsets = [0, 0, 0], sizes = [4, 16, 24], strides = [1, 1, 1]} : vector<4x16x26xf32> to vector<4x16x24xf32>
    %589 = vector.extract_strided_slice %587 {offsets = [0, 0, 1], sizes = [4, 16, 24], strides = [1, 1, 1]} : vector<4x16x26xf32> to vector<4x16x24xf32>
    %590 = arith.addf %588, %589 : vector<4x16x24xf32>
    %591 = vector.extract_strided_slice %587 {offsets = [0, 0, 2], sizes = [4, 16, 24], strides = [1, 1, 1]} : vector<4x16x26xf32> to vector<4x16x24xf32>
    %592 = arith.addf %590, %591 : vector<4x16x24xf32>
    %cst_577 = arith.constant 0.0370370373 : f32
    %593 = vector.broadcast %cst_577 : f32 to vector<4x16x24xf32>
    %594 = arith.mulf %592, %593 : vector<4x16x24xf32>
    %c5_578 = arith.constant 5 : index
    %c0_579 = arith.constant 0 : index
    %c0_580 = arith.constant 0 : index
    %c0_581 = arith.constant 0 : index
    %595 = vector.load %arg5[%c5_578, %c0_579, %c0_580, %c0_581] : memref<6x6x16x24xf32, #tpu.memory_space<vmem>>, vector<1x6x16x24xf32>
    %596 = vector.shape_cast %595 : vector<1x6x16x24xf32> to vector<6x16x24xf32>
    %c1_582 = arith.constant 1 : index
    %c0_583 = arith.constant 0 : index
    %c0_584 = arith.constant 0 : index
    %c0_585 = arith.constant 0 : index
    %597 = vector.load %arg5[%c1_582, %c0_583, %c0_584, %c0_585] : memref<6x6x16x24xf32, #tpu.memory_space<vmem>>, vector<1x6x16x24xf32>
    %598 = vector.shape_cast %597 : vector<1x6x16x24xf32> to vector<6x16x24xf32>
    %599 = arith.subf %596, %598 : vector<6x16x24xf32>
    %600 = arith.mulf %599, %599 : vector<6x16x24xf32>
    %601 = vector.extract_strided_slice %600 {offsets = [0, 0, 0], sizes = [4, 16, 24], strides = [1, 1, 1]} : vector<6x16x24xf32> to vector<4x16x24xf32>
    %602 = vector.extract_strided_slice %600 {offsets = [1, 0, 0], sizes = [4, 16, 24], strides = [1, 1, 1]} : vector<6x16x24xf32> to vector<4x16x24xf32>
    %603 = arith.addf %601, %602 : vector<4x16x24xf32>
    %604 = vector.extract_strided_slice %600 {offsets = [2, 0, 0], sizes = [4, 16, 24], strides = [1, 1, 1]} : vector<6x16x24xf32> to vector<4x16x24xf32>
    %605 = arith.addf %603, %604 : vector<4x16x24xf32>
    %c0_586 = arith.constant 0 : index
    %c1_587 = arith.constant 1 : index
    %c0_588 = arith.constant 0 : index
    %606 = vector.load %arg6[%c0_586, %c1_587, %c0_588] : memref<4x18x24xf32, #tpu.memory_space<vmem>>, vector<4x16x24xf32>
    tpu.vector_store %arg6[%c0_586, %c1_587, %c0_588], %605 {strides = array<i32>} : memref<4x18x24xf32, #tpu.memory_space<vmem>>, vector<4x16x24xf32>,
    %607 = vector.extract_strided_slice %605 {offsets = [0, 0, 0], sizes = [4, 1, 24], strides = [1, 1, 1]} : vector<4x16x24xf32> to vector<4x1x24xf32>
    %c0_589 = arith.constant 0 : index
    %c0_590 = arith.constant 0 : index
    %c0_591 = arith.constant 0 : index
    %608 = vector.load %arg6[%c0_589, %c0_590, %c0_591] : memref<4x18x24xf32, #tpu.memory_space<vmem>>, vector<4x1x24xf32>
    tpu.vector_store %arg6[%c0_589, %c0_590, %c0_591], %607 {strides = array<i32>} : memref<4x18x24xf32, #tpu.memory_space<vmem>>, vector<4x1x24xf32>,
    %609 = vector.extract_strided_slice %605 {offsets = [0, 15, 0], sizes = [4, 1, 24], strides = [1, 1, 1]} : vector<4x16x24xf32> to vector<4x1x24xf32>
    %c0_592 = arith.constant 0 : index
    %c17_593 = arith.constant 17 : index
    %c0_594 = arith.constant 0 : index
    %610 = vector.load %arg6[%c0_592, %c17_593, %c0_594] : memref<4x18x24xf32, #tpu.memory_space<vmem>>, vector<4x1x24xf32>
    tpu.vector_store %arg6[%c0_592, %c17_593, %c0_594], %609 {strides = array<i32>} : memref<4x18x24xf32, #tpu.memory_space<vmem>>, vector<4x1x24xf32>,
    %c0_595 = arith.constant 0 : index
    %c0_596 = arith.constant 0 : index
    %c0_597 = arith.constant 0 : index
    %611 = vector.load %arg6[%c0_595, %c0_596, %c0_597] : memref<4x18x24xf32, #tpu.memory_space<vmem>>, vector<4x18x24xf32>
    %612 = vector.extract_strided_slice %611 {offsets = [0, 0, 0], sizes = [4, 16, 24], strides = [1, 1, 1]} : vector<4x18x24xf32> to vector<4x16x24xf32>
    %613 = vector.extract_strided_slice %611 {offsets = [0, 1, 0], sizes = [4, 16, 24], strides = [1, 1, 1]} : vector<4x18x24xf32> to vector<4x16x24xf32>
    %614 = arith.addf %612, %613 : vector<4x16x24xf32>
    %615 = vector.extract_strided_slice %611 {offsets = [0, 2, 0], sizes = [4, 16, 24], strides = [1, 1, 1]} : vector<4x18x24xf32> to vector<4x16x24xf32>
    %616 = arith.addf %614, %615 : vector<4x16x24xf32>
    %c0_598 = arith.constant 0 : index
    %c0_599 = arith.constant 0 : index
    %c1_600 = arith.constant 1 : index
    %617 = vector.load %arg7[%c0_598, %c0_599, %c1_600] : memref<4x16x26xf32, #tpu.memory_space<vmem>>, vector<4x16x24xf32>
    tpu.vector_store %arg7[%c0_598, %c0_599, %c1_600], %616 {strides = array<i32>} : memref<4x16x26xf32, #tpu.memory_space<vmem>>, vector<4x16x24xf32>,
    %618 = vector.extract_strided_slice %616 {offsets = [0, 0, 0], sizes = [4, 16, 1], strides = [1, 1, 1]} : vector<4x16x24xf32> to vector<4x16x1xf32>
    %c0_601 = arith.constant 0 : index
    %c0_602 = arith.constant 0 : index
    %c0_603 = arith.constant 0 : index
    %619 = vector.load %arg7[%c0_601, %c0_602, %c0_603] : memref<4x16x26xf32, #tpu.memory_space<vmem>>, vector<4x16x1xf32>
    tpu.vector_store %arg7[%c0_601, %c0_602, %c0_603], %618 {strides = array<i32>} : memref<4x16x26xf32, #tpu.memory_space<vmem>>, vector<4x16x1xf32>,
    %620 = vector.extract_strided_slice %616 {offsets = [0, 0, 23], sizes = [4, 16, 1], strides = [1, 1, 1]} : vector<4x16x24xf32> to vector<4x16x1xf32>
    %c0_604 = arith.constant 0 : index
    %c0_605 = arith.constant 0 : index
    %c25_606 = arith.constant 25 : index
    %621 = vector.load %arg7[%c0_604, %c0_605, %c25_606] : memref<4x16x26xf32, #tpu.memory_space<vmem>>, vector<4x16x1xf32>
    tpu.vector_store %arg7[%c0_604, %c0_605, %c25_606], %620 {strides = array<i32>} : memref<4x16x26xf32, #tpu.memory_space<vmem>>, vector<4x16x1xf32>,
    %c0_607 = arith.constant 0 : index
    %c0_608 = arith.constant 0 : index
    %c0_609 = arith.constant 0 : index
    %622 = vector.load %arg7[%c0_607, %c0_608, %c0_609] : memref<4x16x26xf32, #tpu.memory_space<vmem>>, vector<4x16x26xf32>
    %623 = vector.extract_strided_slice %622 {offsets = [0, 0, 0], sizes = [4, 16, 24], strides = [1, 1, 1]} : vector<4x16x26xf32> to vector<4x16x24xf32>
    %624 = vector.extract_strided_slice %622 {offsets = [0, 0, 1], sizes = [4, 16, 24], strides = [1, 1, 1]} : vector<4x16x26xf32> to vector<4x16x24xf32>
    %625 = arith.addf %623, %624 : vector<4x16x24xf32>
    %626 = vector.extract_strided_slice %622 {offsets = [0, 0, 2], sizes = [4, 16, 24], strides = [1, 1, 1]} : vector<4x16x26xf32> to vector<4x16x24xf32>
    %627 = arith.addf %625, %626 : vector<4x16x24xf32>
    %cst_610 = arith.constant 0.0370370373 : f32
    %628 = vector.broadcast %cst_610 : f32 to vector<4x16x24xf32>
    %629 = arith.mulf %627, %628 : vector<4x16x24xf32>
    %c5_611 = arith.constant 5 : index
    %c0_612 = arith.constant 0 : index
    %c0_613 = arith.constant 0 : index
    %c0_614 = arith.constant 0 : index
    %630 = vector.load %arg5[%c5_611, %c0_612, %c0_613, %c0_614] : memref<6x6x16x24xf32, #tpu.memory_space<vmem>>, vector<1x6x16x24xf32>
    %631 = vector.shape_cast %630 : vector<1x6x16x24xf32> to vector<6x16x24xf32>
    %c3_615 = arith.constant 3 : index
    %c0_616 = arith.constant 0 : index
    %c0_617 = arith.constant 0 : index
    %c0_618 = arith.constant 0 : index
    %632 = vector.load %arg5[%c3_615, %c0_616, %c0_617, %c0_618] : memref<6x6x16x24xf32, #tpu.memory_space<vmem>>, vector<1x6x16x24xf32>
    %633 = vector.shape_cast %632 : vector<1x6x16x24xf32> to vector<6x16x24xf32>
    %634 = arith.subf %631, %633 : vector<6x16x24xf32>
    %635 = arith.mulf %634, %634 : vector<6x16x24xf32>
    %636 = vector.extract_strided_slice %635 {offsets = [0, 0, 0], sizes = [4, 16, 24], strides = [1, 1, 1]} : vector<6x16x24xf32> to vector<4x16x24xf32>
    %637 = vector.extract_strided_slice %635 {offsets = [1, 0, 0], sizes = [4, 16, 24], strides = [1, 1, 1]} : vector<6x16x24xf32> to vector<4x16x24xf32>
    %638 = arith.addf %636, %637 : vector<4x16x24xf32>
    %639 = vector.extract_strided_slice %635 {offsets = [2, 0, 0], sizes = [4, 16, 24], strides = [1, 1, 1]} : vector<6x16x24xf32> to vector<4x16x24xf32>
    %640 = arith.addf %638, %639 : vector<4x16x24xf32>
    %c0_619 = arith.constant 0 : index
    %c1_620 = arith.constant 1 : index
    %c0_621 = arith.constant 0 : index
    %641 = vector.load %arg6[%c0_619, %c1_620, %c0_621] : memref<4x18x24xf32, #tpu.memory_space<vmem>>, vector<4x16x24xf32>
    tpu.vector_store %arg6[%c0_619, %c1_620, %c0_621], %640 {strides = array<i32>} : memref<4x18x24xf32, #tpu.memory_space<vmem>>, vector<4x16x24xf32>,
    %642 = vector.extract_strided_slice %640 {offsets = [0, 0, 0], sizes = [4, 1, 24], strides = [1, 1, 1]} : vector<4x16x24xf32> to vector<4x1x24xf32>
    %c0_622 = arith.constant 0 : index
    %c0_623 = arith.constant 0 : index
    %c0_624 = arith.constant 0 : index
    %643 = vector.load %arg6[%c0_622, %c0_623, %c0_624] : memref<4x18x24xf32, #tpu.memory_space<vmem>>, vector<4x1x24xf32>
    tpu.vector_store %arg6[%c0_622, %c0_623, %c0_624], %642 {strides = array<i32>} : memref<4x18x24xf32, #tpu.memory_space<vmem>>, vector<4x1x24xf32>,
    %644 = vector.extract_strided_slice %640 {offsets = [0, 15, 0], sizes = [4, 1, 24], strides = [1, 1, 1]} : vector<4x16x24xf32> to vector<4x1x24xf32>
    %c0_625 = arith.constant 0 : index
    %c17_626 = arith.constant 17 : index
    %c0_627 = arith.constant 0 : index
    %645 = vector.load %arg6[%c0_625, %c17_626, %c0_627] : memref<4x18x24xf32, #tpu.memory_space<vmem>>, vector<4x1x24xf32>
    tpu.vector_store %arg6[%c0_625, %c17_626, %c0_627], %644 {strides = array<i32>} : memref<4x18x24xf32, #tpu.memory_space<vmem>>, vector<4x1x24xf32>,
    %c0_628 = arith.constant 0 : index
    %c0_629 = arith.constant 0 : index
    %c0_630 = arith.constant 0 : index
    %646 = vector.load %arg6[%c0_628, %c0_629, %c0_630] : memref<4x18x24xf32, #tpu.memory_space<vmem>>, vector<4x18x24xf32>
    %647 = vector.extract_strided_slice %646 {offsets = [0, 0, 0], sizes = [4, 16, 24], strides = [1, 1, 1]} : vector<4x18x24xf32> to vector<4x16x24xf32>
    %648 = vector.extract_strided_slice %646 {offsets = [0, 1, 0], sizes = [4, 16, 24], strides = [1, 1, 1]} : vector<4x18x24xf32> to vector<4x16x24xf32>
    %649 = arith.addf %647, %648 : vector<4x16x24xf32>
    %650 = vector.extract_strided_slice %646 {offsets = [0, 2, 0], sizes = [4, 16, 24], strides = [1, 1, 1]} : vector<4x18x24xf32> to vector<4x16x24xf32>
    %651 = arith.addf %649, %650 : vector<4x16x24xf32>
    %c0_631 = arith.constant 0 : index
    %c0_632 = arith.constant 0 : index
    %c1_633 = arith.constant 1 : index
    %652 = vector.load %arg7[%c0_631, %c0_632, %c1_633] : memref<4x16x26xf32, #tpu.memory_space<vmem>>, vector<4x16x24xf32>
    tpu.vector_store %arg7[%c0_631, %c0_632, %c1_633], %651 {strides = array<i32>} : memref<4x16x26xf32, #tpu.memory_space<vmem>>, vector<4x16x24xf32>,
    %653 = vector.extract_strided_slice %651 {offsets = [0, 0, 0], sizes = [4, 16, 1], strides = [1, 1, 1]} : vector<4x16x24xf32> to vector<4x16x1xf32>
    %c0_634 = arith.constant 0 : index
    %c0_635 = arith.constant 0 : index
    %c0_636 = arith.constant 0 : index
    %654 = vector.load %arg7[%c0_634, %c0_635, %c0_636] : memref<4x16x26xf32, #tpu.memory_space<vmem>>, vector<4x16x1xf32>
    tpu.vector_store %arg7[%c0_634, %c0_635, %c0_636], %653 {strides = array<i32>} : memref<4x16x26xf32, #tpu.memory_space<vmem>>, vector<4x16x1xf32>,
    %655 = vector.extract_strided_slice %651 {offsets = [0, 0, 23], sizes = [4, 16, 1], strides = [1, 1, 1]} : vector<4x16x24xf32> to vector<4x16x1xf32>
    %c0_637 = arith.constant 0 : index
    %c0_638 = arith.constant 0 : index
    %c25_639 = arith.constant 25 : index
    %656 = vector.load %arg7[%c0_637, %c0_638, %c25_639] : memref<4x16x26xf32, #tpu.memory_space<vmem>>, vector<4x16x1xf32>
    tpu.vector_store %arg7[%c0_637, %c0_638, %c25_639], %655 {strides = array<i32>} : memref<4x16x26xf32, #tpu.memory_space<vmem>>, vector<4x16x1xf32>,
    %c0_640 = arith.constant 0 : index
    %c0_641 = arith.constant 0 : index
    %c0_642 = arith.constant 0 : index
    %657 = vector.load %arg7[%c0_640, %c0_641, %c0_642] : memref<4x16x26xf32, #tpu.memory_space<vmem>>, vector<4x16x26xf32>
    %658 = vector.extract_strided_slice %657 {offsets = [0, 0, 0], sizes = [4, 16, 24], strides = [1, 1, 1]} : vector<4x16x26xf32> to vector<4x16x24xf32>
    %659 = vector.extract_strided_slice %657 {offsets = [0, 0, 1], sizes = [4, 16, 24], strides = [1, 1, 1]} : vector<4x16x26xf32> to vector<4x16x24xf32>
    %660 = arith.addf %658, %659 : vector<4x16x24xf32>
    %661 = vector.extract_strided_slice %657 {offsets = [0, 0, 2], sizes = [4, 16, 24], strides = [1, 1, 1]} : vector<4x16x26xf32> to vector<4x16x24xf32>
    %662 = arith.addf %660, %661 : vector<4x16x24xf32>
    %cst_643 = arith.constant 0.0370370373 : f32
    %663 = vector.broadcast %cst_643 : f32 to vector<4x16x24xf32>
    %664 = arith.mulf %662, %663 : vector<4x16x24xf32>
    %c5_644 = arith.constant 5 : index
    %c0_645 = arith.constant 0 : index
    %c0_646 = arith.constant 0 : index
    %c0_647 = arith.constant 0 : index
    %665 = vector.load %arg5[%c5_644, %c0_645, %c0_646, %c0_647] : memref<6x6x16x24xf32, #tpu.memory_space<vmem>>, vector<1x6x16x24xf32>
    %666 = vector.shape_cast %665 : vector<1x6x16x24xf32> to vector<6x16x24xf32>
    %c4_648 = arith.constant 4 : index
    %c0_649 = arith.constant 0 : index
    %c0_650 = arith.constant 0 : index
    %c0_651 = arith.constant 0 : index
    %667 = vector.load %arg5[%c4_648, %c0_649, %c0_650, %c0_651] : memref<6x6x16x24xf32, #tpu.memory_space<vmem>>, vector<1x6x16x24xf32>
    %668 = vector.shape_cast %667 : vector<1x6x16x24xf32> to vector<6x16x24xf32>
    %669 = arith.subf %666, %668 : vector<6x16x24xf32>
    %670 = arith.mulf %669, %669 : vector<6x16x24xf32>
    %671 = vector.extract_strided_slice %670 {offsets = [0, 0, 0], sizes = [4, 16, 24], strides = [1, 1, 1]} : vector<6x16x24xf32> to vector<4x16x24xf32>
    %672 = vector.extract_strided_slice %670 {offsets = [1, 0, 0], sizes = [4, 16, 24], strides = [1, 1, 1]} : vector<6x16x24xf32> to vector<4x16x24xf32>
    %673 = arith.addf %671, %672 : vector<4x16x24xf32>
    %674 = vector.extract_strided_slice %670 {offsets = [2, 0, 0], sizes = [4, 16, 24], strides = [1, 1, 1]} : vector<6x16x24xf32> to vector<4x16x24xf32>
    %675 = arith.addf %673, %674 : vector<4x16x24xf32>
    %c0_652 = arith.constant 0 : index
    %c1_653 = arith.constant 1 : index
    %c0_654 = arith.constant 0 : index
    %676 = vector.load %arg6[%c0_652, %c1_653, %c0_654] : memref<4x18x24xf32, #tpu.memory_space<vmem>>, vector<4x16x24xf32>
    tpu.vector_store %arg6[%c0_652, %c1_653, %c0_654], %675 {strides = array<i32>} : memref<4x18x24xf32, #tpu.memory_space<vmem>>, vector<4x16x24xf32>,
    %677 = vector.extract_strided_slice %675 {offsets = [0, 0, 0], sizes = [4, 1, 24], strides = [1, 1, 1]} : vector<4x16x24xf32> to vector<4x1x24xf32>
    %c0_655 = arith.constant 0 : index
    %c0_656 = arith.constant 0 : index
    %c0_657 = arith.constant 0 : index
    %678 = vector.load %arg6[%c0_655, %c0_656, %c0_657] : memref<4x18x24xf32, #tpu.memory_space<vmem>>, vector<4x1x24xf32>
    tpu.vector_store %arg6[%c0_655, %c0_656, %c0_657], %677 {strides = array<i32>} : memref<4x18x24xf32, #tpu.memory_space<vmem>>, vector<4x1x24xf32>,
    %679 = vector.extract_strided_slice %675 {offsets = [0, 15, 0], sizes = [4, 1, 24], strides = [1, 1, 1]} : vector<4x16x24xf32> to vector<4x1x24xf32>
    %c0_658 = arith.constant 0 : index
    %c17_659 = arith.constant 17 : index
    %c0_660 = arith.constant 0 : index
    %680 = vector.load %arg6[%c0_658, %c17_659, %c0_660] : memref<4x18x24xf32, #tpu.memory_space<vmem>>, vector<4x1x24xf32>
    tpu.vector_store %arg6[%c0_658, %c17_659, %c0_660], %679 {strides = array<i32>} : memref<4x18x24xf32, #tpu.memory_space<vmem>>, vector<4x1x24xf32>,
    %c0_661 = arith.constant 0 : index
    %c0_662 = arith.constant 0 : index
    %c0_663 = arith.constant 0 : index
    %681 = vector.load %arg6[%c0_661, %c0_662, %c0_663] : memref<4x18x24xf32, #tpu.memory_space<vmem>>, vector<4x18x24xf32>
    %682 = vector.extract_strided_slice %681 {offsets = [0, 0, 0], sizes = [4, 16, 24], strides = [1, 1, 1]} : vector<4x18x24xf32> to vector<4x16x24xf32>
    %683 = vector.extract_strided_slice %681 {offsets = [0, 1, 0], sizes = [4, 16, 24], strides = [1, 1, 1]} : vector<4x18x24xf32> to vector<4x16x24xf32>
    %684 = arith.addf %682, %683 : vector<4x16x24xf32>
    %685 = vector.extract_strided_slice %681 {offsets = [0, 2, 0], sizes = [4, 16, 24], strides = [1, 1, 1]} : vector<4x18x24xf32> to vector<4x16x24xf32>
    %686 = arith.addf %684, %685 : vector<4x16x24xf32>
    %c0_664 = arith.constant 0 : index
    %c0_665 = arith.constant 0 : index
    %c1_666 = arith.constant 1 : index
    %687 = vector.load %arg7[%c0_664, %c0_665, %c1_666] : memref<4x16x26xf32, #tpu.memory_space<vmem>>, vector<4x16x24xf32>
    tpu.vector_store %arg7[%c0_664, %c0_665, %c1_666], %686 {strides = array<i32>} : memref<4x16x26xf32, #tpu.memory_space<vmem>>, vector<4x16x24xf32>,
    %688 = vector.extract_strided_slice %686 {offsets = [0, 0, 0], sizes = [4, 16, 1], strides = [1, 1, 1]} : vector<4x16x24xf32> to vector<4x16x1xf32>
    %c0_667 = arith.constant 0 : index
    %c0_668 = arith.constant 0 : index
    %c0_669 = arith.constant 0 : index
    %689 = vector.load %arg7[%c0_667, %c0_668, %c0_669] : memref<4x16x26xf32, #tpu.memory_space<vmem>>, vector<4x16x1xf32>
    tpu.vector_store %arg7[%c0_667, %c0_668, %c0_669], %688 {strides = array<i32>} : memref<4x16x26xf32, #tpu.memory_space<vmem>>, vector<4x16x1xf32>,
    %690 = vector.extract_strided_slice %686 {offsets = [0, 0, 23], sizes = [4, 16, 1], strides = [1, 1, 1]} : vector<4x16x24xf32> to vector<4x16x1xf32>
    %c0_670 = arith.constant 0 : index
    %c0_671 = arith.constant 0 : index
    %c25_672 = arith.constant 25 : index
    %691 = vector.load %arg7[%c0_670, %c0_671, %c25_672] : memref<4x16x26xf32, #tpu.memory_space<vmem>>, vector<4x16x1xf32>
    tpu.vector_store %arg7[%c0_670, %c0_671, %c25_672], %690 {strides = array<i32>} : memref<4x16x26xf32, #tpu.memory_space<vmem>>, vector<4x16x1xf32>,
    %c0_673 = arith.constant 0 : index
    %c0_674 = arith.constant 0 : index
    %c0_675 = arith.constant 0 : index
    %692 = vector.load %arg7[%c0_673, %c0_674, %c0_675] : memref<4x16x26xf32, #tpu.memory_space<vmem>>, vector<4x16x26xf32>
    %693 = vector.extract_strided_slice %692 {offsets = [0, 0, 0], sizes = [4, 16, 24], strides = [1, 1, 1]} : vector<4x16x26xf32> to vector<4x16x24xf32>
    %694 = vector.extract_strided_slice %692 {offsets = [0, 0, 1], sizes = [4, 16, 24], strides = [1, 1, 1]} : vector<4x16x26xf32> to vector<4x16x24xf32>
    %695 = arith.addf %693, %694 : vector<4x16x24xf32>
    %696 = vector.extract_strided_slice %692 {offsets = [0, 0, 2], sizes = [4, 16, 24], strides = [1, 1, 1]} : vector<4x16x26xf32> to vector<4x16x24xf32>
    %697 = arith.addf %695, %696 : vector<4x16x24xf32>
    %cst_676 = arith.constant 0.0370370373 : f32
    %698 = vector.broadcast %cst_676 : f32 to vector<4x16x24xf32>
    %699 = arith.mulf %697, %698 : vector<4x16x24xf32>
    %700 = arith.minimumf %314, %349 : vector<4x16x24xf32>
    %701 = arith.addf %314, %349 : vector<4x16x24xf32>
    %702 = arith.minimumf %700, %384 : vector<4x16x24xf32>
    %703 = arith.addf %701, %384 : vector<4x16x24xf32>
    %704 = arith.minimumf %702, %419 : vector<4x16x24xf32>
    %705 = arith.addf %703, %419 : vector<4x16x24xf32>
    %706 = arith.minimumf %704, %454 : vector<4x16x24xf32>
    %707 = arith.addf %705, %454 : vector<4x16x24xf32>
    %708 = arith.minimumf %706, %489 : vector<4x16x24xf32>
    %709 = arith.addf %707, %489 : vector<4x16x24xf32>
    %710 = arith.minimumf %708, %524 : vector<4x16x24xf32>
    %711 = arith.addf %709, %524 : vector<4x16x24xf32>
    %712 = arith.minimumf %710, %559 : vector<4x16x24xf32>
    %713 = arith.addf %711, %559 : vector<4x16x24xf32>
    %714 = arith.minimumf %712, %594 : vector<4x16x24xf32>
    %715 = arith.addf %713, %594 : vector<4x16x24xf32>
    %716 = arith.minimumf %714, %629 : vector<4x16x24xf32>
    %717 = arith.addf %715, %629 : vector<4x16x24xf32>
    %718 = arith.minimumf %716, %664 : vector<4x16x24xf32>
    %719 = arith.addf %717, %664 : vector<4x16x24xf32>
    %720 = arith.minimumf %718, %699 : vector<4x16x24xf32>
    %721 = arith.addf %719, %699 : vector<4x16x24xf32>
    %cst_677 = arith.constant 0.0833333358 : f32
    %722 = vector.broadcast %cst_677 : f32 to vector<4x16x24xf32>
    %723 = arith.mulf %721, %722 : vector<4x16x24xf32>
    %724 = arith.subf %723, %720 : vector<4x16x24xf32>
    %c0_678 = arith.constant 0 : index
    %c0_679 = arith.constant 0 : index
    %c0_680 = arith.constant 0 : index
    %725 = vector.load %arg4[%c0_678, %c0_679, %c0_680] : memref<4x16x24xf32, #tpu.memory_space<vmem>>, vector<4x16x24xf32>
    %726 = arith.addf %725, %724 : vector<4x16x24xf32>
    %c0_681 = arith.constant 0 : index
    %c0_682 = arith.constant 0 : index
    %c0_683 = arith.constant 0 : index
    %727 = vector.load %arg4[%c0_681, %c0_682, %c0_683] : memref<4x16x24xf32, #tpu.memory_space<vmem>>, vector<4x16x24xf32>
    tpu.vector_store %arg4[%c0_681, %c0_682, %c0_683], %726 {strides = array<i32>} : memref<4x16x24xf32, #tpu.memory_space<vmem>>, vector<4x16x24xf32>,
    %c2_i32_684 = arith.constant 2 : i32
    %728 = arith.cmpi eq, %arg1, %c2_i32_684 : i32
    %729 = arith.extui %728 : i1 to i32
    %c0_i32_685 = arith.constant 0 : i32
    %730 = arith.cmpi ne, %729, %c0_i32_685 : i32
    scf.if %730 {
      %c0_686 = arith.constant 0 : index
      %c0_687 = arith.constant 0 : index
      %c0_688 = arith.constant 0 : index
      %731 = vector.load %arg4[%c0_686, %c0_687, %c0_688] : memref<4x16x24xf32, #tpu.memory_space<vmem>>, vector<4x16x24xf32>
      %732 = vector.shape_cast %731 : vector<4x16x24xf32> to vector<1x4x16x24xf32>
      %cst_689 = arith.constant dense<0.000000e+00> : vector<1xf32>
      %733 = vector.multi_reduction <add>, %732, %cst_689 [1, 2, 3] : vector<1x4x16x24xf32> to vector<1xf32>
      %734 = vector.shape_cast %733 : vector<1xf32> to vector<1x1x1x1xf32>
      %735 = vector.extract %734[0, 0, 0, 0] : f32 from vector<1x1x1x1xf32>
      %736 = vector.broadcast %735 : f32 to vector<1x8x128xf32>
      %c0_690 = arith.constant 0 : index
      %c0_691 = arith.constant 0 : index
      %c0_692 = arith.constant 0 : index
      %737 = vector.load %arg3[%c0_690, %c0_691, %c0_692] : memref<1x8x128xf32, #tpu.memory_space<vmem>>, vector<1x8x128xf32>
      tpu.vector_store %arg3[%c0_690, %c0_691, %c0_692], %736 {strides = array<i32>} : memref<1x8x128xf32, #tpu.memory_space<vmem>>, vector<1x8x128xf32>,
    } else {
    }
    return
  }
  func.func @transform_0(%arg0: i32, %arg1: i32) -> (i32, i32, i32, i32) {
    %c0_i32 = arith.constant 0 : i32
    %c0_i32_0 = arith.constant 0 : i32
    %c0_i32_1 = arith.constant 0 : i32
    %c0_i32_2 = arith.constant 0 : i32
    return %arg0, %c0_i32, %c0_i32_0, %c0_i32_1 : i32, i32, i32, i32
  }
  func.func @transform_1(%arg0: i32, %arg1: i32) -> (i32, i32, i32) {
    %c0_i32 = arith.constant 0 : i32
    %c0_i32_0 = arith.constant 0 : i32
    %c0_i32_1 = arith.constant 0 : i32
    return %arg0, %c0_i32, %c0_i32_0 : i32, i32, i32
  }
}

</mosaic_0001>

<llo_original>
// kernel: tpu_custom_call.1
$region0: #{tpu_custom_call.1}
  #allocation0 [shape = 'u32[]', space=smem, size = 0x4, offset = 0x4, fixed_abs, tag = 'smem constant byte address 0x4 - core index']
  #allocation1 [shape = 'u32[144,128]{1,0:T(1,128)}', space=vmem, size = 0x12000, scoped, tag = 'internal scratch']
  #allocation2 [shape = 'f32[4,16,24]{2,1,0:T(8,128)}', space=vmem, size = 0x8000, scoped, tag = 'scratch operand']
  #allocation3 [shape = 'f32[6,6,16,24]{3,2,1,0:T(8,128)}', space=vmem, size = 0x48000, scoped, tag = 'scratch operand']
  #allocation4 [shape = 'f32[4,18,24]{2,1,0:T(8,128)}', space=vmem, size = 0xc000, scoped, tag = 'scratch operand']
  #allocation5 [shape = 'f32[4,16,26]{2,1,0:T(8,128)}', space=vmem, size = 0x8000, scoped, tag = 'scratch operand']
  %s0 = inlined_call_operand.vmem [shape: f32[2,16,20,28], index: 0, kind: input, shape index: {}]
  %s1 = inlined_call_operand.hbm [shape: f32[2,8,128], index: 1, kind: output, shape index: {}]
  %s2 = sld [smem:[#allocation0]]
  $region45: #{tpu_custom_call.1} parent=0
    _
  %s4 = ssub.s32 1, %s2
  %s5 = scalar_select 0, %s4, %s2
  $region1: #{tpu_custom_call.1} parent=0
    #allocation6 [shape = 'u8[8192]{0}', space=vmem, size = 0x2000, scoped, tag = 'output window, operand 0']
    #allocation7 [shape = 's32[2]{0}', space=sflag, size = 0x8, scoped, tag = 'scoped memory for tpu_custom_call.1']
    %6 = vsyncpa [#allocation7], 0
    %s7 = scalar_lea.sflag [#allocation7], 1
    %8 = vsyncpa %s7, 0
    loop: start=0, step=1, limit=8
    $region2: #{tpu_custom_call.1} parent=1 // loop_pre_header
      _
    $region3: #{tpu_custom_call.1} parent=1 // loop_header
      %s10 = sphi 0, %s14
      %p11 = scmp.ge.s32.totalorder %s10, 8
      %s17 = sphi 0, %s29
      %s18 = sphi 0, %s25
      %s19 = sphi 0, %s17
      %s20 = sphi 0, %s18
      %s21 = sphi 0, %s19
      %s22 = sphi 0, %s20
      %s32 = sphi 0, %s34
      %s35 = sphi 0, %s32
      %s36 = sphi 0, %s35
      %s52 = sphi 0, %s36
      %s58 = sphi 0, %s60
      %s61 = sphi 0, %s58
      %s62 = sphi 0, %s61
      %s78 = sphi 0, %s62
    $region4: #{tpu_custom_call.1} parent=1 // loop_header_branch
      %13 = sbr.rel (%p11) target = $region8
    $region5: #{tpu_custom_call.1} parent=1 // loop_body
      %s15 = ssub.s32 %s10, 1
      %s16 = ssub.s32 %s10, 2
      %s23 = sadd.s32 1, %s18
      %p24 = scmp.ge.s32.totalorder %s23, 3
      %s25 = scalar_select %p24, 0, %s23
      %s26 = sadd.s32 1, %s17
      %s27 = scalar_select %p24, %s26, %s17
      %p28 = scmp.ge.s32.totalorder %s27, 2
      %s29 = scalar_select %p28, 0, %s27
      %s30 = ssub.s32 %s17, %s29
      %p31 = scmp.eq.s32.totalorder %s30, 0
      %s33 = sadd.s32 %s32, 1
      %s34 = scalar_select %p31, %s32, %s33
      %p37 = pneg %p31
      %p38 = scmp.eq.s32.totalorder %s10, 5
      %p39 = por %p37, %p38
      %p40 = scmp.ne.s32.totalorder %s32, %s35
      %p41 = scmp.eq.s32.totalorder %s10, 0
      %p42 = por %p40, %p41
      %p43 = scmp.ne.s32.totalorder %s32, %s35
      %p44 = scmp.eq.s32.totalorder %s15, 5
      %p45 = por %p43, %p44
      %p46 = scmp.ne.s32.totalorder %s35, %s36
      %p47 = scmp.eq.s32.totalorder %s15, 0
      %p48 = por %p46, %p47
      %p49 = scmp.ne.s32.totalorder %s35, %s36
      %p50 = scmp.eq.s32.totalorder %s16, 5
      %p51 = por %p49, %p50
      %p53 = scmp.ne.s32.totalorder %s36, %s52
      %p54 = scmp.eq.s32.totalorder %s16, 0
      %p55 = por %p53, %p54
      %s56 = ssub.s32 %s17, %s29
      %p57 = scmp.eq.s32.totalorder %s56, 0
      %s59 = sadd.s32 %s58, 1
      %s60 = scalar_select %p57, %s58, %s59
      %p63 = pneg %p57
      %p64 = scmp.eq.s32.totalorder %s10, 5
      %p65 = por %p63, %p64
      %p66 = scmp.ne.s32.totalorder %s58, %s61
      %p67 = scmp.eq.s32.totalorder %s10, 0
      %p68 = por %p66, %p67
      %p69 = scmp.ne.s32.totalorder %s58, %s61
      %p70 = scmp.eq.s32.totalorder %s15, 5
      %p71 = por %p69, %p70
      %p72 = scmp.ne.s32.totalorder %s61, %s62
      %p73 = scmp.eq.s32.totalorder %s15, 0
      %p74 = por %p72, %p73
      %p75 = scmp.ne.s32.totalorder %s61, %s62
      %p76 = scmp.eq.s32.totalorder %s16, 5
      %p77 = por %p75, %p76
      %p79 = scmp.ne.s32.totalorder %s62, %s78
      %p80 = scmp.eq.s32.totalorder %s16, 0
      %p81 = por %p79, %p80
      %p82 = scmp.le.s32.totalorder 1, %s10
      %p83 = scmp.lt.s32.totalorder %s10, 7
      %p84 = pnand %p82, %p83
      %p85 = pneg %p84
      // Predicated region
      $region9: #{tpu_custom_call.1} parent=5 // pred_check
        _
      $region10: #{tpu_custom_call.1} parent=5 // pred_check_branch
        %87 = sbr.rel (%p84) target = $region12
      $region11: #{tpu_custom_call.1} parent=5 // pred_region
        %s88 = ssub.s32 %s10, 1
      $region12: #{tpu_custom_call.1} parent=5 // pred_fallthru
        _
      %p89 = scmp.lt.s32.totalorder %s10, 6
      // Predicated region
      $region13: #{tpu_custom_call.1} parent=5 // pred_check
        %p90 = pneg %p89
      $region14: #{tpu_custom_call.1} parent=5 // pred_check_branch
        %92 = sbr.rel (%p90) target = $region16
      $region15: #{tpu_custom_call.1} parent=5 // pred_region
        // Predicated region
        $region17: #{tpu_custom_call.1} parent=15 // pred_check
          %p93 = pneg %p42
        $region18: #{tpu_custom_call.1} parent=15 // pred_check_branch
          %95 = sbr.rel (%p93) target = $region20
        $region19: #{tpu_custom_call.1} parent=15 // pred_region
          %p96 = scmp.lt.s32.totalorder %s17, 1
          %s97 = scalar_select %p96, %s17, 1
          %s98 = smul.addr %s97, 48
          %s99 = smul.addr %s98, 8
          %s100 = scalar_lea.vmem %s0, %s99
        $region20: #{tpu_custom_call.1} parent=15 // pred_fallthru
          _
      $region16: #{tpu_custom_call.1} parent=5 // pred_fallthru
        _
      %p101 = scmp.le.s32.totalorder 1, %s10
      %p102 = scmp.lt.s32.totalorder %s10, 7
      %p103 = pnand %p101, %p102
      %p104 = pneg %p103
      // Predicated region
      $region21: #{tpu_custom_call.1} parent=5 // pred_check
        _
      $region22: #{tpu_custom_call.1} parent=5 // pred_check_branch
        %106 = sbr.rel (%p103) target = $region24
      $region23: #{tpu_custom_call.1} parent=5 // pred_region
        %s107 = ssub.s32 %s10, 1
        %p108 = scmp.lt.s32.totalorder %s19, 1
        %s109 = scalar_select %p108, %s19, 1
        %s110 = smul.addr %s109, 48
        %s111 = smul.addr %s110, 8
        %s112 = scalar_lea.vmem %s0, %s111
        %p113 = pneg %p48
        %p114 = pneg %p45
        %p115 = pneg %p74
        %p116 = pneg %p71
        %s117 = sand.u32 %s61, 1
        %s118 = scalar_lea.sflag [#allocation7], %s117
        %s119 = sand.u32 %s61, 1
        %s120 = smul.addr %s119, 8
        %s121 = scalar_lea.vmem [#allocation6], %s120
        %p122 = scmp.lt.s32.totalorder %s19, 1
        %s123 = scalar_select %p122, %s19, 1
        %s124 = smul.addr %s123, 48
        %s125 = smul.addr %s124, 8
        %s126 = scalar_lea.vmem %s0, %s125
        %s127 = smul.u32 %s20, 4
        %p128 = scmp.eq.s32.totalorder %s20, 0
        // Predicated region
        $region25: #{tpu_custom_call.1} parent=23 // pred_check
          %p129 = pneg %p128
        $region26: #{tpu_custom_call.1} parent=23 // pred_check_branch
          %131 = sbr.rel (%p129) target = $region28
        $region27: #{tpu_custom_call.1} parent=23 // pred_region
          %vm132 = vcmask 195584
          %133 = vst.msk [vmem:[#allocation2] sm:$0xff] %vm132, 0.0
          %134 = vst.msk [vmem:[#allocation2 + $0x8] sm:$0xff] %vm132, 0.0
          %135 = vst.msk [vmem:[#allocation2 + $0x10] sm:$0xff] %vm132, 0.0
          %136 = vst.msk [vmem:[#allocation2 + $0x18] sm:$0xff] %vm132, 0.0
          %137 = vst.msk [vmem:[#allocation2 + $0x20] sm:$0xff] %vm132, 0.0
          %138 = vst.msk [vmem:[#allocation2 + $0x28] sm:$0xff] %vm132, 0.0
          %139 = vst.msk [vmem:[#allocation2 + $0x30] sm:$0xff] %vm132, 0.0
          %140 = vst.msk [vmem:[#allocation2 + $0x38] sm:$0xff] %vm132, 0.0
        $region28: #{tpu_custom_call.1} parent=23 // pred_fallthru
          _
        %s141 = ssub.s32 %s127, 1
        %p142 = scmp.gt.s32.totalorder %s141, 0
        %s143 = scalar_select %p142, %s141, 0
        %p144 = scmp.lt.s32.totalorder %s143, 11
        %s145 = scalar_select %p144, %s143, 11
        %s146 = smul.u32 %s145, 24
        %s147 = scalar_lea.vmem %s126, %s146
        %v148 = vld [vmem:[%s147] sm:$0xff]
        %v149 = vld [vmem:[%s147 + $0x8] sm:$0xff]
        %v150 = vld [vmem:[%s147 + $0x10] sm:$0xf]
        %s151 = sadd.s32 %s145, 2
        %s152 = smul.u32 %s151, 24
        %s153 = scalar_lea.vmem %s126, %s152
        %v154 = vld [vmem:[%s153] sm:$0xff]
        %v155 = vld [vmem:[%s153 + $0x8] sm:$0xff]
        %v156 = vld [vmem:[%s153 + $0x10] sm:$0xf]
        %s157 = sadd.s32 %s145, 4
        %s158 = smul.u32 %s157, 24
        %s159 = scalar_lea.vmem %s126, %s158
        %v160 = vld [vmem:[%s159] sm:$0xff]
        %v161 = vld [vmem:[%s159 + $0x8] sm:$0xff]
        %v162 = vld [vmem:[%s159 + $0x10] sm:$0xf]
        %166 = vrot.lane.b32.xlu0 %v148, 126
        %v167 = vpop.permute.xlu0 %166
        %168 = vrot.lane.b32.xlu0 %v149, 126
        %v169 = vpop.permute.xlu0 %168
        %170 = vrot.lane.b32.xlu0 %v150, 126
        %v171 = vpop.permute.xlu0 %170
        %vm175 = vcmask 195586
        %176 = vst.msk [vmem:[#allocation3 - $0x2] sm:$0xfc] %vm175, %v167
        %vm177 = vcmask 195584
        %178 = vst.msk [vmem:[#allocation3 + $0x6] sm:$0xff] %vm177, %v169
        %vm179 = vcmask 189440
        %180 = vst.msk [vmem:[#allocation3 + $0xe] sm:$0x3] %vm179, %v171
        %s181 = scalar_lea.vmem [#allocation3], 96
        %182 = vst.msk [vmem:[%s181 - $0x2] sm:$0xfc] %vm175, %v154
        %183 = vst.msk [vmem:[%s181 + $0x6] sm:$0xff] %vm177, %v155
        %184 = vst.msk [vmem:[%s181 + $0xe] sm:$0x3] %vm179, %v156
        %187 = vrot.lane.b32.xlu0 %v154, 126
        %v188 = vpop.permute.xlu0 %187
        %189 = vrot.lane.b32.xlu0 %v155, 126
        %v190 = vpop.permute.xlu0 %189
        %s193 = scalar_lea.vmem [#allocation3], 192
        %194 = vst.msk [vmem:[%s193] sm:$0xff] %vm177, %v188
        %195 = vst.msk [vmem:[%s193 + $0x8] sm:$0xff] %vm177, %v190
        %197 = vrot.lane.b32.xlu0 %v154, 124
        %v198 = vpop.permute.xlu0 %197
        %199 = vrot.lane.b32.xlu0 %v155, 124
        %v200 = vpop.permute.xlu0 %199
        %201 = vrot.lane.b32.xlu0 %v156, 124
        %v202 = vpop.permute.xlu0 %201
        %s206 = scalar_lea.vmem [#allocation3], 288
        %207 = vst.msk [vmem:[%s206 - $0x2] sm:$0xfc] %vm175, %v198
        %208 = vst.msk [vmem:[%s206 + $0x6] sm:$0xff] %vm177, %v200
        %209 = vst.msk [vmem:[%s206 + $0xe] sm:$0x3] %vm179, %v202
        %213 = vrot.lane.b32.xlu0 %v160, 126
        %v214 = vpop.permute.xlu0 %213
        %215 = vrot.lane.b32.xlu0 %v161, 126
        %v216 = vpop.permute.xlu0 %215
        %217 = vrot.lane.b32.xlu0 %v162, 126
        %v218 = vpop.permute.xlu0 %217
        %s222 = scalar_lea.vmem [#allocation3], 384
        %223 = vst.msk [vmem:[%s222 - $0x2] sm:$0xfc] %vm175, %v214
        %224 = vst.msk [vmem:[%s222 + $0x6] sm:$0xff] %vm177, %v216
        %225 = vst.msk [vmem:[%s222 + $0xe] sm:$0x3] %vm179, %v218
        %226 = vrot.lane.b32.xlu0 %v156, 126
        %v227 = vpop.permute.xlu0 %226
        %s229 = scalar_lea.vmem [#allocation3], 480
        %vm230 = vcmask 195588
        %231 = vst.msk [vmem:[%s229 - $0x4] sm:$0xf0] %vm230, %v188
        %232 = vst.msk [vmem:[%s229 + $0x4] sm:$0xff] %vm177, %v190
        %vm233 = vcmask 191488
        %234 = vst.msk [vmem:[%s229 + $0xc] sm:$0xf] %vm233, %v227
        %p235 = scmp.gt.s32.totalorder %s127, 0
        %s236 = scalar_select %p235, %s127, 0
        %p237 = scmp.lt.s32.totalorder %s236, 11
        %s238 = scalar_select %p237, %s236, 11
        %s239 = smul.u32 %s238, 24
        %s240 = scalar_lea.vmem %s126, %s239
        %v241 = vld [vmem:[%s240] sm:$0xff]
        %v242 = vld [vmem:[%s240 + $0x8] sm:$0xff]
        %v243 = vld [vmem:[%s240 + $0x10] sm:$0xf]
        %s244 = sadd.s32 %s238, 2
        %s245 = smul.u32 %s244, 24
        %s246 = scalar_lea.vmem %s126, %s245
        %v247 = vld [vmem:[%s246] sm:$0xff]
        %v248 = vld [vmem:[%s246 + $0x8] sm:$0xff]
        %v249 = vld [vmem:[%s246 + $0x10] sm:$0xf]
        %s250 = sadd.s32 %s238, 4
        %s251 = smul.u32 %s250, 24
        %s252 = scalar_lea.vmem %s126, %s251
        %v253 = vld [vmem:[%s252] sm:$0xff]
        %v254 = vld [vmem:[%s252 + $0x8] sm:$0xff]
        %v255 = vld [vmem:[%s252 + $0x10] sm:$0xf]
        %259 = vrot.lane.b32.xlu0 %v241, 126
        %v260 = vpop.permute.xlu0 %259
        %261 = vrot.lane.b32.xlu0 %v242, 126
        %v262 = vpop.permute.xlu0 %261
        %263 = vrot.lane.b32.xlu0 %v243, 126
        %v264 = vpop.permute.xlu0 %263
        %s268 = scalar_lea.vmem [#allocation3], 16
        %269 = vst.msk [vmem:[%s268 - $0x2] sm:$0xfc] %vm175, %v260
        %270 = vst.msk [vmem:[%s268 + $0x6] sm:$0xff] %vm177, %v262
        %271 = vst.msk [vmem:[%s268 + $0xe] sm:$0x3] %vm179, %v264
        %s272 = scalar_lea.vmem [#allocation3], 112
        %273 = vst.msk [vmem:[%s272 - $0x2] sm:$0xfc] %vm175, %v247
        %274 = vst.msk [vmem:[%s272 + $0x6] sm:$0xff] %vm177, %v248
        %275 = vst.msk [vmem:[%s272 + $0xe] sm:$0x3] %vm179, %v249
        %278 = vrot.lane.b32.xlu0 %v247, 126
        %v279 = vpop.permute.xlu0 %278
        %280 = vrot.lane.b32.xlu0 %v248, 126
        %v281 = vpop.permute.xlu0 %280
        %s284 = scalar_lea.vmem [#allocation3], 208
        %285 = vst.msk [vmem:[%s284] sm:$0xff] %vm177, %v279
        %286 = vst.msk [vmem:[%s284 + $0x8] sm:$0xff] %vm177, %v281
        %288 = vrot.lane.b32.xlu0 %v247, 124
        %v289 = vpop.permute.xlu0 %288
        %290 = vrot.lane.b32.xlu0 %v248, 124
        %v291 = vpop.permute.xlu0 %290
        %292 = vrot.lane.b32.xlu0 %v249, 124
        %v293 = vpop.permute.xlu0 %292
        %s297 = scalar_lea.vmem [#allocation3], 304
        %298 = vst.msk [vmem:[%s297 - $0x2] sm:$0xfc] %vm175, %v289
        %299 = vst.msk [vmem:[%s297 + $0x6] sm:$0xff] %vm177, %v291
        %300 = vst.msk [vmem:[%s297 + $0xe] sm:$0x3] %vm179, %v293
        %304 = vrot.lane.b32.xlu0 %v253, 126
        %v305 = vpop.permute.xlu0 %304
        %306 = vrot.lane.b32.xlu0 %v254, 126
        %v307 = vpop.permute.xlu0 %306
        %308 = vrot.lane.b32.xlu0 %v255, 126
        %v309 = vpop.permute.xlu0 %308
        %s313 = scalar_lea.vmem [#allocation3], 400
        %314 = vst.msk [vmem:[%s313 - $0x2] sm:$0xfc] %vm175, %v305
        %315 = vst.msk [vmem:[%s313 + $0x6] sm:$0xff] %vm177, %v307
        %316 = vst.msk [vmem:[%s313 + $0xe] sm:$0x3] %vm179, %v309
        %317 = vrot.lane.b32.xlu0 %v249, 126
        %v318 = vpop.permute.xlu0 %317
        %s320 = scalar_lea.vmem [#allocation3], 496
        %321 = vst.msk [vmem:[%s320 - $0x4] sm:$0xf0] %vm230, %v279
        %322 = vst.msk [vmem:[%s320 + $0x4] sm:$0xff] %vm177, %v281
        %323 = vst.msk [vmem:[%s320 + $0xc] sm:$0xf] %vm233, %v318
        %s324 = sadd.s32 %s127, 1
        %p325 = scmp.gt.s32.totalorder %s324, 0
        %s326 = scalar_select %p325, %s324, 0
        %p327 = scmp.lt.s32.totalorder %s326, 11
        %s328 = scalar_select %p327, %s326, 11
        %s329 = smul.u32 %s328, 24
        %s330 = scalar_lea.vmem %s126, %s329
        %v331 = vld [vmem:[%s330] sm:$0xff]
        %v332 = vld [vmem:[%s330 + $0x8] sm:$0xff]
        %v333 = vld [vmem:[%s330 + $0x10] sm:$0xf]
        %s334 = sadd.s32 %s328, 2
        %s335 = smul.u32 %s334, 24
        %s336 = scalar_lea.vmem %s126, %s335
        %v337 = vld [vmem:[%s336] sm:$0xff]
        %v338 = vld [vmem:[%s336 + $0x8] sm:$0xff]
        %v339 = vld [vmem:[%s336 + $0x10] sm:$0xf]
        %s340 = sadd.s32 %s328, 4
        %s341 = smul.u32 %s340, 24
        %s342 = scalar_lea.vmem %s126, %s341
        %v343 = vld [vmem:[%s342] sm:$0xff]
        %v344 = vld [vmem:[%s342 + $0x8] sm:$0xff]
        %v345 = vld [vmem:[%s342 + $0x10] sm:$0xf]
        %349 = vrot.lane.b32.xlu0 %v331, 126
        %v350 = vpop.permute.xlu0 %349
        %351 = vrot.lane.b32.xlu0 %v332, 126
        %v352 = vpop.permute.xlu0 %351
        %353 = vrot.lane.b32.xlu0 %v333, 126
        %v354 = vpop.permute.xlu0 %353
        %s358 = scalar_lea.vmem [#allocation3], 32
        %359 = vst.msk [vmem:[%s358 - $0x2] sm:$0xfc] %vm175, %v350
        %360 = vst.msk [vmem:[%s358 + $0x6] sm:$0xff] %vm177, %v352
        %361 = vst.msk [vmem:[%s358 + $0xe] sm:$0x3] %vm179, %v354
        %s362 = scalar_lea.vmem [#allocation3], 128
        %363 = vst.msk [vmem:[%s362 - $0x2] sm:$0xfc] %vm175, %v337
        %364 = vst.msk [vmem:[%s362 + $0x6] sm:$0xff] %vm177, %v338
        %365 = vst.msk [vmem:[%s362 + $0xe] sm:$0x3] %vm179, %v339
        %368 = vrot.lane.b32.xlu0 %v337, 126
        %v369 = vpop.permute.xlu0 %368
        %370 = vrot.lane.b32.xlu0 %v338, 126
        %v371 = vpop.permute.xlu0 %370
        %s374 = scalar_lea.vmem [#allocation3], 224
        %375 = vst.msk [vmem:[%s374] sm:$0xff] %vm177, %v369
        %376 = vst.msk [vmem:[%s374 + $0x8] sm:$0xff] %vm177, %v371
        %378 = vrot.lane.b32.xlu0 %v337, 124
        %v379 = vpop.permute.xlu0 %378
        %380 = vrot.lane.b32.xlu0 %v338, 124
        %v381 = vpop.permute.xlu0 %380
        %382 = vrot.lane.b32.xlu0 %v339, 124
        %v383 = vpop.permute.xlu0 %382
        %s387 = scalar_lea.vmem [#allocation3], 320
        %388 = vst.msk [vmem:[%s387 - $0x2] sm:$0xfc] %vm175, %v379
        %389 = vst.msk [vmem:[%s387 + $0x6] sm:$0xff] %vm177, %v381
        %390 = vst.msk [vmem:[%s387 + $0xe] sm:$0x3] %vm179, %v383
        %394 = vrot.lane.b32.xlu0 %v343, 126
        %v395 = vpop.permute.xlu0 %394
        %396 = vrot.lane.b32.xlu0 %v344, 126
        %v397 = vpop.permute.xlu0 %396
        %398 = vrot.lane.b32.xlu0 %v345, 126
        %v399 = vpop.permute.xlu0 %398
        %s403 = scalar_lea.vmem [#allocation3], 416
        %404 = vst.msk [vmem:[%s403 - $0x2] sm:$0xfc] %vm175, %v395
        %405 = vst.msk [vmem:[%s403 + $0x6] sm:$0xff] %vm177, %v397
        %406 = vst.msk [vmem:[%s403 + $0xe] sm:$0x3] %vm179, %v399
        %407 = vrot.lane.b32.xlu0 %v339, 126
        %v408 = vpop.permute.xlu0 %407
        %s410 = scalar_lea.vmem [#allocation3], 512
        %411 = vst.msk [vmem:[%s410 - $0x4] sm:$0xf0] %vm230, %v369
        %412 = vst.msk [vmem:[%s410 + $0x4] sm:$0xff] %vm177, %v371
        %413 = vst.msk [vmem:[%s410 + $0xc] sm:$0xf] %vm233, %v408
        %s414 = sadd.s32 %s127, 2
        %p415 = scmp.gt.s32.totalorder %s414, 0
        %s416 = scalar_select %p415, %s414, 0
        %p417 = scmp.lt.s32.totalorder %s416, 11
        %s418 = scalar_select %p417, %s416, 11
        %s419 = smul.u32 %s418, 24
        %s420 = scalar_lea.vmem %s126, %s419
        %v421 = vld [vmem:[%s420] sm:$0xff]
        %v422 = vld [vmem:[%s420 + $0x8] sm:$0xff]
        %v423 = vld [vmem:[%s420 + $0x10] sm:$0xf]
        %s424 = sadd.s32 %s418, 2
        %s425 = smul.u32 %s424, 24
        %s426 = scalar_lea.vmem %s126, %s425
        %v427 = vld [vmem:[%s426] sm:$0xff]
        %v428 = vld [vmem:[%s426 + $0x8] sm:$0xff]
        %v429 = vld [vmem:[%s426 + $0x10] sm:$0xf]
        %s430 = sadd.s32 %s418, 4
        %s431 = smul.u32 %s430, 24
        %s432 = scalar_lea.vmem %s126, %s431
        %v433 = vld [vmem:[%s432] sm:$0xff]
        %v434 = vld [vmem:[%s432 + $0x8] sm:$0xff]
        %v435 = vld [vmem:[%s432 + $0x10] sm:$0xf]
        %439 = vrot.lane.b32.xlu0 %v421, 126
        %v440 = vpop.permute.xlu0 %439
        %441 = vrot.lane.b32.xlu0 %v422, 126
        %v442 = vpop.permute.xlu0 %441
        %443 = vrot.lane.b32.xlu0 %v423, 126
        %v444 = vpop.permute.xlu0 %443
        %s448 = scalar_lea.vmem [#allocation3], 48
        %449 = vst.msk [vmem:[%s448 - $0x2] sm:$0xfc] %vm175, %v440
        %450 = vst.msk [vmem:[%s448 + $0x6] sm:$0xff] %vm177, %v442
        %451 = vst.msk [vmem:[%s448 + $0xe] sm:$0x3] %vm179, %v444
        %s452 = scalar_lea.vmem [#allocation3], 144
        %453 = vst.msk [vmem:[%s452 - $0x2] sm:$0xfc] %vm175, %v427
        %454 = vst.msk [vmem:[%s452 + $0x6] sm:$0xff] %vm177, %v428
        %455 = vst.msk [vmem:[%s452 + $0xe] sm:$0x3] %vm179, %v429
        %458 = vrot.lane.b32.xlu0 %v427, 126
        %v459 = vpop.permute.xlu0 %458
        %460 = vrot.lane.b32.xlu0 %v428, 126
        %v461 = vpop.permute.xlu0 %460
        %s464 = scalar_lea.vmem [#allocation3], 240
        %465 = vst.msk [vmem:[%s464] sm:$0xff] %vm177, %v459
        %466 = vst.msk [vmem:[%s464 + $0x8] sm:$0xff] %vm177, %v461
        %468 = vrot.lane.b32.xlu0 %v427, 124
        %v469 = vpop.permute.xlu0 %468
        %470 = vrot.lane.b32.xlu0 %v428, 124
        %v471 = vpop.permute.xlu0 %470
        %472 = vrot.lane.b32.xlu0 %v429, 124
        %v473 = vpop.permute.xlu0 %472
        %s477 = scalar_lea.vmem [#allocation3], 336
        %478 = vst.msk [vmem:[%s477 - $0x2] sm:$0xfc] %vm175, %v469
        %479 = vst.msk [vmem:[%s477 + $0x6] sm:$0xff] %vm177, %v471
        %480 = vst.msk [vmem:[%s477 + $0xe] sm:$0x3] %vm179, %v473
        %484 = vrot.lane.b32.xlu0 %v433, 126
        %v485 = vpop.permute.xlu0 %484
        %486 = vrot.lane.b32.xlu0 %v434, 126
        %v487 = vpop.permute.xlu0 %486
        %488 = vrot.lane.b32.xlu0 %v435, 126
        %v489 = vpop.permute.xlu0 %488
        %s493 = scalar_lea.vmem [#allocation3], 432
        %494 = vst.msk [vmem:[%s493 - $0x2] sm:$0xfc] %vm175, %v485
        %495 = vst.msk [vmem:[%s493 + $0x6] sm:$0xff] %vm177, %v487
        %496 = vst.msk [vmem:[%s493 + $0xe] sm:$0x3] %vm179, %v489
        %497 = vrot.lane.b32.xlu0 %v429, 126
        %v498 = vpop.permute.xlu0 %497
        %s500 = scalar_lea.vmem [#allocation3], 528
        %501 = vst.msk [vmem:[%s500 - $0x4] sm:$0xf0] %vm230, %v459
        %502 = vst.msk [vmem:[%s500 + $0x4] sm:$0xff] %vm177, %v461
        %503 = vst.msk [vmem:[%s500 + $0xc] sm:$0xf] %vm233, %v498
        %s504 = sadd.s32 %s127, 3
        %p505 = scmp.gt.s32.totalorder %s504, 0
        %s506 = scalar_select %p505, %s504, 0
        %p507 = scmp.lt.s32.totalorder %s506, 11
        %s508 = scalar_select %p507, %s506, 11
        %s509 = smul.u32 %s508, 24
        %s510 = scalar_lea.vmem %s126, %s509
        %v511 = vld [vmem:[%s510] sm:$0xff]
        %v512 = vld [vmem:[%s510 + $0x8] sm:$0xff]
        %v513 = vld [vmem:[%s510 + $0x10] sm:$0xf]
        %s514 = sadd.s32 %s508, 2
        %s515 = smul.u32 %s514, 24
        %s516 = scalar_lea.vmem %s126, %s515
        %v517 = vld [vmem:[%s516] sm:$0xff]
        %v518 = vld [vmem:[%s516 + $0x8] sm:$0xff]
        %v519 = vld [vmem:[%s516 + $0x10] sm:$0xf]
        %s520 = sadd.s32 %s508, 4
        %s521 = smul.u32 %s520, 24
        %s522 = scalar_lea.vmem %s126, %s521
        %v523 = vld [vmem:[%s522] sm:$0xff]
        %v524 = vld [vmem:[%s522 + $0x8] sm:$0xff]
        %v525 = vld [vmem:[%s522 + $0x10] sm:$0xf]
        %529 = vrot.lane.b32.xlu0 %v511, 126
        %v530 = vpop.permute.xlu0 %529
        %531 = vrot.lane.b32.xlu0 %v512, 126
        %v532 = vpop.permute.xlu0 %531
        %533 = vrot.lane.b32.xlu0 %v513, 126
        %v534 = vpop.permute.xlu0 %533
        %s538 = scalar_lea.vmem [#allocation3], 64
        %539 = vst.msk [vmem:[%s538 - $0x2] sm:$0xfc] %vm175, %v530
        %540 = vst.msk [vmem:[%s538 + $0x6] sm:$0xff] %vm177, %v532
        %541 = vst.msk [vmem:[%s538 + $0xe] sm:$0x3] %vm179, %v534
        %s542 = scalar_lea.vmem [#allocation3], 160
        %543 = vst.msk [vmem:[%s542 - $0x2] sm:$0xfc] %vm175, %v517
        %544 = vst.msk [vmem:[%s542 + $0x6] sm:$0xff] %vm177, %v518
        %545 = vst.msk [vmem:[%s542 + $0xe] sm:$0x3] %vm179, %v519
        %548 = vrot.lane.b32.xlu0 %v517, 126
        %v549 = vpop.permute.xlu0 %548
        %550 = vrot.lane.b32.xlu0 %v518, 126
        %v551 = vpop.permute.xlu0 %550
        %s554 = scalar_lea.vmem [#allocation3], 256
        %555 = vst.msk [vmem:[%s554] sm:$0xff] %vm177, %v549
        %556 = vst.msk [vmem:[%s554 + $0x8] sm:$0xff] %vm177, %v551
        %558 = vrot.lane.b32.xlu0 %v517, 124
        %v559 = vpop.permute.xlu0 %558
        %560 = vrot.lane.b32.xlu0 %v518, 124
        %v561 = vpop.permute.xlu0 %560
        %562 = vrot.lane.b32.xlu0 %v519, 124
        %v563 = vpop.permute.xlu0 %562
        %s567 = scalar_lea.vmem [#allocation3], 352
        %568 = vst.msk [vmem:[%s567 - $0x2] sm:$0xfc] %vm175, %v559
        %569 = vst.msk [vmem:[%s567 + $0x6] sm:$0xff] %vm177, %v561
        %570 = vst.msk [vmem:[%s567 + $0xe] sm:$0x3] %vm179, %v563
        %574 = vrot.lane.b32.xlu0 %v523, 126
        %v575 = vpop.permute.xlu0 %574
        %576 = vrot.lane.b32.xlu0 %v524, 126
        %v577 = vpop.permute.xlu0 %576
        %578 = vrot.lane.b32.xlu0 %v525, 126
        %v579 = vpop.permute.xlu0 %578
        %s583 = scalar_lea.vmem [#allocation3], 448
        %584 = vst.msk [vmem:[%s583 - $0x2] sm:$0xfc] %vm175, %v575
        %585 = vst.msk [vmem:[%s583 + $0x6] sm:$0xff] %vm177, %v577
        %586 = vst.msk [vmem:[%s583 + $0xe] sm:$0x3] %vm179, %v579
        %587 = vrot.lane.b32.xlu0 %v519, 126
        %v588 = vpop.permute.xlu0 %587
        %s590 = scalar_lea.vmem [#allocation3], 544
        %591 = vst.msk [vmem:[%s590 - $0x4] sm:$0xf0] %vm230, %v549
        %592 = vst.msk [vmem:[%s590 + $0x4] sm:$0xff] %vm177, %v551
        %593 = vst.msk [vmem:[%s590 + $0xc] sm:$0xf] %vm233, %v588
        %s594 = sadd.s32 %s127, 4
        %p595 = scmp.gt.s32.totalorder %s594, 0
        %s596 = scalar_select %p595, %s594, 0
        %p597 = scmp.lt.s32.totalorder %s596, 11
        %s598 = scalar_select %p597, %s596, 11
        %s599 = smul.u32 %s598, 24
        %s600 = scalar_lea.vmem %s126, %s599
        %v601 = vld [vmem:[%s600] sm:$0xff]
        %v602 = vld [vmem:[%s600 + $0x8] sm:$0xff]
        %v603 = vld [vmem:[%s600 + $0x10] sm:$0xf]
        %s604 = sadd.s32 %s598, 2
        %s605 = smul.u32 %s604, 24
        %s606 = scalar_lea.vmem %s126, %s605
        %v607 = vld [vmem:[%s606] sm:$0xff]
        %v608 = vld [vmem:[%s606 + $0x8] sm:$0xff]
        %v609 = vld [vmem:[%s606 + $0x10] sm:$0xf]
        %s610 = sadd.s32 %s598, 4
        %s611 = smul.u32 %s610, 24
        %s612 = scalar_lea.vmem %s126, %s611
        %v613 = vld [vmem:[%s612] sm:$0xff]
        %v614 = vld [vmem:[%s612 + $0x8] sm:$0xff]
        %v615 = vld [vmem:[%s612 + $0x10] sm:$0xf]
        %619 = vrot.lane.b32.xlu0 %v601, 126
        %v620 = vpop.permute.xlu0 %619
        %621 = vrot.lane.b32.xlu0 %v602, 126
        %v622 = vpop.permute.xlu0 %621
        %623 = vrot.lane.b32.xlu0 %v603, 126
        %v624 = vpop.permute.xlu0 %623
        %s628 = scalar_lea.vmem [#allocation3], 80
        %629 = vst.msk [vmem:[%s628 - $0x2] sm:$0xfc] %vm175, %v620
        %630 = vst.msk [vmem:[%s628 + $0x6] sm:$0xff] %vm177, %v622
        %631 = vst.msk [vmem:[%s628 + $0xe] sm:$0x3] %vm179, %v624
        %s632 = scalar_lea.vmem [#allocation3], 176
        %633 = vst.msk [vmem:[%s632 - $0x2] sm:$0xfc] %vm175, %v607
        %634 = vst.msk [vmem:[%s632 + $0x6] sm:$0xff] %vm177, %v608
        %635 = vst.msk [vmem:[%s632 + $0xe] sm:$0x3] %vm179, %v609
        %638 = vrot.lane.b32.xlu0 %v607, 126
        %v639 = vpop.permute.xlu0 %638
        %640 = vrot.lane.b32.xlu0 %v608, 126
        %v641 = vpop.permute.xlu0 %640
        %s644 = scalar_lea.vmem [#allocation3], 272
        %645 = vst.msk [vmem:[%s644] sm:$0xff] %vm177, %v639
        %646 = vst.msk [vmem:[%s644 + $0x8] sm:$0xff] %vm177, %v641
        %648 = vrot.lane.b32.xlu0 %v607, 124
        %v649 = vpop.permute.xlu0 %648
        %650 = vrot.lane.b32.xlu0 %v608, 124
        %v651 = vpop.permute.xlu0 %650
        %652 = vrot.lane.b32.xlu0 %v609, 124
        %v653 = vpop.permute.xlu0 %652
        %s657 = scalar_lea.vmem [#allocation3], 368
        %658 = vst.msk [vmem:[%s657 - $0x2] sm:$0xfc] %vm175, %v649
        %659 = vst.msk [vmem:[%s657 + $0x6] sm:$0xff] %vm177, %v651
        %660 = vst.msk [vmem:[%s657 + $0xe] sm:$0x3] %vm179, %v653
        %664 = vrot.lane.b32.xlu0 %v613, 126
        %v665 = vpop.permute.xlu0 %664
        %666 = vrot.lane.b32.xlu0 %v614, 126
        %v667 = vpop.permute.xlu0 %666
        %668 = vrot.lane.b32.xlu0 %v615, 126
        %v669 = vpop.permute.xlu0 %668
        %s673 = scalar_lea.vmem [#allocation3], 464
        %674 = vst.msk [vmem:[%s673 - $0x2] sm:$0xfc] %vm175, %v665
        %675 = vst.msk [vmem:[%s673 + $0x6] sm:$0xff] %vm177, %v667
        %676 = vst.msk [vmem:[%s673 + $0xe] sm:$0x3] %vm179, %v669
        %677 = vrot.lane.b32.xlu0 %v609, 126
        %v678 = vpop.permute.xlu0 %677
        %s680 = scalar_lea.vmem [#allocation3], 560
        %681 = vst.msk [vmem:[%s680 - $0x4] sm:$0xf0] %vm230, %v639
        %682 = vst.msk [vmem:[%s680 + $0x4] sm:$0xff] %vm177, %v641
        %683 = vst.msk [vmem:[%s680 + $0xc] sm:$0xf] %vm233, %v678
        %v684 = vld [vmem:[%s181] sm:$0xff]
        %v685 = vld [vmem:[%s181 + $0x8] sm:$0xff]
        %v686 = vld [vmem:[%s181 + $0x10] sm:$0xff]
        %v687 = vld [vmem:[%s181 + $0x18] sm:$0xff]
        %v688 = vld [vmem:[%s181 + $0x20] sm:$0xff]
        %v689 = vld [vmem:[%s181 + $0x28] sm:$0xff]
        %v690 = vld [vmem:[%s181 + $0x30] sm:$0xff]
        %v691 = vld [vmem:[%s181 + $0x38] sm:$0xff]
        %v692 = vld [vmem:[%s181 + $0x40] sm:$0xff]
        %v693 = vld [vmem:[%s181 + $0x48] sm:$0xff]
        %v694 = vld [vmem:[%s181 + $0x50] sm:$0xff]
        %v695 = vld [vmem:[%s181 + $0x58] sm:$0xff]
        %v696 = vld [vmem:[#allocation3] sm:$0xff]
        %v697 = vld [vmem:[#allocation3 + $0x8] sm:$0xff]
        %v698 = vld [vmem:[#allocation3 + $0x10] sm:$0xff]
        %v699 = vld [vmem:[#allocation3 + $0x18] sm:$0xff]
        %v700 = vld [vmem:[#allocation3 + $0x20] sm:$0xff]
        %v701 = vld [vmem:[#allocation3 + $0x28] sm:$0xff]
        %v702 = vld [vmem:[#allocation3 + $0x30] sm:$0xff]
        %v703 = vld [vmem:[#allocation3 + $0x38] sm:$0xff]
        %v704 = vld [vmem:[#allocation3 + $0x40] sm:$0xff]
        %v705 = vld [vmem:[#allocation3 + $0x48] sm:$0xff]
        %v706 = vld [vmem:[#allocation3 + $0x50] sm:$0xff]
        %v707 = vld [vmem:[#allocation3 + $0x58] sm:$0xff]
        %v708 = vsub.f32 %v684, %v696
        %v709 = vsub.f32 %v685, %v697
        %v710 = vsub.f32 %v686, %v698
        %v711 = vsub.f32 %v687, %v699
        %v712 = vsub.f32 %v688, %v700
        %v713 = vsub.f32 %v689, %v701
        %v714 = vsub.f32 %v690, %v702
        %v715 = vsub.f32 %v691, %v703
        %v716 = vsub.f32 %v692, %v704
        %v717 = vsub.f32 %v693, %v705
        %v718 = vsub.f32 %v694, %v706
        %v719 = vsub.f32 %v695, %v707
        %v720 = vmul.f32 %v708, %v708
        %v721 = vmul.f32 %v709, %v709
        %v722 = vmul.f32 %v710, %v710
        %v723 = vmul.f32 %v711, %v711
        %v724 = vmul.f32 %v712, %v712
        %v725 = vmul.f32 %v713, %v713
        %v726 = vmul.f32 %v714, %v714
        %v727 = vmul.f32 %v715, %v715
        %v728 = vmul.f32 %v716, %v716
        %v729 = vmul.f32 %v717, %v717
        %v730 = vmul.f32 %v718, %v718
        %v731 = vmul.f32 %v719, %v719
        %v732 = vadd.f32 %v720, %v722
        %v733 = vadd.f32 %v721, %v723
        %v734 = vadd.f32 %v722, %v724
        %v735 = vadd.f32 %v723, %v725
        %v736 = vadd.f32 %v724, %v726
        %v737 = vadd.f32 %v725, %v727
        %v738 = vadd.f32 %v726, %v728
        %v739 = vadd.f32 %v727, %v729
        %v740 = vadd.f32 %v732, %v724
        %v741 = vadd.f32 %v733, %v725
        %v742 = vadd.f32 %v734, %v726
        %v743 = vadd.f32 %v735, %v727
        %v744 = vadd.f32 %v736, %v728
        %v745 = vadd.f32 %v737, %v729
        %v746 = vadd.f32 %v738, %v730
        %v747 = vadd.f32 %v739, %v731
        %748 = vst.msk [vmem:[#allocation4 + $0x1] sm:$0xff] %vm177, %v740
        %749 = vst.msk [vmem:[#allocation4 + $0x9] sm:$0xff] %vm177, %v741
        %750 = vst.msk [vmem:[#allocation4 + $0x19] sm:$0xff] %vm177, %v742
        %751 = vst.msk [vmem:[#allocation4 + $0x21] sm:$0xff] %vm177, %v743
        %752 = vst.msk [vmem:[#allocation4 + $0x31] sm:$0xff] %vm177, %v744
        %753 = vst.msk [vmem:[#allocation4 + $0x39] sm:$0xff] %vm177, %v745
        %754 = vst.msk [vmem:[#allocation4 + $0x49] sm:$0xff] %vm177, %v746
        %755 = vst.msk [vmem:[#allocation4 + $0x51] sm:$0xff] %vm177, %v747
        %vm756 = vcmask 188416
        %757 = vst.msk [vmem:[#allocation4] sm:$0x1] %vm756, %v740
        %758 = vst.msk [vmem:[#allocation4 + $0x18] sm:$0x1] %vm756, %v742
        %759 = vst.msk [vmem:[#allocation4 + $0x30] sm:$0x1] %vm756, %v744
        %760 = vst.msk [vmem:[#allocation4 + $0x48] sm:$0x1] %vm756, %v746
        %vm761 = vcmask 195591
        %762 = vst.msk [vmem:[#allocation4 + $0xa] sm:$0x80] %vm761, %v741
        %763 = vst.msk [vmem:[#allocation4 + $0x22] sm:$0x80] %vm761, %v743
        %764 = vst.msk [vmem:[#allocation4 + $0x3a] sm:$0x80] %vm761, %v745
        %765 = vst.msk [vmem:[#allocation4 + $0x52] sm:$0x80] %vm761, %v747
        %v766 = vld [vmem:[#allocation4] sm:$0xff]
        %v767 = vld [vmem:[#allocation4 + $0x8] sm:$0xff]
        %v768 = vld [vmem:[#allocation4 + $0x10] sm:$0x3]
        %v769 = vld [vmem:[#allocation4 + $0x18] sm:$0xff]
        %v770 = vld [vmem:[#allocation4 + $0x20] sm:$0xff]
        %v771 = vld [vmem:[#allocation4 + $0x28] sm:$0x3]
        %v772 = vld [vmem:[#allocation4 + $0x30] sm:$0xff]
        %v773 = vld [vmem:[#allocation4 + $0x38] sm:$0xff]
        %v774 = vld [vmem:[#allocation4 + $0x40] sm:$0x3]
        %v775 = vld [vmem:[#allocation4 + $0x48] sm:$0xff]
        %v776 = vld [vmem:[#allocation4 + $0x50] sm:$0xff]
        %v777 = vld [vmem:[#allocation4 + $0x58] sm:$0x3]
        %vm790 = vcmask 1046528
        %v791 = vrot.slane %v766, 1
        %v792 = vrot.slane %v767, 1
        %v793 = vsel %vm790, %v791, %v792
        %v794 = vrot.slane %v768, 1
        %v795 = vsel %vm790, %v792, %v794
        %v796 = vrot.slane %v769, 1
        %v797 = vrot.slane %v770, 1
        %v798 = vsel %vm790, %v796, %v797
        %v799 = vrot.slane %v771, 1
        %v800 = vsel %vm790, %v797, %v799
        %v801 = vrot.slane %v772, 1
        %v802 = vrot.slane %v773, 1
        %v803 = vsel %vm790, %v801, %v802
        %v804 = vrot.slane %v774, 1
        %v805 = vsel %vm790, %v802, %v804
        %v806 = vrot.slane %v775, 1
        %v807 = vrot.slane %v776, 1
        %v808 = vsel %vm790, %v806, %v807
        %v809 = vrot.slane %v777, 1
        %v810 = vsel %vm790, %v807, %v809
        %v819 = vadd.f32 %v766, %v793
        %v820 = vadd.f32 %v767, %v795
        %v821 = vadd.f32 %v769, %v798
        %v822 = vadd.f32 %v770, %v800
        %v823 = vadd.f32 %v772, %v803
        %v824 = vadd.f32 %v773, %v805
        %v825 = vadd.f32 %v775, %v808
        %v826 = vadd.f32 %v776, %v810
        %vm827 = vcmask 1045504
        %v828 = vrot.slane %v766, 2
        %v829 = vrot.slane %v767, 2
        %v830 = vsel %vm827, %v828, %v829
        %v831 = vrot.slane %v768, 2
        %v832 = vsel %vm827, %v829, %v831
        %v833 = vrot.slane %v769, 2
        %v834 = vrot.slane %v770, 2
        %v835 = vsel %vm827, %v833, %v834
        %v836 = vrot.slane %v771, 2
        %v837 = vsel %vm827, %v834, %v836
        %v838 = vrot.slane %v772, 2
        %v839 = vrot.slane %v773, 2
        %v840 = vsel %vm827, %v838, %v839
        %v841 = vrot.slane %v774, 2
        %v842 = vsel %vm827, %v839, %v841
        %v843 = vrot.slane %v775, 2
        %v844 = vrot.slane %v776, 2
        %v845 = vsel %vm827, %v843, %v844
        %v846 = vrot.slane %v777, 2
        %v847 = vsel %vm827, %v844, %v846
        %v856 = vadd.f32 %v819, %v830
        %v857 = vadd.f32 %v820, %v832
        %v858 = vadd.f32 %v821, %v835
        %v859 = vadd.f32 %v822, %v837
        %v860 = vadd.f32 %v823, %v840
        %v861 = vadd.f32 %v824, %v842
        %v862 = vadd.f32 %v825, %v845
        %v863 = vadd.f32 %v826, %v847
        %872 = vrot.lane.b32.xlu0 %v856, 1
        %v873 = vpop.permute.xlu0 %872
        %874 = vrot.lane.b32.xlu0 %v857, 1
        %v875 = vpop.permute.xlu0 %874
        %876 = vrot.lane.b32.xlu0 %v858, 1
        %v877 = vpop.permute.xlu0 %876
        %878 = vrot.lane.b32.xlu0 %v859, 1
        %v879 = vpop.permute.xlu0 %878
        %880 = vrot.lane.b32.xlu0 %v860, 1
        %v881 = vpop.permute.xlu0 %880
        %882 = vrot.lane.b32.xlu0 %v861, 1
        %v883 = vpop.permute.xlu0 %882
        %884 = vrot.lane.b32.xlu0 %v862, 1
        %v885 = vpop.permute.xlu0 %884
        %886 = vrot.lane.b32.xlu0 %v863, 1
        %v887 = vpop.permute.xlu0 %886
        %vm896 = vcmask 203784
        %897 = vst.msk [vmem:[#allocation5] sm:$0xff] %vm896, %v873
        %898 = vst.msk [vmem:[#allocation5 + $0x8] sm:$0xff] %vm896, %v875
        %899 = vst.msk [vmem:[#allocation5 + $0x10] sm:$0xff] %vm896, %v877
        %900 = vst.msk [vmem:[#allocation5 + $0x18] sm:$0xff] %vm896, %v879
        %901 = vst.msk [vmem:[#allocation5 + $0x20] sm:$0xff] %vm896, %v881
        %902 = vst.msk [vmem:[#allocation5 + $0x28] sm:$0xff] %vm896, %v883
        %903 = vst.msk [vmem:[#allocation5 + $0x30] sm:$0xff] %vm896, %v885
        %904 = vst.msk [vmem:[#allocation5 + $0x38] sm:$0xff] %vm896, %v887
        %vm905 = vcmask 7168
        %906 = vst.msk [vmem:[#allocation5] sm:$0xff] %vm905, %v856
        %907 = vst.msk [vmem:[#allocation5 + $0x8] sm:$0xff] %vm905, %v857
        %908 = vst.msk [vmem:[#allocation5 + $0x10] sm:$0xff] %vm905, %v858
        %909 = vst.msk [vmem:[#allocation5 + $0x18] sm:$0xff] %vm905, %v859
        %910 = vst.msk [vmem:[#allocation5 + $0x20] sm:$0xff] %vm905, %v860
        %911 = vst.msk [vmem:[#allocation5 + $0x28] sm:$0xff] %vm905, %v861
        %912 = vst.msk [vmem:[#allocation5 + $0x30] sm:$0xff] %vm905, %v862
        %913 = vst.msk [vmem:[#allocation5 + $0x38] sm:$0xff] %vm905, %v863
        %914 = vrot.lane.b32.xlu0 %v856, 2
        %v915 = vpop.permute.xlu0 %914
        %916 = vrot.lane.b32.xlu0 %v857, 2
        %v917 = vpop.permute.xlu0 %916
        %918 = vrot.lane.b32.xlu0 %v858, 2
        %v919 = vpop.permute.xlu0 %918
        %920 = vrot.lane.b32.xlu0 %v859, 2
        %v921 = vpop.permute.xlu0 %920
        %922 = vrot.lane.b32.xlu0 %v860, 2
        %v923 = vpop.permute.xlu0 %922
        %924 = vrot.lane.b32.xlu0 %v861, 2
        %v925 = vpop.permute.xlu0 %924
        %926 = vrot.lane.b32.xlu0 %v862, 2
        %v927 = vpop.permute.xlu0 %926
        %928 = vrot.lane.b32.xlu0 %v863, 2
        %v929 = vpop.permute.xlu0 %928
        %vm938 = vcmask 212168
        %939 = vst.msk [vmem:[#allocation5] sm:$0xff] %vm938, %v915
        %940 = vst.msk [vmem:[#allocation5 + $0x8] sm:$0xff] %vm938, %v917
        %941 = vst.msk [vmem:[#allocation5 + $0x10] sm:$0xff] %vm938, %v919
        %942 = vst.msk [vmem:[#allocation5 + $0x18] sm:$0xff] %vm938, %v921
        %943 = vst.msk [vmem:[#allocation5 + $0x20] sm:$0xff] %vm938, %v923
        %944 = vst.msk [vmem:[#allocation5 + $0x28] sm:$0xff] %vm938, %v925
        %945 = vst.msk [vmem:[#allocation5 + $0x30] sm:$0xff] %vm938, %v927
        %946 = vst.msk [vmem:[#allocation5 + $0x38] sm:$0xff] %vm938, %v929
        %v947 = vld [vmem:[#allocation5] sm:$0xff]
        %v948 = vld [vmem:[#allocation5 + $0x8] sm:$0xff]
        %v949 = vld [vmem:[#allocation5 + $0x10] sm:$0xff]
        %v950 = vld [vmem:[#allocation5 + $0x18] sm:$0xff]
        %v951 = vld [vmem:[#allocation5 + $0x20] sm:$0xff]
        %v952 = vld [vmem:[#allocation5 + $0x28] sm:$0xff]
        %v953 = vld [vmem:[#allocation5 + $0x30] sm:$0xff]
        %v954 = vld [vmem:[#allocation5 + $0x38] sm:$0xff]
        %963 = vrot.lane.b32.xlu0 %v947, 127
        %v964 = vpop.permute.xlu0 %963
        %965 = vrot.lane.b32.xlu0 %v948, 127
        %v966 = vpop.permute.xlu0 %965
        %967 = vrot.lane.b32.xlu0 %v949, 127
        %v968 = vpop.permute.xlu0 %967
        %969 = vrot.lane.b32.xlu0 %v950, 127
        %v970 = vpop.permute.xlu0 %969
        %971 = vrot.lane.b32.xlu0 %v951, 127
        %v972 = vpop.permute.xlu0 %971
        %973 = vrot.lane.b32.xlu0 %v952, 127
        %v974 = vpop.permute.xlu0 %973
        %975 = vrot.lane.b32.xlu0 %v953, 127
        %v976 = vpop.permute.xlu0 %975
        %977 = vrot.lane.b32.xlu0 %v954, 127
        %v978 = vpop.permute.xlu0 %977
        %v987 = vadd.f32 %v947, %v964
        %v988 = vadd.f32 %v948, %v966
        %v989 = vadd.f32 %v949, %v968
        %v990 = vadd.f32 %v950, %v970
        %v991 = vadd.f32 %v951, %v972
        %v992 = vadd.f32 %v952, %v974
        %v993 = vadd.f32 %v953, %v976
        %v994 = vadd.f32 %v954, %v978
        %995 = vrot.lane.b32.xlu0 %v947, 126
        %v996 = vpop.permute.xlu0 %995
        %997 = vrot.lane.b32.xlu0 %v948, 126
        %v998 = vpop.permute.xlu0 %997
        %999 = vrot.lane.b32.xlu0 %v949, 126
        %v1000 = vpop.permute.xlu0 %999
        %1001 = vrot.lane.b32.xlu0 %v950, 126
        %v1002 = vpop.permute.xlu0 %1001
        %1003 = vrot.lane.b32.xlu0 %v951, 126
        %v1004 = vpop.permute.xlu0 %1003
        %1005 = vrot.lane.b32.xlu0 %v952, 126
        %v1006 = vpop.permute.xlu0 %1005
        %1007 = vrot.lane.b32.xlu0 %v953, 126
        %v1008 = vpop.permute.xlu0 %1007
        %1009 = vrot.lane.b32.xlu0 %v954, 126
        %v1010 = vpop.permute.xlu0 %1009
        %v1019 = vadd.f32 %v987, %v996
        %v1020 = vadd.f32 %v988, %v998
        %v1021 = vadd.f32 %v989, %v1000
        %v1022 = vadd.f32 %v990, %v1002
        %v1023 = vadd.f32 %v991, %v1004
        %v1024 = vadd.f32 %v992, %v1006
        %v1025 = vadd.f32 %v993, %v1008
        %v1026 = vadd.f32 %v994, %v1010
        %v1027 = vmul.f32 %v1019, 0.037037037
        %v1028 = vmul.f32 %v1020, 0.037037037
        %v1029 = vmul.f32 %v1021, 0.037037037
        %v1030 = vmul.f32 %v1022, 0.037037037
        %v1031 = vmul.f32 %v1023, 0.037037037
        %v1032 = vmul.f32 %v1024, 0.037037037
        %v1033 = vmul.f32 %v1025, 0.037037037
        %v1034 = vmul.f32 %v1026, 0.037037037
        %v1035 = vld [vmem:[%s193] sm:$0xff]
        %v1036 = vld [vmem:[%s193 + $0x8] sm:$0xff]
        %v1037 = vld [vmem:[%s193 + $0x10] sm:$0xff]
        %v1038 = vld [vmem:[%s193 + $0x18] sm:$0xff]
        %v1039 = vld [vmem:[%s193 + $0x20] sm:$0xff]
        %v1040 = vld [vmem:[%s193 + $0x28] sm:$0xff]
        %v1041 = vld [vmem:[%s193 + $0x30] sm:$0xff]
        %v1042 = vld [vmem:[%s193 + $0x38] sm:$0xff]
        %v1043 = vld [vmem:[%s193 + $0x40] sm:$0xff]
        %v1044 = vld [vmem:[%s193 + $0x48] sm:$0xff]
        %v1045 = vld [vmem:[%s193 + $0x50] sm:$0xff]
        %v1046 = vld [vmem:[%s193 + $0x58] sm:$0xff]
        %v1047 = vld [vmem:[#allocation3] sm:$0xff]
        %v1048 = vld [vmem:[#allocation3 + $0x8] sm:$0xff]
        %v1049 = vld [vmem:[#allocation3 + $0x10] sm:$0xff]
        %v1050 = vld [vmem:[#allocation3 + $0x18] sm:$0xff]
        %v1051 = vld [vmem:[#allocation3 + $0x20] sm:$0xff]
        %v1052 = vld [vmem:[#allocation3 + $0x28] sm:$0xff]
        %v1053 = vld [vmem:[#allocation3 + $0x30] sm:$0xff]
        %v1054 = vld [vmem:[#allocation3 + $0x38] sm:$0xff]
        %v1055 = vld [vmem:[#allocation3 + $0x40] sm:$0xff]
        %v1056 = vld [vmem:[#allocation3 + $0x48] sm:$0xff]
        %v1057 = vld [vmem:[#allocation3 + $0x50] sm:$0xff]
        %v1058 = vld [vmem:[#allocation3 + $0x58] sm:$0xff]
        %v1059 = vsub.f32 %v1035, %v1047
        %v1060 = vsub.f32 %v1036, %v1048
        %v1061 = vsub.f32 %v1037, %v1049
        %v1062 = vsub.f32 %v1038, %v1050
        %v1063 = vsub.f32 %v1039, %v1051
        %v1064 = vsub.f32 %v1040, %v1052
        %v1065 = vsub.f32 %v1041, %v1053
        %v1066 = vsub.f32 %v1042, %v1054
        %v1067 = vsub.f32 %v1043, %v1055
        %v1068 = vsub.f32 %v1044, %v1056
        %v1069 = vsub.f32 %v1045, %v1057
        %v1070 = vsub.f32 %v1046, %v1058
        %v1071 = vmul.f32 %v1059, %v1059
        %v1072 = vmul.f32 %v1060, %v1060
        %v1073 = vmul.f32 %v1061, %v1061
        %v1074 = vmul.f32 %v1062, %v1062
        %v1075 = vmul.f32 %v1063, %v1063
        %v1076 = vmul.f32 %v1064, %v1064
        %v1077 = vmul.f32 %v1065, %v1065
        %v1078 = vmul.f32 %v1066, %v1066
        %v1079 = vmul.f32 %v1067, %v1067
        %v1080 = vmul.f32 %v1068, %v1068
        %v1081 = vmul.f32 %v1069, %v1069
        %v1082 = vmul.f32 %v1070, %v1070
        %v1083 = vadd.f32 %v1071, %v1073
        %v1084 = vadd.f32 %v1072, %v1074
        %v1085 = vadd.f32 %v1073, %v1075
        %v1086 = vadd.f32 %v1074, %v1076
        %v1087 = vadd.f32 %v1075, %v1077
        %v1088 = vadd.f32 %v1076, %v1078
        %v1089 = vadd.f32 %v1077, %v1079
        %v1090 = vadd.f32 %v1078, %v1080
        %v1091 = vadd.f32 %v1083, %v1075
        %v1092 = vadd.f32 %v1084, %v1076
        %v1093 = vadd.f32 %v1085, %v1077
        %v1094 = vadd.f32 %v1086, %v1078
        %v1095 = vadd.f32 %v1087, %v1079
        %v1096 = vadd.f32 %v1088, %v1080
        %v1097 = vadd.f32 %v1089, %v1081
        %v1098 = vadd.f32 %v1090, %v1082
        %1099 = vst.msk [vmem:[#allocation4 + $0x1] sm:$0xff] %vm177, %v1091
        %1100 = vst.msk [vmem:[#allocation4 + $0x9] sm:$0xff] %vm177, %v1092
        %1101 = vst.msk [vmem:[#allocation4 + $0x19] sm:$0xff] %vm177, %v1093
        %1102 = vst.msk [vmem:[#allocation4 + $0x21] sm:$0xff] %vm177, %v1094
        %1103 = vst.msk [vmem:[#allocation4 + $0x31] sm:$0xff] %vm177, %v1095
        %1104 = vst.msk [vmem:[#allocation4 + $0x39] sm:$0xff] %vm177, %v1096
        %1105 = vst.msk [vmem:[#allocation4 + $0x49] sm:$0xff] %vm177, %v1097
        %1106 = vst.msk [vmem:[#allocation4 + $0x51] sm:$0xff] %vm177, %v1098
        %1107 = vst.msk [vmem:[#allocation4] sm:$0x1] %vm756, %v1091
        %1108 = vst.msk [vmem:[#allocation4 + $0x18] sm:$0x1] %vm756, %v1093
        %1109 = vst.msk [vmem:[#allocation4 + $0x30] sm:$0x1] %vm756, %v1095
        %1110 = vst.msk [vmem:[#allocation4 + $0x48] sm:$0x1] %vm756, %v1097
        %1111 = vst.msk [vmem:[#allocation4 + $0xa] sm:$0x80] %vm761, %v1092
        %1112 = vst.msk [vmem:[#allocation4 + $0x22] sm:$0x80] %vm761, %v1094
        %1113 = vst.msk [vmem:[#allocation4 + $0x3a] sm:$0x80] %vm761, %v1096
        %1114 = vst.msk [vmem:[#allocation4 + $0x52] sm:$0x80] %vm761, %v1098
        %v1115 = vld [vmem:[#allocation4] sm:$0xff]
        %v1116 = vld [vmem:[#allocation4 + $0x8] sm:$0xff]
        %v1117 = vld [vmem:[#allocation4 + $0x10] sm:$0x3]
        %v1118 = vld [vmem:[#allocation4 + $0x18] sm:$0xff]
        %v1119 = vld [vmem:[#allocation4 + $0x20] sm:$0xff]
        %v1120 = vld [vmem:[#allocation4 + $0x28] sm:$0x3]
        %v1121 = vld [vmem:[#allocation4 + $0x30] sm:$0xff]
        %v1122 = vld [vmem:[#allocation4 + $0x38] sm:$0xff]
        %v1123 = vld [vmem:[#allocation4 + $0x40] sm:$0x3]
        %v1124 = vld [vmem:[#allocation4 + $0x48] sm:$0xff]
        %v1125 = vld [vmem:[#allocation4 + $0x50] sm:$0xff]
        %v1126 = vld [vmem:[#allocation4 + $0x58] sm:$0x3]
        %v1139 = vrot.slane %v1115, 1
        %v1140 = vrot.slane %v1116, 1
        %v1141 = vsel %vm790, %v1139, %v1140
        %v1142 = vrot.slane %v1117, 1
        %v1143 = vsel %vm790, %v1140, %v1142
        %v1144 = vrot.slane %v1118, 1
        %v1145 = vrot.slane %v1119, 1
        %v1146 = vsel %vm790, %v1144, %v1145
        %v1147 = vrot.slane %v1120, 1
        %v1148 = vsel %vm790, %v1145, %v1147
        %v1149 = vrot.slane %v1121, 1
        %v1150 = vrot.slane %v1122, 1
        %v1151 = vsel %vm790, %v1149, %v1150
        %v1152 = vrot.slane %v1123, 1
        %v1153 = vsel %vm790, %v1150, %v1152
        %v1154 = vrot.slane %v1124, 1
        %v1155 = vrot.slane %v1125, 1
        %v1156 = vsel %vm790, %v1154, %v1155
        %v1157 = vrot.slane %v1126, 1
        %v1158 = vsel %vm790, %v1155, %v1157
        %v1167 = vadd.f32 %v1115, %v1141
        %v1168 = vadd.f32 %v1116, %v1143
        %v1169 = vadd.f32 %v1118, %v1146
        %v1170 = vadd.f32 %v1119, %v1148
        %v1171 = vadd.f32 %v1121, %v1151
        %v1172 = vadd.f32 %v1122, %v1153
        %v1173 = vadd.f32 %v1124, %v1156
        %v1174 = vadd.f32 %v1125, %v1158
        %v1175 = vrot.slane %v1115, 2
        %v1176 = vrot.slane %v1116, 2
        %v1177 = vsel %vm827, %v1175, %v1176
        %v1178 = vrot.slane %v1117, 2
        %v1179 = vsel %vm827, %v1176, %v1178
        %v1180 = vrot.slane %v1118, 2
        %v1181 = vrot.slane %v1119, 2
        %v1182 = vsel %vm827, %v1180, %v1181
        %v1183 = vrot.slane %v1120, 2
        %v1184 = vsel %vm827, %v1181, %v1183
        %v1185 = vrot.slane %v1121, 2
        %v1186 = vrot.slane %v1122, 2
        %v1187 = vsel %vm827, %v1185, %v1186
        %v1188 = vrot.slane %v1123, 2
        %v1189 = vsel %vm827, %v1186, %v1188
        %v1190 = vrot.slane %v1124, 2
        %v1191 = vrot.slane %v1125, 2
        %v1192 = vsel %vm827, %v1190, %v1191
        %v1193 = vrot.slane %v1126, 2
        %v1194 = vsel %vm827, %v1191, %v1193
        %v1203 = vadd.f32 %v1167, %v1177
        %v1204 = vadd.f32 %v1168, %v1179
        %v1205 = vadd.f32 %v1169, %v1182
        %v1206 = vadd.f32 %v1170, %v1184
        %v1207 = vadd.f32 %v1171, %v1187
        %v1208 = vadd.f32 %v1172, %v1189
        %v1209 = vadd.f32 %v1173, %v1192
        %v1210 = vadd.f32 %v1174, %v1194
        %1219 = vrot.lane.b32.xlu0 %v1203, 1
        %v1220 = vpop.permute.xlu0 %1219
        %1221 = vrot.lane.b32.xlu0 %v1204, 1
        %v1222 = vpop.permute.xlu0 %1221
        %1223 = vrot.lane.b32.xlu0 %v1205, 1
        %v1224 = vpop.permute.xlu0 %1223
        %1225 = vrot.lane.b32.xlu0 %v1206, 1
        %v1226 = vpop.permute.xlu0 %1225
        %1227 = vrot.lane.b32.xlu0 %v1207, 1
        %v1228 = vpop.permute.xlu0 %1227
        %1229 = vrot.lane.b32.xlu0 %v1208, 1
        %v1230 = vpop.permute.xlu0 %1229
        %1231 = vrot.lane.b32.xlu0 %v1209, 1
        %v1232 = vpop.permute.xlu0 %1231
        %1233 = vrot.lane.b32.xlu0 %v1210, 1
        %v1234 = vpop.permute.xlu0 %1233
        %1243 = vst.msk [vmem:[#allocation5] sm:$0xff] %vm896, %v1220
        %1244 = vst.msk [vmem:[#allocation5 + $0x8] sm:$0xff] %vm896, %v1222
        %1245 = vst.msk [vmem:[#allocation5 + $0x10] sm:$0xff] %vm896, %v1224
        %1246 = vst.msk [vmem:[#allocation5 + $0x18] sm:$0xff] %vm896, %v1226
        %1247 = vst.msk [vmem:[#allocation5 + $0x20] sm:$0xff] %vm896, %v1228
        %1248 = vst.msk [vmem:[#allocation5 + $0x28] sm:$0xff] %vm896, %v1230
        %1249 = vst.msk [vmem:[#allocation5 + $0x30] sm:$0xff] %vm896, %v1232
        %1250 = vst.msk [vmem:[#allocation5 + $0x38] sm:$0xff] %vm896, %v1234
        %1251 = vst.msk [vmem:[#allocation5] sm:$0xff] %vm905, %v1203
        %1252 = vst.msk [vmem:[#allocation5 + $0x8] sm:$0xff] %vm905, %v1204
        %1253 = vst.msk [vmem:[#allocation5 + $0x10] sm:$0xff] %vm905, %v1205
        %1254 = vst.msk [vmem:[#allocation5 + $0x18] sm:$0xff] %vm905, %v1206
        %1255 = vst.msk [vmem:[#allocation5 + $0x20] sm:$0xff] %vm905, %v1207
        %1256 = vst.msk [vmem:[#allocation5 + $0x28] sm:$0xff] %vm905, %v1208
        %1257 = vst.msk [vmem:[#allocation5 + $0x30] sm:$0xff] %vm905, %v1209
        %1258 = vst.msk [vmem:[#allocation5 + $0x38] sm:$0xff] %vm905, %v1210
        %1259 = vrot.lane.b32.xlu0 %v1203, 2
        %v1260 = vpop.permute.xlu0 %1259
        %1261 = vrot.lane.b32.xlu0 %v1204, 2
        %v1262 = vpop.permute.xlu0 %1261
        %1263 = vrot.lane.b32.xlu0 %v1205, 2
        %v1264 = vpop.permute.xlu0 %1263
        %1265 = vrot.lane.b32.xlu0 %v1206, 2
        %v1266 = vpop.permute.xlu0 %1265
        %1267 = vrot.lane.b32.xlu0 %v1207, 2
        %v1268 = vpop.permute.xlu0 %1267
        %1269 = vrot.lane.b32.xlu0 %v1208, 2
        %v1270 = vpop.permute.xlu0 %1269
        %1271 = vrot.lane.b32.xlu0 %v1209, 2
        %v1272 = vpop.permute.xlu0 %1271
        %1273 = vrot.lane.b32.xlu0 %v1210, 2
        %v1274 = vpop.permute.xlu0 %1273
        %1283 = vst.msk [vmem:[#allocation5] sm:$0xff] %vm938, %v1260
        %1284 = vst.msk [vmem:[#allocation5 + $0x8] sm:$0xff] %vm938, %v1262
        %1285 = vst.msk [vmem:[#allocation5 + $0x10] sm:$0xff] %vm938, %v1264
        %1286 = vst.msk [vmem:[#allocation5 + $0x18] sm:$0xff] %vm938, %v1266
        %1287 = vst.msk [vmem:[#allocation5 + $0x20] sm:$0xff] %vm938, %v1268
        %1288 = vst.msk [vmem:[#allocation5 + $0x28] sm:$0xff] %vm938, %v1270
        %1289 = vst.msk [vmem:[#allocation5 + $0x30] sm:$0xff] %vm938, %v1272
        %1290 = vst.msk [vmem:[#allocation5 + $0x38] sm:$0xff] %vm938, %v1274
        %v1291 = vld [vmem:[#allocation5] sm:$0xff]
        %v1292 = vld [vmem:[#allocation5 + $0x8] sm:$0xff]
        %v1293 = vld [vmem:[#allocation5 + $0x10] sm:$0xff]
        %v1294 = vld [vmem:[#allocation5 + $0x18] sm:$0xff]
        %v1295 = vld [vmem:[#allocation5 + $0x20] sm:$0xff]
        %v1296 = vld [vmem:[#allocation5 + $0x28] sm:$0xff]
        %v1297 = vld [vmem:[#allocation5 + $0x30] sm:$0xff]
        %v1298 = vld [vmem:[#allocation5 + $0x38] sm:$0xff]
        %1307 = vrot.lane.b32.xlu0 %v1291, 127
        %v1308 = vpop.permute.xlu0 %1307
        %1309 = vrot.lane.b32.xlu0 %v1292, 127
        %v1310 = vpop.permute.xlu0 %1309
        %1311 = vrot.lane.b32.xlu0 %v1293, 127
        %v1312 = vpop.permute.xlu0 %1311
        %1313 = vrot.lane.b32.xlu0 %v1294, 127
        %v1314 = vpop.permute.xlu0 %1313
        %1315 = vrot.lane.b32.xlu0 %v1295, 127
        %v1316 = vpop.permute.xlu0 %1315
        %1317 = vrot.lane.b32.xlu0 %v1296, 127
        %v1318 = vpop.permute.xlu0 %1317
        %1319 = vrot.lane.b32.xlu0 %v1297, 127
        %v1320 = vpop.permute.xlu0 %1319
        %1321 = vrot.lane.b32.xlu0 %v1298, 127
        %v1322 = vpop.permute.xlu0 %1321
        %v1331 = vadd.f32 %v1291, %v1308
        %v1332 = vadd.f32 %v1292, %v1310
        %v1333 = vadd.f32 %v1293, %v1312
        %v1334 = vadd.f32 %v1294, %v1314
        %v1335 = vadd.f32 %v1295, %v1316
        %v1336 = vadd.f32 %v1296, %v1318
        %v1337 = vadd.f32 %v1297, %v1320
        %v1338 = vadd.f32 %v1298, %v1322
        %1339 = vrot.lane.b32.xlu0 %v1291, 126
        %v1340 = vpop.permute.xlu0 %1339
        %1341 = vrot.lane.b32.xlu0 %v1292, 126
        %v1342 = vpop.permute.xlu0 %1341
        %1343 = vrot.lane.b32.xlu0 %v1293, 126
        %v1344 = vpop.permute.xlu0 %1343
        %1345 = vrot.lane.b32.xlu0 %v1294, 126
        %v1346 = vpop.permute.xlu0 %1345
        %1347 = vrot.lane.b32.xlu0 %v1295, 126
        %v1348 = vpop.permute.xlu0 %1347
        %1349 = vrot.lane.b32.xlu0 %v1296, 126
        %v1350 = vpop.permute.xlu0 %1349
        %1351 = vrot.lane.b32.xlu0 %v1297, 126
        %v1352 = vpop.permute.xlu0 %1351
        %1353 = vrot.lane.b32.xlu0 %v1298, 126
        %v1354 = vpop.permute.xlu0 %1353
        %v1363 = vadd.f32 %v1331, %v1340
        %v1364 = vadd.f32 %v1332, %v1342
        %v1365 = vadd.f32 %v1333, %v1344
        %v1366 = vadd.f32 %v1334, %v1346
        %v1367 = vadd.f32 %v1335, %v1348
        %v1368 = vadd.f32 %v1336, %v1350
        %v1369 = vadd.f32 %v1337, %v1352
        %v1370 = vadd.f32 %v1338, %v1354
        %v1371 = vmul.f32 %v1363, 0.037037037
        %v1372 = vmul.f32 %v1364, 0.037037037
        %v1373 = vmul.f32 %v1365, 0.037037037
        %v1374 = vmul.f32 %v1366, 0.037037037
        %v1375 = vmul.f32 %v1367, 0.037037037
        %v1376 = vmul.f32 %v1368, 0.037037037
        %v1377 = vmul.f32 %v1369, 0.037037037
        %v1378 = vmul.f32 %v1370, 0.037037037
        %v1379 = vld [vmem:[%s193] sm:$0xff]
        %v1380 = vld [vmem:[%s193 + $0x8] sm:$0xff]
        %v1381 = vld [vmem:[%s193 + $0x10] sm:$0xff]
        %v1382 = vld [vmem:[%s193 + $0x18] sm:$0xff]
        %v1383 = vld [vmem:[%s193 + $0x20] sm:$0xff]
        %v1384 = vld [vmem:[%s193 + $0x28] sm:$0xff]
        %v1385 = vld [vmem:[%s193 + $0x30] sm:$0xff]
        %v1386 = vld [vmem:[%s193 + $0x38] sm:$0xff]
        %v1387 = vld [vmem:[%s193 + $0x40] sm:$0xff]
        %v1388 = vld [vmem:[%s193 + $0x48] sm:$0xff]
        %v1389 = vld [vmem:[%s193 + $0x50] sm:$0xff]
        %v1390 = vld [vmem:[%s193 + $0x58] sm:$0xff]
        %v1391 = vld [vmem:[%s181] sm:$0xff]
        %v1392 = vld [vmem:[%s181 + $0x8] sm:$0xff]
        %v1393 = vld [vmem:[%s181 + $0x10] sm:$0xff]
        %v1394 = vld [vmem:[%s181 + $0x18] sm:$0xff]
        %v1395 = vld [vmem:[%s181 + $0x20] sm:$0xff]
        %v1396 = vld [vmem:[%s181 + $0x28] sm:$0xff]
        %v1397 = vld [vmem:[%s181 + $0x30] sm:$0xff]
        %v1398 = vld [vmem:[%s181 + $0x38] sm:$0xff]
        %v1399 = vld [vmem:[%s181 + $0x40] sm:$0xff]
        %v1400 = vld [vmem:[%s181 + $0x48] sm:$0xff]
        %v1401 = vld [vmem:[%s181 + $0x50] sm:$0xff]
        %v1402 = vld [vmem:[%s181 + $0x58] sm:$0xff]
        %v1403 = vsub.f32 %v1379, %v1391
        %v1404 = vsub.f32 %v1380, %v1392
        %v1405 = vsub.f32 %v1381, %v1393
        %v1406 = vsub.f32 %v1382, %v1394
        %v1407 = vsub.f32 %v1383, %v1395
        %v1408 = vsub.f32 %v1384, %v1396
        %v1409 = vsub.f32 %v1385, %v1397
        %v1410 = vsub.f32 %v1386, %v1398
        %v1411 = vsub.f32 %v1387, %v1399
        %v1412 = vsub.f32 %v1388, %v1400
        %v1413 = vsub.f32 %v1389, %v1401
        %v1414 = vsub.f32 %v1390, %v1402
        %v1415 = vmul.f32 %v1403, %v1403
        %v1416 = vmul.f32 %v1404, %v1404
        %v1417 = vmul.f32 %v1405, %v1405
        %v1418 = vmul.f32 %v1406, %v1406
        %v1419 = vmul.f32 %v1407, %v1407
        %v1420 = vmul.f32 %v1408, %v1408
        %v1421 = vmul.f32 %v1409, %v1409
        %v1422 = vmul.f32 %v1410, %v1410
        %v1423 = vmul.f32 %v1411, %v1411
        %v1424 = vmul.f32 %v1412, %v1412
        %v1425 = vmul.f32 %v1413, %v1413
        %v1426 = vmul.f32 %v1414, %v1414
        %v1427 = vadd.f32 %v1415, %v1417
        %v1428 = vadd.f32 %v1416, %v1418
        %v1429 = vadd.f32 %v1417, %v1419
        %v1430 = vadd.f32 %v1418, %v1420
        %v1431 = vadd.f32 %v1419, %v1421
        %v1432 = vadd.f32 %v1420, %v1422
        %v1433 = vadd.f32 %v1421, %v1423
        %v1434 = vadd.f32 %v1422, %v1424
        %v1435 = vadd.f32 %v1427, %v1419
        %v1436 = vadd.f32 %v1428, %v1420
        %v1437 = vadd.f32 %v1429, %v1421
        %v1438 = vadd.f32 %v1430, %v1422
        %v1439 = vadd.f32 %v1431, %v1423
        %v1440 = vadd.f32 %v1432, %v1424
        %v1441 = vadd.f32 %v1433, %v1425
        %v1442 = vadd.f32 %v1434, %v1426
        %1443 = vst.msk [vmem:[#allocation4 + $0x1] sm:$0xff] %vm177, %v1435
        %1444 = vst.msk [vmem:[#allocation4 + $0x9] sm:$0xff] %vm177, %v1436
        %1445 = vst.msk [vmem:[#allocation4 + $0x19] sm:$0xff] %vm177, %v1437
        %1446 = vst.msk [vmem:[#allocation4 + $0x21] sm:$0xff] %vm177, %v1438
        %1447 = vst.msk [vmem:[#allocation4 + $0x31] sm:$0xff] %vm177, %v1439
        %1448 = vst.msk [vmem:[#allocation4 + $0x39] sm:$0xff] %vm177, %v1440
        %1449 = vst.msk [vmem:[#allocation4 + $0x49] sm:$0xff] %vm177, %v1441
        %1450 = vst.msk [vmem:[#allocation4 + $0x51] sm:$0xff] %vm177, %v1442
        %1451 = vst.msk [vmem:[#allocation4] sm:$0x1] %vm756, %v1435
        %1452 = vst.msk [vmem:[#allocation4 + $0x18] sm:$0x1] %vm756, %v1437
        %1453 = vst.msk [vmem:[#allocation4 + $0x30] sm:$0x1] %vm756, %v1439
        %1454 = vst.msk [vmem:[#allocation4 + $0x48] sm:$0x1] %vm756, %v1441
        %1455 = vst.msk [vmem:[#allocation4 + $0xa] sm:$0x80] %vm761, %v1436
        %1456 = vst.msk [vmem:[#allocation4 + $0x22] sm:$0x80] %vm761, %v1438
        %1457 = vst.msk [vmem:[#allocation4 + $0x3a] sm:$0x80] %vm761, %v1440
        %1458 = vst.msk [vmem:[#allocation4 + $0x52] sm:$0x80] %vm761, %v1442
        %v1459 = vld [vmem:[#allocation4] sm:$0xff]
        %v1460 = vld [vmem:[#allocation4 + $0x8] sm:$0xff]
        %v1461 = vld [vmem:[#allocation4 + $0x10] sm:$0x3]
        %v1462 = vld [vmem:[#allocation4 + $0x18] sm:$0xff]
        %v1463 = vld [vmem:[#allocation4 + $0x20] sm:$0xff]
        %v1464 = vld [vmem:[#allocation4 + $0x28] sm:$0x3]
        %v1465 = vld [vmem:[#allocation4 + $0x30] sm:$0xff]
        %v1466 = vld [vmem:[#allocation4 + $0x38] sm:$0xff]
        %v1467 = vld [vmem:[#allocation4 + $0x40] sm:$0x3]
        %v1468 = vld [vmem:[#allocation4 + $0x48] sm:$0xff]
        %v1469 = vld [vmem:[#allocation4 + $0x50] sm:$0xff]
        %v1470 = vld [vmem:[#allocation4 + $0x58] sm:$0x3]
        %v1483 = vrot.slane %v1459, 1
        %v1484 = vrot.slane %v1460, 1
        %v1485 = vsel %vm790, %v1483, %v1484
        %v1486 = vrot.slane %v1461, 1
        %v1487 = vsel %vm790, %v1484, %v1486
        %v1488 = vrot.slane %v1462, 1
        %v1489 = vrot.slane %v1463, 1
        %v1490 = vsel %vm790, %v1488, %v1489
        %v1491 = vrot.slane %v1464, 1
        %v1492 = vsel %vm790, %v1489, %v1491
        %v1493 = vrot.slane %v1465, 1
        %v1494 = vrot.slane %v1466, 1
        %v1495 = vsel %vm790, %v1493, %v1494
        %v1496 = vrot.slane %v1467, 1
        %v1497 = vsel %vm790, %v1494, %v1496
        %v1498 = vrot.slane %v1468, 1
        %v1499 = vrot.slane %v1469, 1
        %v1500 = vsel %vm790, %v1498, %v1499
        %v1501 = vrot.slane %v1470, 1
        %v1502 = vsel %vm790, %v1499, %v1501
        %v1511 = vadd.f32 %v1459, %v1485
        %v1512 = vadd.f32 %v1460, %v1487
        %v1513 = vadd.f32 %v1462, %v1490
        %v1514 = vadd.f32 %v1463, %v1492
        %v1515 = vadd.f32 %v1465, %v1495
        %v1516 = vadd.f32 %v1466, %v1497
        %v1517 = vadd.f32 %v1468, %v1500
        %v1518 = vadd.f32 %v1469, %v1502
        %v1519 = vrot.slane %v1459, 2
        %v1520 = vrot.slane %v1460, 2
        %v1521 = vsel %vm827, %v1519, %v1520
        %v1522 = vrot.slane %v1461, 2
        %v1523 = vsel %vm827, %v1520, %v1522
        %v1524 = vrot.slane %v1462, 2
        %v1525 = vrot.slane %v1463, 2
        %v1526 = vsel %vm827, %v1524, %v1525
        %v1527 = vrot.slane %v1464, 2
        %v1528 = vsel %vm827, %v1525, %v1527
        %v1529 = vrot.slane %v1465, 2
        %v1530 = vrot.slane %v1466, 2
        %v1531 = vsel %vm827, %v1529, %v1530
        %v1532 = vrot.slane %v1467, 2
        %v1533 = vsel %vm827, %v1530, %v1532
        %v1534 = vrot.slane %v1468, 2
        %v1535 = vrot.slane %v1469, 2
        %v1536 = vsel %vm827, %v1534, %v1535
        %v1537 = vrot.slane %v1470, 2
        %v1538 = vsel %vm827, %v1535, %v1537
        %v1547 = vadd.f32 %v1511, %v1521
        %v1548 = vadd.f32 %v1512, %v1523
        %v1549 = vadd.f32 %v1513, %v1526
        %v1550 = vadd.f32 %v1514, %v1528
        %v1551 = vadd.f32 %v1515, %v1531
        %v1552 = vadd.f32 %v1516, %v1533
        %v1553 = vadd.f32 %v1517, %v1536
        %v1554 = vadd.f32 %v1518, %v1538
        %1563 = vrot.lane.b32.xlu0 %v1547, 1
        %v1564 = vpop.permute.xlu0 %1563
        %1565 = vrot.lane.b32.xlu0 %v1548, 1
        %v1566 = vpop.permute.xlu0 %1565
        %1567 = vrot.lane.b32.xlu0 %v1549, 1
        %v1568 = vpop.permute.xlu0 %1567
        %1569 = vrot.lane.b32.xlu0 %v1550, 1
        %v1570 = vpop.permute.xlu0 %1569
        %1571 = vrot.lane.b32.xlu0 %v1551, 1
        %v1572 = vpop.permute.xlu0 %1571
        %1573 = vrot.lane.b32.xlu0 %v1552, 1
        %v1574 = vpop.permute.xlu0 %1573
        %1575 = vrot.lane.b32.xlu0 %v1553, 1
        %v1576 = vpop.permute.xlu0 %1575
        %1577 = vrot.lane.b32.xlu0 %v1554, 1
        %v1578 = vpop.permute.xlu0 %1577
        %1587 = vst.msk [vmem:[#allocation5] sm:$0xff] %vm896, %v1564
        %1588 = vst.msk [vmem:[#allocation5 + $0x8] sm:$0xff] %vm896, %v1566
        %1589 = vst.msk [vmem:[#allocation5 + $0x10] sm:$0xff] %vm896, %v1568
        %1590 = vst.msk [vmem:[#allocation5 + $0x18] sm:$0xff] %vm896, %v1570
        %1591 = vst.msk [vmem:[#allocation5 + $0x20] sm:$0xff] %vm896, %v1572
        %1592 = vst.msk [vmem:[#allocation5 + $0x28] sm:$0xff] %vm896, %v1574
        %1593 = vst.msk [vmem:[#allocation5 + $0x30] sm:$0xff] %vm896, %v1576
        %1594 = vst.msk [vmem:[#allocation5 + $0x38] sm:$0xff] %vm896, %v1578
        %1595 = vst.msk [vmem:[#allocation5] sm:$0xff] %vm905, %v1547
        %1596 = vst.msk [vmem:[#allocation5 + $0x8] sm:$0xff] %vm905, %v1548
        %1597 = vst.msk [vmem:[#allocation5 + $0x10] sm:$0xff] %vm905, %v1549
        %1598 = vst.msk [vmem:[#allocation5 + $0x18] sm:$0xff] %vm905, %v1550
        %1599 = vst.msk [vmem:[#allocation5 + $0x20] sm:$0xff] %vm905, %v1551
        %1600 = vst.msk [vmem:[#allocation5 + $0x28] sm:$0xff] %vm905, %v1552
        %1601 = vst.msk [vmem:[#allocation5 + $0x30] sm:$0xff] %vm905, %v1553
        %1602 = vst.msk [vmem:[#allocation5 + $0x38] sm:$0xff] %vm905, %v1554
        %1603 = vrot.lane.b32.xlu0 %v1547, 2
        %v1604 = vpop.permute.xlu0 %1603
        %1605 = vrot.lane.b32.xlu0 %v1548, 2
        %v1606 = vpop.permute.xlu0 %1605
        %1607 = vrot.lane.b32.xlu0 %v1549, 2
        %v1608 = vpop.permute.xlu0 %1607
        %1609 = vrot.lane.b32.xlu0 %v1550, 2
        %v1610 = vpop.permute.xlu0 %1609
        %1611 = vrot.lane.b32.xlu0 %v1551, 2
        %v1612 = vpop.permute.xlu0 %1611
        %1613 = vrot.lane.b32.xlu0 %v1552, 2
        %v1614 = vpop.permute.xlu0 %1613
        %1615 = vrot.lane.b32.xlu0 %v1553, 2
        %v1616 = vpop.permute.xlu0 %1615
        %1617 = vrot.lane.b32.xlu0 %v1554, 2
        %v1618 = vpop.permute.xlu0 %1617
        %1627 = vst.msk [vmem:[#allocation5] sm:$0xff] %vm938, %v1604
        %1628 = vst.msk [vmem:[#allocation5 + $0x8] sm:$0xff] %vm938, %v1606
        %1629 = vst.msk [vmem:[#allocation5 + $0x10] sm:$0xff] %vm938, %v1608
        %1630 = vst.msk [vmem:[#allocation5 + $0x18] sm:$0xff] %vm938, %v1610
        %1631 = vst.msk [vmem:[#allocation5 + $0x20] sm:$0xff] %vm938, %v1612
        %1632 = vst.msk [vmem:[#allocation5 + $0x28] sm:$0xff] %vm938, %v1614
        %1633 = vst.msk [vmem:[#allocation5 + $0x30] sm:$0xff] %vm938, %v1616
        %1634 = vst.msk [vmem:[#allocation5 + $0x38] sm:$0xff] %vm938, %v1618
        %v1635 = vld [vmem:[#allocation5] sm:$0xff]
        %v1636 = vld [vmem:[#allocation5 + $0x8] sm:$0xff]
        %v1637 = vld [vmem:[#allocation5 + $0x10] sm:$0xff]
        %v1638 = vld [vmem:[#allocation5 + $0x18] sm:$0xff]
        %v1639 = vld [vmem:[#allocation5 + $0x20] sm:$0xff]
        %v1640 = vld [vmem:[#allocation5 + $0x28] sm:$0xff]
        %v1641 = vld [vmem:[#allocation5 + $0x30] sm:$0xff]
        %v1642 = vld [vmem:[#allocation5 + $0x38] sm:$0xff]
        %1651 = vrot.lane.b32.xlu0 %v1635, 127
        %v1652 = vpop.permute.xlu0 %1651
        %1653 = vrot.lane.b32.xlu0 %v1636, 127
        %v1654 = vpop.permute.xlu0 %1653
        %1655 = vrot.lane.b32.xlu0 %v1637, 127
        %v1656 = vpop.permute.xlu0 %1655
        %1657 = vrot.lane.b32.xlu0 %v1638, 127
        %v1658 = vpop.permute.xlu0 %1657
        %1659 = vrot.lane.b32.xlu0 %v1639, 127
        %v1660 = vpop.permute.xlu0 %1659
        %1661 = vrot.lane.b32.xlu0 %v1640, 127
        %v1662 = vpop.permute.xlu0 %1661
        %1663 = vrot.lane.b32.xlu0 %v1641, 127
        %v1664 = vpop.permute.xlu0 %1663
        %1665 = vrot.lane.b32.xlu0 %v1642, 127
        %v1666 = vpop.permute.xlu0 %1665
        %v1675 = vadd.f32 %v1635, %v1652
        %v1676 = vadd.f32 %v1636, %v1654
        %v1677 = vadd.f32 %v1637, %v1656
        %v1678 = vadd.f32 %v1638, %v1658
        %v1679 = vadd.f32 %v1639, %v1660
        %v1680 = vadd.f32 %v1640, %v1662
        %v1681 = vadd.f32 %v1641, %v1664
        %v1682 = vadd.f32 %v1642, %v1666
        %1683 = vrot.lane.b32.xlu0 %v1635, 126
        %v1684 = vpop.permute.xlu0 %1683
        %1685 = vrot.lane.b32.xlu0 %v1636, 126
        %v1686 = vpop.permute.xlu0 %1685
        %1687 = vrot.lane.b32.xlu0 %v1637, 126
        %v1688 = vpop.permute.xlu0 %1687
        %1689 = vrot.lane.b32.xlu0 %v1638, 126
        %v1690 = vpop.permute.xlu0 %1689
        %1691 = vrot.lane.b32.xlu0 %v1639, 126
        %v1692 = vpop.permute.xlu0 %1691
        %1693 = vrot.lane.b32.xlu0 %v1640, 126
        %v1694 = vpop.permute.xlu0 %1693
        %1695 = vrot.lane.b32.xlu0 %v1641, 126
        %v1696 = vpop.permute.xlu0 %1695
        %1697 = vrot.lane.b32.xlu0 %v1642, 126
        %v1698 = vpop.permute.xlu0 %1697
        %v1707 = vadd.f32 %v1675, %v1684
        %v1708 = vadd.f32 %v1676, %v1686
        %v1709 = vadd.f32 %v1677, %v1688
        %v1710 = vadd.f32 %v1678, %v1690
        %v1711 = vadd.f32 %v1679, %v1692
        %v1712 = vadd.f32 %v1680, %v1694
        %v1713 = vadd.f32 %v1681, %v1696
        %v1714 = vadd.f32 %v1682, %v1698
        %v1715 = vmul.f32 %v1707, 0.037037037
        %v1716 = vmul.f32 %v1708, 0.037037037
        %v1717 = vmul.f32 %v1709, 0.037037037
        %v1718 = vmul.f32 %v1710, 0.037037037
        %v1719 = vmul.f32 %v1711, 0.037037037
        %v1720 = vmul.f32 %v1712, 0.037037037
        %v1721 = vmul.f32 %v1713, 0.037037037
        %v1722 = vmul.f32 %v1714, 0.037037037
        %v1723 = vld [vmem:[%s206] sm:$0xff]
        %v1724 = vld [vmem:[%s206 + $0x8] sm:$0xff]
        %v1725 = vld [vmem:[%s206 + $0x10] sm:$0xff]
        %v1726 = vld [vmem:[%s206 + $0x18] sm:$0xff]
        %v1727 = vld [vmem:[%s206 + $0x20] sm:$0xff]
        %v1728 = vld [vmem:[%s206 + $0x28] sm:$0xff]
        %v1729 = vld [vmem:[%s206 + $0x30] sm:$0xff]
        %v1730 = vld [vmem:[%s206 + $0x38] sm:$0xff]
        %v1731 = vld [vmem:[%s206 + $0x40] sm:$0xff]
        %v1732 = vld [vmem:[%s206 + $0x48] sm:$0xff]
        %v1733 = vld [vmem:[%s206 + $0x50] sm:$0xff]
        %v1734 = vld [vmem:[%s206 + $0x58] sm:$0xff]
        %v1735 = vld [vmem:[#allocation3] sm:$0xff]
        %v1736 = vld [vmem:[#allocation3 + $0x8] sm:$0xff]
        %v1737 = vld [vmem:[#allocation3 + $0x10] sm:$0xff]
        %v1738 = vld [vmem:[#allocation3 + $0x18] sm:$0xff]
        %v1739 = vld [vmem:[#allocation3 + $0x20] sm:$0xff]
        %v1740 = vld [vmem:[#allocation3 + $0x28] sm:$0xff]
        %v1741 = vld [vmem:[#allocation3 + $0x30] sm:$0xff]
        %v1742 = vld [vmem:[#allocation3 + $0x38] sm:$0xff]
        %v1743 = vld [vmem:[#allocation3 + $0x40] sm:$0xff]
        %v1744 = vld [vmem:[#allocation3 + $0x48] sm:$0xff]
        %v1745 = vld [vmem:[#allocation3 + $0x50] sm:$0xff]
        %v1746 = vld [vmem:[#allocation3 + $0x58] sm:$0xff]
        %v1747 = vsub.f32 %v1723, %v1735
        %v1748 = vsub.f32 %v1724, %v1736
        %v1749 = vsub.f32 %v1725, %v1737
        %v1750 = vsub.f32 %v1726, %v1738
        %v1751 = vsub.f32 %v1727, %v1739
        %v1752 = vsub.f32 %v1728, %v1740
        %v1753 = vsub.f32 %v1729, %v1741
        %v1754 = vsub.f32 %v1730, %v1742
        %v1755 = vsub.f32 %v1731, %v1743
        %v1756 = vsub.f32 %v1732, %v1744
        %v1757 = vsub.f32 %v1733, %v1745
        %v1758 = vsub.f32 %v1734, %v1746
        %v1759 = vmul.f32 %v1747, %v1747
        %v1760 = vmul.f32 %v1748, %v1748
        %v1761 = vmul.f32 %v1749, %v1749
        %v1762 = vmul.f32 %v1750, %v1750
        %v1763 = vmul.f32 %v1751, %v1751
        %v1764 = vmul.f32 %v1752, %v1752
        %v1765 = vmul.f32 %v1753, %v1753
        %v1766 = vmul.f32 %v1754, %v1754
        %v1767 = vmul.f32 %v1755, %v1755
        %v1768 = vmul.f32 %v1756, %v1756
        %v1769 = vmul.f32 %v1757, %v1757
        %v1770 = vmul.f32 %v1758, %v1758
        %v1771 = vadd.f32 %v1759, %v1761
        %v1772 = vadd.f32 %v1760, %v1762
        %v1773 = vadd.f32 %v1761, %v1763
        %v1774 = vadd.f32 %v1762, %v1764
        %v1775 = vadd.f32 %v1763, %v1765
        %v1776 = vadd.f32 %v1764, %v1766
        %v1777 = vadd.f32 %v1765, %v1767
        %v1778 = vadd.f32 %v1766, %v1768
        %v1779 = vadd.f32 %v1771, %v1763
        %v1780 = vadd.f32 %v1772, %v1764
        %v1781 = vadd.f32 %v1773, %v1765
        %v1782 = vadd.f32 %v1774, %v1766
        %v1783 = vadd.f32 %v1775, %v1767
        %v1784 = vadd.f32 %v1776, %v1768
        %v1785 = vadd.f32 %v1777, %v1769
        %v1786 = vadd.f32 %v1778, %v1770
        %1787 = vst.msk [vmem:[#allocation4 + $0x1] sm:$0xff] %vm177, %v1779
        %1788 = vst.msk [vmem:[#allocation4 + $0x9] sm:$0xff] %vm177, %v1780
        %1789 = vst.msk [vmem:[#allocation4 + $0x19] sm:$0xff] %vm177, %v1781
        %1790 = vst.msk [vmem:[#allocation4 + $0x21] sm:$0xff] %vm177, %v1782
        %1791 = vst.msk [vmem:[#allocation4 + $0x31] sm:$0xff] %vm177, %v1783
        %1792 = vst.msk [vmem:[#allocation4 + $0x39] sm:$0xff] %vm177, %v1784
        %1793 = vst.msk [vmem:[#allocation4 + $0x49] sm:$0xff] %vm177, %v1785
        %1794 = vst.msk [vmem:[#allocation4 + $0x51] sm:$0xff] %vm177, %v1786
        %1795 = vst.msk [vmem:[#allocation4] sm:$0x1] %vm756, %v1779
        %1796 = vst.msk [vmem:[#allocation4 + $0x18] sm:$0x1] %vm756, %v1781
        %1797 = vst.msk [vmem:[#allocation4 + $0x30] sm:$0x1] %vm756, %v1783
        %1798 = vst.msk [vmem:[#allocation4 + $0x48] sm:$0x1] %vm756, %v1785
        %1799 = vst.msk [vmem:[#allocation4 + $0xa] sm:$0x80] %vm761, %v1780
        %1800 = vst.msk [vmem:[#allocation4 + $0x22] sm:$0x80] %vm761, %v1782
        %1801 = vst.msk [vmem:[#allocation4 + $0x3a] sm:$0x80] %vm761, %v1784
        %1802 = vst.msk [vmem:[#allocation4 + $0x52] sm:$0x80] %vm761, %v1786
        %v1803 = vld [vmem:[#allocation4] sm:$0xff]
        %v1804 = vld [vmem:[#allocation4 + $0x8] sm:$0xff]
        %v1805 = vld [vmem:[#allocation4 + $0x10] sm:$0x3]
        %v1806 = vld [vmem:[#allocation4 + $0x18] sm:$0xff]
        %v1807 = vld [vmem:[#allocation4 + $0x20] sm:$0xff]
        %v1808 = vld [vmem:[#allocation4 + $0x28] sm:$0x3]
        %v1809 = vld [vmem:[#allocation4 + $0x30] sm:$0xff]
        %v1810 = vld [vmem:[#allocation4 + $0x38] sm:$0xff]
        %v1811 = vld [vmem:[#allocation4 + $0x40] sm:$0x3]
        %v1812 = vld [vmem:[#allocation4 + $0x48] sm:$0xff]
        %v1813 = vld [vmem:[#allocation4 + $0x50] sm:$0xff]
        %v1814 = vld [vmem:[#allocation4 + $0x58] sm:$0x3]
        %v1827 = vrot.slane %v1803, 1
        %v1828 = vrot.slane %v1804, 1
        %v1829 = vsel %vm790, %v1827, %v1828
        %v1830 = vrot.slane %v1805, 1
        %v1831 = vsel %vm790, %v1828, %v1830
        %v1832 = vrot.slane %v1806, 1
        %v1833 = vrot.slane %v1807, 1
        %v1834 = vsel %vm790, %v1832, %v1833
        %v1835 = vrot.slane %v1808, 1
        %v1836 = vsel %vm790, %v1833, %v1835
        %v1837 = vrot.slane %v1809, 1
        %v1838 = vrot.slane %v1810, 1
        %v1839 = vsel %vm790, %v1837, %v1838
        %v1840 = vrot.slane %v1811, 1
        %v1841 = vsel %vm790, %v1838, %v1840
        %v1842 = vrot.slane %v1812, 1
        %v1843 = vrot.slane %v1813, 1
        %v1844 = vsel %vm790, %v1842, %v1843
        %v1845 = vrot.slane %v1814, 1
        %v1846 = vsel %vm790, %v1843, %v1845
        %v1855 = vadd.f32 %v1803, %v1829
        %v1856 = vadd.f32 %v1804, %v1831
        %v1857 = vadd.f32 %v1806, %v1834
        %v1858 = vadd.f32 %v1807, %v1836
        %v1859 = vadd.f32 %v1809, %v1839
        %v1860 = vadd.f32 %v1810, %v1841
        %v1861 = vadd.f32 %v1812, %v1844
        %v1862 = vadd.f32 %v1813, %v1846
        %v1863 = vrot.slane %v1803, 2
        %v1864 = vrot.slane %v1804, 2
        %v1865 = vsel %vm827, %v1863, %v1864
        %v1866 = vrot.slane %v1805, 2
        %v1867 = vsel %vm827, %v1864, %v1866
        %v1868 = vrot.slane %v1806, 2
        %v1869 = vrot.slane %v1807, 2
        %v1870 = vsel %vm827, %v1868, %v1869
        %v1871 = vrot.slane %v1808, 2
        %v1872 = vsel %vm827, %v1869, %v1871
        %v1873 = vrot.slane %v1809, 2
        %v1874 = vrot.slane %v1810, 2
        %v1875 = vsel %vm827, %v1873, %v1874
        %v1876 = vrot.slane %v1811, 2
        %v1877 = vsel %vm827, %v1874, %v1876
        %v1878 = vrot.slane %v1812, 2
        %v1879 = vrot.slane %v1813, 2
        %v1880 = vsel %vm827, %v1878, %v1879
        %v1881 = vrot.slane %v1814, 2
        %v1882 = vsel %vm827, %v1879, %v1881
        %v1891 = vadd.f32 %v1855, %v1865
        %v1892 = vadd.f32 %v1856, %v1867
        %v1893 = vadd.f32 %v1857, %v1870
        %v1894 = vadd.f32 %v1858, %v1872
        %v1895 = vadd.f32 %v1859, %v1875
        %v1896 = vadd.f32 %v1860, %v1877
        %v1897 = vadd.f32 %v1861, %v1880
        %v1898 = vadd.f32 %v1862, %v1882
        %1907 = vrot.lane.b32.xlu0 %v1891, 1
        %v1908 = vpop.permute.xlu0 %1907
        %1909 = vrot.lane.b32.xlu0 %v1892, 1
        %v1910 = vpop.permute.xlu0 %1909
        %1911 = vrot.lane.b32.xlu0 %v1893, 1
        %v1912 = vpop.permute.xlu0 %1911
        %1913 = vrot.lane.b32.xlu0 %v1894, 1
        %v1914 = vpop.permute.xlu0 %1913
        %1915 = vrot.lane.b32.xlu0 %v1895, 1
        %v1916 = vpop.permute.xlu0 %1915
        %1917 = vrot.lane.b32.xlu0 %v1896, 1
        %v1918 = vpop.permute.xlu0 %1917
        %1919 = vrot.lane.b32.xlu0 %v1897, 1
        %v1920 = vpop.permute.xlu0 %1919
        %1921 = vrot.lane.b32.xlu0 %v1898, 1
        %v1922 = vpop.permute.xlu0 %1921
        %1931 = vst.msk [vmem:[#allocation5] sm:$0xff] %vm896, %v1908
        %1932 = vst.msk [vmem:[#allocation5 + $0x8] sm:$0xff] %vm896, %v1910
        %1933 = vst.msk [vmem:[#allocation5 + $0x10] sm:$0xff] %vm896, %v1912
        %1934 = vst.msk [vmem:[#allocation5 + $0x18] sm:$0xff] %vm896, %v1914
        %1935 = vst.msk [vmem:[#allocation5 + $0x20] sm:$0xff] %vm896, %v1916
        %1936 = vst.msk [vmem:[#allocation5 + $0x28] sm:$0xff] %vm896, %v1918
        %1937 = vst.msk [vmem:[#allocation5 + $0x30] sm:$0xff] %vm896, %v1920
        %1938 = vst.msk [vmem:[#allocation5 + $0x38] sm:$0xff] %vm896, %v1922
        %1939 = vst.msk [vmem:[#allocation5] sm:$0xff] %vm905, %v1891
        %1940 = vst.msk [vmem:[#allocation5 + $0x8] sm:$0xff] %vm905, %v1892
        %1941 = vst.msk [vmem:[#allocation5 + $0x10] sm:$0xff] %vm905, %v1893
        %1942 = vst.msk [vmem:[#allocation5 + $0x18] sm:$0xff] %vm905, %v1894
        %1943 = vst.msk [vmem:[#allocation5 + $0x20] sm:$0xff] %vm905, %v1895
        %1944 = vst.msk [vmem:[#allocation5 + $0x28] sm:$0xff] %vm905, %v1896
        %1945 = vst.msk [vmem:[#allocation5 + $0x30] sm:$0xff] %vm905, %v1897
        %1946 = vst.msk [vmem:[#allocation5 + $0x38] sm:$0xff] %vm905, %v1898
        %1947 = vrot.lane.b32.xlu0 %v1891, 2
        %v1948 = vpop.permute.xlu0 %1947
        %1949 = vrot.lane.b32.xlu0 %v1892, 2
        %v1950 = vpop.permute.xlu0 %1949
        %1951 = vrot.lane.b32.xlu0 %v1893, 2
        %v1952 = vpop.permute.xlu0 %1951
        %1953 = vrot.lane.b32.xlu0 %v1894, 2
        %v1954 = vpop.permute.xlu0 %1953
        %1955 = vrot.lane.b32.xlu0 %v1895, 2
        %v1956 = vpop.permute.xlu0 %1955
        %1957 = vrot.lane.b32.xlu0 %v1896, 2
        %v1958 = vpop.permute.xlu0 %1957
        %1959 = vrot.lane.b32.xlu0 %v1897, 2
        %v1960 = vpop.permute.xlu0 %1959
        %1961 = vrot.lane.b32.xlu0 %v1898, 2
        %v1962 = vpop.permute.xlu0 %1961
        %1971 = vst.msk [vmem:[#allocation5] sm:$0xff] %vm938, %v1948
        %1972 = vst.msk [vmem:[#allocation5 + $0x8] sm:$0xff] %vm938, %v1950
        %1973 = vst.msk [vmem:[#allocation5 + $0x10] sm:$0xff] %vm938, %v1952
        %1974 = vst.msk [vmem:[#allocation5 + $0x18] sm:$0xff] %vm938, %v1954
        %1975 = vst.msk [vmem:[#allocation5 + $0x20] sm:$0xff] %vm938, %v1956
        %1976 = vst.msk [vmem:[#allocation5 + $0x28] sm:$0xff] %vm938, %v1958
        %1977 = vst.msk [vmem:[#allocation5 + $0x30] sm:$0xff] %vm938, %v1960
        %1978 = vst.msk [vmem:[#allocation5 + $0x38] sm:$0xff] %vm938, %v1962
        %v1979 = vld [vmem:[#allocation5] sm:$0xff]
        %v1980 = vld [vmem:[#allocation5 + $0x8] sm:$0xff]
        %v1981 = vld [vmem:[#allocation5 + $0x10] sm:$0xff]
        %v1982 = vld [vmem:[#allocation5 + $0x18] sm:$0xff]
        %v1983 = vld [vmem:[#allocation5 + $0x20] sm:$0xff]
        %v1984 = vld [vmem:[#allocation5 + $0x28] sm:$0xff]
        %v1985 = vld [vmem:[#allocation5 + $0x30] sm:$0xff]
        %v1986 = vld [vmem:[#allocation5 + $0x38] sm:$0xff]
        %1995 = vrot.lane.b32.xlu0 %v1979, 127
        %v1996 = vpop.permute.xlu0 %1995
        %1997 = vrot.lane.b32.xlu0 %v1980, 127
        %v1998 = vpop.permute.xlu0 %1997
        %1999 = vrot.lane.b32.xlu0 %v1981, 127
        %v2000 = vpop.permute.xlu0 %1999
        %2001 = vrot.lane.b32.xlu0 %v1982, 127
        %v2002 = vpop.permute.xlu0 %2001
        %2003 = vrot.lane.b32.xlu0 %v1983, 127
        %v2004 = vpop.permute.xlu0 %2003
        %2005 = vrot.lane.b32.xlu0 %v1984, 127
        %v2006 = vpop.permute.xlu0 %2005
        %2007 = vrot.lane.b32.xlu0 %v1985, 127
        %v2008 = vpop.permute.xlu0 %2007
        %2009 = vrot.lane.b32.xlu0 %v1986, 127
        %v2010 = vpop.permute.xlu0 %2009
        %v2019 = vadd.f32 %v1979, %v1996
        %v2020 = vadd.f32 %v1980, %v1998
        %v2021 = vadd.f32 %v1981, %v2000
        %v2022 = vadd.f32 %v1982, %v2002
        %v2023 = vadd.f32 %v1983, %v2004
        %v2024 = vadd.f32 %v1984, %v2006
        %v2025 = vadd.f32 %v1985, %v2008
        %v2026 = vadd.f32 %v1986, %v2010
        %2027 = vrot.lane.b32.xlu0 %v1979, 126
        %v2028 = vpop.permute.xlu0 %2027
        %2029 = vrot.lane.b32.xlu0 %v1980, 126
        %v2030 = vpop.permute.xlu0 %2029
        %2031 = vrot.lane.b32.xlu0 %v1981, 126
        %v2032 = vpop.permute.xlu0 %2031
        %2033 = vrot.lane.b32.xlu0 %v1982, 126
        %v2034 = vpop.permute.xlu0 %2033
        %2035 = vrot.lane.b32.xlu0 %v1983, 126
        %v2036 = vpop.permute.xlu0 %2035
        %2037 = vrot.lane.b32.xlu0 %v1984, 126
        %v2038 = vpop.permute.xlu0 %2037
        %2039 = vrot.lane.b32.xlu0 %v1985, 126
        %v2040 = vpop.permute.xlu0 %2039
        %2041 = vrot.lane.b32.xlu0 %v1986, 126
        %v2042 = vpop.permute.xlu0 %2041
        %v2051 = vadd.f32 %v2019, %v2028
        %v2052 = vadd.f32 %v2020, %v2030
        %v2053 = vadd.f32 %v2021, %v2032
        %v2054 = vadd.f32 %v2022, %v2034
        %v2055 = vadd.f32 %v2023, %v2036
        %v2056 = vadd.f32 %v2024, %v2038
        %v2057 = vadd.f32 %v2025, %v2040
        %v2058 = vadd.f32 %v2026, %v2042
        %v2059 = vmul.f32 %v2051, 0.037037037
        %v2060 = vmul.f32 %v2052, 0.037037037
        %v2061 = vmul.f32 %v2053, 0.037037037
        %v2062 = vmul.f32 %v2054, 0.037037037
        %v2063 = vmul.f32 %v2055, 0.037037037
        %v2064 = vmul.f32 %v2056, 0.037037037
        %v2065 = vmul.f32 %v2057, 0.037037037
        %v2066 = vmul.f32 %v2058, 0.037037037
        %v2067 = vld [vmem:[%s206] sm:$0xff]
        %v2068 = vld [vmem:[%s206 + $0x8] sm:$0xff]
        %v2069 = vld [vmem:[%s206 + $0x10] sm:$0xff]
        %v2070 = vld [vmem:[%s206 + $0x18] sm:$0xff]
        %v2071 = vld [vmem:[%s206 + $0x20] sm:$0xff]
        %v2072 = vld [vmem:[%s206 + $0x28] sm:$0xff]
        %v2073 = vld [vmem:[%s206 + $0x30] sm:$0xff]
        %v2074 = vld [vmem:[%s206 + $0x38] sm:$0xff]
        %v2075 = vld [vmem:[%s206 + $0x40] sm:$0xff]
        %v2076 = vld [vmem:[%s206 + $0x48] sm:$0xff]
        %v2077 = vld [vmem:[%s206 + $0x50] sm:$0xff]
        %v2078 = vld [vmem:[%s206 + $0x58] sm:$0xff]
        %v2079 = vld [vmem:[%s193] sm:$0xff]
        %v2080 = vld [vmem:[%s193 + $0x8] sm:$0xff]
        %v2081 = vld [vmem:[%s193 + $0x10] sm:$0xff]
        %v2082 = vld [vmem:[%s193 + $0x18] sm:$0xff]
        %v2083 = vld [vmem:[%s193 + $0x20] sm:$0xff]
        %v2084 = vld [vmem:[%s193 + $0x28] sm:$0xff]
        %v2085 = vld [vmem:[%s193 + $0x30] sm:$0xff]
        %v2086 = vld [vmem:[%s193 + $0x38] sm:$0xff]
        %v2087 = vld [vmem:[%s193 + $0x40] sm:$0xff]
        %v2088 = vld [vmem:[%s193 + $0x48] sm:$0xff]
        %v2089 = vld [vmem:[%s193 + $0x50] sm:$0xff]
        %v2090 = vld [vmem:[%s193 + $0x58] sm:$0xff]
        %v2091 = vsub.f32 %v2067, %v2079
        %v2092 = vsub.f32 %v2068, %v2080
        %v2093 = vsub.f32 %v2069, %v2081
        %v2094 = vsub.f32 %v2070, %v2082
        %v2095 = vsub.f32 %v2071, %v2083
        %v2096 = vsub.f32 %v2072, %v2084
        %v2097 = vsub.f32 %v2073, %v2085
        %v2098 = vsub.f32 %v2074, %v2086
        %v2099 = vsub.f32 %v2075, %v2087
        %v2100 = vsub.f32 %v2076, %v2088
        %v2101 = vsub.f32 %v2077, %v2089
        %v2102 = vsub.f32 %v2078, %v2090
        %v2103 = vmul.f32 %v2091, %v2091
        %v2104 = vmul.f32 %v2092, %v2092
        %v2105 = vmul.f32 %v2093, %v2093
        %v2106 = vmul.f32 %v2094, %v2094
        %v2107 = vmul.f32 %v2095, %v2095
        %v2108 = vmul.f32 %v2096, %v2096
        %v2109 = vmul.f32 %v2097, %v2097
        %v2110 = vmul.f32 %v2098, %v2098
        %v2111 = vmul.f32 %v2099, %v2099
        %v2112 = vmul.f32 %v2100, %v2100
        %v2113 = vmul.f32 %v2101, %v2101
        %v2114 = vmul.f32 %v2102, %v2102
        %v2115 = vadd.f32 %v2103, %v2105
        %v2116 = vadd.f32 %v2104, %v2106
        %v2117 = vadd.f32 %v2105, %v2107
        %v2118 = vadd.f32 %v2106, %v2108
        %v2119 = vadd.f32 %v2107, %v2109
        %v2120 = vadd.f32 %v2108, %v2110
        %v2121 = vadd.f32 %v2109, %v2111
        %v2122 = vadd.f32 %v2110, %v2112
        %v2123 = vadd.f32 %v2115, %v2107
        %v2124 = vadd.f32 %v2116, %v2108
        %v2125 = vadd.f32 %v2117, %v2109
        %v2126 = vadd.f32 %v2118, %v2110
        %v2127 = vadd.f32 %v2119, %v2111
        %v2128 = vadd.f32 %v2120, %v2112
        %v2129 = vadd.f32 %v2121, %v2113
        %v2130 = vadd.f32 %v2122, %v2114
        %2131 = vst.msk [vmem:[#allocation4 + $0x1] sm:$0xff] %vm177, %v2123
        %2132 = vst.msk [vmem:[#allocation4 + $0x9] sm:$0xff] %vm177, %v2124
        %2133 = vst.msk [vmem:[#allocation4 + $0x19] sm:$0xff] %vm177, %v2125
        %2134 = vst.msk [vmem:[#allocation4 + $0x21] sm:$0xff] %vm177, %v2126
        %2135 = vst.msk [vmem:[#allocation4 + $0x31] sm:$0xff] %vm177, %v2127
        %2136 = vst.msk [vmem:[#allocation4 + $0x39] sm:$0xff] %vm177, %v2128
        %2137 = vst.msk [vmem:[#allocation4 + $0x49] sm:$0xff] %vm177, %v2129
        %2138 = vst.msk [vmem:[#allocation4 + $0x51] sm:$0xff] %vm177, %v2130
        %2139 = vst.msk [vmem:[#allocation4] sm:$0x1] %vm756, %v2123
        %2140 = vst.msk [vmem:[#allocation4 + $0x18] sm:$0x1] %vm756, %v2125
        %2141 = vst.msk [vmem:[#allocation4 + $0x30] sm:$0x1] %vm756, %v2127
        %2142 = vst.msk [vmem:[#allocation4 + $0x48] sm:$0x1] %vm756, %v2129
        %2143 = vst.msk [vmem:[#allocation4 + $0xa] sm:$0x80] %vm761, %v2124
        %2144 = vst.msk [vmem:[#allocation4 + $0x22] sm:$0x80] %vm761, %v2126
        %2145 = vst.msk [vmem:[#allocation4 + $0x3a] sm:$0x80] %vm761, %v2128
        %2146 = vst.msk [vmem:[#allocation4 + $0x52] sm:$0x80] %vm761, %v2130
        %v2147 = vld [vmem:[#allocation4] sm:$0xff]
        %v2148 = vld [vmem:[#allocation4 + $0x8] sm:$0xff]
        %v2149 = vld [vmem:[#allocation4 + $0x10] sm:$0x3]
        %v2150 = vld [vmem:[#allocation4 + $0x18] sm:$0xff]
        %v2151 = vld [vmem:[#allocation4 + $0x20] sm:$0xff]
        %v2152 = vld [vmem:[#allocation4 + $0x28] sm:$0x3]
        %v2153 = vld [vmem:[#allocation4 + $0x30] sm:$0xff]
        %v2154 = vld [vmem:[#allocation4 + $0x38] sm:$0xff]
        %v2155 = vld [vmem:[#allocation4 + $0x40] sm:$0x3]
        %v2156 = vld [vmem:[#allocation4 + $0x48] sm:$0xff]
        %v2157 = vld [vmem:[#allocation4 + $0x50] sm:$0xff]
        %v2158 = vld [vmem:[#allocation4 + $0x58] sm:$0x3]
        %v2171 = vrot.slane %v2147, 1
        %v2172 = vrot.slane %v2148, 1
        %v2173 = vsel %vm790, %v2171, %v2172
        %v2174 = vrot.slane %v2149, 1
        %v2175 = vsel %vm790, %v2172, %v2174
        %v2176 = vrot.slane %v2150, 1
        %v2177 = vrot.slane %v2151, 1
        %v2178 = vsel %vm790, %v2176, %v2177
        %v2179 = vrot.slane %v2152, 1
        %v2180 = vsel %vm790, %v2177, %v2179
        %v2181 = vrot.slane %v2153, 1
        %v2182 = vrot.slane %v2154, 1
        %v2183 = vsel %vm790, %v2181, %v2182
        %v2184 = vrot.slane %v2155, 1
        %v2185 = vsel %vm790, %v2182, %v2184
        %v2186 = vrot.slane %v2156, 1
        %v2187 = vrot.slane %v2157, 1
        %v2188 = vsel %vm790, %v2186, %v2187
        %v2189 = vrot.slane %v2158, 1
        %v2190 = vsel %vm790, %v2187, %v2189
        %v2199 = vadd.f32 %v2147, %v2173
        %v2200 = vadd.f32 %v2148, %v2175
        %v2201 = vadd.f32 %v2150, %v2178
        %v2202 = vadd.f32 %v2151, %v2180
        %v2203 = vadd.f32 %v2153, %v2183
        %v2204 = vadd.f32 %v2154, %v2185
        %v2205 = vadd.f32 %v2156, %v2188
        %v2206 = vadd.f32 %v2157, %v2190
        %v2207 = vrot.slane %v2147, 2
        %v2208 = vrot.slane %v2148, 2
        %v2209 = vsel %vm827, %v2207, %v2208
        %v2210 = vrot.slane %v2149, 2
        %v2211 = vsel %vm827, %v2208, %v2210
        %v2212 = vrot.slane %v2150, 2
        %v2213 = vrot.slane %v2151, 2
        %v2214 = vsel %vm827, %v2212, %v2213
        %v2215 = vrot.slane %v2152, 2
        %v2216 = vsel %vm827, %v2213, %v2215
        %v2217 = vrot.slane %v2153, 2
        %v2218 = vrot.slane %v2154, 2
        %v2219 = vsel %vm827, %v2217, %v2218
        %v2220 = vrot.slane %v2155, 2
        %v2221 = vsel %vm827, %v2218, %v2220
        %v2222 = vrot.slane %v2156, 2
        %v2223 = vrot.slane %v2157, 2
        %v2224 = vsel %vm827, %v2222, %v2223
        %v2225 = vrot.slane %v2158, 2
        %v2226 = vsel %vm827, %v2223, %v2225
        %v2235 = vadd.f32 %v2199, %v2209
        %v2236 = vadd.f32 %v2200, %v2211
        %v2237 = vadd.f32 %v2201, %v2214
        %v2238 = vadd.f32 %v2202, %v2216
        %v2239 = vadd.f32 %v2203, %v2219
        %v2240 = vadd.f32 %v2204, %v2221
        %v2241 = vadd.f32 %v2205, %v2224
        %v2242 = vadd.f32 %v2206, %v2226
        %2251 = vrot.lane.b32.xlu0 %v2235, 1
        %v2252 = vpop.permute.xlu0 %2251
        %2253 = vrot.lane.b32.xlu0 %v2236, 1
        %v2254 = vpop.permute.xlu0 %2253
        %2255 = vrot.lane.b32.xlu0 %v2237, 1
        %v2256 = vpop.permute.xlu0 %2255
        %2257 = vrot.lane.b32.xlu0 %v2238, 1
        %v2258 = vpop.permute.xlu0 %2257
        %2259 = vrot.lane.b32.xlu0 %v2239, 1
        %v2260 = vpop.permute.xlu0 %2259
        %2261 = vrot.lane.b32.xlu0 %v2240, 1
        %v2262 = vpop.permute.xlu0 %2261
        %2263 = vrot.lane.b32.xlu0 %v2241, 1
        %v2264 = vpop.permute.xlu0 %2263
        %2265 = vrot.lane.b32.xlu0 %v2242, 1
        %v2266 = vpop.permute.xlu0 %2265
        %2275 = vst.msk [vmem:[#allocation5] sm:$0xff] %vm896, %v2252
        %2276 = vst.msk [vmem:[#allocation5 + $0x8] sm:$0xff] %vm896, %v2254
        %2277 = vst.msk [vmem:[#allocation5 + $0x10] sm:$0xff] %vm896, %v2256
        %2278 = vst.msk [vmem:[#allocation5 + $0x18] sm:$0xff] %vm896, %v2258
        %2279 = vst.msk [vmem:[#allocation5 + $0x20] sm:$0xff] %vm896, %v2260
        %2280 = vst.msk [vmem:[#allocation5 + $0x28] sm:$0xff] %vm896, %v2262
        %2281 = vst.msk [vmem:[#allocation5 + $0x30] sm:$0xff] %vm896, %v2264
        %2282 = vst.msk [vmem:[#allocation5 + $0x38] sm:$0xff] %vm896, %v2266
        %2283 = vst.msk [vmem:[#allocation5] sm:$0xff] %vm905, %v2235
        %2284 = vst.msk [vmem:[#allocation5 + $0x8] sm:$0xff] %vm905, %v2236
        %2285 = vst.msk [vmem:[#allocation5 + $0x10] sm:$0xff] %vm905, %v2237
        %2286 = vst.msk [vmem:[#allocation5 + $0x18] sm:$0xff] %vm905, %v2238
        %2287 = vst.msk [vmem:[#allocation5 + $0x20] sm:$0xff] %vm905, %v2239
        %2288 = vst.msk [vmem:[#allocation5 + $0x28] sm:$0xff] %vm905, %v2240
        %2289 = vst.msk [vmem:[#allocation5 + $0x30] sm:$0xff] %vm905, %v2241
        %2290 = vst.msk [vmem:[#allocation5 + $0x38] sm:$0xff] %vm905, %v2242
        %2291 = vrot.lane.b32.xlu0 %v2235, 2
        %v2292 = vpop.permute.xlu0 %2291
        %2293 = vrot.lane.b32.xlu0 %v2236, 2
        %v2294 = vpop.permute.xlu0 %2293
        %2295 = vrot.lane.b32.xlu0 %v2237, 2
        %v2296 = vpop.permute.xlu0 %2295
        %2297 = vrot.lane.b32.xlu0 %v2238, 2
        %v2298 = vpop.permute.xlu0 %2297
        %2299 = vrot.lane.b32.xlu0 %v2239, 2
        %v2300 = vpop.permute.xlu0 %2299
        %2301 = vrot.lane.b32.xlu0 %v2240, 2
        %v2302 = vpop.permute.xlu0 %2301
        %2303 = vrot.lane.b32.xlu0 %v2241, 2
        %v2304 = vpop.permute.xlu0 %2303
        %2305 = vrot.lane.b32.xlu0 %v2242, 2
        %v2306 = vpop.permute.xlu0 %2305
        %2315 = vst.msk [vmem:[#allocation5] sm:$0xff] %vm938, %v2292
        %2316 = vst.msk [vmem:[#allocation5 + $0x8] sm:$0xff] %vm938, %v2294
        %2317 = vst.msk [vmem:[#allocation5 + $0x10] sm:$0xff] %vm938, %v2296
        %2318 = vst.msk [vmem:[#allocation5 + $0x18] sm:$0xff] %vm938, %v2298
        %2319 = vst.msk [vmem:[#allocation5 + $0x20] sm:$0xff] %vm938, %v2300
        %2320 = vst.msk [vmem:[#allocation5 + $0x28] sm:$0xff] %vm938, %v2302
        %2321 = vst.msk [vmem:[#allocation5 + $0x30] sm:$0xff] %vm938, %v2304
        %2322 = vst.msk [vmem:[#allocation5 + $0x38] sm:$0xff] %vm938, %v2306
        %v2323 = vld [vmem:[#allocation5] sm:$0xff]
        %v2324 = vld [vmem:[#allocation5 + $0x8] sm:$0xff]
        %v2325 = vld [vmem:[#allocation5 + $0x10] sm:$0xff]
        %v2326 = vld [vmem:[#allocation5 + $0x18] sm:$0xff]
        %v2327 = vld [vmem:[#allocation5 + $0x20] sm:$0xff]
        %v2328 = vld [vmem:[#allocation5 + $0x28] sm:$0xff]
        %v2329 = vld [vmem:[#allocation5 + $0x30] sm:$0xff]
        %v2330 = vld [vmem:[#allocation5 + $0x38] sm:$0xff]
        %2339 = vrot.lane.b32.xlu0 %v2323, 127
        %v2340 = vpop.permute.xlu0 %2339
        %2341 = vrot.lane.b32.xlu0 %v2324, 127
        %v2342 = vpop.permute.xlu0 %2341
        %2343 = vrot.lane.b32.xlu0 %v2325, 127
        %v2344 = vpop.permute.xlu0 %2343
        %2345 = vrot.lane.b32.xlu0 %v2326, 127
        %v2346 = vpop.permute.xlu0 %2345
        %2347 = vrot.lane.b32.xlu0 %v2327, 127
        %v2348 = vpop.permute.xlu0 %2347
        %2349 = vrot.lane.b32.xlu0 %v2328, 127
        %v2350 = vpop.permute.xlu0 %2349
        %2351 = vrot.lane.b32.xlu0 %v2329, 127
        %v2352 = vpop.permute.xlu0 %2351
        %2353 = vrot.lane.b32.xlu0 %v2330, 127
        %v2354 = vpop.permute.xlu0 %2353
        %v2363 = vadd.f32 %v2323, %v2340
        %v2364 = vadd.f32 %v2324, %v2342
        %v2365 = vadd.f32 %v2325, %v2344
        %v2366 = vadd.f32 %v2326, %v2346
        %v2367 = vadd.f32 %v2327, %v2348
        %v2368 = vadd.f32 %v2328, %v2350
        %v2369 = vadd.f32 %v2329, %v2352
        %v2370 = vadd.f32 %v2330, %v2354
        %2371 = vrot.lane.b32.xlu0 %v2323, 126
        %v2372 = vpop.permute.xlu0 %2371
        %2373 = vrot.lane.b32.xlu0 %v2324, 126
        %v2374 = vpop.permute.xlu0 %2373
        %2375 = vrot.lane.b32.xlu0 %v2325, 126
        %v2376 = vpop.permute.xlu0 %2375
        %2377 = vrot.lane.b32.xlu0 %v2326, 126
        %v2378 = vpop.permute.xlu0 %2377
        %2379 = vrot.lane.b32.xlu0 %v2327, 126
        %v2380 = vpop.permute.xlu0 %2379
        %2381 = vrot.lane.b32.xlu0 %v2328, 126
        %v2382 = vpop.permute.xlu0 %2381
        %2383 = vrot.lane.b32.xlu0 %v2329, 126
        %v2384 = vpop.permute.xlu0 %2383
        %2385 = vrot.lane.b32.xlu0 %v2330, 126
        %v2386 = vpop.permute.xlu0 %2385
        %v2395 = vadd.f32 %v2363, %v2372
        %v2396 = vadd.f32 %v2364, %v2374
        %v2397 = vadd.f32 %v2365, %v2376
        %v2398 = vadd.f32 %v2366, %v2378
        %v2399 = vadd.f32 %v2367, %v2380
        %v2400 = vadd.f32 %v2368, %v2382
        %v2401 = vadd.f32 %v2369, %v2384
        %v2402 = vadd.f32 %v2370, %v2386
        %v2403 = vmul.f32 %v2395, 0.037037037
        %v2404 = vmul.f32 %v2396, 0.037037037
        %v2405 = vmul.f32 %v2397, 0.037037037
        %v2406 = vmul.f32 %v2398, 0.037037037
        %v2407 = vmul.f32 %v2399, 0.037037037
        %v2408 = vmul.f32 %v2400, 0.037037037
        %v2409 = vmul.f32 %v2401, 0.037037037
        %v2410 = vmul.f32 %v2402, 0.037037037
        %v2411 = vld [vmem:[%s222] sm:$0xff]
        %v2412 = vld [vmem:[%s222 + $0x8] sm:$0xff]
        %v2413 = vld [vmem:[%s222 + $0x10] sm:$0xff]
        %v2414 = vld [vmem:[%s222 + $0x18] sm:$0xff]
        %v2415 = vld [vmem:[%s222 + $0x20] sm:$0xff]
        %v2416 = vld [vmem:[%s222 + $0x28] sm:$0xff]
        %v2417 = vld [vmem:[%s222 + $0x30] sm:$0xff]
        %v2418 = vld [vmem:[%s222 + $0x38] sm:$0xff]
        %v2419 = vld [vmem:[%s222 + $0x40] sm:$0xff]
        %v2420 = vld [vmem:[%s222 + $0x48] sm:$0xff]
        %v2421 = vld [vmem:[%s222 + $0x50] sm:$0xff]
        %v2422 = vld [vmem:[%s222 + $0x58] sm:$0xff]
        %v2423 = vld [vmem:[%s181] sm:$0xff]
        %v2424 = vld [vmem:[%s181 + $0x8] sm:$0xff]
        %v2425 = vld [vmem:[%s181 + $0x10] sm:$0xff]
        %v2426 = vld [vmem:[%s181 + $0x18] sm:$0xff]
        %v2427 = vld [vmem:[%s181 + $0x20] sm:$0xff]
        %v2428 = vld [vmem:[%s181 + $0x28] sm:$0xff]
        %v2429 = vld [vmem:[%s181 + $0x30] sm:$0xff]
        %v2430 = vld [vmem:[%s181 + $0x38] sm:$0xff]
        %v2431 = vld [vmem:[%s181 + $0x40] sm:$0xff]
        %v2432 = vld [vmem:[%s181 + $0x48] sm:$0xff]
        %v2433 = vld [vmem:[%s181 + $0x50] sm:$0xff]
        %v2434 = vld [vmem:[%s181 + $0x58] sm:$0xff]
        %v2435 = vsub.f32 %v2411, %v2423
        %v2436 = vsub.f32 %v2412, %v2424
        %v2437 = vsub.f32 %v2413, %v2425
        %v2438 = vsub.f32 %v2414, %v2426
        %v2439 = vsub.f32 %v2415, %v2427
        %v2440 = vsub.f32 %v2416, %v2428
        %v2441 = vsub.f32 %v2417, %v2429
        %v2442 = vsub.f32 %v2418, %v2430
        %v2443 = vsub.f32 %v2419, %v2431
        %v2444 = vsub.f32 %v2420, %v2432
        %v2445 = vsub.f32 %v2421, %v2433
        %v2446 = vsub.f32 %v2422, %v2434
        %v2447 = vmul.f32 %v2435, %v2435
        %v2448 = vmul.f32 %v2436, %v2436
        %v2449 = vmul.f32 %v2437, %v2437
        %v2450 = vmul.f32 %v2438, %v2438
        %v2451 = vmul.f32 %v2439, %v2439
        %v2452 = vmul.f32 %v2440, %v2440
        %v2453 = vmul.f32 %v2441, %v2441
        %v2454 = vmul.f32 %v2442, %v2442
        %v2455 = vmul.f32 %v2443, %v2443
        %v2456 = vmul.f32 %v2444, %v2444
        %v2457 = vmul.f32 %v2445, %v2445
        %v2458 = vmul.f32 %v2446, %v2446
        %v2459 = vadd.f32 %v2447, %v2449
        %v2460 = vadd.f32 %v2448, %v2450
        %v2461 = vadd.f32 %v2449, %v2451
        %v2462 = vadd.f32 %v2450, %v2452
        %v2463 = vadd.f32 %v2451, %v2453
        %v2464 = vadd.f32 %v2452, %v2454
        %v2465 = vadd.f32 %v2453, %v2455
        %v2466 = vadd.f32 %v2454, %v2456
        %v2467 = vadd.f32 %v2459, %v2451
        %v2468 = vadd.f32 %v2460, %v2452
        %v2469 = vadd.f32 %v2461, %v2453
        %v2470 = vadd.f32 %v2462, %v2454
        %v2471 = vadd.f32 %v2463, %v2455
        %v2472 = vadd.f32 %v2464, %v2456
        %v2473 = vadd.f32 %v2465, %v2457
        %v2474 = vadd.f32 %v2466, %v2458
        %2475 = vst.msk [vmem:[#allocation4 + $0x1] sm:$0xff] %vm177, %v2467
        %2476 = vst.msk [vmem:[#allocation4 + $0x9] sm:$0xff] %vm177, %v2468
        %2477 = vst.msk [vmem:[#allocation4 + $0x19] sm:$0xff] %vm177, %v2469
        %2478 = vst.msk [vmem:[#allocation4 + $0x21] sm:$0xff] %vm177, %v2470
        %2479 = vst.msk [vmem:[#allocation4 + $0x31] sm:$0xff] %vm177, %v2471
        %2480 = vst.msk [vmem:[#allocation4 + $0x39] sm:$0xff] %vm177, %v2472
        %2481 = vst.msk [vmem:[#allocation4 + $0x49] sm:$0xff] %vm177, %v2473
        %2482 = vst.msk [vmem:[#allocation4 + $0x51] sm:$0xff] %vm177, %v2474
        %2483 = vst.msk [vmem:[#allocation4] sm:$0x1] %vm756, %v2467
        %2484 = vst.msk [vmem:[#allocation4 + $0x18] sm:$0x1] %vm756, %v2469
        %2485 = vst.msk [vmem:[#allocation4 + $0x30] sm:$0x1] %vm756, %v2471
        %2486 = vst.msk [vmem:[#allocation4 + $0x48] sm:$0x1] %vm756, %v2473
        %2487 = vst.msk [vmem:[#allocation4 + $0xa] sm:$0x80] %vm761, %v2468
        %2488 = vst.msk [vmem:[#allocation4 + $0x22] sm:$0x80] %vm761, %v2470
        %2489 = vst.msk [vmem:[#allocation4 + $0x3a] sm:$0x80] %vm761, %v2472
        %2490 = vst.msk [vmem:[#allocation4 + $0x52] sm:$0x80] %vm761, %v2474
        %v2491 = vld [vmem:[#allocation4] sm:$0xff]
        %v2492 = vld [vmem:[#allocation4 + $0x8] sm:$0xff]
        %v2493 = vld [vmem:[#allocation4 + $0x10] sm:$0x3]
        %v2494 = vld [vmem:[#allocation4 + $0x18] sm:$0xff]
        %v2495 = vld [vmem:[#allocation4 + $0x20] sm:$0xff]
        %v2496 = vld [vmem:[#allocation4 + $0x28] sm:$0x3]
        %v2497 = vld [vmem:[#allocation4 + $0x30] sm:$0xff]
        %v2498 = vld [vmem:[#allocation4 + $0x38] sm:$0xff]
        %v2499 = vld [vmem:[#allocation4 + $0x40] sm:$0x3]
        %v2500 = vld [vmem:[#allocation4 + $0x48] sm:$0xff]
        %v2501 = vld [vmem:[#allocation4 + $0x50] sm:$0xff]
        %v2502 = vld [vmem:[#allocation4 + $0x58] sm:$0x3]
        %v2515 = vrot.slane %v2491, 1
        %v2516 = vrot.slane %v2492, 1
        %v2517 = vsel %vm790, %v2515, %v2516
        %v2518 = vrot.slane %v2493, 1
        %v2519 = vsel %vm790, %v2516, %v2518
        %v2520 = vrot.slane %v2494, 1
        %v2521 = vrot.slane %v2495, 1
        %v2522 = vsel %vm790, %v2520, %v2521
        %v2523 = vrot.slane %v2496, 1
        %v2524 = vsel %vm790, %v2521, %v2523
        %v2525 = vrot.slane %v2497, 1
        %v2526 = vrot.slane %v2498, 1
        %v2527 = vsel %vm790, %v2525, %v2526
        %v2528 = vrot.slane %v2499, 1
        %v2529 = vsel %vm790, %v2526, %v2528
        %v2530 = vrot.slane %v2500, 1
        %v2531 = vrot.slane %v2501, 1
        %v2532 = vsel %vm790, %v2530, %v2531
        %v2533 = vrot.slane %v2502, 1
        %v2534 = vsel %vm790, %v2531, %v2533
        %v2543 = vadd.f32 %v2491, %v2517
        %v2544 = vadd.f32 %v2492, %v2519
        %v2545 = vadd.f32 %v2494, %v2522
        %v2546 = vadd.f32 %v2495, %v2524
        %v2547 = vadd.f32 %v2497, %v2527
        %v2548 = vadd.f32 %v2498, %v2529
        %v2549 = vadd.f32 %v2500, %v2532
        %v2550 = vadd.f32 %v2501, %v2534
        %v2551 = vrot.slane %v2491, 2
        %v2552 = vrot.slane %v2492, 2
        %v2553 = vsel %vm827, %v2551, %v2552
        %v2554 = vrot.slane %v2493, 2
        %v2555 = vsel %vm827, %v2552, %v2554
        %v2556 = vrot.slane %v2494, 2
        %v2557 = vrot.slane %v2495, 2
        %v2558 = vsel %vm827, %v2556, %v2557
        %v2559 = vrot.slane %v2496, 2
        %v2560 = vsel %vm827, %v2557, %v2559
        %v2561 = vrot.slane %v2497, 2
        %v2562 = vrot.slane %v2498, 2
        %v2563 = vsel %vm827, %v2561, %v2562
        %v2564 = vrot.slane %v2499, 2
        %v2565 = vsel %vm827, %v2562, %v2564
        %v2566 = vrot.slane %v2500, 2
        %v2567 = vrot.slane %v2501, 2
        %v2568 = vsel %vm827, %v2566, %v2567
        %v2569 = vrot.slane %v2502, 2
        %v2570 = vsel %vm827, %v2567, %v2569
        %v2579 = vadd.f32 %v2543, %v2553
        %v2580 = vadd.f32 %v2544, %v2555
        %v2581 = vadd.f32 %v2545, %v2558
        %v2582 = vadd.f32 %v2546, %v2560
        %v2583 = vadd.f32 %v2547, %v2563
        %v2584 = vadd.f32 %v2548, %v2565
        %v2585 = vadd.f32 %v2549, %v2568
        %v2586 = vadd.f32 %v2550, %v2570
        %2595 = vrot.lane.b32.xlu0 %v2579, 1
        %v2596 = vpop.permute.xlu0 %2595
        %2597 = vrot.lane.b32.xlu0 %v2580, 1
        %v2598 = vpop.permute.xlu0 %2597
        %2599 = vrot.lane.b32.xlu0 %v2581, 1
        %v2600 = vpop.permute.xlu0 %2599
        %2601 = vrot.lane.b32.xlu0 %v2582, 1
        %v2602 = vpop.permute.xlu0 %2601
        %2603 = vrot.lane.b32.xlu0 %v2583, 1
        %v2604 = vpop.permute.xlu0 %2603
        %2605 = vrot.lane.b32.xlu0 %v2584, 1
        %v2606 = vpop.permute.xlu0 %2605
        %2607 = vrot.lane.b32.xlu0 %v2585, 1
        %v2608 = vpop.permute.xlu0 %2607
        %2609 = vrot.lane.b32.xlu0 %v2586, 1
        %v2610 = vpop.permute.xlu0 %2609
        %2619 = vst.msk [vmem:[#allocation5] sm:$0xff] %vm896, %v2596
        %2620 = vst.msk [vmem:[#allocation5 + $0x8] sm:$0xff] %vm896, %v2598
        %2621 = vst.msk [vmem:[#allocation5 + $0x10] sm:$0xff] %vm896, %v2600
        %2622 = vst.msk [vmem:[#allocation5 + $0x18] sm:$0xff] %vm896, %v2602
        %2623 = vst.msk [vmem:[#allocation5 + $0x20] sm:$0xff] %vm896, %v2604
        %2624 = vst.msk [vmem:[#allocation5 + $0x28] sm:$0xff] %vm896, %v2606
        %2625 = vst.msk [vmem:[#allocation5 + $0x30] sm:$0xff] %vm896, %v2608
        %2626 = vst.msk [vmem:[#allocation5 + $0x38] sm:$0xff] %vm896, %v2610
        %2627 = vst.msk [vmem:[#allocation5] sm:$0xff] %vm905, %v2579
        %2628 = vst.msk [vmem:[#allocation5 + $0x8] sm:$0xff] %vm905, %v2580
        %2629 = vst.msk [vmem:[#allocation5 + $0x10] sm:$0xff] %vm905, %v2581
        %2630 = vst.msk [vmem:[#allocation5 + $0x18] sm:$0xff] %vm905, %v2582
        %2631 = vst.msk [vmem:[#allocation5 + $0x20] sm:$0xff] %vm905, %v2583
        %2632 = vst.msk [vmem:[#allocation5 + $0x28] sm:$0xff] %vm905, %v2584
        %2633 = vst.msk [vmem:[#allocation5 + $0x30] sm:$0xff] %vm905, %v2585
        %2634 = vst.msk [vmem:[#allocation5 + $0x38] sm:$0xff] %vm905, %v2586
        %2635 = vrot.lane.b32.xlu0 %v2579, 2
        %v2636 = vpop.permute.xlu0 %2635
        %2637 = vrot.lane.b32.xlu0 %v2580, 2
        %v2638 = vpop.permute.xlu0 %2637
        %2639 = vrot.lane.b32.xlu0 %v2581, 2
        %v2640 = vpop.permute.xlu0 %2639
        %2641 = vrot.lane.b32.xlu0 %v2582, 2
        %v2642 = vpop.permute.xlu0 %2641
        %2643 = vrot.lane.b32.xlu0 %v2583, 2
        %v2644 = vpop.permute.xlu0 %2643
        %2645 = vrot.lane.b32.xlu0 %v2584, 2
        %v2646 = vpop.permute.xlu0 %2645
        %2647 = vrot.lane.b32.xlu0 %v2585, 2
        %v2648 = vpop.permute.xlu0 %2647
        %2649 = vrot.lane.b32.xlu0 %v2586, 2
        %v2650 = vpop.permute.xlu0 %2649
        %2659 = vst.msk [vmem:[#allocation5] sm:$0xff] %vm938, %v2636
        %2660 = vst.msk [vmem:[#allocation5 + $0x8] sm:$0xff] %vm938, %v2638
        %2661 = vst.msk [vmem:[#allocation5 + $0x10] sm:$0xff] %vm938, %v2640
        %2662 = vst.msk [vmem:[#allocation5 + $0x18] sm:$0xff] %vm938, %v2642
        %2663 = vst.msk [vmem:[#allocation5 + $0x20] sm:$0xff] %vm938, %v2644
        %2664 = vst.msk [vmem:[#allocation5 + $0x28] sm:$0xff] %vm938, %v2646
        %2665 = vst.msk [vmem:[#allocation5 + $0x30] sm:$0xff] %vm938, %v2648
        %2666 = vst.msk [vmem:[#allocation5 + $0x38] sm:$0xff] %vm938, %v2650
        %v2667 = vld [vmem:[#allocation5] sm:$0xff]
        %v2668 = vld [vmem:[#allocation5 + $0x8] sm:$0xff]
        %v2669 = vld [vmem:[#allocation5 + $0x10] sm:$0xff]
        %v2670 = vld [vmem:[#allocation5 + $0x18] sm:$0xff]
        %v2671 = vld [vmem:[#allocation5 + $0x20] sm:$0xff]
        %v2672 = vld [vmem:[#allocation5 + $0x28] sm:$0xff]
        %v2673 = vld [vmem:[#allocation5 + $0x30] sm:$0xff]
        %v2674 = vld [vmem:[#allocation5 + $0x38] sm:$0xff]
        %2683 = vrot.lane.b32.xlu0 %v2667, 127
        %v2684 = vpop.permute.xlu0 %2683
        %2685 = vrot.lane.b32.xlu0 %v2668, 127
        %v2686 = vpop.permute.xlu0 %2685
        %2687 = vrot.lane.b32.xlu0 %v2669, 127
        %v2688 = vpop.permute.xlu0 %2687
        %2689 = vrot.lane.b32.xlu0 %v2670, 127
        %v2690 = vpop.permute.xlu0 %2689
        %2691 = vrot.lane.b32.xlu0 %v2671, 127
        %v2692 = vpop.permute.xlu0 %2691
        %2693 = vrot.lane.b32.xlu0 %v2672, 127
        %v2694 = vpop.permute.xlu0 %2693
        %2695 = vrot.lane.b32.xlu0 %v2673, 127
        %v2696 = vpop.permute.xlu0 %2695
        %2697 = vrot.lane.b32.xlu0 %v2674, 127
        %v2698 = vpop.permute.xlu0 %2697
        %v2707 = vadd.f32 %v2667, %v2684
        %v2708 = vadd.f32 %v2668, %v2686
        %v2709 = vadd.f32 %v2669, %v2688
        %v2710 = vadd.f32 %v2670, %v2690
        %v2711 = vadd.f32 %v2671, %v2692
        %v2712 = vadd.f32 %v2672, %v2694
        %v2713 = vadd.f32 %v2673, %v2696
        %v2714 = vadd.f32 %v2674, %v2698
        %2715 = vrot.lane.b32.xlu0 %v2667, 126
        %v2716 = vpop.permute.xlu0 %2715
        %2717 = vrot.lane.b32.xlu0 %v2668, 126
        %v2718 = vpop.permute.xlu0 %2717
        %2719 = vrot.lane.b32.xlu0 %v2669, 126
        %v2720 = vpop.permute.xlu0 %2719
        %2721 = vrot.lane.b32.xlu0 %v2670, 126
        %v2722 = vpop.permute.xlu0 %2721
        %2723 = vrot.lane.b32.xlu0 %v2671, 126
        %v2724 = vpop.permute.xlu0 %2723
        %2725 = vrot.lane.b32.xlu0 %v2672, 126
        %v2726 = vpop.permute.xlu0 %2725
        %2727 = vrot.lane.b32.xlu0 %v2673, 126
        %v2728 = vpop.permute.xlu0 %2727
        %2729 = vrot.lane.b32.xlu0 %v2674, 126
        %v2730 = vpop.permute.xlu0 %2729
        %v2739 = vadd.f32 %v2707, %v2716
        %v2740 = vadd.f32 %v2708, %v2718
        %v2741 = vadd.f32 %v2709, %v2720
        %v2742 = vadd.f32 %v2710, %v2722
        %v2743 = vadd.f32 %v2711, %v2724
        %v2744 = vadd.f32 %v2712, %v2726
        %v2745 = vadd.f32 %v2713, %v2728
        %v2746 = vadd.f32 %v2714, %v2730
        %v2747 = vmul.f32 %v2739, 0.037037037
        %v2748 = vmul.f32 %v2740, 0.037037037
        %v2749 = vmul.f32 %v2741, 0.037037037
        %v2750 = vmul.f32 %v2742, 0.037037037
        %v2751 = vmul.f32 %v2743, 0.037037037
        %v2752 = vmul.f32 %v2744, 0.037037037
        %v2753 = vmul.f32 %v2745, 0.037037037
        %v2754 = vmul.f32 %v2746, 0.037037037
        %v2755 = vld [vmem:[%s222] sm:$0xff]
        %v2756 = vld [vmem:[%s222 + $0x8] sm:$0xff]
        %v2757 = vld [vmem:[%s222 + $0x10] sm:$0xff]
        %v2758 = vld [vmem:[%s222 + $0x18] sm:$0xff]
        %v2759 = vld [vmem:[%s222 + $0x20] sm:$0xff]
        %v2760 = vld [vmem:[%s222 + $0x28] sm:$0xff]
        %v2761 = vld [vmem:[%s222 + $0x30] sm:$0xff]
        %v2762 = vld [vmem:[%s222 + $0x38] sm:$0xff]
        %v2763 = vld [vmem:[%s222 + $0x40] sm:$0xff]
        %v2764 = vld [vmem:[%s222 + $0x48] sm:$0xff]
        %v2765 = vld [vmem:[%s222 + $0x50] sm:$0xff]
        %v2766 = vld [vmem:[%s222 + $0x58] sm:$0xff]
        %v2767 = vld [vmem:[%s193] sm:$0xff]
        %v2768 = vld [vmem:[%s193 + $0x8] sm:$0xff]
        %v2769 = vld [vmem:[%s193 + $0x10] sm:$0xff]
        %v2770 = vld [vmem:[%s193 + $0x18] sm:$0xff]
        %v2771 = vld [vmem:[%s193 + $0x20] sm:$0xff]
        %v2772 = vld [vmem:[%s193 + $0x28] sm:$0xff]
        %v2773 = vld [vmem:[%s193 + $0x30] sm:$0xff]
        %v2774 = vld [vmem:[%s193 + $0x38] sm:$0xff]
        %v2775 = vld [vmem:[%s193 + $0x40] sm:$0xff]
        %v2776 = vld [vmem:[%s193 + $0x48] sm:$0xff]
        %v2777 = vld [vmem:[%s193 + $0x50] sm:$0xff]
        %v2778 = vld [vmem:[%s193 + $0x58] sm:$0xff]
        %v2779 = vsub.f32 %v2755, %v2767
        %v2780 = vsub.f32 %v2756, %v2768
        %v2781 = vsub.f32 %v2757, %v2769
        %v2782 = vsub.f32 %v2758, %v2770
        %v2783 = vsub.f32 %v2759, %v2771
        %v2784 = vsub.f32 %v2760, %v2772
        %v2785 = vsub.f32 %v2761, %v2773
        %v2786 = vsub.f32 %v2762, %v2774
        %v2787 = vsub.f32 %v2763, %v2775
        %v2788 = vsub.f32 %v2764, %v2776
        %v2789 = vsub.f32 %v2765, %v2777
        %v2790 = vsub.f32 %v2766, %v2778
        %v2791 = vmul.f32 %v2779, %v2779
        %v2792 = vmul.f32 %v2780, %v2780
        %v2793 = vmul.f32 %v2781, %v2781
        %v2794 = vmul.f32 %v2782, %v2782
        %v2795 = vmul.f32 %v2783, %v2783
        %v2796 = vmul.f32 %v2784, %v2784
        %v2797 = vmul.f32 %v2785, %v2785
        %v2798 = vmul.f32 %v2786, %v2786
        %v2799 = vmul.f32 %v2787, %v2787
        %v2800 = vmul.f32 %v2788, %v2788
        %v2801 = vmul.f32 %v2789, %v2789
        %v2802 = vmul.f32 %v2790, %v2790
        %v2803 = vadd.f32 %v2791, %v2793
        %v2804 = vadd.f32 %v2792, %v2794
        %v2805 = vadd.f32 %v2793, %v2795
        %v2806 = vadd.f32 %v2794, %v2796
        %v2807 = vadd.f32 %v2795, %v2797
        %v2808 = vadd.f32 %v2796, %v2798
        %v2809 = vadd.f32 %v2797, %v2799
        %v2810 = vadd.f32 %v2798, %v2800
        %v2811 = vadd.f32 %v2803, %v2795
        %v2812 = vadd.f32 %v2804, %v2796
        %v2813 = vadd.f32 %v2805, %v2797
        %v2814 = vadd.f32 %v2806, %v2798
        %v2815 = vadd.f32 %v2807, %v2799
        %v2816 = vadd.f32 %v2808, %v2800
        %v2817 = vadd.f32 %v2809, %v2801
        %v2818 = vadd.f32 %v2810, %v2802
        %2819 = vst.msk [vmem:[#allocation4 + $0x1] sm:$0xff] %vm177, %v2811
        %2820 = vst.msk [vmem:[#allocation4 + $0x9] sm:$0xff] %vm177, %v2812
        %2821 = vst.msk [vmem:[#allocation4 + $0x19] sm:$0xff] %vm177, %v2813
        %2822 = vst.msk [vmem:[#allocation4 + $0x21] sm:$0xff] %vm177, %v2814
        %2823 = vst.msk [vmem:[#allocation4 + $0x31] sm:$0xff] %vm177, %v2815
        %2824 = vst.msk [vmem:[#allocation4 + $0x39] sm:$0xff] %vm177, %v2816
        %2825 = vst.msk [vmem:[#allocation4 + $0x49] sm:$0xff] %vm177, %v2817
        %2826 = vst.msk [vmem:[#allocation4 + $0x51] sm:$0xff] %vm177, %v2818
        %2827 = vst.msk [vmem:[#allocation4] sm:$0x1] %vm756, %v2811
        %2828 = vst.msk [vmem:[#allocation4 + $0x18] sm:$0x1] %vm756, %v2813
        %2829 = vst.msk [vmem:[#allocation4 + $0x30] sm:$0x1] %vm756, %v2815
        %2830 = vst.msk [vmem:[#allocation4 + $0x48] sm:$0x1] %vm756, %v2817
        %2831 = vst.msk [vmem:[#allocation4 + $0xa] sm:$0x80] %vm761, %v2812
        %2832 = vst.msk [vmem:[#allocation4 + $0x22] sm:$0x80] %vm761, %v2814
        %2833 = vst.msk [vmem:[#allocation4 + $0x3a] sm:$0x80] %vm761, %v2816
        %2834 = vst.msk [vmem:[#allocation4 + $0x52] sm:$0x80] %vm761, %v2818
        %v2835 = vld [vmem:[#allocation4] sm:$0xff]
        %v2836 = vld [vmem:[#allocation4 + $0x8] sm:$0xff]
        %v2837 = vld [vmem:[#allocation4 + $0x10] sm:$0x3]
        %v2838 = vld [vmem:[#allocation4 + $0x18] sm:$0xff]
        %v2839 = vld [vmem:[#allocation4 + $0x20] sm:$0xff]
        %v2840 = vld [vmem:[#allocation4 + $0x28] sm:$0x3]
        %v2841 = vld [vmem:[#allocation4 + $0x30] sm:$0xff]
        %v2842 = vld [vmem:[#allocation4 + $0x38] sm:$0xff]
        %v2843 = vld [vmem:[#allocation4 + $0x40] sm:$0x3]
        %v2844 = vld [vmem:[#allocation4 + $0x48] sm:$0xff]
        %v2845 = vld [vmem:[#allocation4 + $0x50] sm:$0xff]
        %v2846 = vld [vmem:[#allocation4 + $0x58] sm:$0x3]
        %v2859 = vrot.slane %v2835, 1
        %v2860 = vrot.slane %v2836, 1
        %v2861 = vsel %vm790, %v2859, %v2860
        %v2862 = vrot.slane %v2837, 1
        %v2863 = vsel %vm790, %v2860, %v2862
        %v2864 = vrot.slane %v2838, 1
        %v2865 = vrot.slane %v2839, 1
        %v2866 = vsel %vm790, %v2864, %v2865
        %v2867 = vrot.slane %v2840, 1
        %v2868 = vsel %vm790, %v2865, %v2867
        %v2869 = vrot.slane %v2841, 1
        %v2870 = vrot.slane %v2842, 1
        %v2871 = vsel %vm790, %v2869, %v2870
        %v2872 = vrot.slane %v2843, 1
        %v2873 = vsel %vm790, %v2870, %v2872
        %v2874 = vrot.slane %v2844, 1
        %v2875 = vrot.slane %v2845, 1
        %v2876 = vsel %vm790, %v2874, %v2875
        %v2877 = vrot.slane %v2846, 1
        %v2878 = vsel %vm790, %v2875, %v2877
        %v2887 = vadd.f32 %v2835, %v2861
        %v2888 = vadd.f32 %v2836, %v2863
        %v2889 = vadd.f32 %v2838, %v2866
        %v2890 = vadd.f32 %v2839, %v2868
        %v2891 = vadd.f32 %v2841, %v2871
        %v2892 = vadd.f32 %v2842, %v2873
        %v2893 = vadd.f32 %v2844, %v2876
        %v2894 = vadd.f32 %v2845, %v2878
        %v2895 = vrot.slane %v2835, 2
        %v2896 = vrot.slane %v2836, 2
        %v2897 = vsel %vm827, %v2895, %v2896
        %v2898 = vrot.slane %v2837, 2
        %v2899 = vsel %vm827, %v2896, %v2898
        %v2900 = vrot.slane %v2838, 2
        %v2901 = vrot.slane %v2839, 2
        %v2902 = vsel %vm827, %v2900, %v2901
        %v2903 = vrot.slane %v2840, 2
        %v2904 = vsel %vm827, %v2901, %v2903
        %v2905 = vrot.slane %v2841, 2
        %v2906 = vrot.slane %v2842, 2
        %v2907 = vsel %vm827, %v2905, %v2906
        %v2908 = vrot.slane %v2843, 2
        %v2909 = vsel %vm827, %v2906, %v2908
        %v2910 = vrot.slane %v2844, 2
        %v2911 = vrot.slane %v2845, 2
        %v2912 = vsel %vm827, %v2910, %v2911
        %v2913 = vrot.slane %v2846, 2
        %v2914 = vsel %vm827, %v2911, %v2913
        %v2923 = vadd.f32 %v2887, %v2897
        %v2924 = vadd.f32 %v2888, %v2899
        %v2925 = vadd.f32 %v2889, %v2902
        %v2926 = vadd.f32 %v2890, %v2904
        %v2927 = vadd.f32 %v2891, %v2907
        %v2928 = vadd.f32 %v2892, %v2909
        %v2929 = vadd.f32 %v2893, %v2912
        %v2930 = vadd.f32 %v2894, %v2914
        %2939 = vrot.lane.b32.xlu0 %v2923, 1
        %v2940 = vpop.permute.xlu0 %2939
        %2941 = vrot.lane.b32.xlu0 %v2924, 1
        %v2942 = vpop.permute.xlu0 %2941
        %2943 = vrot.lane.b32.xlu0 %v2925, 1
        %v2944 = vpop.permute.xlu0 %2943
        %2945 = vrot.lane.b32.xlu0 %v2926, 1
        %v2946 = vpop.permute.xlu0 %2945
        %2947 = vrot.lane.b32.xlu0 %v2927, 1
        %v2948 = vpop.permute.xlu0 %2947
        %2949 = vrot.lane.b32.xlu0 %v2928, 1
        %v2950 = vpop.permute.xlu0 %2949
        %2951 = vrot.lane.b32.xlu0 %v2929, 1
        %v2952 = vpop.permute.xlu0 %2951
        %2953 = vrot.lane.b32.xlu0 %v2930, 1
        %v2954 = vpop.permute.xlu0 %2953
        %2963 = vst.msk [vmem:[#allocation5] sm:$0xff] %vm896, %v2940
        %2964 = vst.msk [vmem:[#allocation5 + $0x8] sm:$0xff] %vm896, %v2942
        %2965 = vst.msk [vmem:[#allocation5 + $0x10] sm:$0xff] %vm896, %v2944
        %2966 = vst.msk [vmem:[#allocation5 + $0x18] sm:$0xff] %vm896, %v2946
        %2967 = vst.msk [vmem:[#allocation5 + $0x20] sm:$0xff] %vm896, %v2948
        %2968 = vst.msk [vmem:[#allocation5 + $0x28] sm:$0xff] %vm896, %v2950
        %2969 = vst.msk [vmem:[#allocation5 + $0x30] sm:$0xff] %vm896, %v2952
        %2970 = vst.msk [vmem:[#allocation5 + $0x38] sm:$0xff] %vm896, %v2954
        %2971 = vst.msk [vmem:[#allocation5] sm:$0xff] %vm905, %v2923
        %2972 = vst.msk [vmem:[#allocation5 + $0x8] sm:$0xff] %vm905, %v2924
        %2973 = vst.msk [vmem:[#allocation5 + $0x10] sm:$0xff] %vm905, %v2925
        %2974 = vst.msk [vmem:[#allocation5 + $0x18] sm:$0xff] %vm905, %v2926
        %2975 = vst.msk [vmem:[#allocation5 + $0x20] sm:$0xff] %vm905, %v2927
        %2976 = vst.msk [vmem:[#allocation5 + $0x28] sm:$0xff] %vm905, %v2928
        %2977 = vst.msk [vmem:[#allocation5 + $0x30] sm:$0xff] %vm905, %v2929
        %2978 = vst.msk [vmem:[#allocation5 + $0x38] sm:$0xff] %vm905, %v2930
        %2979 = vrot.lane.b32.xlu0 %v2923, 2
        %v2980 = vpop.permute.xlu0 %2979
        %2981 = vrot.lane.b32.xlu0 %v2924, 2
        %v2982 = vpop.permute.xlu0 %2981
        %2983 = vrot.lane.b32.xlu0 %v2925, 2
        %v2984 = vpop.permute.xlu0 %2983
        %2985 = vrot.lane.b32.xlu0 %v2926, 2
        %v2986 = vpop.permute.xlu0 %2985
        %2987 = vrot.lane.b32.xlu0 %v2927, 2
        %v2988 = vpop.permute.xlu0 %2987
        %2989 = vrot.lane.b32.xlu0 %v2928, 2
        %v2990 = vpop.permute.xlu0 %2989
        %2991 = vrot.lane.b32.xlu0 %v2929, 2
        %v2992 = vpop.permute.xlu0 %2991
        %2993 = vrot.lane.b32.xlu0 %v2930, 2
        %v2994 = vpop.permute.xlu0 %2993
        %3003 = vst.msk [vmem:[#allocation5] sm:$0xff] %vm938, %v2980
        %3004 = vst.msk [vmem:[#allocation5 + $0x8] sm:$0xff] %vm938, %v2982
        %3005 = vst.msk [vmem:[#allocation5 + $0x10] sm:$0xff] %vm938, %v2984
        %3006 = vst.msk [vmem:[#allocation5 + $0x18] sm:$0xff] %vm938, %v2986
        %3007 = vst.msk [vmem:[#allocation5 + $0x20] sm:$0xff] %vm938, %v2988
        %3008 = vst.msk [vmem:[#allocation5 + $0x28] sm:$0xff] %vm938, %v2990
        %3009 = vst.msk [vmem:[#allocation5 + $0x30] sm:$0xff] %vm938, %v2992
        %3010 = vst.msk [vmem:[#allocation5 + $0x38] sm:$0xff] %vm938, %v2994
        %v3011 = vld [vmem:[#allocation5] sm:$0xff]
        %v3012 = vld [vmem:[#allocation5 + $0x8] sm:$0xff]
        %v3013 = vld [vmem:[#allocation5 + $0x10] sm:$0xff]
        %v3014 = vld [vmem:[#allocation5 + $0x18] sm:$0xff]
        %v3015 = vld [vmem:[#allocation5 + $0x20] sm:$0xff]
        %v3016 = vld [vmem:[#allocation5 + $0x28] sm:$0xff]
        %v3017 = vld [vmem:[#allocation5 + $0x30] sm:$0xff]
        %v3018 = vld [vmem:[#allocation5 + $0x38] sm:$0xff]
        %3027 = vrot.lane.b32.xlu0 %v3011, 127
        %v3028 = vpop.permute.xlu0 %3027
        %3029 = vrot.lane.b32.xlu0 %v3012, 127
        %v3030 = vpop.permute.xlu0 %3029
        %3031 = vrot.lane.b32.xlu0 %v3013, 127
        %v3032 = vpop.permute.xlu0 %3031
        %3033 = vrot.lane.b32.xlu0 %v3014, 127
        %v3034 = vpop.permute.xlu0 %3033
        %3035 = vrot.lane.b32.xlu0 %v3015, 127
        %v3036 = vpop.permute.xlu0 %3035
        %3037 = vrot.lane.b32.xlu0 %v3016, 127
        %v3038 = vpop.permute.xlu0 %3037
        %3039 = vrot.lane.b32.xlu0 %v3017, 127
        %v3040 = vpop.permute.xlu0 %3039
        %3041 = vrot.lane.b32.xlu0 %v3018, 127
        %v3042 = vpop.permute.xlu0 %3041
        %v3051 = vadd.f32 %v3011, %v3028
        %v3052 = vadd.f32 %v3012, %v3030
        %v3053 = vadd.f32 %v3013, %v3032
        %v3054 = vadd.f32 %v3014, %v3034
        %v3055 = vadd.f32 %v3015, %v3036
        %v3056 = vadd.f32 %v3016, %v3038
        %v3057 = vadd.f32 %v3017, %v3040
        %v3058 = vadd.f32 %v3018, %v3042
        %3059 = vrot.lane.b32.xlu0 %v3011, 126
        %v3060 = vpop.permute.xlu0 %3059
        %3061 = vrot.lane.b32.xlu0 %v3012, 126
        %v3062 = vpop.permute.xlu0 %3061
        %3063 = vrot.lane.b32.xlu0 %v3013, 126
        %v3064 = vpop.permute.xlu0 %3063
        %3065 = vrot.lane.b32.xlu0 %v3014, 126
        %v3066 = vpop.permute.xlu0 %3065
        %3067 = vrot.lane.b32.xlu0 %v3015, 126
        %v3068 = vpop.permute.xlu0 %3067
        %3069 = vrot.lane.b32.xlu0 %v3016, 126
        %v3070 = vpop.permute.xlu0 %3069
        %3071 = vrot.lane.b32.xlu0 %v3017, 126
        %v3072 = vpop.permute.xlu0 %3071
        %3073 = vrot.lane.b32.xlu0 %v3018, 126
        %v3074 = vpop.permute.xlu0 %3073
        %v3083 = vadd.f32 %v3051, %v3060
        %v3084 = vadd.f32 %v3052, %v3062
        %v3085 = vadd.f32 %v3053, %v3064
        %v3086 = vadd.f32 %v3054, %v3066
        %v3087 = vadd.f32 %v3055, %v3068
        %v3088 = vadd.f32 %v3056, %v3070
        %v3089 = vadd.f32 %v3057, %v3072
        %v3090 = vadd.f32 %v3058, %v3074
        %v3091 = vmul.f32 %v3083, 0.037037037
        %v3092 = vmul.f32 %v3084, 0.037037037
        %v3093 = vmul.f32 %v3085, 0.037037037
        %v3094 = vmul.f32 %v3086, 0.037037037
        %v3095 = vmul.f32 %v3087, 0.037037037
        %v3096 = vmul.f32 %v3088, 0.037037037
        %v3097 = vmul.f32 %v3089, 0.037037037
        %v3098 = vmul.f32 %v3090, 0.037037037
        %v3099 = vld [vmem:[%s222] sm:$0xff]
        %v3100 = vld [vmem:[%s222 + $0x8] sm:$0xff]
        %v3101 = vld [vmem:[%s222 + $0x10] sm:$0xff]
        %v3102 = vld [vmem:[%s222 + $0x18] sm:$0xff]
        %v3103 = vld [vmem:[%s222 + $0x20] sm:$0xff]
        %v3104 = vld [vmem:[%s222 + $0x28] sm:$0xff]
        %v3105 = vld [vmem:[%s222 + $0x30] sm:$0xff]
        %v3106 = vld [vmem:[%s222 + $0x38] sm:$0xff]
        %v3107 = vld [vmem:[%s222 + $0x40] sm:$0xff]
        %v3108 = vld [vmem:[%s222 + $0x48] sm:$0xff]
        %v3109 = vld [vmem:[%s222 + $0x50] sm:$0xff]
        %v3110 = vld [vmem:[%s222 + $0x58] sm:$0xff]
        %v3111 = vld [vmem:[%s206] sm:$0xff]
        %v3112 = vld [vmem:[%s206 + $0x8] sm:$0xff]
        %v3113 = vld [vmem:[%s206 + $0x10] sm:$0xff]
        %v3114 = vld [vmem:[%s206 + $0x18] sm:$0xff]
        %v3115 = vld [vmem:[%s206 + $0x20] sm:$0xff]
        %v3116 = vld [vmem:[%s206 + $0x28] sm:$0xff]
        %v3117 = vld [vmem:[%s206 + $0x30] sm:$0xff]
        %v3118 = vld [vmem:[%s206 + $0x38] sm:$0xff]
        %v3119 = vld [vmem:[%s206 + $0x40] sm:$0xff]
        %v3120 = vld [vmem:[%s206 + $0x48] sm:$0xff]
        %v3121 = vld [vmem:[%s206 + $0x50] sm:$0xff]
        %v3122 = vld [vmem:[%s206 + $0x58] sm:$0xff]
        %v3123 = vsub.f32 %v3099, %v3111
        %v3124 = vsub.f32 %v3100, %v3112
        %v3125 = vsub.f32 %v3101, %v3113
        %v3126 = vsub.f32 %v3102, %v3114
        %v3127 = vsub.f32 %v3103, %v3115
        %v3128 = vsub.f32 %v3104, %v3116
        %v3129 = vsub.f32 %v3105, %v3117
        %v3130 = vsub.f32 %v3106, %v3118
        %v3131 = vsub.f32 %v3107, %v3119
        %v3132 = vsub.f32 %v3108, %v3120
        %v3133 = vsub.f32 %v3109, %v3121
        %v3134 = vsub.f32 %v3110, %v3122
        %v3135 = vmul.f32 %v3123, %v3123
        %v3136 = vmul.f32 %v3124, %v3124
        %v3137 = vmul.f32 %v3125, %v3125
        %v3138 = vmul.f32 %v3126, %v3126
        %v3139 = vmul.f32 %v3127, %v3127
        %v3140 = vmul.f32 %v3128, %v3128
        %v3141 = vmul.f32 %v3129, %v3129
        %v3142 = vmul.f32 %v3130, %v3130
        %v3143 = vmul.f32 %v3131, %v3131
        %v3144 = vmul.f32 %v3132, %v3132
        %v3145 = vmul.f32 %v3133, %v3133
        %v3146 = vmul.f32 %v3134, %v3134
        %v3147 = vadd.f32 %v3135, %v3137
        %v3148 = vadd.f32 %v3136, %v3138
        %v3149 = vadd.f32 %v3137, %v3139
        %v3150 = vadd.f32 %v3138, %v3140
        %v3151 = vadd.f32 %v3139, %v3141
        %v3152 = vadd.f32 %v3140, %v3142
        %v3153 = vadd.f32 %v3141, %v3143
        %v3154 = vadd.f32 %v3142, %v3144
        %v3155 = vadd.f32 %v3147, %v3139
        %v3156 = vadd.f32 %v3148, %v3140
        %v3157 = vadd.f32 %v3149, %v3141
        %v3158 = vadd.f32 %v3150, %v3142
        %v3159 = vadd.f32 %v3151, %v3143
        %v3160 = vadd.f32 %v3152, %v3144
        %v3161 = vadd.f32 %v3153, %v3145
        %v3162 = vadd.f32 %v3154, %v3146
        %3163 = vst.msk [vmem:[#allocation4 + $0x1] sm:$0xff] %vm177, %v3155
        %3164 = vst.msk [vmem:[#allocation4 + $0x9] sm:$0xff] %vm177, %v3156
        %3165 = vst.msk [vmem:[#allocation4 + $0x19] sm:$0xff] %vm177, %v3157
        %3166 = vst.msk [vmem:[#allocation4 + $0x21] sm:$0xff] %vm177, %v3158
        %3167 = vst.msk [vmem:[#allocation4 + $0x31] sm:$0xff] %vm177, %v3159
        %3168 = vst.msk [vmem:[#allocation4 + $0x39] sm:$0xff] %vm177, %v3160
        %3169 = vst.msk [vmem:[#allocation4 + $0x49] sm:$0xff] %vm177, %v3161
        %3170 = vst.msk [vmem:[#allocation4 + $0x51] sm:$0xff] %vm177, %v3162
        %3171 = vst.msk [vmem:[#allocation4] sm:$0x1] %vm756, %v3155
        %3172 = vst.msk [vmem:[#allocation4 + $0x18] sm:$0x1] %vm756, %v3157
        %3173 = vst.msk [vmem:[#allocation4 + $0x30] sm:$0x1] %vm756, %v3159
        %3174 = vst.msk [vmem:[#allocation4 + $0x48] sm:$0x1] %vm756, %v3161
        %3175 = vst.msk [vmem:[#allocation4 + $0xa] sm:$0x80] %vm761, %v3156
        %3176 = vst.msk [vmem:[#allocation4 + $0x22] sm:$0x80] %vm761, %v3158
        %3177 = vst.msk [vmem:[#allocation4 + $0x3a] sm:$0x80] %vm761, %v3160
        %3178 = vst.msk [vmem:[#allocation4 + $0x52] sm:$0x80] %vm761, %v3162
        %v3179 = vld [vmem:[#allocation4] sm:$0xff]
        %v3180 = vld [vmem:[#allocation4 + $0x8] sm:$0xff]
        %v3181 = vld [vmem:[#allocation4 + $0x10] sm:$0x3]
        %v3182 = vld [vmem:[#allocation4 + $0x18] sm:$0xff]
        %v3183 = vld [vmem:[#allocation4 + $0x20] sm:$0xff]
        %v3184 = vld [vmem:[#allocation4 + $0x28] sm:$0x3]
        %v3185 = vld [vmem:[#allocation4 + $0x30] sm:$0xff]
        %v3186 = vld [vmem:[#allocation4 + $0x38] sm:$0xff]
        %v3187 = vld [vmem:[#allocation4 + $0x40] sm:$0x3]
        %v3188 = vld [vmem:[#allocation4 + $0x48] sm:$0xff]
        %v3189 = vld [vmem:[#allocation4 + $0x50] sm:$0xff]
        %v3190 = vld [vmem:[#allocation4 + $0x58] sm:$0x3]
        %v3203 = vrot.slane %v3179, 1
        %v3204 = vrot.slane %v3180, 1
        %v3205 = vsel %vm790, %v3203, %v3204
        %v3206 = vrot.slane %v3181, 1
        %v3207 = vsel %vm790, %v3204, %v3206
        %v3208 = vrot.slane %v3182, 1
        %v3209 = vrot.slane %v3183, 1
        %v3210 = vsel %vm790, %v3208, %v3209
        %v3211 = vrot.slane %v3184, 1
        %v3212 = vsel %vm790, %v3209, %v3211
        %v3213 = vrot.slane %v3185, 1
        %v3214 = vrot.slane %v3186, 1
        %v3215 = vsel %vm790, %v3213, %v3214
        %v3216 = vrot.slane %v3187, 1
        %v3217 = vsel %vm790, %v3214, %v3216
        %v3218 = vrot.slane %v3188, 1
        %v3219 = vrot.slane %v3189, 1
        %v3220 = vsel %vm790, %v3218, %v3219
        %v3221 = vrot.slane %v3190, 1
        %v3222 = vsel %vm790, %v3219, %v3221
        %v3231 = vadd.f32 %v3179, %v3205
        %v3232 = vadd.f32 %v3180, %v3207
        %v3233 = vadd.f32 %v3182, %v3210
        %v3234 = vadd.f32 %v3183, %v3212
        %v3235 = vadd.f32 %v3185, %v3215
        %v3236 = vadd.f32 %v3186, %v3217
        %v3237 = vadd.f32 %v3188, %v3220
        %v3238 = vadd.f32 %v3189, %v3222
        %v3239 = vrot.slane %v3179, 2
        %v3240 = vrot.slane %v3180, 2
        %v3241 = vsel %vm827, %v3239, %v3240
        %v3242 = vrot.slane %v3181, 2
        %v3243 = vsel %vm827, %v3240, %v3242
        %v3244 = vrot.slane %v3182, 2
        %v3245 = vrot.slane %v3183, 2
        %v3246 = vsel %vm827, %v3244, %v3245
        %v3247 = vrot.slane %v3184, 2
        %v3248 = vsel %vm827, %v3245, %v3247
        %v3249 = vrot.slane %v3185, 2
        %v3250 = vrot.slane %v3186, 2
        %v3251 = vsel %vm827, %v3249, %v3250
        %v3252 = vrot.slane %v3187, 2
        %v3253 = vsel %vm827, %v3250, %v3252
        %v3254 = vrot.slane %v3188, 2
        %v3255 = vrot.slane %v3189, 2
        %v3256 = vsel %vm827, %v3254, %v3255
        %v3257 = vrot.slane %v3190, 2
        %v3258 = vsel %vm827, %v3255, %v3257
        %v3267 = vadd.f32 %v3231, %v3241
        %v3268 = vadd.f32 %v3232, %v3243
        %v3269 = vadd.f32 %v3233, %v3246
        %v3270 = vadd.f32 %v3234, %v3248
        %v3271 = vadd.f32 %v3235, %v3251
        %v3272 = vadd.f32 %v3236, %v3253
        %v3273 = vadd.f32 %v3237, %v3256
        %v3274 = vadd.f32 %v3238, %v3258
        %3283 = vrot.lane.b32.xlu0 %v3267, 1
        %v3284 = vpop.permute.xlu0 %3283
        %3285 = vrot.lane.b32.xlu0 %v3268, 1
        %v3286 = vpop.permute.xlu0 %3285
        %3287 = vrot.lane.b32.xlu0 %v3269, 1
        %v3288 = vpop.permute.xlu0 %3287
        %3289 = vrot.lane.b32.xlu0 %v3270, 1
        %v3290 = vpop.permute.xlu0 %3289
        %3291 = vrot.lane.b32.xlu0 %v3271, 1
        %v3292 = vpop.permute.xlu0 %3291
        %3293 = vrot.lane.b32.xlu0 %v3272, 1
        %v3294 = vpop.permute.xlu0 %3293
        %3295 = vrot.lane.b32.xlu0 %v3273, 1
        %v3296 = vpop.permute.xlu0 %3295
        %3297 = vrot.lane.b32.xlu0 %v3274, 1
        %v3298 = vpop.permute.xlu0 %3297
        %3307 = vst.msk [vmem:[#allocation5] sm:$0xff] %vm896, %v3284
        %3308 = vst.msk [vmem:[#allocation5 + $0x8] sm:$0xff] %vm896, %v3286
        %3309 = vst.msk [vmem:[#allocation5 + $0x10] sm:$0xff] %vm896, %v3288
        %3310 = vst.msk [vmem:[#allocation5 + $0x18] sm:$0xff] %vm896, %v3290
        %3311 = vst.msk [vmem:[#allocation5 + $0x20] sm:$0xff] %vm896, %v3292
        %3312 = vst.msk [vmem:[#allocation5 + $0x28] sm:$0xff] %vm896, %v3294
        %3313 = vst.msk [vmem:[#allocation5 + $0x30] sm:$0xff] %vm896, %v3296
        %3314 = vst.msk [vmem:[#allocation5 + $0x38] sm:$0xff] %vm896, %v3298
        %3315 = vst.msk [vmem:[#allocation5] sm:$0xff] %vm905, %v3267
        %3316 = vst.msk [vmem:[#allocation5 + $0x8] sm:$0xff] %vm905, %v3268
        %3317 = vst.msk [vmem:[#allocation5 + $0x10] sm:$0xff] %vm905, %v3269
        %3318 = vst.msk [vmem:[#allocation5 + $0x18] sm:$0xff] %vm905, %v3270
        %3319 = vst.msk [vmem:[#allocation5 + $0x20] sm:$0xff] %vm905, %v3271
        %3320 = vst.msk [vmem:[#allocation5 + $0x28] sm:$0xff] %vm905, %v3272
        %3321 = vst.msk [vmem:[#allocation5 + $0x30] sm:$0xff] %vm905, %v3273
        %3322 = vst.msk [vmem:[#allocation5 + $0x38] sm:$0xff] %vm905, %v3274
        %3323 = vrot.lane.b32.xlu0 %v3267, 2
        %v3324 = vpop.permute.xlu0 %3323
        %3325 = vrot.lane.b32.xlu0 %v3268, 2
        %v3326 = vpop.permute.xlu0 %3325
        %3327 = vrot.lane.b32.xlu0 %v3269, 2
        %v3328 = vpop.permute.xlu0 %3327
        %3329 = vrot.lane.b32.xlu0 %v3270, 2
        %v3330 = vpop.permute.xlu0 %3329
        %3331 = vrot.lane.b32.xlu0 %v3271, 2
        %v3332 = vpop.permute.xlu0 %3331
        %3333 = vrot.lane.b32.xlu0 %v3272, 2
        %v3334 = vpop.permute.xlu0 %3333
        %3335 = vrot.lane.b32.xlu0 %v3273, 2
        %v3336 = vpop.permute.xlu0 %3335
        %3337 = vrot.lane.b32.xlu0 %v3274, 2
        %v3338 = vpop.permute.xlu0 %3337
        %3347 = vst.msk [vmem:[#allocation5] sm:$0xff] %vm938, %v3324
        %3348 = vst.msk [vmem:[#allocation5 + $0x8] sm:$0xff] %vm938, %v3326
        %3349 = vst.msk [vmem:[#allocation5 + $0x10] sm:$0xff] %vm938, %v3328
        %3350 = vst.msk [vmem:[#allocation5 + $0x18] sm:$0xff] %vm938, %v3330
        %3351 = vst.msk [vmem:[#allocation5 + $0x20] sm:$0xff] %vm938, %v3332
        %3352 = vst.msk [vmem:[#allocation5 + $0x28] sm:$0xff] %vm938, %v3334
        %3353 = vst.msk [vmem:[#allocation5 + $0x30] sm:$0xff] %vm938, %v3336
        %3354 = vst.msk [vmem:[#allocation5 + $0x38] sm:$0xff] %vm938, %v3338
        %v3355 = vld [vmem:[#allocation5] sm:$0xff]
        %v3356 = vld [vmem:[#allocation5 + $0x8] sm:$0xff]
        %v3357 = vld [vmem:[#allocation5 + $0x10] sm:$0xff]
        %v3358 = vld [vmem:[#allocation5 + $0x18] sm:$0xff]
        %v3359 = vld [vmem:[#allocation5 + $0x20] sm:$0xff]
        %v3360 = vld [vmem:[#allocation5 + $0x28] sm:$0xff]
        %v3361 = vld [vmem:[#allocation5 + $0x30] sm:$0xff]
        %v3362 = vld [vmem:[#allocation5 + $0x38] sm:$0xff]
        %3371 = vrot.lane.b32.xlu0 %v3355, 127
        %v3372 = vpop.permute.xlu0 %3371
        %3373 = vrot.lane.b32.xlu0 %v3356, 127
        %v3374 = vpop.permute.xlu0 %3373
        %3375 = vrot.lane.b32.xlu0 %v3357, 127
        %v3376 = vpop.permute.xlu0 %3375
        %3377 = vrot.lane.b32.xlu0 %v3358, 127
        %v3378 = vpop.permute.xlu0 %3377
        %3379 = vrot.lane.b32.xlu0 %v3359, 127
        %v3380 = vpop.permute.xlu0 %3379
        %3381 = vrot.lane.b32.xlu0 %v3360, 127
        %v3382 = vpop.permute.xlu0 %3381
        %3383 = vrot.lane.b32.xlu0 %v3361, 127
        %v3384 = vpop.permute.xlu0 %3383
        %3385 = vrot.lane.b32.xlu0 %v3362, 127
        %v3386 = vpop.permute.xlu0 %3385
        %v3395 = vadd.f32 %v3355, %v3372
        %v3396 = vadd.f32 %v3356, %v3374
        %v3397 = vadd.f32 %v3357, %v3376
        %v3398 = vadd.f32 %v3358, %v3378
        %v3399 = vadd.f32 %v3359, %v3380
        %v3400 = vadd.f32 %v3360, %v3382
        %v3401 = vadd.f32 %v3361, %v3384
        %v3402 = vadd.f32 %v3362, %v3386
        %3403 = vrot.lane.b32.xlu0 %v3355, 126
        %v3404 = vpop.permute.xlu0 %3403
        %3405 = vrot.lane.b32.xlu0 %v3356, 126
        %v3406 = vpop.permute.xlu0 %3405
        %3407 = vrot.lane.b32.xlu0 %v3357, 126
        %v3408 = vpop.permute.xlu0 %3407
        %3409 = vrot.lane.b32.xlu0 %v3358, 126
        %v3410 = vpop.permute.xlu0 %3409
        %3411 = vrot.lane.b32.xlu0 %v3359, 126
        %v3412 = vpop.permute.xlu0 %3411
        %3413 = vrot.lane.b32.xlu0 %v3360, 126
        %v3414 = vpop.permute.xlu0 %3413
        %3415 = vrot.lane.b32.xlu0 %v3361, 126
        %v3416 = vpop.permute.xlu0 %3415
        %3417 = vrot.lane.b32.xlu0 %v3362, 126
        %v3418 = vpop.permute.xlu0 %3417
        %v3427 = vadd.f32 %v3395, %v3404
        %v3428 = vadd.f32 %v3396, %v3406
        %v3429 = vadd.f32 %v3397, %v3408
        %v3430 = vadd.f32 %v3398, %v3410
        %v3431 = vadd.f32 %v3399, %v3412
        %v3432 = vadd.f32 %v3400, %v3414
        %v3433 = vadd.f32 %v3401, %v3416
        %v3434 = vadd.f32 %v3402, %v3418
        %v3435 = vmul.f32 %v3427, 0.037037037
        %v3436 = vmul.f32 %v3428, 0.037037037
        %v3437 = vmul.f32 %v3429, 0.037037037
        %v3438 = vmul.f32 %v3430, 0.037037037
        %v3439 = vmul.f32 %v3431, 0.037037037
        %v3440 = vmul.f32 %v3432, 0.037037037
        %v3441 = vmul.f32 %v3433, 0.037037037
        %v3442 = vmul.f32 %v3434, 0.037037037
        %v3443 = vld [vmem:[%s229] sm:$0xff]
        %v3444 = vld [vmem:[%s229 + $0x8] sm:$0xff]
        %v3445 = vld [vmem:[%s229 + $0x10] sm:$0xff]
        %v3446 = vld [vmem:[%s229 + $0x18] sm:$0xff]
        %v3447 = vld [vmem:[%s229 + $0x20] sm:$0xff]
        %v3448 = vld [vmem:[%s229 + $0x28] sm:$0xff]
        %v3449 = vld [vmem:[%s229 + $0x30] sm:$0xff]
        %v3450 = vld [vmem:[%s229 + $0x38] sm:$0xff]
        %v3451 = vld [vmem:[%s229 + $0x40] sm:$0xff]
        %v3452 = vld [vmem:[%s229 + $0x48] sm:$0xff]
        %v3453 = vld [vmem:[%s229 + $0x50] sm:$0xff]
        %v3454 = vld [vmem:[%s229 + $0x58] sm:$0xff]
        %v3455 = vld [vmem:[#allocation3] sm:$0xff]
        %v3456 = vld [vmem:[#allocation3 + $0x8] sm:$0xff]
        %v3457 = vld [vmem:[#allocation3 + $0x10] sm:$0xff]
        %v3458 = vld [vmem:[#allocation3 + $0x18] sm:$0xff]
        %v3459 = vld [vmem:[#allocation3 + $0x20] sm:$0xff]
        %v3460 = vld [vmem:[#allocation3 + $0x28] sm:$0xff]
        %v3461 = vld [vmem:[#allocation3 + $0x30] sm:$0xff]
        %v3462 = vld [vmem:[#allocation3 + $0x38] sm:$0xff]
        %v3463 = vld [vmem:[#allocation3 + $0x40] sm:$0xff]
        %v3464 = vld [vmem:[#allocation3 + $0x48] sm:$0xff]
        %v3465 = vld [vmem:[#allocation3 + $0x50] sm:$0xff]
        %v3466 = vld [vmem:[#allocation3 + $0x58] sm:$0xff]
        %v3467 = vsub.f32 %v3443, %v3455
        %v3468 = vsub.f32 %v3444, %v3456
        %v3469 = vsub.f32 %v3445, %v3457
        %v3470 = vsub.f32 %v3446, %v3458
        %v3471 = vsub.f32 %v3447, %v3459
        %v3472 = vsub.f32 %v3448, %v3460
        %v3473 = vsub.f32 %v3449, %v3461
        %v3474 = vsub.f32 %v3450, %v3462
        %v3475 = vsub.f32 %v3451, %v3463
        %v3476 = vsub.f32 %v3452, %v3464
        %v3477 = vsub.f32 %v3453, %v3465
        %v3478 = vsub.f32 %v3454, %v3466
        %v3479 = vmul.f32 %v3467, %v3467
        %v3480 = vmul.f32 %v3468, %v3468
        %v3481 = vmul.f32 %v3469, %v3469
        %v3482 = vmul.f32 %v3470, %v3470
        %v3483 = vmul.f32 %v3471, %v3471
        %v3484 = vmul.f32 %v3472, %v3472
        %v3485 = vmul.f32 %v3473, %v3473
        %v3486 = vmul.f32 %v3474, %v3474
        %v3487 = vmul.f32 %v3475, %v3475
        %v3488 = vmul.f32 %v3476, %v3476
        %v3489 = vmul.f32 %v3477, %v3477
        %v3490 = vmul.f32 %v3478, %v3478
        %v3491 = vadd.f32 %v3479, %v3481
        %v3492 = vadd.f32 %v3480, %v3482
        %v3493 = vadd.f32 %v3481, %v3483
        %v3494 = vadd.f32 %v3482, %v3484
        %v3495 = vadd.f32 %v3483, %v3485
        %v3496 = vadd.f32 %v3484, %v3486
        %v3497 = vadd.f32 %v3485, %v3487
        %v3498 = vadd.f32 %v3486, %v3488
        %v3499 = vadd.f32 %v3491, %v3483
        %v3500 = vadd.f32 %v3492, %v3484
        %v3501 = vadd.f32 %v3493, %v3485
        %v3502 = vadd.f32 %v3494, %v3486
        %v3503 = vadd.f32 %v3495, %v3487
        %v3504 = vadd.f32 %v3496, %v3488
        %v3505 = vadd.f32 %v3497, %v3489
        %v3506 = vadd.f32 %v3498, %v3490
        %3507 = vst.msk [vmem:[#allocation4 + $0x1] sm:$0xff] %vm177, %v3499
        %3508 = vst.msk [vmem:[#allocation4 + $0x9] sm:$0xff] %vm177, %v3500
        %3509 = vst.msk [vmem:[#allocation4 + $0x19] sm:$0xff] %vm177, %v3501
        %3510 = vst.msk [vmem:[#allocation4 + $0x21] sm:$0xff] %vm177, %v3502
        %3511 = vst.msk [vmem:[#allocation4 + $0x31] sm:$0xff] %vm177, %v3503
        %3512 = vst.msk [vmem:[#allocation4 + $0x39] sm:$0xff] %vm177, %v3504
        %3513 = vst.msk [vmem:[#allocation4 + $0x49] sm:$0xff] %vm177, %v3505
        %3514 = vst.msk [vmem:[#allocation4 + $0x51] sm:$0xff] %vm177, %v3506
        %3515 = vst.msk [vmem:[#allocation4] sm:$0x1] %vm756, %v3499
        %3516 = vst.msk [vmem:[#allocation4 + $0x18] sm:$0x1] %vm756, %v3501
        %3517 = vst.msk [vmem:[#allocation4 + $0x30] sm:$0x1] %vm756, %v3503
        %3518 = vst.msk [vmem:[#allocation4 + $0x48] sm:$0x1] %vm756, %v3505
        %3519 = vst.msk [vmem:[#allocation4 + $0xa] sm:$0x80] %vm761, %v3500
        %3520 = vst.msk [vmem:[#allocation4 + $0x22] sm:$0x80] %vm761, %v3502
        %3521 = vst.msk [vmem:[#allocation4 + $0x3a] sm:$0x80] %vm761, %v3504
        %3522 = vst.msk [vmem:[#allocation4 + $0x52] sm:$0x80] %vm761, %v3506
        %v3523 = vld [vmem:[#allocation4] sm:$0xff]
        %v3524 = vld [vmem:[#allocation4 + $0x8] sm:$0xff]
        %v3525 = vld [vmem:[#allocation4 + $0x10] sm:$0x3]
        %v3526 = vld [vmem:[#allocation4 + $0x18] sm:$0xff]
        %v3527 = vld [vmem:[#allocation4 + $0x20] sm:$0xff]
        %v3528 = vld [vmem:[#allocation4 + $0x28] sm:$0x3]
        %v3529 = vld [vmem:[#allocation4 + $0x30] sm:$0xff]
        %v3530 = vld [vmem:[#allocation4 + $0x38] sm:$0xff]
        %v3531 = vld [vmem:[#allocation4 + $0x40] sm:$0x3]
        %v3532 = vld [vmem:[#allocation4 + $0x48] sm:$0xff]
        %v3533 = vld [vmem:[#allocation4 + $0x50] sm:$0xff]
        %v3534 = vld [vmem:[#allocation4 + $0x58] sm:$0x3]
        %v3547 = vrot.slane %v3523, 1
        %v3548 = vrot.slane %v3524, 1
        %v3549 = vsel %vm790, %v3547, %v3548
        %v3550 = vrot.slane %v3525, 1
        %v3551 = vsel %vm790, %v3548, %v3550
        %v3552 = vrot.slane %v3526, 1
        %v3553 = vrot.slane %v3527, 1
        %v3554 = vsel %vm790, %v3552, %v3553
        %v3555 = vrot.slane %v3528, 1
        %v3556 = vsel %vm790, %v3553, %v3555
        %v3557 = vrot.slane %v3529, 1
        %v3558 = vrot.slane %v3530, 1
        %v3559 = vsel %vm790, %v3557, %v3558
        %v3560 = vrot.slane %v3531, 1
        %v3561 = vsel %vm790, %v3558, %v3560
        %v3562 = vrot.slane %v3532, 1
        %v3563 = vrot.slane %v3533, 1
        %v3564 = vsel %vm790, %v3562, %v3563
        %v3565 = vrot.slane %v3534, 1
        %v3566 = vsel %vm790, %v3563, %v3565
        %v3575 = vadd.f32 %v3523, %v3549
        %v3576 = vadd.f32 %v3524, %v3551
        %v3577 = vadd.f32 %v3526, %v3554
        %v3578 = vadd.f32 %v3527, %v3556
        %v3579 = vadd.f32 %v3529, %v3559
        %v3580 = vadd.f32 %v3530, %v3561
        %v3581 = vadd.f32 %v3532, %v3564
        %v3582 = vadd.f32 %v3533, %v3566
        %v3583 = vrot.slane %v3523, 2
        %v3584 = vrot.slane %v3524, 2
        %v3585 = vsel %vm827, %v3583, %v3584
        %v3586 = vrot.slane %v3525, 2
        %v3587 = vsel %vm827, %v3584, %v3586
        %v3588 = vrot.slane %v3526, 2
        %v3589 = vrot.slane %v3527, 2
        %v3590 = vsel %vm827, %v3588, %v3589
        %v3591 = vrot.slane %v3528, 2
        %v3592 = vsel %vm827, %v3589, %v3591
        %v3593 = vrot.slane %v3529, 2
        %v3594 = vrot.slane %v3530, 2
        %v3595 = vsel %vm827, %v3593, %v3594
        %v3596 = vrot.slane %v3531, 2
        %v3597 = vsel %vm827, %v3594, %v3596
        %v3598 = vrot.slane %v3532, 2
        %v3599 = vrot.slane %v3533, 2
        %v3600 = vsel %vm827, %v3598, %v3599
        %v3601 = vrot.slane %v3534, 2
        %v3602 = vsel %vm827, %v3599, %v3601
        %v3611 = vadd.f32 %v3575, %v3585
        %v3612 = vadd.f32 %v3576, %v3587
        %v3613 = vadd.f32 %v3577, %v3590
        %v3614 = vadd.f32 %v3578, %v3592
        %v3615 = vadd.f32 %v3579, %v3595
        %v3616 = vadd.f32 %v3580, %v3597
        %v3617 = vadd.f32 %v3581, %v3600
        %v3618 = vadd.f32 %v3582, %v3602
        %3627 = vrot.lane.b32.xlu0 %v3611, 1
        %v3628 = vpop.permute.xlu0 %3627
        %3629 = vrot.lane.b32.xlu0 %v3612, 1
        %v3630 = vpop.permute.xlu0 %3629
        %3631 = vrot.lane.b32.xlu0 %v3613, 1
        %v3632 = vpop.permute.xlu0 %3631
        %3633 = vrot.lane.b32.xlu0 %v3614, 1
        %v3634 = vpop.permute.xlu0 %3633
        %3635 = vrot.lane.b32.xlu0 %v3615, 1
        %v3636 = vpop.permute.xlu0 %3635
        %3637 = vrot.lane.b32.xlu0 %v3616, 1
        %v3638 = vpop.permute.xlu0 %3637
        %3639 = vrot.lane.b32.xlu0 %v3617, 1
        %v3640 = vpop.permute.xlu0 %3639
        %3641 = vrot.lane.b32.xlu0 %v3618, 1
        %v3642 = vpop.permute.xlu0 %3641
        %3651 = vst.msk [vmem:[#allocation5] sm:$0xff] %vm896, %v3628
        %3652 = vst.msk [vmem:[#allocation5 + $0x8] sm:$0xff] %vm896, %v3630
        %3653 = vst.msk [vmem:[#allocation5 + $0x10] sm:$0xff] %vm896, %v3632
        %3654 = vst.msk [vmem:[#allocation5 + $0x18] sm:$0xff] %vm896, %v3634
        %3655 = vst.msk [vmem:[#allocation5 + $0x20] sm:$0xff] %vm896, %v3636
        %3656 = vst.msk [vmem:[#allocation5 + $0x28] sm:$0xff] %vm896, %v3638
        %3657 = vst.msk [vmem:[#allocation5 + $0x30] sm:$0xff] %vm896, %v3640
        %3658 = vst.msk [vmem:[#allocation5 + $0x38] sm:$0xff] %vm896, %v3642
        %3659 = vst.msk [vmem:[#allocation5] sm:$0xff] %vm905, %v3611
        %3660 = vst.msk [vmem:[#allocation5 + $0x8] sm:$0xff] %vm905, %v3612
        %3661 = vst.msk [vmem:[#allocation5 + $0x10] sm:$0xff] %vm905, %v3613
        %3662 = vst.msk [vmem:[#allocation5 + $0x18] sm:$0xff] %vm905, %v3614
        %3663 = vst.msk [vmem:[#allocation5 + $0x20] sm:$0xff] %vm905, %v3615
        %3664 = vst.msk [vmem:[#allocation5 + $0x28] sm:$0xff] %vm905, %v3616
        %3665 = vst.msk [vmem:[#allocation5 + $0x30] sm:$0xff] %vm905, %v3617
        %3666 = vst.msk [vmem:[#allocation5 + $0x38] sm:$0xff] %vm905, %v3618
        %3667 = vrot.lane.b32.xlu0 %v3611, 2
        %v3668 = vpop.permute.xlu0 %3667
        %3669 = vrot.lane.b32.xlu0 %v3612, 2
        %v3670 = vpop.permute.xlu0 %3669
        %3671 = vrot.lane.b32.xlu0 %v3613, 2
        %v3672 = vpop.permute.xlu0 %3671
        %3673 = vrot.lane.b32.xlu0 %v3614, 2
        %v3674 = vpop.permute.xlu0 %3673
        %3675 = vrot.lane.b32.xlu0 %v3615, 2
        %v3676 = vpop.permute.xlu0 %3675
        %3677 = vrot.lane.b32.xlu0 %v3616, 2
        %v3678 = vpop.permute.xlu0 %3677
        %3679 = vrot.lane.b32.xlu0 %v3617, 2
        %v3680 = vpop.permute.xlu0 %3679
        %3681 = vrot.lane.b32.xlu0 %v3618, 2
        %v3682 = vpop.permute.xlu0 %3681
        %3691 = vst.msk [vmem:[#allocation5] sm:$0xff] %vm938, %v3668
        %3692 = vst.msk [vmem:[#allocation5 + $0x8] sm:$0xff] %vm938, %v3670
        %3693 = vst.msk [vmem:[#allocation5 + $0x10] sm:$0xff] %vm938, %v3672
        %3694 = vst.msk [vmem:[#allocation5 + $0x18] sm:$0xff] %vm938, %v3674
        %3695 = vst.msk [vmem:[#allocation5 + $0x20] sm:$0xff] %vm938, %v3676
        %3696 = vst.msk [vmem:[#allocation5 + $0x28] sm:$0xff] %vm938, %v3678
        %3697 = vst.msk [vmem:[#allocation5 + $0x30] sm:$0xff] %vm938, %v3680
        %3698 = vst.msk [vmem:[#allocation5 + $0x38] sm:$0xff] %vm938, %v3682
        %v3699 = vld [vmem:[#allocation5] sm:$0xff]
        %v3700 = vld [vmem:[#allocation5 + $0x8] sm:$0xff]
        %v3701 = vld [vmem:[#allocation5 + $0x10] sm:$0xff]
        %v3702 = vld [vmem:[#allocation5 + $0x18] sm:$0xff]
        %v3703 = vld [vmem:[#allocation5 + $0x20] sm:$0xff]
        %v3704 = vld [vmem:[#allocation5 + $0x28] sm:$0xff]
        %v3705 = vld [vmem:[#allocation5 + $0x30] sm:$0xff]
        %v3706 = vld [vmem:[#allocation5 + $0x38] sm:$0xff]
        %3715 = vrot.lane.b32.xlu0 %v3699, 127
        %v3716 = vpop.permute.xlu0 %3715
        %3717 = vrot.lane.b32.xlu0 %v3700, 127
        %v3718 = vpop.permute.xlu0 %3717
        %3719 = vrot.lane.b32.xlu0 %v3701, 127
        %v3720 = vpop.permute.xlu0 %3719
        %3721 = vrot.lane.b32.xlu0 %v3702, 127
        %v3722 = vpop.permute.xlu0 %3721
        %3723 = vrot.lane.b32.xlu0 %v3703, 127
        %v3724 = vpop.permute.xlu0 %3723
        %3725 = vrot.lane.b32.xlu0 %v3704, 127
        %v3726 = vpop.permute.xlu0 %3725
        %3727 = vrot.lane.b32.xlu0 %v3705, 127
        %v3728 = vpop.permute.xlu0 %3727
        %3729 = vrot.lane.b32.xlu0 %v3706, 127
        %v3730 = vpop.permute.xlu0 %3729
        %v3739 = vadd.f32 %v3699, %v3716
        %v3740 = vadd.f32 %v3700, %v3718
        %v3741 = vadd.f32 %v3701, %v3720
        %v3742 = vadd.f32 %v3702, %v3722
        %v3743 = vadd.f32 %v3703, %v3724
        %v3744 = vadd.f32 %v3704, %v3726
        %v3745 = vadd.f32 %v3705, %v3728
        %v3746 = vadd.f32 %v3706, %v3730
        %3747 = vrot.lane.b32.xlu0 %v3699, 126
        %v3748 = vpop.permute.xlu0 %3747
        %3749 = vrot.lane.b32.xlu0 %v3700, 126
        %v3750 = vpop.permute.xlu0 %3749
        %3751 = vrot.lane.b32.xlu0 %v3701, 126
        %v3752 = vpop.permute.xlu0 %3751
        %3753 = vrot.lane.b32.xlu0 %v3702, 126
        %v3754 = vpop.permute.xlu0 %3753
        %3755 = vrot.lane.b32.xlu0 %v3703, 126
        %v3756 = vpop.permute.xlu0 %3755
        %3757 = vrot.lane.b32.xlu0 %v3704, 126
        %v3758 = vpop.permute.xlu0 %3757
        %3759 = vrot.lane.b32.xlu0 %v3705, 126
        %v3760 = vpop.permute.xlu0 %3759
        %3761 = vrot.lane.b32.xlu0 %v3706, 126
        %v3762 = vpop.permute.xlu0 %3761
        %v3771 = vadd.f32 %v3739, %v3748
        %v3772 = vadd.f32 %v3740, %v3750
        %v3773 = vadd.f32 %v3741, %v3752
        %v3774 = vadd.f32 %v3742, %v3754
        %v3775 = vadd.f32 %v3743, %v3756
        %v3776 = vadd.f32 %v3744, %v3758
        %v3777 = vadd.f32 %v3745, %v3760
        %v3778 = vadd.f32 %v3746, %v3762
        %v3779 = vmul.f32 %v3771, 0.037037037
        %v3780 = vmul.f32 %v3772, 0.037037037
        %v3781 = vmul.f32 %v3773, 0.037037037
        %v3782 = vmul.f32 %v3774, 0.037037037
        %v3783 = vmul.f32 %v3775, 0.037037037
        %v3784 = vmul.f32 %v3776, 0.037037037
        %v3785 = vmul.f32 %v3777, 0.037037037
        %v3786 = vmul.f32 %v3778, 0.037037037
        %v3787 = vld [vmem:[%s229] sm:$0xff]
        %v3788 = vld [vmem:[%s229 + $0x8] sm:$0xff]
        %v3789 = vld [vmem:[%s229 + $0x10] sm:$0xff]
        %v3790 = vld [vmem:[%s229 + $0x18] sm:$0xff]
        %v3791 = vld [vmem:[%s229 + $0x20] sm:$0xff]
        %v3792 = vld [vmem:[%s229 + $0x28] sm:$0xff]
        %v3793 = vld [vmem:[%s229 + $0x30] sm:$0xff]
        %v3794 = vld [vmem:[%s229 + $0x38] sm:$0xff]
        %v3795 = vld [vmem:[%s229 + $0x40] sm:$0xff]
        %v3796 = vld [vmem:[%s229 + $0x48] sm:$0xff]
        %v3797 = vld [vmem:[%s229 + $0x50] sm:$0xff]
        %v3798 = vld [vmem:[%s229 + $0x58] sm:$0xff]
        %v3799 = vld [vmem:[%s181] sm:$0xff]
        %v3800 = vld [vmem:[%s181 + $0x8] sm:$0xff]
        %v3801 = vld [vmem:[%s181 + $0x10] sm:$0xff]
        %v3802 = vld [vmem:[%s181 + $0x18] sm:$0xff]
        %v3803 = vld [vmem:[%s181 + $0x20] sm:$0xff]
        %v3804 = vld [vmem:[%s181 + $0x28] sm:$0xff]
        %v3805 = vld [vmem:[%s181 + $0x30] sm:$0xff]
        %v3806 = vld [vmem:[%s181 + $0x38] sm:$0xff]
        %v3807 = vld [vmem:[%s181 + $0x40] sm:$0xff]
        %v3808 = vld [vmem:[%s181 + $0x48] sm:$0xff]
        %v3809 = vld [vmem:[%s181 + $0x50] sm:$0xff]
        %v3810 = vld [vmem:[%s181 + $0x58] sm:$0xff]
        %v3811 = vsub.f32 %v3787, %v3799
        %v3812 = vsub.f32 %v3788, %v3800
        %v3813 = vsub.f32 %v3789, %v3801
        %v3814 = vsub.f32 %v3790, %v3802
        %v3815 = vsub.f32 %v3791, %v3803
        %v3816 = vsub.f32 %v3792, %v3804
        %v3817 = vsub.f32 %v3793, %v3805
        %v3818 = vsub.f32 %v3794, %v3806
        %v3819 = vsub.f32 %v3795, %v3807
        %v3820 = vsub.f32 %v3796, %v3808
        %v3821 = vsub.f32 %v3797, %v3809
        %v3822 = vsub.f32 %v3798, %v3810
        %v3823 = vmul.f32 %v3811, %v3811
        %v3824 = vmul.f32 %v3812, %v3812
        %v3825 = vmul.f32 %v3813, %v3813
        %v3826 = vmul.f32 %v3814, %v3814
        %v3827 = vmul.f32 %v3815, %v3815
        %v3828 = vmul.f32 %v3816, %v3816
        %v3829 = vmul.f32 %v3817, %v3817
        %v3830 = vmul.f32 %v3818, %v3818
        %v3831 = vmul.f32 %v3819, %v3819
        %v3832 = vmul.f32 %v3820, %v3820
        %v3833 = vmul.f32 %v3821, %v3821
        %v3834 = vmul.f32 %v3822, %v3822
        %v3835 = vadd.f32 %v3823, %v3825
        %v3836 = vadd.f32 %v3824, %v3826
        %v3837 = vadd.f32 %v3825, %v3827
        %v3838 = vadd.f32 %v3826, %v3828
        %v3839 = vadd.f32 %v3827, %v3829
        %v3840 = vadd.f32 %v3828, %v3830
        %v3841 = vadd.f32 %v3829, %v3831
        %v3842 = vadd.f32 %v3830, %v3832
        %v3843 = vadd.f32 %v3835, %v3827
        %v3844 = vadd.f32 %v3836, %v3828
        %v3845 = vadd.f32 %v3837, %v3829
        %v3846 = vadd.f32 %v3838, %v3830
        %v3847 = vadd.f32 %v3839, %v3831
        %v3848 = vadd.f32 %v3840, %v3832
        %v3849 = vadd.f32 %v3841, %v3833
        %v3850 = vadd.f32 %v3842, %v3834
        %3851 = vst.msk [vmem:[#allocation4 + $0x1] sm:$0xff] %vm177, %v3843
        %3852 = vst.msk [vmem:[#allocation4 + $0x9] sm:$0xff] %vm177, %v3844
        %3853 = vst.msk [vmem:[#allocation4 + $0x19] sm:$0xff] %vm177, %v3845
        %3854 = vst.msk [vmem:[#allocation4 + $0x21] sm:$0xff] %vm177, %v3846
        %3855 = vst.msk [vmem:[#allocation4 + $0x31] sm:$0xff] %vm177, %v3847
        %3856 = vst.msk [vmem:[#allocation4 + $0x39] sm:$0xff] %vm177, %v3848
        %3857 = vst.msk [vmem:[#allocation4 + $0x49] sm:$0xff] %vm177, %v3849
        %3858 = vst.msk [vmem:[#allocation4 + $0x51] sm:$0xff] %vm177, %v3850
        %3859 = vst.msk [vmem:[#allocation4] sm:$0x1] %vm756, %v3843
        %3860 = vst.msk [vmem:[#allocation4 + $0x18] sm:$0x1] %vm756, %v3845
        %3861 = vst.msk [vmem:[#allocation4 + $0x30] sm:$0x1] %vm756, %v3847
        %3862 = vst.msk [vmem:[#allocation4 + $0x48] sm:$0x1] %vm756, %v3849
        %3863 = vst.msk [vmem:[#allocation4 + $0xa] sm:$0x80] %vm761, %v3844
        %3864 = vst.msk [vmem:[#allocation4 + $0x22] sm:$0x80] %vm761, %v3846
        %3865 = vst.msk [vmem:[#allocation4 + $0x3a] sm:$0x80] %vm761, %v3848
        %3866 = vst.msk [vmem:[#allocation4 + $0x52] sm:$0x80] %vm761, %v3850
        %v3867 = vld [vmem:[#allocation4] sm:$0xff]
        %v3868 = vld [vmem:[#allocation4 + $0x8] sm:$0xff]
        %v3869 = vld [vmem:[#allocation4 + $0x10] sm:$0x3]
        %v3870 = vld [vmem:[#allocation4 + $0x18] sm:$0xff]
        %v3871 = vld [vmem:[#allocation4 + $0x20] sm:$0xff]
        %v3872 = vld [vmem:[#allocation4 + $0x28] sm:$0x3]
        %v3873 = vld [vmem:[#allocation4 + $0x30] sm:$0xff]
        %v3874 = vld [vmem:[#allocation4 + $0x38] sm:$0xff]
        %v3875 = vld [vmem:[#allocation4 + $0x40] sm:$0x3]
        %v3876 = vld [vmem:[#allocation4 + $0x48] sm:$0xff]
        %v3877 = vld [vmem:[#allocation4 + $0x50] sm:$0xff]
        %v3878 = vld [vmem:[#allocation4 + $0x58] sm:$0x3]
        %v3891 = vrot.slane %v3867, 1
        %v3892 = vrot.slane %v3868, 1
        %v3893 = vsel %vm790, %v3891, %v3892
        %v3894 = vrot.slane %v3869, 1
        %v3895 = vsel %vm790, %v3892, %v3894
        %v3896 = vrot.slane %v3870, 1
        %v3897 = vrot.slane %v3871, 1
        %v3898 = vsel %vm790, %v3896, %v3897
        %v3899 = vrot.slane %v3872, 1
        %v3900 = vsel %vm790, %v3897, %v3899
        %v3901 = vrot.slane %v3873, 1
        %v3902 = vrot.slane %v3874, 1
        %v3903 = vsel %vm790, %v3901, %v3902
        %v3904 = vrot.slane %v3875, 1
        %v3905 = vsel %vm790, %v3902, %v3904
        %v3906 = vrot.slane %v3876, 1
        %v3907 = vrot.slane %v3877, 1
        %v3908 = vsel %vm790, %v3906, %v3907
        %v3909 = vrot.slane %v3878, 1
        %v3910 = vsel %vm790, %v3907, %v3909
        %v3919 = vadd.f32 %v3867, %v3893
        %v3920 = vadd.f32 %v3868, %v3895
        %v3921 = vadd.f32 %v3870, %v3898
        %v3922 = vadd.f32 %v3871, %v3900
        %v3923 = vadd.f32 %v3873, %v3903
        %v3924 = vadd.f32 %v3874, %v3905
        %v3925 = vadd.f32 %v3876, %v3908
        %v3926 = vadd.f32 %v3877, %v3910
        %v3927 = vrot.slane %v3867, 2
        %v3928 = vrot.slane %v3868, 2
        %v3929 = vsel %vm827, %v3927, %v3928
        %v3930 = vrot.slane %v3869, 2
        %v3931 = vsel %vm827, %v3928, %v3930
        %v3932 = vrot.slane %v3870, 2
        %v3933 = vrot.slane %v3871, 2
        %v3934 = vsel %vm827, %v3932, %v3933
        %v3935 = vrot.slane %v3872, 2
        %v3936 = vsel %vm827, %v3933, %v3935
        %v3937 = vrot.slane %v3873, 2
        %v3938 = vrot.slane %v3874, 2
        %v3939 = vsel %vm827, %v3937, %v3938
        %v3940 = vrot.slane %v3875, 2
        %v3941 = vsel %vm827, %v3938, %v3940
        %v3942 = vrot.slane %v3876, 2
        %v3943 = vrot.slane %v3877, 2
        %v3944 = vsel %vm827, %v3942, %v3943
        %v3945 = vrot.slane %v3878, 2
        %v3946 = vsel %vm827, %v3943, %v3945
        %v3955 = vadd.f32 %v3919, %v3929
        %v3956 = vadd.f32 %v3920, %v3931
        %v3957 = vadd.f32 %v3921, %v3934
        %v3958 = vadd.f32 %v3922, %v3936
        %v3959 = vadd.f32 %v3923, %v3939
        %v3960 = vadd.f32 %v3924, %v3941
        %v3961 = vadd.f32 %v3925, %v3944
        %v3962 = vadd.f32 %v3926, %v3946
        %3971 = vrot.lane.b32.xlu0 %v3955, 1
        %v3972 = vpop.permute.xlu0 %3971
        %3973 = vrot.lane.b32.xlu0 %v3956, 1
        %v3974 = vpop.permute.xlu0 %3973
        %3975 = vrot.lane.b32.xlu0 %v3957, 1
        %v3976 = vpop.permute.xlu0 %3975
        %3977 = vrot.lane.b32.xlu0 %v3958, 1
        %v3978 = vpop.permute.xlu0 %3977
        %3979 = vrot.lane.b32.xlu0 %v3959, 1
        %v3980 = vpop.permute.xlu0 %3979
        %3981 = vrot.lane.b32.xlu0 %v3960, 1
        %v3982 = vpop.permute.xlu0 %3981
        %3983 = vrot.lane.b32.xlu0 %v3961, 1
        %v3984 = vpop.permute.xlu0 %3983
        %3985 = vrot.lane.b32.xlu0 %v3962, 1
        %v3986 = vpop.permute.xlu0 %3985
        %3995 = vst.msk [vmem:[#allocation5] sm:$0xff] %vm896, %v3972
        %3996 = vst.msk [vmem:[#allocation5 + $0x8] sm:$0xff] %vm896, %v3974
        %3997 = vst.msk [vmem:[#allocation5 + $0x10] sm:$0xff] %vm896, %v3976
        %3998 = vst.msk [vmem:[#allocation5 + $0x18] sm:$0xff] %vm896, %v3978
        %3999 = vst.msk [vmem:[#allocation5 + $0x20] sm:$0xff] %vm896, %v3980
        %4000 = vst.msk [vmem:[#allocation5 + $0x28] sm:$0xff] %vm896, %v3982
        %4001 = vst.msk [vmem:[#allocation5 + $0x30] sm:$0xff] %vm896, %v3984
        %4002 = vst.msk [vmem:[#allocation5 + $0x38] sm:$0xff] %vm896, %v3986
        %4003 = vst.msk [vmem:[#allocation5] sm:$0xff] %vm905, %v3955
        %4004 = vst.msk [vmem:[#allocation5 + $0x8] sm:$0xff] %vm905, %v3956
        %4005 = vst.msk [vmem:[#allocation5 + $0x10] sm:$0xff] %vm905, %v3957
        %4006 = vst.msk [vmem:[#allocation5 + $0x18] sm:$0xff] %vm905, %v3958
        %4007 = vst.msk [vmem:[#allocation5 + $0x20] sm:$0xff] %vm905, %v3959
        %4008 = vst.msk [vmem:[#allocation5 + $0x28] sm:$0xff] %vm905, %v3960
        %4009 = vst.msk [vmem:[#allocation5 + $0x30] sm:$0xff] %vm905, %v3961
        %4010 = vst.msk [vmem:[#allocation5 + $0x38] sm:$0xff] %vm905, %v3962
        %4011 = vrot.lane.b32.xlu0 %v3955, 2
        %v4012 = vpop.permute.xlu0 %4011
        %4013 = vrot.lane.b32.xlu0 %v3956, 2
        %v4014 = vpop.permute.xlu0 %4013
        %4015 = vrot.lane.b32.xlu0 %v3957, 2
        %v4016 = vpop.permute.xlu0 %4015
        %4017 = vrot.lane.b32.xlu0 %v3958, 2
        %v4018 = vpop.permute.xlu0 %4017
        %4019 = vrot.lane.b32.xlu0 %v3959, 2
        %v4020 = vpop.permute.xlu0 %4019
        %4021 = vrot.lane.b32.xlu0 %v3960, 2
        %v4022 = vpop.permute.xlu0 %4021
        %4023 = vrot.lane.b32.xlu0 %v3961, 2
        %v4024 = vpop.permute.xlu0 %4023
        %4025 = vrot.lane.b32.xlu0 %v3962, 2
        %v4026 = vpop.permute.xlu0 %4025
        %4035 = vst.msk [vmem:[#allocation5] sm:$0xff] %vm938, %v4012
        %4036 = vst.msk [vmem:[#allocation5 + $0x8] sm:$0xff] %vm938, %v4014
        %4037 = vst.msk [vmem:[#allocation5 + $0x10] sm:$0xff] %vm938, %v4016
        %4038 = vst.msk [vmem:[#allocation5 + $0x18] sm:$0xff] %vm938, %v4018
        %4039 = vst.msk [vmem:[#allocation5 + $0x20] sm:$0xff] %vm938, %v4020
        %4040 = vst.msk [vmem:[#allocation5 + $0x28] sm:$0xff] %vm938, %v4022
        %4041 = vst.msk [vmem:[#allocation5 + $0x30] sm:$0xff] %vm938, %v4024
        %4042 = vst.msk [vmem:[#allocation5 + $0x38] sm:$0xff] %vm938, %v4026
        %v4043 = vld [vmem:[#allocation5] sm:$0xff]
        %v4044 = vld [vmem:[#allocation5 + $0x8] sm:$0xff]
        %v4045 = vld [vmem:[#allocation5 + $0x10] sm:$0xff]
        %v4046 = vld [vmem:[#allocation5 + $0x18] sm:$0xff]
        %v4047 = vld [vmem:[#allocation5 + $0x20] sm:$0xff]
        %v4048 = vld [vmem:[#allocation5 + $0x28] sm:$0xff]
        %v4049 = vld [vmem:[#allocation5 + $0x30] sm:$0xff]
        %v4050 = vld [vmem:[#allocation5 + $0x38] sm:$0xff]
        %4059 = vrot.lane.b32.xlu0 %v4043, 127
        %v4060 = vpop.permute.xlu0 %4059
        %4061 = vrot.lane.b32.xlu0 %v4044, 127
        %v4062 = vpop.permute.xlu0 %4061
        %4063 = vrot.lane.b32.xlu0 %v4045, 127
        %v4064 = vpop.permute.xlu0 %4063
        %4065 = vrot.lane.b32.xlu0 %v4046, 127
        %v4066 = vpop.permute.xlu0 %4065
        %4067 = vrot.lane.b32.xlu0 %v4047, 127
        %v4068 = vpop.permute.xlu0 %4067
        %4069 = vrot.lane.b32.xlu0 %v4048, 127
        %v4070 = vpop.permute.xlu0 %4069
        %4071 = vrot.lane.b32.xlu0 %v4049, 127
        %v4072 = vpop.permute.xlu0 %4071
        %4073 = vrot.lane.b32.xlu0 %v4050, 127
        %v4074 = vpop.permute.xlu0 %4073
        %v4083 = vadd.f32 %v4043, %v4060
        %v4084 = vadd.f32 %v4044, %v4062
        %v4085 = vadd.f32 %v4045, %v4064
        %v4086 = vadd.f32 %v4046, %v4066
        %v4087 = vadd.f32 %v4047, %v4068
        %v4088 = vadd.f32 %v4048, %v4070
        %v4089 = vadd.f32 %v4049, %v4072
        %v4090 = vadd.f32 %v4050, %v4074
        %4091 = vrot.lane.b32.xlu0 %v4043, 126
        %v4092 = vpop.permute.xlu0 %4091
        %4093 = vrot.lane.b32.xlu0 %v4044, 126
        %v4094 = vpop.permute.xlu0 %4093
        %4095 = vrot.lane.b32.xlu0 %v4045, 126
        %v4096 = vpop.permute.xlu0 %4095
        %4097 = vrot.lane.b32.xlu0 %v4046, 126
        %v4098 = vpop.permute.xlu0 %4097
        %4099 = vrot.lane.b32.xlu0 %v4047, 126
        %v4100 = vpop.permute.xlu0 %4099
        %4101 = vrot.lane.b32.xlu0 %v4048, 126
        %v4102 = vpop.permute.xlu0 %4101
        %4103 = vrot.lane.b32.xlu0 %v4049, 126
        %v4104 = vpop.permute.xlu0 %4103
        %4105 = vrot.lane.b32.xlu0 %v4050, 126
        %v4106 = vpop.permute.xlu0 %4105
        %v4115 = vadd.f32 %v4083, %v4092
        %v4116 = vadd.f32 %v4084, %v4094
        %v4117 = vadd.f32 %v4085, %v4096
        %v4118 = vadd.f32 %v4086, %v4098
        %v4119 = vadd.f32 %v4087, %v4100
        %v4120 = vadd.f32 %v4088, %v4102
        %v4121 = vadd.f32 %v4089, %v4104
        %v4122 = vadd.f32 %v4090, %v4106
        %v4123 = vmul.f32 %v4115, 0.037037037
        %v4124 = vmul.f32 %v4116, 0.037037037
        %v4125 = vmul.f32 %v4117, 0.037037037
        %v4126 = vmul.f32 %v4118, 0.037037037
        %v4127 = vmul.f32 %v4119, 0.037037037
        %v4128 = vmul.f32 %v4120, 0.037037037
        %v4129 = vmul.f32 %v4121, 0.037037037
        %v4130 = vmul.f32 %v4122, 0.037037037
        %v4131 = vld [vmem:[%s229] sm:$0xff]
        %v4132 = vld [vmem:[%s229 + $0x8] sm:$0xff]
        %v4133 = vld [vmem:[%s229 + $0x10] sm:$0xff]
        %v4134 = vld [vmem:[%s229 + $0x18] sm:$0xff]
        %v4135 = vld [vmem:[%s229 + $0x20] sm:$0xff]
        %v4136 = vld [vmem:[%s229 + $0x28] sm:$0xff]
        %v4137 = vld [vmem:[%s229 + $0x30] sm:$0xff]
        %v4138 = vld [vmem:[%s229 + $0x38] sm:$0xff]
        %v4139 = vld [vmem:[%s229 + $0x40] sm:$0xff]
        %v4140 = vld [vmem:[%s229 + $0x48] sm:$0xff]
        %v4141 = vld [vmem:[%s229 + $0x50] sm:$0xff]
        %v4142 = vld [vmem:[%s229 + $0x58] sm:$0xff]
        %v4143 = vld [vmem:[%s206] sm:$0xff]
        %v4144 = vld [vmem:[%s206 + $0x8] sm:$0xff]
        %v4145 = vld [vmem:[%s206 + $0x10] sm:$0xff]
        %v4146 = vld [vmem:[%s206 + $0x18] sm:$0xff]
        %v4147 = vld [vmem:[%s206 + $0x20] sm:$0xff]
        %v4148 = vld [vmem:[%s206 + $0x28] sm:$0xff]
        %v4149 = vld [vmem:[%s206 + $0x30] sm:$0xff]
        %v4150 = vld [vmem:[%s206 + $0x38] sm:$0xff]
        %v4151 = vld [vmem:[%s206 + $0x40] sm:$0xff]
        %v4152 = vld [vmem:[%s206 + $0x48] sm:$0xff]
        %v4153 = vld [vmem:[%s206 + $0x50] sm:$0xff]
        %v4154 = vld [vmem:[%s206 + $0x58] sm:$0xff]
        %v4155 = vsub.f32 %v4131, %v4143
        %v4156 = vsub.f32 %v4132, %v4144
        %v4157 = vsub.f32 %v4133, %v4145
        %v4158 = vsub.f32 %v4134, %v4146
        %v4159 = vsub.f32 %v4135, %v4147
        %v4160 = vsub.f32 %v4136, %v4148
        %v4161 = vsub.f32 %v4137, %v4149
        %v4162 = vsub.f32 %v4138, %v4150
        %v4163 = vsub.f32 %v4139, %v4151
        %v4164 = vsub.f32 %v4140, %v4152
        %v4165 = vsub.f32 %v4141, %v4153
        %v4166 = vsub.f32 %v4142, %v4154
        %v4167 = vmul.f32 %v4155, %v4155
        %v4168 = vmul.f32 %v4156, %v4156
        %v4169 = vmul.f32 %v4157, %v4157
        %v4170 = vmul.f32 %v4158, %v4158
        %v4171 = vmul.f32 %v4159, %v4159
        %v4172 = vmul.f32 %v4160, %v4160
        %v4173 = vmul.f32 %v4161, %v4161
        %v4174 = vmul.f32 %v4162, %v4162
        %v4175 = vmul.f32 %v4163, %v4163
        %v4176 = vmul.f32 %v4164, %v4164
        %v4177 = vmul.f32 %v4165, %v4165
        %v4178 = vmul.f32 %v4166, %v4166
        %v4179 = vadd.f32 %v4167, %v4169
        %v4180 = vadd.f32 %v4168, %v4170
        %v4181 = vadd.f32 %v4169, %v4171
        %v4182 = vadd.f32 %v4170, %v4172
        %v4183 = vadd.f32 %v4171, %v4173
        %v4184 = vadd.f32 %v4172, %v4174
        %v4185 = vadd.f32 %v4173, %v4175
        %v4186 = vadd.f32 %v4174, %v4176
        %v4187 = vadd.f32 %v4179, %v4171
        %v4188 = vadd.f32 %v4180, %v4172
        %v4189 = vadd.f32 %v4181, %v4173
        %v4190 = vadd.f32 %v4182, %v4174
        %v4191 = vadd.f32 %v4183, %v4175
        %v4192 = vadd.f32 %v4184, %v4176
        %v4193 = vadd.f32 %v4185, %v4177
        %v4194 = vadd.f32 %v4186, %v4178
        %4195 = vst.msk [vmem:[#allocation4 + $0x1] sm:$0xff] %vm177, %v4187
        %4196 = vst.msk [vmem:[#allocation4 + $0x9] sm:$0xff] %vm177, %v4188
        %4197 = vst.msk [vmem:[#allocation4 + $0x19] sm:$0xff] %vm177, %v4189
        %4198 = vst.msk [vmem:[#allocation4 + $0x21] sm:$0xff] %vm177, %v4190
        %4199 = vst.msk [vmem:[#allocation4 + $0x31] sm:$0xff] %vm177, %v4191
        %4200 = vst.msk [vmem:[#allocation4 + $0x39] sm:$0xff] %vm177, %v4192
        %4201 = vst.msk [vmem:[#allocation4 + $0x49] sm:$0xff] %vm177, %v4193
        %4202 = vst.msk [vmem:[#allocation4 + $0x51] sm:$0xff] %vm177, %v4194
        %4203 = vst.msk [vmem:[#allocation4] sm:$0x1] %vm756, %v4187
        %4204 = vst.msk [vmem:[#allocation4 + $0x18] sm:$0x1] %vm756, %v4189
        %4205 = vst.msk [vmem:[#allocation4 + $0x30] sm:$0x1] %vm756, %v4191
        %4206 = vst.msk [vmem:[#allocation4 + $0x48] sm:$0x1] %vm756, %v4193
        %4207 = vst.msk [vmem:[#allocation4 + $0xa] sm:$0x80] %vm761, %v4188
        %4208 = vst.msk [vmem:[#allocation4 + $0x22] sm:$0x80] %vm761, %v4190
        %4209 = vst.msk [vmem:[#allocation4 + $0x3a] sm:$0x80] %vm761, %v4192
        %4210 = vst.msk [vmem:[#allocation4 + $0x52] sm:$0x80] %vm761, %v4194
        %v4211 = vld [vmem:[#allocation4] sm:$0xff]
        %v4212 = vld [vmem:[#allocation4 + $0x8] sm:$0xff]
        %v4213 = vld [vmem:[#allocation4 + $0x10] sm:$0x3]
        %v4214 = vld [vmem:[#allocation4 + $0x18] sm:$0xff]
        %v4215 = vld [vmem:[#allocation4 + $0x20] sm:$0xff]
        %v4216 = vld [vmem:[#allocation4 + $0x28] sm:$0x3]
        %v4217 = vld [vmem:[#allocation4 + $0x30] sm:$0xff]
        %v4218 = vld [vmem:[#allocation4 + $0x38] sm:$0xff]
        %v4219 = vld [vmem:[#allocation4 + $0x40] sm:$0x3]
        %v4220 = vld [vmem:[#allocation4 + $0x48] sm:$0xff]
        %v4221 = vld [vmem:[#allocation4 + $0x50] sm:$0xff]
        %v4222 = vld [vmem:[#allocation4 + $0x58] sm:$0x3]
        %v4235 = vrot.slane %v4211, 1
        %v4236 = vrot.slane %v4212, 1
        %v4237 = vsel %vm790, %v4235, %v4236
        %v4238 = vrot.slane %v4213, 1
        %v4239 = vsel %vm790, %v4236, %v4238
        %v4240 = vrot.slane %v4214, 1
        %v4241 = vrot.slane %v4215, 1
        %v4242 = vsel %vm790, %v4240, %v4241
        %v4243 = vrot.slane %v4216, 1
        %v4244 = vsel %vm790, %v4241, %v4243
        %v4245 = vrot.slane %v4217, 1
        %v4246 = vrot.slane %v4218, 1
        %v4247 = vsel %vm790, %v4245, %v4246
        %v4248 = vrot.slane %v4219, 1
        %v4249 = vsel %vm790, %v4246, %v4248
        %v4250 = vrot.slane %v4220, 1
        %v4251 = vrot.slane %v4221, 1
        %v4252 = vsel %vm790, %v4250, %v4251
        %v4253 = vrot.slane %v4222, 1
        %v4254 = vsel %vm790, %v4251, %v4253
        %v4263 = vadd.f32 %v4211, %v4237
        %v4264 = vadd.f32 %v4212, %v4239
        %v4265 = vadd.f32 %v4214, %v4242
        %v4266 = vadd.f32 %v4215, %v4244
        %v4267 = vadd.f32 %v4217, %v4247
        %v4268 = vadd.f32 %v4218, %v4249
        %v4269 = vadd.f32 %v4220, %v4252
        %v4270 = vadd.f32 %v4221, %v4254
        %v4271 = vrot.slane %v4211, 2
        %v4272 = vrot.slane %v4212, 2
        %v4273 = vsel %vm827, %v4271, %v4272
        %v4274 = vrot.slane %v4213, 2
        %v4275 = vsel %vm827, %v4272, %v4274
        %v4276 = vrot.slane %v4214, 2
        %v4277 = vrot.slane %v4215, 2
        %v4278 = vsel %vm827, %v4276, %v4277
        %v4279 = vrot.slane %v4216, 2
        %v4280 = vsel %vm827, %v4277, %v4279
        %v4281 = vrot.slane %v4217, 2
        %v4282 = vrot.slane %v4218, 2
        %v4283 = vsel %vm827, %v4281, %v4282
        %v4284 = vrot.slane %v4219, 2
        %v4285 = vsel %vm827, %v4282, %v4284
        %v4286 = vrot.slane %v4220, 2
        %v4287 = vrot.slane %v4221, 2
        %v4288 = vsel %vm827, %v4286, %v4287
        %v4289 = vrot.slane %v4222, 2
        %v4290 = vsel %vm827, %v4287, %v4289
        %v4299 = vadd.f32 %v4263, %v4273
        %v4300 = vadd.f32 %v4264, %v4275
        %v4301 = vadd.f32 %v4265, %v4278
        %v4302 = vadd.f32 %v4266, %v4280
        %v4303 = vadd.f32 %v4267, %v4283
        %v4304 = vadd.f32 %v4268, %v4285
        %v4305 = vadd.f32 %v4269, %v4288
        %v4306 = vadd.f32 %v4270, %v4290
        %4315 = vrot.lane.b32.xlu0 %v4299, 1
        %v4316 = vpop.permute.xlu0 %4315
        %4317 = vrot.lane.b32.xlu0 %v4300, 1
        %v4318 = vpop.permute.xlu0 %4317
        %4319 = vrot.lane.b32.xlu0 %v4301, 1
        %v4320 = vpop.permute.xlu0 %4319
        %4321 = vrot.lane.b32.xlu0 %v4302, 1
        %v4322 = vpop.permute.xlu0 %4321
        %4323 = vrot.lane.b32.xlu0 %v4303, 1
        %v4324 = vpop.permute.xlu0 %4323
        %4325 = vrot.lane.b32.xlu0 %v4304, 1
        %v4326 = vpop.permute.xlu0 %4325
        %4327 = vrot.lane.b32.xlu0 %v4305, 1
        %v4328 = vpop.permute.xlu0 %4327
        %4329 = vrot.lane.b32.xlu0 %v4306, 1
        %v4330 = vpop.permute.xlu0 %4329
        %4339 = vst.msk [vmem:[#allocation5] sm:$0xff] %vm896, %v4316
        %4340 = vst.msk [vmem:[#allocation5 + $0x8] sm:$0xff] %vm896, %v4318
        %4341 = vst.msk [vmem:[#allocation5 + $0x10] sm:$0xff] %vm896, %v4320
        %4342 = vst.msk [vmem:[#allocation5 + $0x18] sm:$0xff] %vm896, %v4322
        %4343 = vst.msk [vmem:[#allocation5 + $0x20] sm:$0xff] %vm896, %v4324
        %4344 = vst.msk [vmem:[#allocation5 + $0x28] sm:$0xff] %vm896, %v4326
        %4345 = vst.msk [vmem:[#allocation5 + $0x30] sm:$0xff] %vm896, %v4328
        %4346 = vst.msk [vmem:[#allocation5 + $0x38] sm:$0xff] %vm896, %v4330
        %4347 = vst.msk [vmem:[#allocation5] sm:$0xff] %vm905, %v4299
        %4348 = vst.msk [vmem:[#allocation5 + $0x8] sm:$0xff] %vm905, %v4300
        %4349 = vst.msk [vmem:[#allocation5 + $0x10] sm:$0xff] %vm905, %v4301
        %4350 = vst.msk [vmem:[#allocation5 + $0x18] sm:$0xff] %vm905, %v4302
        %4351 = vst.msk [vmem:[#allocation5 + $0x20] sm:$0xff] %vm905, %v4303
        %4352 = vst.msk [vmem:[#allocation5 + $0x28] sm:$0xff] %vm905, %v4304
        %4353 = vst.msk [vmem:[#allocation5 + $0x30] sm:$0xff] %vm905, %v4305
        %4354 = vst.msk [vmem:[#allocation5 + $0x38] sm:$0xff] %vm905, %v4306
        %4355 = vrot.lane.b32.xlu0 %v4299, 2
        %v4356 = vpop.permute.xlu0 %4355
        %4357 = vrot.lane.b32.xlu0 %v4300, 2
        %v4358 = vpop.permute.xlu0 %4357
        %4359 = vrot.lane.b32.xlu0 %v4301, 2
        %v4360 = vpop.permute.xlu0 %4359
        %4361 = vrot.lane.b32.xlu0 %v4302, 2
        %v4362 = vpop.permute.xlu0 %4361
        %4363 = vrot.lane.b32.xlu0 %v4303, 2
        %v4364 = vpop.permute.xlu0 %4363
        %4365 = vrot.lane.b32.xlu0 %v4304, 2
        %v4366 = vpop.permute.xlu0 %4365
        %4367 = vrot.lane.b32.xlu0 %v4305, 2
        %v4368 = vpop.permute.xlu0 %4367
        %4369 = vrot.lane.b32.xlu0 %v4306, 2
        %v4370 = vpop.permute.xlu0 %4369
        %4379 = vst.msk [vmem:[#allocation5] sm:$0xff] %vm938, %v4356
        %4380 = vst.msk [vmem:[#allocation5 + $0x8] sm:$0xff] %vm938, %v4358
        %4381 = vst.msk [vmem:[#allocation5 + $0x10] sm:$0xff] %vm938, %v4360
        %4382 = vst.msk [vmem:[#allocation5 + $0x18] sm:$0xff] %vm938, %v4362
        %4383 = vst.msk [vmem:[#allocation5 + $0x20] sm:$0xff] %vm938, %v4364
        %4384 = vst.msk [vmem:[#allocation5 + $0x28] sm:$0xff] %vm938, %v4366
        %4385 = vst.msk [vmem:[#allocation5 + $0x30] sm:$0xff] %vm938, %v4368
        %4386 = vst.msk [vmem:[#allocation5 + $0x38] sm:$0xff] %vm938, %v4370
        %v4387 = vld [vmem:[#allocation5] sm:$0xff]
        %v4388 = vld [vmem:[#allocation5 + $0x8] sm:$0xff]
        %v4389 = vld [vmem:[#allocation5 + $0x10] sm:$0xff]
        %v4390 = vld [vmem:[#allocation5 + $0x18] sm:$0xff]
        %v4391 = vld [vmem:[#allocation5 + $0x20] sm:$0xff]
        %v4392 = vld [vmem:[#allocation5 + $0x28] sm:$0xff]
        %v4393 = vld [vmem:[#allocation5 + $0x30] sm:$0xff]
        %v4394 = vld [vmem:[#allocation5 + $0x38] sm:$0xff]
        %4403 = vrot.lane.b32.xlu0 %v4387, 127
        %v4404 = vpop.permute.xlu0 %4403
        %4405 = vrot.lane.b32.xlu0 %v4388, 127
        %v4406 = vpop.permute.xlu0 %4405
        %4407 = vrot.lane.b32.xlu0 %v4389, 127
        %v4408 = vpop.permute.xlu0 %4407
        %4409 = vrot.lane.b32.xlu0 %v4390, 127
        %v4410 = vpop.permute.xlu0 %4409
        %4411 = vrot.lane.b32.xlu0 %v4391, 127
        %v4412 = vpop.permute.xlu0 %4411
        %4413 = vrot.lane.b32.xlu0 %v4392, 127
        %v4414 = vpop.permute.xlu0 %4413
        %4415 = vrot.lane.b32.xlu0 %v4393, 127
        %v4416 = vpop.permute.xlu0 %4415
        %4417 = vrot.lane.b32.xlu0 %v4394, 127
        %v4418 = vpop.permute.xlu0 %4417
        %v4427 = vadd.f32 %v4387, %v4404
        %v4428 = vadd.f32 %v4388, %v4406
        %v4429 = vadd.f32 %v4389, %v4408
        %v4430 = vadd.f32 %v4390, %v4410
        %v4431 = vadd.f32 %v4391, %v4412
        %v4432 = vadd.f32 %v4392, %v4414
        %v4433 = vadd.f32 %v4393, %v4416
        %v4434 = vadd.f32 %v4394, %v4418
        %4435 = vrot.lane.b32.xlu0 %v4387, 126
        %v4436 = vpop.permute.xlu0 %4435
        %4437 = vrot.lane.b32.xlu0 %v4388, 126
        %v4438 = vpop.permute.xlu0 %4437
        %4439 = vrot.lane.b32.xlu0 %v4389, 126
        %v4440 = vpop.permute.xlu0 %4439
        %4441 = vrot.lane.b32.xlu0 %v4390, 126
        %v4442 = vpop.permute.xlu0 %4441
        %4443 = vrot.lane.b32.xlu0 %v4391, 126
        %v4444 = vpop.permute.xlu0 %4443
        %4445 = vrot.lane.b32.xlu0 %v4392, 126
        %v4446 = vpop.permute.xlu0 %4445
        %4447 = vrot.lane.b32.xlu0 %v4393, 126
        %v4448 = vpop.permute.xlu0 %4447
        %4449 = vrot.lane.b32.xlu0 %v4394, 126
        %v4450 = vpop.permute.xlu0 %4449
        %v4459 = vadd.f32 %v4427, %v4436
        %v4460 = vadd.f32 %v4428, %v4438
        %v4461 = vadd.f32 %v4429, %v4440
        %v4462 = vadd.f32 %v4430, %v4442
        %v4463 = vadd.f32 %v4431, %v4444
        %v4464 = vadd.f32 %v4432, %v4446
        %v4465 = vadd.f32 %v4433, %v4448
        %v4466 = vadd.f32 %v4434, %v4450
        %v4467 = vmul.f32 %v4459, 0.037037037
        %v4468 = vmul.f32 %v4460, 0.037037037
        %v4469 = vmul.f32 %v4461, 0.037037037
        %v4470 = vmul.f32 %v4462, 0.037037037
        %v4471 = vmul.f32 %v4463, 0.037037037
        %v4472 = vmul.f32 %v4464, 0.037037037
        %v4473 = vmul.f32 %v4465, 0.037037037
        %v4474 = vmul.f32 %v4466, 0.037037037
        %v4475 = vld [vmem:[%s229] sm:$0xff]
        %v4476 = vld [vmem:[%s229 + $0x8] sm:$0xff]
        %v4477 = vld [vmem:[%s229 + $0x10] sm:$0xff]
        %v4478 = vld [vmem:[%s229 + $0x18] sm:$0xff]
        %v4479 = vld [vmem:[%s229 + $0x20] sm:$0xff]
        %v4480 = vld [vmem:[%s229 + $0x28] sm:$0xff]
        %v4481 = vld [vmem:[%s229 + $0x30] sm:$0xff]
        %v4482 = vld [vmem:[%s229 + $0x38] sm:$0xff]
        %v4483 = vld [vmem:[%s229 + $0x40] sm:$0xff]
        %v4484 = vld [vmem:[%s229 + $0x48] sm:$0xff]
        %v4485 = vld [vmem:[%s229 + $0x50] sm:$0xff]
        %v4486 = vld [vmem:[%s229 + $0x58] sm:$0xff]
        %v4487 = vld [vmem:[%s222] sm:$0xff]
        %v4488 = vld [vmem:[%s222 + $0x8] sm:$0xff]
        %v4489 = vld [vmem:[%s222 + $0x10] sm:$0xff]
        %v4490 = vld [vmem:[%s222 + $0x18] sm:$0xff]
        %v4491 = vld [vmem:[%s222 + $0x20] sm:$0xff]
        %v4492 = vld [vmem:[%s222 + $0x28] sm:$0xff]
        %v4493 = vld [vmem:[%s222 + $0x30] sm:$0xff]
        %v4494 = vld [vmem:[%s222 + $0x38] sm:$0xff]
        %v4495 = vld [vmem:[%s222 + $0x40] sm:$0xff]
        %v4496 = vld [vmem:[%s222 + $0x48] sm:$0xff]
        %v4497 = vld [vmem:[%s222 + $0x50] sm:$0xff]
        %v4498 = vld [vmem:[%s222 + $0x58] sm:$0xff]
        %v4499 = vsub.f32 %v4475, %v4487
        %v4500 = vsub.f32 %v4476, %v4488
        %v4501 = vsub.f32 %v4477, %v4489
        %v4502 = vsub.f32 %v4478, %v4490
        %v4503 = vsub.f32 %v4479, %v4491
        %v4504 = vsub.f32 %v4480, %v4492
        %v4505 = vsub.f32 %v4481, %v4493
        %v4506 = vsub.f32 %v4482, %v4494
        %v4507 = vsub.f32 %v4483, %v4495
        %v4508 = vsub.f32 %v4484, %v4496
        %v4509 = vsub.f32 %v4485, %v4497
        %v4510 = vsub.f32 %v4486, %v4498
        %v4511 = vmul.f32 %v4499, %v4499
        %v4512 = vmul.f32 %v4500, %v4500
        %v4513 = vmul.f32 %v4501, %v4501
        %v4514 = vmul.f32 %v4502, %v4502
        %v4515 = vmul.f32 %v4503, %v4503
        %v4516 = vmul.f32 %v4504, %v4504
        %v4517 = vmul.f32 %v4505, %v4505
        %v4518 = vmul.f32 %v4506, %v4506
        %v4519 = vmul.f32 %v4507, %v4507
        %v4520 = vmul.f32 %v4508, %v4508
        %v4521 = vmul.f32 %v4509, %v4509
        %v4522 = vmul.f32 %v4510, %v4510
        %v4523 = vadd.f32 %v4511, %v4513
        %v4524 = vadd.f32 %v4512, %v4514
        %v4525 = vadd.f32 %v4513, %v4515
        %v4526 = vadd.f32 %v4514, %v4516
        %v4527 = vadd.f32 %v4515, %v4517
        %v4528 = vadd.f32 %v4516, %v4518
        %v4529 = vadd.f32 %v4517, %v4519
        %v4530 = vadd.f32 %v4518, %v4520
        %v4531 = vadd.f32 %v4523, %v4515
        %v4532 = vadd.f32 %v4524, %v4516
        %v4533 = vadd.f32 %v4525, %v4517
        %v4534 = vadd.f32 %v4526, %v4518
        %v4535 = vadd.f32 %v4527, %v4519
        %v4536 = vadd.f32 %v4528, %v4520
        %v4537 = vadd.f32 %v4529, %v4521
        %v4538 = vadd.f32 %v4530, %v4522
        %4539 = vst.msk [vmem:[#allocation4 + $0x1] sm:$0xff] %vm177, %v4531
        %4540 = vst.msk [vmem:[#allocation4 + $0x9] sm:$0xff] %vm177, %v4532
        %4541 = vst.msk [vmem:[#allocation4 + $0x19] sm:$0xff] %vm177, %v4533
        %4542 = vst.msk [vmem:[#allocation4 + $0x21] sm:$0xff] %vm177, %v4534
        %4543 = vst.msk [vmem:[#allocation4 + $0x31] sm:$0xff] %vm177, %v4535
        %4544 = vst.msk [vmem:[#allocation4 + $0x39] sm:$0xff] %vm177, %v4536
        %4545 = vst.msk [vmem:[#allocation4 + $0x49] sm:$0xff] %vm177, %v4537
        %4546 = vst.msk [vmem:[#allocation4 + $0x51] sm:$0xff] %vm177, %v4538
        %4547 = vst.msk [vmem:[#allocation4] sm:$0x1] %vm756, %v4531
        %4548 = vst.msk [vmem:[#allocation4 + $0x18] sm:$0x1] %vm756, %v4533
        %4549 = vst.msk [vmem:[#allocation4 + $0x30] sm:$0x1] %vm756, %v4535
        %4550 = vst.msk [vmem:[#allocation4 + $0x48] sm:$0x1] %vm756, %v4537
        %4551 = vst.msk [vmem:[#allocation4 + $0xa] sm:$0x80] %vm761, %v4532
        %4552 = vst.msk [vmem:[#allocation4 + $0x22] sm:$0x80] %vm761, %v4534
        %4553 = vst.msk [vmem:[#allocation4 + $0x3a] sm:$0x80] %vm761, %v4536
        %4554 = vst.msk [vmem:[#allocation4 + $0x52] sm:$0x80] %vm761, %v4538
        %v4555 = vld [vmem:[#allocation4] sm:$0xff]
        %v4556 = vld [vmem:[#allocation4 + $0x8] sm:$0xff]
        %v4557 = vld [vmem:[#allocation4 + $0x10] sm:$0x3]
        %v4558 = vld [vmem:[#allocation4 + $0x18] sm:$0xff]
        %v4559 = vld [vmem:[#allocation4 + $0x20] sm:$0xff]
        %v4560 = vld [vmem:[#allocation4 + $0x28] sm:$0x3]
        %v4561 = vld [vmem:[#allocation4 + $0x30] sm:$0xff]
        %v4562 = vld [vmem:[#allocation4 + $0x38] sm:$0xff]
        %v4563 = vld [vmem:[#allocation4 + $0x40] sm:$0x3]
        %v4564 = vld [vmem:[#allocation4 + $0x48] sm:$0xff]
        %v4565 = vld [vmem:[#allocation4 + $0x50] sm:$0xff]
        %v4566 = vld [vmem:[#allocation4 + $0x58] sm:$0x3]
        %v4579 = vrot.slane %v4555, 1
        %v4580 = vrot.slane %v4556, 1
        %v4581 = vsel %vm790, %v4579, %v4580
        %v4582 = vrot.slane %v4557, 1
        %v4583 = vsel %vm790, %v4580, %v4582
        %v4584 = vrot.slane %v4558, 1
        %v4585 = vrot.slane %v4559, 1
        %v4586 = vsel %vm790, %v4584, %v4585
        %v4587 = vrot.slane %v4560, 1
        %v4588 = vsel %vm790, %v4585, %v4587
        %v4589 = vrot.slane %v4561, 1
        %v4590 = vrot.slane %v4562, 1
        %v4591 = vsel %vm790, %v4589, %v4590
        %v4592 = vrot.slane %v4563, 1
        %v4593 = vsel %vm790, %v4590, %v4592
        %v4594 = vrot.slane %v4564, 1
        %v4595 = vrot.slane %v4565, 1
        %v4596 = vsel %vm790, %v4594, %v4595
        %v4597 = vrot.slane %v4566, 1
        %v4598 = vsel %vm790, %v4595, %v4597
        %v4607 = vadd.f32 %v4555, %v4581
        %v4608 = vadd.f32 %v4556, %v4583
        %v4609 = vadd.f32 %v4558, %v4586
        %v4610 = vadd.f32 %v4559, %v4588
        %v4611 = vadd.f32 %v4561, %v4591
        %v4612 = vadd.f32 %v4562, %v4593
        %v4613 = vadd.f32 %v4564, %v4596
        %v4614 = vadd.f32 %v4565, %v4598
        %v4615 = vrot.slane %v4555, 2
        %v4616 = vrot.slane %v4556, 2
        %v4617 = vsel %vm827, %v4615, %v4616
        %v4618 = vrot.slane %v4557, 2
        %v4619 = vsel %vm827, %v4616, %v4618
        %v4620 = vrot.slane %v4558, 2
        %v4621 = vrot.slane %v4559, 2
        %v4622 = vsel %vm827, %v4620, %v4621
        %v4623 = vrot.slane %v4560, 2
        %v4624 = vsel %vm827, %v4621, %v4623
        %v4625 = vrot.slane %v4561, 2
        %v4626 = vrot.slane %v4562, 2
        %v4627 = vsel %vm827, %v4625, %v4626
        %v4628 = vrot.slane %v4563, 2
        %v4629 = vsel %vm827, %v4626, %v4628
        %v4630 = vrot.slane %v4564, 2
        %v4631 = vrot.slane %v4565, 2
        %v4632 = vsel %vm827, %v4630, %v4631
        %v4633 = vrot.slane %v4566, 2
        %v4634 = vsel %vm827, %v4631, %v4633
        %v4643 = vadd.f32 %v4607, %v4617
        %v4644 = vadd.f32 %v4608, %v4619
        %v4645 = vadd.f32 %v4609, %v4622
        %v4646 = vadd.f32 %v4610, %v4624
        %v4647 = vadd.f32 %v4611, %v4627
        %v4648 = vadd.f32 %v4612, %v4629
        %v4649 = vadd.f32 %v4613, %v4632
        %v4650 = vadd.f32 %v4614, %v4634
        %4659 = vrot.lane.b32.xlu0 %v4643, 1
        %v4660 = vpop.permute.xlu0 %4659
        %4661 = vrot.lane.b32.xlu0 %v4644, 1
        %v4662 = vpop.permute.xlu0 %4661
        %4663 = vrot.lane.b32.xlu0 %v4645, 1
        %v4664 = vpop.permute.xlu0 %4663
        %4665 = vrot.lane.b32.xlu0 %v4646, 1
        %v4666 = vpop.permute.xlu0 %4665
        %4667 = vrot.lane.b32.xlu0 %v4647, 1
        %v4668 = vpop.permute.xlu0 %4667
        %4669 = vrot.lane.b32.xlu0 %v4648, 1
        %v4670 = vpop.permute.xlu0 %4669
        %4671 = vrot.lane.b32.xlu0 %v4649, 1
        %v4672 = vpop.permute.xlu0 %4671
        %4673 = vrot.lane.b32.xlu0 %v4650, 1
        %v4674 = vpop.permute.xlu0 %4673
        %4683 = vst.msk [vmem:[#allocation5] sm:$0xff] %vm896, %v4660
        %4684 = vst.msk [vmem:[#allocation5 + $0x8] sm:$0xff] %vm896, %v4662
        %4685 = vst.msk [vmem:[#allocation5 + $0x10] sm:$0xff] %vm896, %v4664
        %4686 = vst.msk [vmem:[#allocation5 + $0x18] sm:$0xff] %vm896, %v4666
        %4687 = vst.msk [vmem:[#allocation5 + $0x20] sm:$0xff] %vm896, %v4668
        %4688 = vst.msk [vmem:[#allocation5 + $0x28] sm:$0xff] %vm896, %v4670
        %4689 = vst.msk [vmem:[#allocation5 + $0x30] sm:$0xff] %vm896, %v4672
        %4690 = vst.msk [vmem:[#allocation5 + $0x38] sm:$0xff] %vm896, %v4674
        %4691 = vst.msk [vmem:[#allocation5] sm:$0xff] %vm905, %v4643
        %4692 = vst.msk [vmem:[#allocation5 + $0x8] sm:$0xff] %vm905, %v4644
        %4693 = vst.msk [vmem:[#allocation5 + $0x10] sm:$0xff] %vm905, %v4645
        %4694 = vst.msk [vmem:[#allocation5 + $0x18] sm:$0xff] %vm905, %v4646
        %4695 = vst.msk [vmem:[#allocation5 + $0x20] sm:$0xff] %vm905, %v4647
        %4696 = vst.msk [vmem:[#allocation5 + $0x28] sm:$0xff] %vm905, %v4648
        %4697 = vst.msk [vmem:[#allocation5 + $0x30] sm:$0xff] %vm905, %v4649
        %4698 = vst.msk [vmem:[#allocation5 + $0x38] sm:$0xff] %vm905, %v4650
        %4699 = vrot.lane.b32.xlu0 %v4643, 2
        %v4700 = vpop.permute.xlu0 %4699
        %4701 = vrot.lane.b32.xlu0 %v4644, 2
        %v4702 = vpop.permute.xlu0 %4701
        %4703 = vrot.lane.b32.xlu0 %v4645, 2
        %v4704 = vpop.permute.xlu0 %4703
        %4705 = vrot.lane.b32.xlu0 %v4646, 2
        %v4706 = vpop.permute.xlu0 %4705
        %4707 = vrot.lane.b32.xlu0 %v4647, 2
        %v4708 = vpop.permute.xlu0 %4707
        %4709 = vrot.lane.b32.xlu0 %v4648, 2
        %v4710 = vpop.permute.xlu0 %4709
        %4711 = vrot.lane.b32.xlu0 %v4649, 2
        %v4712 = vpop.permute.xlu0 %4711
        %4713 = vrot.lane.b32.xlu0 %v4650, 2
        %v4714 = vpop.permute.xlu0 %4713
        %4723 = vst.msk [vmem:[#allocation5] sm:$0xff] %vm938, %v4700
        %4724 = vst.msk [vmem:[#allocation5 + $0x8] sm:$0xff] %vm938, %v4702
        %4725 = vst.msk [vmem:[#allocation5 + $0x10] sm:$0xff] %vm938, %v4704
        %4726 = vst.msk [vmem:[#allocation5 + $0x18] sm:$0xff] %vm938, %v4706
        %4727 = vst.msk [vmem:[#allocation5 + $0x20] sm:$0xff] %vm938, %v4708
        %4728 = vst.msk [vmem:[#allocation5 + $0x28] sm:$0xff] %vm938, %v4710
        %4729 = vst.msk [vmem:[#allocation5 + $0x30] sm:$0xff] %vm938, %v4712
        %4730 = vst.msk [vmem:[#allocation5 + $0x38] sm:$0xff] %vm938, %v4714
        %v4731 = vld [vmem:[#allocation5] sm:$0xff]
        %v4732 = vld [vmem:[#allocation5 + $0x8] sm:$0xff]
        %v4733 = vld [vmem:[#allocation5 + $0x10] sm:$0xff]
        %v4734 = vld [vmem:[#allocation5 + $0x18] sm:$0xff]
        %v4735 = vld [vmem:[#allocation5 + $0x20] sm:$0xff]
        %v4736 = vld [vmem:[#allocation5 + $0x28] sm:$0xff]
        %v4737 = vld [vmem:[#allocation5 + $0x30] sm:$0xff]
        %v4738 = vld [vmem:[#allocation5 + $0x38] sm:$0xff]
        %4747 = vrot.lane.b32.xlu0 %v4731, 127
        %v4748 = vpop.permute.xlu0 %4747
        %4749 = vrot.lane.b32.xlu0 %v4732, 127
        %v4750 = vpop.permute.xlu0 %4749
        %4751 = vrot.lane.b32.xlu0 %v4733, 127
        %v4752 = vpop.permute.xlu0 %4751
        %4753 = vrot.lane.b32.xlu0 %v4734, 127
        %v4754 = vpop.permute.xlu0 %4753
        %4755 = vrot.lane.b32.xlu0 %v4735, 127
        %v4756 = vpop.permute.xlu0 %4755
        %4757 = vrot.lane.b32.xlu0 %v4736, 127
        %v4758 = vpop.permute.xlu0 %4757
        %4759 = vrot.lane.b32.xlu0 %v4737, 127
        %v4760 = vpop.permute.xlu0 %4759
        %4761 = vrot.lane.b32.xlu0 %v4738, 127
        %v4762 = vpop.permute.xlu0 %4761
        %v4771 = vadd.f32 %v4731, %v4748
        %v4772 = vadd.f32 %v4732, %v4750
        %v4773 = vadd.f32 %v4733, %v4752
        %v4774 = vadd.f32 %v4734, %v4754
        %v4775 = vadd.f32 %v4735, %v4756
        %v4776 = vadd.f32 %v4736, %v4758
        %v4777 = vadd.f32 %v4737, %v4760
        %v4778 = vadd.f32 %v4738, %v4762
        %4779 = vrot.lane.b32.xlu0 %v4731, 126
        %v4780 = vpop.permute.xlu0 %4779
        %4781 = vrot.lane.b32.xlu0 %v4732, 126
        %v4782 = vpop.permute.xlu0 %4781
        %4783 = vrot.lane.b32.xlu0 %v4733, 126
        %v4784 = vpop.permute.xlu0 %4783
        %4785 = vrot.lane.b32.xlu0 %v4734, 126
        %v4786 = vpop.permute.xlu0 %4785
        %4787 = vrot.lane.b32.xlu0 %v4735, 126
        %v4788 = vpop.permute.xlu0 %4787
        %4789 = vrot.lane.b32.xlu0 %v4736, 126
        %v4790 = vpop.permute.xlu0 %4789
        %4791 = vrot.lane.b32.xlu0 %v4737, 126
        %v4792 = vpop.permute.xlu0 %4791
        %4793 = vrot.lane.b32.xlu0 %v4738, 126
        %v4794 = vpop.permute.xlu0 %4793
        %v4803 = vadd.f32 %v4771, %v4780
        %v4804 = vadd.f32 %v4772, %v4782
        %v4805 = vadd.f32 %v4773, %v4784
        %v4806 = vadd.f32 %v4774, %v4786
        %v4807 = vadd.f32 %v4775, %v4788
        %v4808 = vadd.f32 %v4776, %v4790
        %v4809 = vadd.f32 %v4777, %v4792
        %v4810 = vadd.f32 %v4778, %v4794
        %v4811 = vmul.f32 %v4803, 0.037037037
        %v4812 = vmul.f32 %v4804, 0.037037037
        %v4813 = vmul.f32 %v4805, 0.037037037
        %v4814 = vmul.f32 %v4806, 0.037037037
        %v4815 = vmul.f32 %v4807, 0.037037037
        %v4816 = vmul.f32 %v4808, 0.037037037
        %v4817 = vmul.f32 %v4809, 0.037037037
        %v4818 = vmul.f32 %v4810, 0.037037037
        %v4819 = vmin.f32 %v1027, %v1371
        %v4820 = vmin.f32 %v1028, %v1372
        %v4821 = vmin.f32 %v1029, %v1373
        %v4822 = vmin.f32 %v1030, %v1374
        %v4823 = vmin.f32 %v1031, %v1375
        %v4824 = vmin.f32 %v1032, %v1376
        %v4825 = vmin.f32 %v1033, %v1377
        %v4826 = vmin.f32 %v1034, %v1378
        %v4827 = vadd.f32 %v1027, %v1371
        %v4828 = vadd.f32 %v1028, %v1372
        %v4829 = vadd.f32 %v1029, %v1373
        %v4830 = vadd.f32 %v1030, %v1374
        %v4831 = vadd.f32 %v1031, %v1375
        %v4832 = vadd.f32 %v1032, %v1376
        %v4833 = vadd.f32 %v1033, %v1377
        %v4834 = vadd.f32 %v1034, %v1378
        %v4835 = vmin.f32 %v4819, %v1715
        %v4836 = vmin.f32 %v4820, %v1716
        %v4837 = vmin.f32 %v4821, %v1717
        %v4838 = vmin.f32 %v4822, %v1718
        %v4839 = vmin.f32 %v4823, %v1719
        %v4840 = vmin.f32 %v4824, %v1720
        %v4841 = vmin.f32 %v4825, %v1721
        %v4842 = vmin.f32 %v4826, %v1722
        %v4843 = vadd.f32 %v4827, %v1715
        %v4844 = vadd.f32 %v4828, %v1716
        %v4845 = vadd.f32 %v4829, %v1717
        %v4846 = vadd.f32 %v4830, %v1718
        %v4847 = vadd.f32 %v4831, %v1719
        %v4848 = vadd.f32 %v4832, %v1720
        %v4849 = vadd.f32 %v4833, %v1721
        %v4850 = vadd.f32 %v4834, %v1722
        %v4851 = vmin.f32 %v4835, %v2059
        %v4852 = vmin.f32 %v4836, %v2060
        %v4853 = vmin.f32 %v4837, %v2061
        %v4854 = vmin.f32 %v4838, %v2062
        %v4855 = vmin.f32 %v4839, %v2063
        %v4856 = vmin.f32 %v4840, %v2064
        %v4857 = vmin.f32 %v4841, %v2065
        %v4858 = vmin.f32 %v4842, %v2066
        %v4859 = vadd.f32 %v4843, %v2059
        %v4860 = vadd.f32 %v4844, %v2060
        %v4861 = vadd.f32 %v4845, %v2061
        %v4862 = vadd.f32 %v4846, %v2062
        %v4863 = vadd.f32 %v4847, %v2063
        %v4864 = vadd.f32 %v4848, %v2064
        %v4865 = vadd.f32 %v4849, %v2065
        %v4866 = vadd.f32 %v4850, %v2066
        %v4867 = vmin.f32 %v4851, %v2403
        %v4868 = vmin.f32 %v4852, %v2404
        %v4869 = vmin.f32 %v4853, %v2405
        %v4870 = vmin.f32 %v4854, %v2406
        %v4871 = vmin.f32 %v4855, %v2407
        %v4872 = vmin.f32 %v4856, %v2408
        %v4873 = vmin.f32 %v4857, %v2409
        %v4874 = vmin.f32 %v4858, %v2410
        %v4875 = vadd.f32 %v4859, %v2403
        %v4876 = vadd.f32 %v4860, %v2404
        %v4877 = vadd.f32 %v4861, %v2405
        %v4878 = vadd.f32 %v4862, %v2406
        %v4879 = vadd.f32 %v4863, %v2407
        %v4880 = vadd.f32 %v4864, %v2408
        %v4881 = vadd.f32 %v4865, %v2409
        %v4882 = vadd.f32 %v4866, %v2410
        %v4883 = vmin.f32 %v4867, %v2747
        %v4884 = vmin.f32 %v4868, %v2748
        %v4885 = vmin.f32 %v4869, %v2749
        %v4886 = vmin.f32 %v4870, %v2750
        %v4887 = vmin.f32 %v4871, %v2751
        %v4888 = vmin.f32 %v4872, %v2752
        %v4889 = vmin.f32 %v4873, %v2753
        %v4890 = vmin.f32 %v4874, %v2754
        %v4891 = vadd.f32 %v4875, %v2747
        %v4892 = vadd.f32 %v4876, %v2748
        %v4893 = vadd.f32 %v4877, %v2749
        %v4894 = vadd.f32 %v4878, %v2750
        %v4895 = vadd.f32 %v4879, %v2751
        %v4896 = vadd.f32 %v4880, %v2752
        %v4897 = vadd.f32 %v4881, %v2753
        %v4898 = vadd.f32 %v4882, %v2754
        %v4899 = vmin.f32 %v4883, %v3091
        %v4900 = vmin.f32 %v4884, %v3092
        %v4901 = vmin.f32 %v4885, %v3093
        %v4902 = vmin.f32 %v4886, %v3094
        %v4903 = vmin.f32 %v4887, %v3095
        %v4904 = vmin.f32 %v4888, %v3096
        %v4905 = vmin.f32 %v4889, %v3097
        %v4906 = vmin.f32 %v4890, %v3098
        %v4907 = vadd.f32 %v4891, %v3091
        %v4908 = vadd.f32 %v4892, %v3092
        %v4909 = vadd.f32 %v4893, %v3093
        %v4910 = vadd.f32 %v4894, %v3094
        %v4911 = vadd.f32 %v4895, %v3095
        %v4912 = vadd.f32 %v4896, %v3096
        %v4913 = vadd.f32 %v4897, %v3097
        %v4914 = vadd.f32 %v4898, %v3098
        %v4915 = vmin.f32 %v4899, %v3435
        %v4916 = vmin.f32 %v4900, %v3436
        %v4917 = vmin.f32 %v4901, %v3437
        %v4918 = vmin.f32 %v4902, %v3438
        %v4919 = vmin.f32 %v4903, %v3439
        %v4920 = vmin.f32 %v4904, %v3440
        %v4921 = vmin.f32 %v4905, %v3441
        %v4922 = vmin.f32 %v4906, %v3442
        %v4923 = vadd.f32 %v4907, %v3435
        %v4924 = vadd.f32 %v4908, %v3436
        %v4925 = vadd.f32 %v4909, %v3437
        %v4926 = vadd.f32 %v4910, %v3438
        %v4927 = vadd.f32 %v4911, %v3439
        %v4928 = vadd.f32 %v4912, %v3440
        %v4929 = vadd.f32 %v4913, %v3441
        %v4930 = vadd.f32 %v4914, %v3442
        %v4931 = vmin.f32 %v4915, %v3779
        %v4932 = vmin.f32 %v4916, %v3780
        %v4933 = vmin.f32 %v4917, %v3781
        %v4934 = vmin.f32 %v4918, %v3782
        %v4935 = vmin.f32 %v4919, %v3783
        %v4936 = vmin.f32 %v4920, %v3784
        %v4937 = vmin.f32 %v4921, %v3785
        %v4938 = vmin.f32 %v4922, %v3786
        %v4939 = vadd.f32 %v4923, %v3779
        %v4940 = vadd.f32 %v4924, %v3780
        %v4941 = vadd.f32 %v4925, %v3781
        %v4942 = vadd.f32 %v4926, %v3782
        %v4943 = vadd.f32 %v4927, %v3783
        %v4944 = vadd.f32 %v4928, %v3784
        %v4945 = vadd.f32 %v4929, %v3785
        %v4946 = vadd.f32 %v4930, %v3786
        %v4947 = vmin.f32 %v4931, %v4123
        %v4948 = vmin.f32 %v4932, %v4124
        %v4949 = vmin.f32 %v4933, %v4125
        %v4950 = vmin.f32 %v4934, %v4126
        %v4951 = vmin.f32 %v4935, %v4127
        %v4952 = vmin.f32 %v4936, %v4128
        %v4953 = vmin.f32 %v4937, %v4129
        %v4954 = vmin.f32 %v4938, %v4130
        %v4955 = vadd.f32 %v4939, %v4123
        %v4956 = vadd.f32 %v4940, %v4124
        %v4957 = vadd.f32 %v4941, %v4125
        %v4958 = vadd.f32 %v4942, %v4126
        %v4959 = vadd.f32 %v4943, %v4127
        %v4960 = vadd.f32 %v4944, %v4128
        %v4961 = vadd.f32 %v4945, %v4129
        %v4962 = vadd.f32 %v4946, %v4130
        %v4963 = vmin.f32 %v4947, %v4467
        %v4964 = vmin.f32 %v4948, %v4468
        %v4965 = vmin.f32 %v4949, %v4469
        %v4966 = vmin.f32 %v4950, %v4470
        %v4967 = vmin.f32 %v4951, %v4471
        %v4968 = vmin.f32 %v4952, %v4472
        %v4969 = vmin.f32 %v4953, %v4473
        %v4970 = vmin.f32 %v4954, %v4474
        %v4971 = vadd.f32 %v4955, %v4467
        %v4972 = vadd.f32 %v4956, %v4468
        %v4973 = vadd.f32 %v4957, %v4469
        %v4974 = vadd.f32 %v4958, %v4470
        %v4975 = vadd.f32 %v4959, %v4471
        %v4976 = vadd.f32 %v4960, %v4472
        %v4977 = vadd.f32 %v4961, %v4473
        %v4978 = vadd.f32 %v4962, %v4474
        %v4979 = vmin.f32 %v4963, %v4811
        %v4980 = vmin.f32 %v4964, %v4812
        %v4981 = vmin.f32 %v4965, %v4813
        %v4982 = vmin.f32 %v4966, %v4814
        %v4983 = vmin.f32 %v4967, %v4815
        %v4984 = vmin.f32 %v4968, %v4816
        %v4985 = vmin.f32 %v4969, %v4817
        %v4986 = vmin.f32 %v4970, %v4818
        %v4987 = vadd.f32 %v4971, %v4811
        %v4988 = vadd.f32 %v4972, %v4812
        %v4989 = vadd.f32 %v4973, %v4813
        %v4990 = vadd.f32 %v4974, %v4814
        %v4991 = vadd.f32 %v4975, %v4815
        %v4992 = vadd.f32 %v4976, %v4816
        %v4993 = vadd.f32 %v4977, %v4817
        %v4994 = vadd.f32 %v4978, %v4818
        %v4995 = vmul.f32 %v4987, 0.083333336
        %v4996 = vmul.f32 %v4988, 0.083333336
        %v4997 = vmul.f32 %v4989, 0.083333336
        %v4998 = vmul.f32 %v4990, 0.083333336
        %v4999 = vmul.f32 %v4991, 0.083333336
        %v5000 = vmul.f32 %v4992, 0.083333336
        %v5001 = vmul.f32 %v4993, 0.083333336
        %v5002 = vmul.f32 %v4994, 0.083333336
        %v5003 = vsub.f32 %v4995, %v4979
        %v5004 = vsub.f32 %v4996, %v4980
        %v5005 = vsub.f32 %v4997, %v4981
        %v5006 = vsub.f32 %v4998, %v4982
        %v5007 = vsub.f32 %v4999, %v4983
        %v5008 = vsub.f32 %v5000, %v4984
        %v5009 = vsub.f32 %v5001, %v4985
        %v5010 = vsub.f32 %v5002, %v4986
        %v5011 = vld [vmem:[#allocation2] sm:$0xff]
        %v5012 = vld [vmem:[#allocation2 + $0x8] sm:$0xff]
        %v5013 = vld [vmem:[#allocation2 + $0x10] sm:$0xff]
        %v5014 = vld [vmem:[#allocation2 + $0x18] sm:$0xff]
        %v5015 = vld [vmem:[#allocation2 + $0x20] sm:$0xff]
        %v5016 = vld [vmem:[#allocation2 + $0x28] sm:$0xff]
        %v5017 = vld [vmem:[#allocation2 + $0x30] sm:$0xff]
        %v5018 = vld [vmem:[#allocation2 + $0x38] sm:$0xff]
        %v5019 = vadd.f32 %v5011, %v5003
        %v5020 = vadd.f32 %v5012, %v5004
        %v5021 = vadd.f32 %v5013, %v5005
        %v5022 = vadd.f32 %v5014, %v5006
        %v5023 = vadd.f32 %v5015, %v5007
        %v5024 = vadd.f32 %v5016, %v5008
        %v5025 = vadd.f32 %v5017, %v5009
        %v5026 = vadd.f32 %v5018, %v5010
        %5027 = vst.msk [vmem:[#allocation2] sm:$0xff] %vm177, %v5019
        %5028 = vst.msk [vmem:[#allocation2 + $0x8] sm:$0xff] %vm177, %v5020
        %5029 = vst.msk [vmem:[#allocation2 + $0x10] sm:$0xff] %vm177, %v5021
        %5030 = vst.msk [vmem:[#allocation2 + $0x18] sm:$0xff] %vm177, %v5022
        %5031 = vst.msk [vmem:[#allocation2 + $0x20] sm:$0xff] %vm177, %v5023
        %5032 = vst.msk [vmem:[#allocation2 + $0x28] sm:$0xff] %vm177, %v5024
        %5033 = vst.msk [vmem:[#allocation2 + $0x30] sm:$0xff] %vm177, %v5025
        %5034 = vst.msk [vmem:[#allocation2 + $0x38] sm:$0xff] %vm177, %v5026
        %p5035 = scmp.eq.s32.totalorder %s20, 2
        // Predicated region
        $region29: #{tpu_custom_call.1} parent=23 // pred_check
          %p5036 = pneg %p5035
        $region30: #{tpu_custom_call.1} parent=23 // pred_check_branch
          %5038 = sbr.rel (%p5036) target = $region32
        $region31: #{tpu_custom_call.1} parent=23 // pred_region
          %v5039 = vld [vmem:[#allocation2] sm:$0xff]
          %v5040 = vld [vmem:[#allocation2 + $0x8] sm:$0xff]
          %v5041 = vld [vmem:[#allocation2 + $0x10] sm:$0xff]
          %v5042 = vld [vmem:[#allocation2 + $0x18] sm:$0xff]
          %v5043 = vld [vmem:[#allocation2 + $0x20] sm:$0xff]
          %v5044 = vld [vmem:[#allocation2 + $0x28] sm:$0xff]
          %v5045 = vld [vmem:[#allocation2 + $0x30] sm:$0xff]
          %v5046 = vld [vmem:[#allocation2 + $0x38] sm:$0xff]
          %v5047 = vsel %vm177, %v5039, 0.0
          %v5048 = vsel %vm177, %v5040, 0.0
          %v5049 = vadd.f32 %v5047, %v5048
          %v5050 = vsel %vm177, %v5041, 0.0
          %v5051 = vadd.f32 %v5049, %v5050
          %v5052 = vsel %vm177, %v5042, 0.0
          %v5053 = vadd.f32 %v5051, %v5052
          %v5054 = vsel %vm177, %v5043, 0.0
          %v5055 = vadd.f32 %v5053, %v5054
          %v5056 = vsel %vm177, %v5044, 0.0
          %v5057 = vadd.f32 %v5055, %v5056
          %v5058 = vsel %vm177, %v5045, 0.0
          %v5059 = vadd.f32 %v5057, %v5058
          %v5060 = vsel %vm177, %v5046, 0.0
          %v5061 = vadd.f32 %v5059, %v5060
          %5062 = vadd.xlane.f32.xlu0 %v5061
          %v5063 = vpop.xlane.xlu0 %5062
          %v5064 = vrot.slane %v5063, 4
          %v5065 = vadd.f32 %v5063, %v5064
          %v5066 = vrot.slane %v5065, 2
          %v5067 = vadd.f32 %v5065, %v5066
          %v5068 = vrot.slane %v5067, 1
          %v5069 = vadd.f32 %v5067, %v5068
          %s5070 = vtos %v5069
          %v5071 = vstv %s5070
          %5072 = vst [vmem:[%s121] sm:$0xff] %v5071
        $region32: #{tpu_custom_call.1} parent=23 // pred_fallthru
          _
        %s5073 = sand.u32 %s61, 1
        %s5074 = scalar_lea.sflag [#allocation7], %s5073
        %s5075 = sand.u32 %s61, 1
        %s5076 = smul.addr %s5075, 8
        %s5077 = scalar_lea.vmem [#allocation6], %s5076
        // Predicated region
        $region33: #{tpu_custom_call.1} parent=23 // pred_check
          %p5078 = pneg %p71
        $region34: #{tpu_custom_call.1} parent=23 // pred_check_branch
          %5080 = sbr.rel (%p5078) target = $region36
        $region35: #{tpu_custom_call.1} parent=23 // pred_region
          %s5082 = ssub.s32 128, 128
          %5083 = vsyncadd %s5074, %s5082
          %s5084 = smul.addr %s19, 128
          %s5085 = scalar_lea.hbm %s1, %s5084
          %s5087 = sshll.u32 %s5077, 4
          %s5088 = int_to_ptr.vmem [resolvable:$true] %s5087
          %5090 = dma.vmem_to_hbm [thread:$0]  %s5088, 128, %s5085, %s5074
        $region36: #{tpu_custom_call.1} parent=23 // pred_fallthru
          _
      $region24: #{tpu_custom_call.1} parent=5 // pred_fallthru
        _
      %p5091 = scmp.le.s32.totalorder 2, %s10
      // Predicated region
      $region37: #{tpu_custom_call.1} parent=5 // pred_check
        %p5092 = pneg %p5091
      $region38: #{tpu_custom_call.1} parent=5 // pred_check_branch
        %5094 = sbr.rel (%p5092) target = $region40
      $region39: #{tpu_custom_call.1} parent=5 // pred_region
        %s5095 = ssub.s32 %s10, 2
        // Predicated region
        $region41: #{tpu_custom_call.1} parent=39 // pred_check
          %p5096 = pneg %p77
        $region42: #{tpu_custom_call.1} parent=39 // pred_check_branch
          %5098 = sbr.rel (%p5096) target = $region44
        $region43: #{tpu_custom_call.1} parent=39 // pred_region
          %s5099 = sand.u32 %s62, 1
          %s5100 = scalar_lea.sflag [#allocation7], %s5099
          %s5101 = sand.u32 %s62, 1
          %s5102 = smul.addr %s5101, 8
          %s5103 = scalar_lea.vmem [#allocation6], %s5102
          %5104 = dma.done %s5100, 128
        $region44: #{tpu_custom_call.1} parent=39 // pred_fallthru
          _
      $region40: #{tpu_custom_call.1} parent=5 // pred_fallthru
        _
    $region6: #{tpu_custom_call.1} parent=1 // loop_footer
      %s14 = sadd.s32 1, %s10
    $region7: #{tpu_custom_call.1} parent=1 // loop_footer_branch
      %9 = sbr.rel target = $region3
    $region8: #{tpu_custom_call.1} parent=1 // loop_exit
      _
    %5105 = vsyncpa [#allocation7], 1
    %s5106 = scalar_lea.sflag [#allocation7], 1
    %5107 = vsyncpa %s5106, 1

</llo_original>
